<compile_context>
chip_gen: v7x
topology: tpu7x:2x2x1
jax: 0.10.0
libtpu: 0.0.40
codegen_flags: <defaults>
</compile_context>

<pallas_src>
import jax
import jax.numpy as jnp
from jax.experimental import pallas as pl
from jax.experimental.pallas import tpu as pltpu

EPS = 1e-5          # BatchNorm1d default eps
NEG_SLOPE = 0.2     # LeakyReLU negative_slope
NUM_LAYERS = 6      # ConvNormRelu blocks in ClusterClassify


# ------------------------- Pallas kernel --------------------------------------

def cluster_classify_kernel(x_ref, sdn_ref, sup_ref, w_ref, b_ref, g_ref,
                            bt_ref, wl_ref, bl_ref, o_ref, act_ref):
    # x_ref   : (M, C)       f32   input rows, M = B*T, channels-last
    # sdn_ref : (M, M)       bf16  shift matrix: row i <- row i-1 (0 at t == 0)
    # sup_ref : (M, M)       bf16  shift matrix: row i <- row i+1 (0 at t == T-1)
    # w_ref   : (L, 3, C, C) bf16  conv weights, tap-major, (cin, cout) inner
    # b_ref   : (L, 1, C)    f32   conv biases
    # g_ref   : (L, 1, C)    f32   BatchNorm gamma
    # bt_ref  : (L, 1, C)    f32   BatchNorm beta
    # wl_ref  : (C, NC)      bf16  1x1 logits conv weight
    # bl_ref  : (1, NC)      f32   logits bias
    # o_ref   : (M, NC)      f32   output rows (channels-last)
    # act_ref : (M, C)       f32   VMEM scratch: resident activation
    num_layers = w_ref.shape[0]

    act_ref[...] = x_ref[...]
    sdn = sdn_ref[...]
    sup = sup_ref[...]

    for l in range(num_layers):
        x = act_ref[...]                       # f32 activation
        xc = x.astype(jnp.bfloat16)
        # +/-1 time shifts with zero fill at sequence boundaries. The shift
        # matrices are exact 0/1 permutations, so the result equals the shifted
        # bf16 activation bit-for-bit.
        xm = jnp.dot(sdn, xc, preferred_element_type=jnp.float32).astype(jnp.bfloat16)
        xp = jnp.dot(sup, xc, preferred_element_type=jnp.float32).astype(jnp.bfloat16)

        # Conv1d(k=3, s=1, pad=1) as three tap matmuls, f32 accumulation.
        y = jnp.dot(xm, w_ref[l, 0], preferred_element_type=jnp.float32)
        y = y + jnp.dot(xc, w_ref[l, 1], preferred_element_type=jnp.float32)
        y = y + jnp.dot(xp, w_ref[l, 2], preferred_element_type=jnp.float32)
        y = y + b_ref[l]

        # BatchNorm1d (train mode): per-channel biased stats over all B*T rows.
        mu = jnp.mean(y, axis=0, keepdims=True)
        var = jnp.mean(jnp.square(y - mu), axis=0, keepdims=True)
        z = (y - mu) * jax.lax.rsqrt(var + EPS)
        z = z * g_ref[l] + bt_ref[l]

        # LeakyReLU(0.2); Dropout(p=0) is an identity.
        act_ref[...] = jnp.where(z >= 0, z, NEG_SLOPE * z)

    # logits head: 1x1 Conv1d == channel matmul (no norm, no relu).
    xf = act_ref[...].astype(jnp.bfloat16)
    o_ref[...] = (jnp.dot(xf, wl_ref[...], preferred_element_type=jnp.float32)
                  + bl_ref[...])


# ------------------------- Host-side glue -------------------------------------

def _vmem():
    return pl.BlockSpec(memory_space=pltpu.MemorySpace.VMEM)


def make_shift_matrices(batch, time):
    """0/1 matrices realizing +/-1 time shifts (zero at sequence boundaries)."""
    m = batch * time
    r = jnp.arange(m)
    t = r % time
    sdn = (r[:, None] - 1 == r[None, :]) & (t[:, None] != 0)          # x[i-1]
    sup = (r[:, None] + 1 == r[None, :]) & (t[:, None] != time - 1)   # x[i+1]
    return sdn.astype(jnp.bfloat16), sup.astype(jnp.bfloat16)


def init_params(key, channels=256, num_clusters=8, num_layers=NUM_LAYERS, k=3):
    """PyTorch-default-like init. Assumes input_channels == 256 (module default)."""
    kw, kb, kwl, kbl = jax.random.split(key, 4)
    bound = 1.0 / float(channels * k) ** 0.5
    w = jax.random.uniform(kw, (num_layers, k, channels, channels),
                           jnp.float32, -bound, bound)
    b = jax.random.uniform(kb, (num_layers, 1, channels), jnp.float32, -bound, bound)
    gamma = jnp.ones((num_layers, 1, channels), jnp.float32)   # BN default weight
    beta = jnp.zeros((num_layers, 1, channels), jnp.float32)   # BN default bias
    lbound = 1.0 / float(channels) ** 0.5
    wl = jax.random.uniform(kwl, (channels, num_clusters), jnp.float32, -lbound, lbound)
    bl = jax.random.uniform(kbl, (1, num_clusters), jnp.float32, -lbound, lbound)
    return {
        "w": w.astype(jnp.bfloat16),    # bf16 at the MXU boundary
        "b": b, "gamma": gamma, "beta": beta,
        "wl": wl.astype(jnp.bfloat16), "bl": bl,
    }


@jax.jit
def cluster_classify(x_bct, params):
    """x_bct: (B, C, T) f32  ->  (B, num_clusters, T) f32."""
    B, C, T = x_bct.shape
    NC = params["wl"].shape[1]
    # channels-last rows for the MXU; the only host ops are tiny layout plumbing.
    x_rows = jnp.transpose(x_bct, (0, 2, 1)).reshape(B * T, C).astype(jnp.float32)
    sdn, sup = make_shift_matrices(B, T)

    out_rows = pl.pallas_call(
        cluster_classify_kernel,
        out_shape=jax.ShapeDtypeStruct((B * T, NC), jnp.float32),
        in_specs=[_vmem()] * 9,
        out_specs=_vmem(),
        scratch_shapes=[pltpu.VMEM((B * T, C), jnp.float32)],
    )(x_rows, sdn, sup, params["w"], params["b"], params["gamma"],
      params["beta"], params["wl"], params["bl"])

    # back to the torch layout (B, num_clusters, T)
    return jnp.transpose(out_rows.reshape(B, T, NC), (0, 2, 1))


if __name__ == "__main__":
    key = jax.random.PRNGKey(0)
    kx, kp = jax.random.split(key)
    # Small shapes consistent with the module: batch=2, channels=256 (module
    # default input_channels), time=64, num_clusters=8.
    B, C, T, NC = 2, 256, 64, 8
    x = jax.random.normal(kx, (B, C, T), dtype=jnp.float32)
    params = init_params(kp, channels=C, num_clusters=NC)

    out = cluster_classify(x, params)
    out = jax.block_until_ready(out)
    assert out.shape == (B, NC, T), out.shape
    assert bool(jnp.all(jnp.isfinite(out)))
    print("KERNEL_OK")
</pallas_src>

<mosaic_0001>
module attributes {stable_mosaic.version = 11 : i64} {
  func.func @cluster_classify_kernel(%arg0: memref<128x256xf32, #tpu.memory_space<vmem>>, %arg1: memref<128x128xbf16, #tpu.memory_space<vmem>>, %arg2: memref<128x128xbf16, #tpu.memory_space<vmem>>, %arg3: memref<6x3x256x256xbf16, #tpu.memory_space<vmem>>, %arg4: memref<6x1x256xf32, #tpu.memory_space<vmem>>, %arg5: memref<6x1x256xf32, #tpu.memory_space<vmem>>, %arg6: memref<6x1x256xf32, #tpu.memory_space<vmem>>, %arg7: memref<256x8xbf16, #tpu.memory_space<vmem>>, %arg8: memref<1x8xf32, #tpu.memory_space<vmem>>, %arg9: memref<128x8xf32, #tpu.memory_space<vmem>>, %arg10: memref<128x256xf32, #tpu.memory_space<vmem>>) attributes {dimension_semantics = [], scalar_prefetch = 0 : i64, scratch_operands = 1 : i64, tpu.core_type = #tpu.core_type<tc>} {
    %c0 = arith.constant 0 : index
    %c0_0 = arith.constant 0 : index
    %0 = vector.load %arg0[%c0, %c0_0] : memref<128x256xf32, #tpu.memory_space<vmem>>, vector<128x256xf32>
    %c0_1 = arith.constant 0 : index
    %c0_2 = arith.constant 0 : index
    %1 = vector.load %arg10[%c0_1, %c0_2] : memref<128x256xf32, #tpu.memory_space<vmem>>, vector<128x256xf32>
    tpu.vector_store %arg10[%c0_1, %c0_2], %0 {strides = array<i32>} : memref<128x256xf32, #tpu.memory_space<vmem>>, vector<128x256xf32>,
    %c0_3 = arith.constant 0 : index
    %c0_4 = arith.constant 0 : index
    %2 = vector.load %arg1[%c0_3, %c0_4] : memref<128x128xbf16, #tpu.memory_space<vmem>>, vector<128x128xbf16>
    %c0_5 = arith.constant 0 : index
    %c0_6 = arith.constant 0 : index
    %3 = vector.load %arg2[%c0_5, %c0_6] : memref<128x128xbf16, #tpu.memory_space<vmem>>, vector<128x128xbf16>
    %c0_7 = arith.constant 0 : index
    %c0_8 = arith.constant 0 : index
    %4 = vector.load %arg10[%c0_7, %c0_8] : memref<128x256xf32, #tpu.memory_space<vmem>>, vector<128x256xf32>
    %5 = arith.truncf %4 : vector<128x256xf32> to vector<128x256xbf16>
    %cst = arith.constant dense<0.000000e+00> : vector<128x256xf32>
    %6 = tpu.matmul %2, %5, %cst {dimension_numbers = #tpu.dot_dimension_numbers<[1], [0], [0], [1], [0, 0, 1, 1], [], []>} : vector<128x128xbf16>, vector<128x256xbf16>, vector<128x256xf32> -> vector<128x256xf32>
    %7 = arith.truncf %6 : vector<128x256xf32> to vector<128x256xbf16>
    %cst_9 = arith.constant dense<0.000000e+00> : vector<128x256xf32>
    %8 = tpu.matmul %3, %5, %cst_9 {dimension_numbers = #tpu.dot_dimension_numbers<[1], [0], [0], [1], [0, 0, 1, 1], [], []>} : vector<128x128xbf16>, vector<128x256xbf16>, vector<128x256xf32> -> vector<128x256xf32>
    %9 = arith.truncf %8 : vector<128x256xf32> to vector<128x256xbf16>
    %c0_10 = arith.constant 0 : index
    %c0_11 = arith.constant 0 : index
    %c0_12 = arith.constant 0 : index
    %c0_13 = arith.constant 0 : index
    %10 = vector.load %arg3[%c0_10, %c0_11, %c0_12, %c0_13] : memref<6x3x256x256xbf16, #tpu.memory_space<vmem>>, vector<1x1x256x256xbf16>
    %11 = vector.shape_cast %10 : vector<1x1x256x256xbf16> to vector<256x256xbf16>
    %cst_14 = arith.constant dense<0.000000e+00> : vector<128x256xf32>
    %12 = tpu.matmul %7, %11, %cst_14 {dimension_numbers = #tpu.dot_dimension_numbers<[1], [0], [0], [1], [0, 0, 1, 1], [], []>} : vector<128x256xbf16>, vector<256x256xbf16>, vector<128x256xf32> -> vector<128x256xf32>
    %c0_15 = arith.constant 0 : index
    %c1 = arith.constant 1 : index
    %c0_16 = arith.constant 0 : index
    %c0_17 = arith.constant 0 : index
    %13 = vector.load %arg3[%c0_15, %c1, %c0_16, %c0_17] : memref<6x3x256x256xbf16, #tpu.memory_space<vmem>>, vector<1x1x256x256xbf16>
    %14 = vector.shape_cast %13 : vector<1x1x256x256xbf16> to vector<256x256xbf16>
    %cst_18 = arith.constant dense<0.000000e+00> : vector<128x256xf32>
    %15 = tpu.matmul %5, %14, %cst_18 {dimension_numbers = #tpu.dot_dimension_numbers<[1], [0], [0], [1], [0, 0, 1, 1], [], []>} : vector<128x256xbf16>, vector<256x256xbf16>, vector<128x256xf32> -> vector<128x256xf32>
    %16 = arith.addf %12, %15 : vector<128x256xf32>
    %c0_19 = arith.constant 0 : index
    %c2 = arith.constant 2 : index
    %c0_20 = arith.constant 0 : index
    %c0_21 = arith.constant 0 : index
    %17 = vector.load %arg3[%c0_19, %c2, %c0_20, %c0_21] : memref<6x3x256x256xbf16, #tpu.memory_space<vmem>>, vector<1x1x256x256xbf16>
    %18 = vector.shape_cast %17 : vector<1x1x256x256xbf16> to vector<256x256xbf16>
    %cst_22 = arith.constant dense<0.000000e+00> : vector<128x256xf32>
    %19 = tpu.matmul %9, %18, %cst_22 {dimension_numbers = #tpu.dot_dimension_numbers<[1], [0], [0], [1], [0, 0, 1, 1], [], []>} : vector<128x256xbf16>, vector<256x256xbf16>, vector<128x256xf32> -> vector<128x256xf32>
    %20 = arith.addf %16, %19 : vector<128x256xf32>
    %c0_23 = arith.constant 0 : index
    %c0_24 = arith.constant 0 : index
    %c0_25 = arith.constant 0 : index
    %21 = vector.load %arg4[%c0_23, %c0_24, %c0_25] : memref<6x1x256xf32, #tpu.memory_space<vmem>>, vector<1x1x256xf32>
    %22 = vector.shape_cast %21 : vector<1x1x256xf32> to vector<1x256xf32>
    %23 = vector.broadcast %22 : vector<1x256xf32> to vector<128x256xf32>
    %24 = arith.addf %20, %23 : vector<128x256xf32>
    %cst_26 = arith.constant dense<0.000000e+00> : vector<256xf32>
    %25 = vector.multi_reduction <add>, %24, %cst_26 [0] : vector<128x256xf32> to vector<256xf32>
    %26 = vector.shape_cast %25 : vector<256xf32> to vector<1x256xf32>
    %cst_27 = arith.constant 1.280000e+02 : f32
    %27 = vector.broadcast %cst_27 : f32 to vector<1x256xf32>
    %28 = arith.divf %26, %27 : vector<1x256xf32>
    %29 = vector.broadcast %28 : vector<1x256xf32> to vector<128x256xf32>
    %30 = arith.subf %24, %29 : vector<128x256xf32>
    %31 = arith.mulf %30, %30 : vector<128x256xf32>
    %cst_28 = arith.constant dense<0.000000e+00> : vector<256xf32>
    %32 = vector.multi_reduction <add>, %31, %cst_28 [0] : vector<128x256xf32> to vector<256xf32>
    %33 = vector.shape_cast %32 : vector<256xf32> to vector<1x256xf32>
    %cst_29 = arith.constant 1.280000e+02 : f32
    %34 = vector.broadcast %cst_29 : f32 to vector<1x256xf32>
    %35 = arith.divf %33, %34 : vector<1x256xf32>
    %36 = vector.broadcast %28 : vector<1x256xf32> to vector<128x256xf32>
    %37 = arith.subf %24, %36 : vector<128x256xf32>
    %cst_30 = arith.constant 9.99999974E-6 : f32
    %38 = vector.broadcast %cst_30 : f32 to vector<1x256xf32>
    %39 = arith.addf %35, %38 : vector<1x256xf32>
    %40 = math.rsqrt %39 : vector<1x256xf32>
    %41 = vector.broadcast %40 : vector<1x256xf32> to vector<128x256xf32>
    %42 = arith.mulf %37, %41 : vector<128x256xf32>
    %c0_31 = arith.constant 0 : index
    %c0_32 = arith.constant 0 : index
    %c0_33 = arith.constant 0 : index
    %43 = vector.load %arg5[%c0_31, %c0_32, %c0_33] : memref<6x1x256xf32, #tpu.memory_space<vmem>>, vector<1x1x256xf32>
    %44 = vector.shape_cast %43 : vector<1x1x256xf32> to vector<1x256xf32>
    %45 = vector.broadcast %44 : vector<1x256xf32> to vector<128x256xf32>
    %46 = arith.mulf %42, %45 : vector<128x256xf32>
    %c0_34 = arith.constant 0 : index
    %c0_35 = arith.constant 0 : index
    %c0_36 = arith.constant 0 : index
    %47 = vector.load %arg6[%c0_34, %c0_35, %c0_36] : memref<6x1x256xf32, #tpu.memory_space<vmem>>, vector<1x1x256xf32>
    %48 = vector.shape_cast %47 : vector<1x1x256xf32> to vector<1x256xf32>
    %49 = vector.broadcast %48 : vector<1x256xf32> to vector<128x256xf32>
    %50 = arith.addf %46, %49 : vector<128x256xf32>
    %cst_37 = arith.constant 0.000000e+00 : f32
    %51 = vector.broadcast %cst_37 : f32 to vector<128x256xf32>
    %52 = arith.cmpf oge, %50, %51 : vector<128x256xf32>
    %cst_38 = arith.constant 2.000000e-01 : f32
    %53 = vector.broadcast %cst_38 : f32 to vector<128x256xf32>
    %54 = arith.mulf %53, %50 : vector<128x256xf32>
    %55 = arith.select %52, %50, %54 : vector<128x256xi1>, vector<128x256xf32>
    %c0_39 = arith.constant 0 : index
    %c0_40 = arith.constant 0 : index
    %56 = vector.load %arg10[%c0_39, %c0_40] : memref<128x256xf32, #tpu.memory_space<vmem>>, vector<128x256xf32>
    tpu.vector_store %arg10[%c0_39, %c0_40], %55 {strides = array<i32>} : memref<128x256xf32, #tpu.memory_space<vmem>>, vector<128x256xf32>,
    %c0_41 = arith.constant 0 : index
    %c0_42 = arith.constant 0 : index
    %57 = vector.load %arg10[%c0_41, %c0_42] : memref<128x256xf32, #tpu.memory_space<vmem>>, vector<128x256xf32>
    %58 = arith.truncf %57 : vector<128x256xf32> to vector<128x256xbf16>
    %cst_43 = arith.constant dense<0.000000e+00> : vector<128x256xf32>
    %59 = tpu.matmul %2, %58, %cst_43 {dimension_numbers = #tpu.dot_dimension_numbers<[1], [0], [0], [1], [0, 0, 1, 1], [], []>} : vector<128x128xbf16>, vector<128x256xbf16>, vector<128x256xf32> -> vector<128x256xf32>
    %60 = arith.truncf %59 : vector<128x256xf32> to vector<128x256xbf16>
    %cst_44 = arith.constant dense<0.000000e+00> : vector<128x256xf32>
    %61 = tpu.matmul %3, %58, %cst_44 {dimension_numbers = #tpu.dot_dimension_numbers<[1], [0], [0], [1], [0, 0, 1, 1], [], []>} : vector<128x128xbf16>, vector<128x256xbf16>, vector<128x256xf32> -> vector<128x256xf32>
    %62 = arith.truncf %61 : vector<128x256xf32> to vector<128x256xbf16>
    %c1_45 = arith.constant 1 : index
    %c0_46 = arith.constant 0 : index
    %c0_47 = arith.constant 0 : index
    %c0_48 = arith.constant 0 : index
    %63 = vector.load %arg3[%c1_45, %c0_46, %c0_47, %c0_48] : memref<6x3x256x256xbf16, #tpu.memory_space<vmem>>, vector<1x1x256x256xbf16>
    %64 = vector.shape_cast %63 : vector<1x1x256x256xbf16> to vector<256x256xbf16>
    %cst_49 = arith.constant dense<0.000000e+00> : vector<128x256xf32>
    %65 = tpu.matmul %60, %64, %cst_49 {dimension_numbers = #tpu.dot_dimension_numbers<[1], [0], [0], [1], [0, 0, 1, 1], [], []>} : vector<128x256xbf16>, vector<256x256xbf16>, vector<128x256xf32> -> vector<128x256xf32>
    %c1_50 = arith.constant 1 : index
    %c1_51 = arith.constant 1 : index
    %c0_52 = arith.constant 0 : index
    %c0_53 = arith.constant 0 : index
    %66 = vector.load %arg3[%c1_50, %c1_51, %c0_52, %c0_53] : memref<6x3x256x256xbf16, #tpu.memory_space<vmem>>, vector<1x1x256x256xbf16>
    %67 = vector.shape_cast %66 : vector<1x1x256x256xbf16> to vector<256x256xbf16>
    %cst_54 = arith.constant dense<0.000000e+00> : vector<128x256xf32>
    %68 = tpu.matmul %58, %67, %cst_54 {dimension_numbers = #tpu.dot_dimension_numbers<[1], [0], [0], [1], [0, 0, 1, 1], [], []>} : vector<128x256xbf16>, vector<256x256xbf16>, vector<128x256xf32> -> vector<128x256xf32>
    %69 = arith.addf %65, %68 : vector<128x256xf32>
    %c1_55 = arith.constant 1 : index
    %c2_56 = arith.constant 2 : index
    %c0_57 = arith.constant 0 : index
    %c0_58 = arith.constant 0 : index
    %70 = vector.load %arg3[%c1_55, %c2_56, %c0_57, %c0_58] : memref<6x3x256x256xbf16, #tpu.memory_space<vmem>>, vector<1x1x256x256xbf16>
    %71 = vector.shape_cast %70 : vector<1x1x256x256xbf16> to vector<256x256xbf16>
    %cst_59 = arith.constant dense<0.000000e+00> : vector<128x256xf32>
    %72 = tpu.matmul %62, %71, %cst_59 {dimension_numbers = #tpu.dot_dimension_numbers<[1], [0], [0], [1], [0, 0, 1, 1], [], []>} : vector<128x256xbf16>, vector<256x256xbf16>, vector<128x256xf32> -> vector<128x256xf32>
    %73 = arith.addf %69, %72 : vector<128x256xf32>
    %c1_60 = arith.constant 1 : index
    %c0_61 = arith.constant 0 : index
    %c0_62 = arith.constant 0 : index
    %74 = vector.load %arg4[%c1_60, %c0_61, %c0_62] : memref<6x1x256xf32, #tpu.memory_space<vmem>>, vector<1x1x256xf32>
    %75 = vector.shape_cast %74 : vector<1x1x256xf32> to vector<1x256xf32>
    %76 = vector.broadcast %75 : vector<1x256xf32> to vector<128x256xf32>
    %77 = arith.addf %73, %76 : vector<128x256xf32>
    %cst_63 = arith.constant dense<0.000000e+00> : vector<256xf32>
    %78 = vector.multi_reduction <add>, %77, %cst_63 [0] : vector<128x256xf32> to vector<256xf32>
    %79 = vector.shape_cast %78 : vector<256xf32> to vector<1x256xf32>
    %cst_64 = arith.constant 1.280000e+02 : f32
    %80 = vector.broadcast %cst_64 : f32 to vector<1x256xf32>
    %81 = arith.divf %79, %80 : vector<1x256xf32>
    %82 = vector.broadcast %81 : vector<1x256xf32> to vector<128x256xf32>
    %83 = arith.subf %77, %82 : vector<128x256xf32>
    %84 = arith.mulf %83, %83 : vector<128x256xf32>
    %cst_65 = arith.constant dense<0.000000e+00> : vector<256xf32>
    %85 = vector.multi_reduction <add>, %84, %cst_65 [0] : vector<128x256xf32> to vector<256xf32>
    %86 = vector.shape_cast %85 : vector<256xf32> to vector<1x256xf32>
    %cst_66 = arith.constant 1.280000e+02 : f32
    %87 = vector.broadcast %cst_66 : f32 to vector<1x256xf32>
    %88 = arith.divf %86, %87 : vector<1x256xf32>
    %89 = vector.broadcast %81 : vector<1x256xf32> to vector<128x256xf32>
    %90 = arith.subf %77, %89 : vector<128x256xf32>
    %cst_67 = arith.constant 9.99999974E-6 : f32
    %91 = vector.broadcast %cst_67 : f32 to vector<1x256xf32>
    %92 = arith.addf %88, %91 : vector<1x256xf32>
    %93 = math.rsqrt %92 : vector<1x256xf32>
    %94 = vector.broadcast %93 : vector<1x256xf32> to vector<128x256xf32>
    %95 = arith.mulf %90, %94 : vector<128x256xf32>
    %c1_68 = arith.constant 1 : index
    %c0_69 = arith.constant 0 : index
    %c0_70 = arith.constant 0 : index
    %96 = vector.load %arg5[%c1_68, %c0_69, %c0_70] : memref<6x1x256xf32, #tpu.memory_space<vmem>>, vector<1x1x256xf32>
    %97 = vector.shape_cast %96 : vector<1x1x256xf32> to vector<1x256xf32>
    %98 = vector.broadcast %97 : vector<1x256xf32> to vector<128x256xf32>
    %99 = arith.mulf %95, %98 : vector<128x256xf32>
    %c1_71 = arith.constant 1 : index
    %c0_72 = arith.constant 0 : index
    %c0_73 = arith.constant 0 : index
    %100 = vector.load %arg6[%c1_71, %c0_72, %c0_73] : memref<6x1x256xf32, #tpu.memory_space<vmem>>, vector<1x1x256xf32>
    %101 = vector.shape_cast %100 : vector<1x1x256xf32> to vector<1x256xf32>
    %102 = vector.broadcast %101 : vector<1x256xf32> to vector<128x256xf32>
    %103 = arith.addf %99, %102 : vector<128x256xf32>
    %cst_74 = arith.constant 0.000000e+00 : f32
    %104 = vector.broadcast %cst_74 : f32 to vector<128x256xf32>
    %105 = arith.cmpf oge, %103, %104 : vector<128x256xf32>
    %cst_75 = arith.constant 2.000000e-01 : f32
    %106 = vector.broadcast %cst_75 : f32 to vector<128x256xf32>
    %107 = arith.mulf %106, %103 : vector<128x256xf32>
    %108 = arith.select %105, %103, %107 : vector<128x256xi1>, vector<128x256xf32>
    %c0_76 = arith.constant 0 : index
    %c0_77 = arith.constant 0 : index
    %109 = vector.load %arg10[%c0_76, %c0_77] : memref<128x256xf32, #tpu.memory_space<vmem>>, vector<128x256xf32>
    tpu.vector_store %arg10[%c0_76, %c0_77], %108 {strides = array<i32>} : memref<128x256xf32, #tpu.memory_space<vmem>>, vector<128x256xf32>,
    %c0_78 = arith.constant 0 : index
    %c0_79 = arith.constant 0 : index
    %110 = vector.load %arg10[%c0_78, %c0_79] : memref<128x256xf32, #tpu.memory_space<vmem>>, vector<128x256xf32>
    %111 = arith.truncf %110 : vector<128x256xf32> to vector<128x256xbf16>
    %cst_80 = arith.constant dense<0.000000e+00> : vector<128x256xf32>
    %112 = tpu.matmul %2, %111, %cst_80 {dimension_numbers = #tpu.dot_dimension_numbers<[1], [0], [0], [1], [0, 0, 1, 1], [], []>} : vector<128x128xbf16>, vector<128x256xbf16>, vector<128x256xf32> -> vector<128x256xf32>
    %113 = arith.truncf %112 : vector<128x256xf32> to vector<128x256xbf16>
    %cst_81 = arith.constant dense<0.000000e+00> : vector<128x256xf32>
    %114 = tpu.matmul %3, %111, %cst_81 {dimension_numbers = #tpu.dot_dimension_numbers<[1], [0], [0], [1], [0, 0, 1, 1], [], []>} : vector<128x128xbf16>, vector<128x256xbf16>, vector<128x256xf32> -> vector<128x256xf32>
    %115 = arith.truncf %114 : vector<128x256xf32> to vector<128x256xbf16>
    %c2_82 = arith.constant 2 : index
    %c0_83 = arith.constant 0 : index
    %c0_84 = arith.constant 0 : index
    %c0_85 = arith.constant 0 : index
    %116 = vector.load %arg3[%c2_82, %c0_83, %c0_84, %c0_85] : memref<6x3x256x256xbf16, #tpu.memory_space<vmem>>, vector<1x1x256x256xbf16>
    %117 = vector.shape_cast %116 : vector<1x1x256x256xbf16> to vector<256x256xbf16>
    %cst_86 = arith.constant dense<0.000000e+00> : vector<128x256xf32>
    %118 = tpu.matmul %113, %117, %cst_86 {dimension_numbers = #tpu.dot_dimension_numbers<[1], [0], [0], [1], [0, 0, 1, 1], [], []>} : vector<128x256xbf16>, vector<256x256xbf16>, vector<128x256xf32> -> vector<128x256xf32>
    %c2_87 = arith.constant 2 : index
    %c1_88 = arith.constant 1 : index
    %c0_89 = arith.constant 0 : index
    %c0_90 = arith.constant 0 : index
    %119 = vector.load %arg3[%c2_87, %c1_88, %c0_89, %c0_90] : memref<6x3x256x256xbf16, #tpu.memory_space<vmem>>, vector<1x1x256x256xbf16>
    %120 = vector.shape_cast %119 : vector<1x1x256x256xbf16> to vector<256x256xbf16>
    %cst_91 = arith.constant dense<0.000000e+00> : vector<128x256xf32>
    %121 = tpu.matmul %111, %120, %cst_91 {dimension_numbers = #tpu.dot_dimension_numbers<[1], [0], [0], [1], [0, 0, 1, 1], [], []>} : vector<128x256xbf16>, vector<256x256xbf16>, vector<128x256xf32> -> vector<128x256xf32>
    %122 = arith.addf %118, %121 : vector<128x256xf32>
    %c2_92 = arith.constant 2 : index
    %c2_93 = arith.constant 2 : index
    %c0_94 = arith.constant 0 : index
    %c0_95 = arith.constant 0 : index
    %123 = vector.load %arg3[%c2_92, %c2_93, %c0_94, %c0_95] : memref<6x3x256x256xbf16, #tpu.memory_space<vmem>>, vector<1x1x256x256xbf16>
    %124 = vector.shape_cast %123 : vector<1x1x256x256xbf16> to vector<256x256xbf16>
    %cst_96 = arith.constant dense<0.000000e+00> : vector<128x256xf32>
    %125 = tpu.matmul %115, %124, %cst_96 {dimension_numbers = #tpu.dot_dimension_numbers<[1], [0], [0], [1], [0, 0, 1, 1], [], []>} : vector<128x256xbf16>, vector<256x256xbf16>, vector<128x256xf32> -> vector<128x256xf32>
    %126 = arith.addf %122, %125 : vector<128x256xf32>
    %c2_97 = arith.constant 2 : index
    %c0_98 = arith.constant 0 : index
    %c0_99 = arith.constant 0 : index
    %127 = vector.load %arg4[%c2_97, %c0_98, %c0_99] : memref<6x1x256xf32, #tpu.memory_space<vmem>>, vector<1x1x256xf32>
    %128 = vector.shape_cast %127 : vector<1x1x256xf32> to vector<1x256xf32>
    %129 = vector.broadcast %128 : vector<1x256xf32> to vector<128x256xf32>
    %130 = arith.addf %126, %129 : vector<128x256xf32>
    %cst_100 = arith.constant dense<0.000000e+00> : vector<256xf32>
    %131 = vector.multi_reduction <add>, %130, %cst_100 [0] : vector<128x256xf32> to vector<256xf32>
    %132 = vector.shape_cast %131 : vector<256xf32> to vector<1x256xf32>
    %cst_101 = arith.constant 1.280000e+02 : f32
    %133 = vector.broadcast %cst_101 : f32 to vector<1x256xf32>
    %134 = arith.divf %132, %133 : vector<1x256xf32>
    %135 = vector.broadcast %134 : vector<1x256xf32> to vector<128x256xf32>
    %136 = arith.subf %130, %135 : vector<128x256xf32>
    %137 = arith.mulf %136, %136 : vector<128x256xf32>
    %cst_102 = arith.constant dense<0.000000e+00> : vector<256xf32>
    %138 = vector.multi_reduction <add>, %137, %cst_102 [0] : vector<128x256xf32> to vector<256xf32>
    %139 = vector.shape_cast %138 : vector<256xf32> to vector<1x256xf32>
    %cst_103 = arith.constant 1.280000e+02 : f32
    %140 = vector.broadcast %cst_103 : f32 to vector<1x256xf32>
    %141 = arith.divf %139, %140 : vector<1x256xf32>
    %142 = vector.broadcast %134 : vector<1x256xf32> to vector<128x256xf32>
    %143 = arith.subf %130, %142 : vector<128x256xf32>
    %cst_104 = arith.constant 9.99999974E-6 : f32
    %144 = vector.broadcast %cst_104 : f32 to vector<1x256xf32>
    %145 = arith.addf %141, %144 : vector<1x256xf32>
    %146 = math.rsqrt %145 : vector<1x256xf32>
    %147 = vector.broadcast %146 : vector<1x256xf32> to vector<128x256xf32>
    %148 = arith.mulf %143, %147 : vector<128x256xf32>
    %c2_105 = arith.constant 2 : index
    %c0_106 = arith.constant 0 : index
    %c0_107 = arith.constant 0 : index
    %149 = vector.load %arg5[%c2_105, %c0_106, %c0_107] : memref<6x1x256xf32, #tpu.memory_space<vmem>>, vector<1x1x256xf32>
    %150 = vector.shape_cast %149 : vector<1x1x256xf32> to vector<1x256xf32>
    %151 = vector.broadcast %150 : vector<1x256xf32> to vector<128x256xf32>
    %152 = arith.mulf %148, %151 : vector<128x256xf32>
    %c2_108 = arith.constant 2 : index
    %c0_109 = arith.constant 0 : index
    %c0_110 = arith.constant 0 : index
    %153 = vector.load %arg6[%c2_108, %c0_109, %c0_110] : memref<6x1x256xf32, #tpu.memory_space<vmem>>, vector<1x1x256xf32>
    %154 = vector.shape_cast %153 : vector<1x1x256xf32> to vector<1x256xf32>
    %155 = vector.broadcast %154 : vector<1x256xf32> to vector<128x256xf32>
    %156 = arith.addf %152, %155 : vector<128x256xf32>
    %cst_111 = arith.constant 0.000000e+00 : f32
    %157 = vector.broadcast %cst_111 : f32 to vector<128x256xf32>
    %158 = arith.cmpf oge, %156, %157 : vector<128x256xf32>
    %cst_112 = arith.constant 2.000000e-01 : f32
    %159 = vector.broadcast %cst_112 : f32 to vector<128x256xf32>
    %160 = arith.mulf %159, %156 : vector<128x256xf32>
    %161 = arith.select %158, %156, %160 : vector<128x256xi1>, vector<128x256xf32>
    %c0_113 = arith.constant 0 : index
    %c0_114 = arith.constant 0 : index
    %162 = vector.load %arg10[%c0_113, %c0_114] : memref<128x256xf32, #tpu.memory_space<vmem>>, vector<128x256xf32>
    tpu.vector_store %arg10[%c0_113, %c0_114], %161 {strides = array<i32>} : memref<128x256xf32, #tpu.memory_space<vmem>>, vector<128x256xf32>,
    %c0_115 = arith.constant 0 : index
    %c0_116 = arith.constant 0 : index
    %163 = vector.load %arg10[%c0_115, %c0_116] : memref<128x256xf32, #tpu.memory_space<vmem>>, vector<128x256xf32>
    %164 = arith.truncf %163 : vector<128x256xf32> to vector<128x256xbf16>
    %cst_117 = arith.constant dense<0.000000e+00> : vector<128x256xf32>
    %165 = tpu.matmul %2, %164, %cst_117 {dimension_numbers = #tpu.dot_dimension_numbers<[1], [0], [0], [1], [0, 0, 1, 1], [], []>} : vector<128x128xbf16>, vector<128x256xbf16>, vector<128x256xf32> -> vector<128x256xf32>
    %166 = arith.truncf %165 : vector<128x256xf32> to vector<128x256xbf16>
    %cst_118 = arith.constant dense<0.000000e+00> : vector<128x256xf32>
    %167 = tpu.matmul %3, %164, %cst_118 {dimension_numbers = #tpu.dot_dimension_numbers<[1], [0], [0], [1], [0, 0, 1, 1], [], []>} : vector<128x128xbf16>, vector<128x256xbf16>, vector<128x256xf32> -> vector<128x256xf32>
    %168 = arith.truncf %167 : vector<128x256xf32> to vector<128x256xbf16>
    %c3 = arith.constant 3 : index
    %c0_119 = arith.constant 0 : index
    %c0_120 = arith.constant 0 : index
    %c0_121 = arith.constant 0 : index
    %169 = vector.load %arg3[%c3, %c0_119, %c0_120, %c0_121] : memref<6x3x256x256xbf16, #tpu.memory_space<vmem>>, vector<1x1x256x256xbf16>
    %170 = vector.shape_cast %169 : vector<1x1x256x256xbf16> to vector<256x256xbf16>
    %cst_122 = arith.constant dense<0.000000e+00> : vector<128x256xf32>
    %171 = tpu.matmul %166, %170, %cst_122 {dimension_numbers = #tpu.dot_dimension_numbers<[1], [0], [0], [1], [0, 0, 1, 1], [], []>} : vector<128x256xbf16>, vector<256x256xbf16>, vector<128x256xf32> -> vector<128x256xf32>
    %c3_123 = arith.constant 3 : index
    %c1_124 = arith.constant 1 : index
    %c0_125 = arith.constant 0 : index
    %c0_126 = arith.constant 0 : index
    %172 = vector.load %arg3[%c3_123, %c1_124, %c0_125, %c0_126] : memref<6x3x256x256xbf16, #tpu.memory_space<vmem>>, vector<1x1x256x256xbf16>
    %173 = vector.shape_cast %172 : vector<1x1x256x256xbf16> to vector<256x256xbf16>
    %cst_127 = arith.constant dense<0.000000e+00> : vector<128x256xf32>
    %174 = tpu.matmul %164, %173, %cst_127 {dimension_numbers = #tpu.dot_dimension_numbers<[1], [0], [0], [1], [0, 0, 1, 1], [], []>} : vector<128x256xbf16>, vector<256x256xbf16>, vector<128x256xf32> -> vector<128x256xf32>
    %175 = arith.addf %171, %174 : vector<128x256xf32>
    %c3_128 = arith.constant 3 : index
    %c2_129 = arith.constant 2 : index
    %c0_130 = arith.constant 0 : index
    %c0_131 = arith.constant 0 : index
    %176 = vector.load %arg3[%c3_128, %c2_129, %c0_130, %c0_131] : memref<6x3x256x256xbf16, #tpu.memory_space<vmem>>, vector<1x1x256x256xbf16>
    %177 = vector.shape_cast %176 : vector<1x1x256x256xbf16> to vector<256x256xbf16>
    %cst_132 = arith.constant dense<0.000000e+00> : vector<128x256xf32>
    %178 = tpu.matmul %168, %177, %cst_132 {dimension_numbers = #tpu.dot_dimension_numbers<[1], [0], [0], [1], [0, 0, 1, 1], [], []>} : vector<128x256xbf16>, vector<256x256xbf16>, vector<128x256xf32> -> vector<128x256xf32>
    %179 = arith.addf %175, %178 : vector<128x256xf32>
    %c3_133 = arith.constant 3 : index
    %c0_134 = arith.constant 0 : index
    %c0_135 = arith.constant 0 : index
    %180 = vector.load %arg4[%c3_133, %c0_134, %c0_135] : memref<6x1x256xf32, #tpu.memory_space<vmem>>, vector<1x1x256xf32>
    %181 = vector.shape_cast %180 : vector<1x1x256xf32> to vector<1x256xf32>
    %182 = vector.broadcast %181 : vector<1x256xf32> to vector<128x256xf32>
    %183 = arith.addf %179, %182 : vector<128x256xf32>
    %cst_136 = arith.constant dense<0.000000e+00> : vector<256xf32>
    %184 = vector.multi_reduction <add>, %183, %cst_136 [0] : vector<128x256xf32> to vector<256xf32>
    %185 = vector.shape_cast %184 : vector<256xf32> to vector<1x256xf32>
    %cst_137 = arith.constant 1.280000e+02 : f32
    %186 = vector.broadcast %cst_137 : f32 to vector<1x256xf32>
    %187 = arith.divf %185, %186 : vector<1x256xf32>
    %188 = vector.broadcast %187 : vector<1x256xf32> to vector<128x256xf32>
    %189 = arith.subf %183, %188 : vector<128x256xf32>
    %190 = arith.mulf %189, %189 : vector<128x256xf32>
    %cst_138 = arith.constant dense<0.000000e+00> : vector<256xf32>
    %191 = vector.multi_reduction <add>, %190, %cst_138 [0] : vector<128x256xf32> to vector<256xf32>
    %192 = vector.shape_cast %191 : vector<256xf32> to vector<1x256xf32>
    %cst_139 = arith.constant 1.280000e+02 : f32
    %193 = vector.broadcast %cst_139 : f32 to vector<1x256xf32>
    %194 = arith.divf %192, %193 : vector<1x256xf32>
    %195 = vector.broadcast %187 : vector<1x256xf32> to vector<128x256xf32>
    %196 = arith.subf %183, %195 : vector<128x256xf32>
    %cst_140 = arith.constant 9.99999974E-6 : f32
    %197 = vector.broadcast %cst_140 : f32 to vector<1x256xf32>
    %198 = arith.addf %194, %197 : vector<1x256xf32>
    %199 = math.rsqrt %198 : vector<1x256xf32>
    %200 = vector.broadcast %199 : vector<1x256xf32> to vector<128x256xf32>
    %201 = arith.mulf %196, %200 : vector<128x256xf32>
    %c3_141 = arith.constant 3 : index
    %c0_142 = arith.constant 0 : index
    %c0_143 = arith.constant 0 : index
    %202 = vector.load %arg5[%c3_141, %c0_142, %c0_143] : memref<6x1x256xf32, #tpu.memory_space<vmem>>, vector<1x1x256xf32>
    %203 = vector.shape_cast %202 : vector<1x1x256xf32> to vector<1x256xf32>
    %204 = vector.broadcast %203 : vector<1x256xf32> to vector<128x256xf32>
    %205 = arith.mulf %201, %204 : vector<128x256xf32>
    %c3_144 = arith.constant 3 : index
    %c0_145 = arith.constant 0 : index
    %c0_146 = arith.constant 0 : index
    %206 = vector.load %arg6[%c3_144, %c0_145, %c0_146] : memref<6x1x256xf32, #tpu.memory_space<vmem>>, vector<1x1x256xf32>
    %207 = vector.shape_cast %206 : vector<1x1x256xf32> to vector<1x256xf32>
    %208 = vector.broadcast %207 : vector<1x256xf32> to vector<128x256xf32>
    %209 = arith.addf %205, %208 : vector<128x256xf32>
    %cst_147 = arith.constant 0.000000e+00 : f32
    %210 = vector.broadcast %cst_147 : f32 to vector<128x256xf32>
    %211 = arith.cmpf oge, %209, %210 : vector<128x256xf32>
    %cst_148 = arith.constant 2.000000e-01 : f32
    %212 = vector.broadcast %cst_148 : f32 to vector<128x256xf32>
    %213 = arith.mulf %212, %209 : vector<128x256xf32>
    %214 = arith.select %211, %209, %213 : vector<128x256xi1>, vector<128x256xf32>
    %c0_149 = arith.constant 0 : index
    %c0_150 = arith.constant 0 : index
    %215 = vector.load %arg10[%c0_149, %c0_150] : memref<128x256xf32, #tpu.memory_space<vmem>>, vector<128x256xf32>
    tpu.vector_store %arg10[%c0_149, %c0_150], %214 {strides = array<i32>} : memref<128x256xf32, #tpu.memory_space<vmem>>, vector<128x256xf32>,
    %c0_151 = arith.constant 0 : index
    %c0_152 = arith.constant 0 : index
    %216 = vector.load %arg10[%c0_151, %c0_152] : memref<128x256xf32, #tpu.memory_space<vmem>>, vector<128x256xf32>
    %217 = arith.truncf %216 : vector<128x256xf32> to vector<128x256xbf16>
    %cst_153 = arith.constant dense<0.000000e+00> : vector<128x256xf32>
    %218 = tpu.matmul %2, %217, %cst_153 {dimension_numbers = #tpu.dot_dimension_numbers<[1], [0], [0], [1], [0, 0, 1, 1], [], []>} : vector<128x128xbf16>, vector<128x256xbf16>, vector<128x256xf32> -> vector<128x256xf32>
    %219 = arith.truncf %218 : vector<128x256xf32> to vector<128x256xbf16>
    %cst_154 = arith.constant dense<0.000000e+00> : vector<128x256xf32>
    %220 = tpu.matmul %3, %217, %cst_154 {dimension_numbers = #tpu.dot_dimension_numbers<[1], [0], [0], [1], [0, 0, 1, 1], [], []>} : vector<128x128xbf16>, vector<128x256xbf16>, vector<128x256xf32> -> vector<128x256xf32>
    %221 = arith.truncf %220 : vector<128x256xf32> to vector<128x256xbf16>
    %c4 = arith.constant 4 : index
    %c0_155 = arith.constant 0 : index
    %c0_156 = arith.constant 0 : index
    %c0_157 = arith.constant 0 : index
    %222 = vector.load %arg3[%c4, %c0_155, %c0_156, %c0_157] : memref<6x3x256x256xbf16, #tpu.memory_space<vmem>>, vector<1x1x256x256xbf16>
    %223 = vector.shape_cast %222 : vector<1x1x256x256xbf16> to vector<256x256xbf16>
    %cst_158 = arith.constant dense<0.000000e+00> : vector<128x256xf32>
    %224 = tpu.matmul %219, %223, %cst_158 {dimension_numbers = #tpu.dot_dimension_numbers<[1], [0], [0], [1], [0, 0, 1, 1], [], []>} : vector<128x256xbf16>, vector<256x256xbf16>, vector<128x256xf32> -> vector<128x256xf32>
    %c4_159 = arith.constant 4 : index
    %c1_160 = arith.constant 1 : index
    %c0_161 = arith.constant 0 : index
    %c0_162 = arith.constant 0 : index
    %225 = vector.load %arg3[%c4_159, %c1_160, %c0_161, %c0_162] : memref<6x3x256x256xbf16, #tpu.memory_space<vmem>>, vector<1x1x256x256xbf16>
    %226 = vector.shape_cast %225 : vector<1x1x256x256xbf16> to vector<256x256xbf16>
    %cst_163 = arith.constant dense<0.000000e+00> : vector<128x256xf32>
    %227 = tpu.matmul %217, %226, %cst_163 {dimension_numbers = #tpu.dot_dimension_numbers<[1], [0], [0], [1], [0, 0, 1, 1], [], []>} : vector<128x256xbf16>, vector<256x256xbf16>, vector<128x256xf32> -> vector<128x256xf32>
    %228 = arith.addf %224, %227 : vector<128x256xf32>
    %c4_164 = arith.constant 4 : index
    %c2_165 = arith.constant 2 : index
    %c0_166 = arith.constant 0 : index
    %c0_167 = arith.constant 0 : index
    %229 = vector.load %arg3[%c4_164, %c2_165, %c0_166, %c0_167] : memref<6x3x256x256xbf16, #tpu.memory_space<vmem>>, vector<1x1x256x256xbf16>
    %230 = vector.shape_cast %229 : vector<1x1x256x256xbf16> to vector<256x256xbf16>
    %cst_168 = arith.constant dense<0.000000e+00> : vector<128x256xf32>
    %231 = tpu.matmul %221, %230, %cst_168 {dimension_numbers = #tpu.dot_dimension_numbers<[1], [0], [0], [1], [0, 0, 1, 1], [], []>} : vector<128x256xbf16>, vector<256x256xbf16>, vector<128x256xf32> -> vector<128x256xf32>
    %232 = arith.addf %228, %231 : vector<128x256xf32>
    %c4_169 = arith.constant 4 : index
    %c0_170 = arith.constant 0 : index
    %c0_171 = arith.constant 0 : index
    %233 = vector.load %arg4[%c4_169, %c0_170, %c0_171] : memref<6x1x256xf32, #tpu.memory_space<vmem>>, vector<1x1x256xf32>
    %234 = vector.shape_cast %233 : vector<1x1x256xf32> to vector<1x256xf32>
    %235 = vector.broadcast %234 : vector<1x256xf32> to vector<128x256xf32>
    %236 = arith.addf %232, %235 : vector<128x256xf32>
    %cst_172 = arith.constant dense<0.000000e+00> : vector<256xf32>
    %237 = vector.multi_reduction <add>, %236, %cst_172 [0] : vector<128x256xf32> to vector<256xf32>
    %238 = vector.shape_cast %237 : vector<256xf32> to vector<1x256xf32>
    %cst_173 = arith.constant 1.280000e+02 : f32
    %239 = vector.broadcast %cst_173 : f32 to vector<1x256xf32>
    %240 = arith.divf %238, %239 : vector<1x256xf32>
    %241 = vector.broadcast %240 : vector<1x256xf32> to vector<128x256xf32>
    %242 = arith.subf %236, %241 : vector<128x256xf32>
    %243 = arith.mulf %242, %242 : vector<128x256xf32>
    %cst_174 = arith.constant dense<0.000000e+00> : vector<256xf32>
    %244 = vector.multi_reduction <add>, %243, %cst_174 [0] : vector<128x256xf32> to vector<256xf32>
    %245 = vector.shape_cast %244 : vector<256xf32> to vector<1x256xf32>
    %cst_175 = arith.constant 1.280000e+02 : f32
    %246 = vector.broadcast %cst_175 : f32 to vector<1x256xf32>
    %247 = arith.divf %245, %246 : vector<1x256xf32>
    %248 = vector.broadcast %240 : vector<1x256xf32> to vector<128x256xf32>
    %249 = arith.subf %236, %248 : vector<128x256xf32>
    %cst_176 = arith.constant 9.99999974E-6 : f32
    %250 = vector.broadcast %cst_176 : f32 to vector<1x256xf32>
    %251 = arith.addf %247, %250 : vector<1x256xf32>
    %252 = math.rsqrt %251 : vector<1x256xf32>
    %253 = vector.broadcast %252 : vector<1x256xf32> to vector<128x256xf32>
    %254 = arith.mulf %249, %253 : vector<128x256xf32>
    %c4_177 = arith.constant 4 : index
    %c0_178 = arith.constant 0 : index
    %c0_179 = arith.constant 0 : index
    %255 = vector.load %arg5[%c4_177, %c0_178, %c0_179] : memref<6x1x256xf32, #tpu.memory_space<vmem>>, vector<1x1x256xf32>
    %256 = vector.shape_cast %255 : vector<1x1x256xf32> to vector<1x256xf32>
    %257 = vector.broadcast %256 : vector<1x256xf32> to vector<128x256xf32>
    %258 = arith.mulf %254, %257 : vector<128x256xf32>
    %c4_180 = arith.constant 4 : index
    %c0_181 = arith.constant 0 : index
    %c0_182 = arith.constant 0 : index
    %259 = vector.load %arg6[%c4_180, %c0_181, %c0_182] : memref<6x1x256xf32, #tpu.memory_space<vmem>>, vector<1x1x256xf32>
    %260 = vector.shape_cast %259 : vector<1x1x256xf32> to vector<1x256xf32>
    %261 = vector.broadcast %260 : vector<1x256xf32> to vector<128x256xf32>
    %262 = arith.addf %258, %261 : vector<128x256xf32>
    %cst_183 = arith.constant 0.000000e+00 : f32
    %263 = vector.broadcast %cst_183 : f32 to vector<128x256xf32>
    %264 = arith.cmpf oge, %262, %263 : vector<128x256xf32>
    %cst_184 = arith.constant 2.000000e-01 : f32
    %265 = vector.broadcast %cst_184 : f32 to vector<128x256xf32>
    %266 = arith.mulf %265, %262 : vector<128x256xf32>
    %267 = arith.select %264, %262, %266 : vector<128x256xi1>, vector<128x256xf32>
    %c0_185 = arith.constant 0 : index
    %c0_186 = arith.constant 0 : index
    %268 = vector.load %arg10[%c0_185, %c0_186] : memref<128x256xf32, #tpu.memory_space<vmem>>, vector<128x256xf32>
    tpu.vector_store %arg10[%c0_185, %c0_186], %267 {strides = array<i32>} : memref<128x256xf32, #tpu.memory_space<vmem>>, vector<128x256xf32>,
    %c0_187 = arith.constant 0 : index
    %c0_188 = arith.constant 0 : index
    %269 = vector.load %arg10[%c0_187, %c0_188] : memref<128x256xf32, #tpu.memory_space<vmem>>, vector<128x256xf32>
    %270 = arith.truncf %269 : vector<128x256xf32> to vector<128x256xbf16>
    %cst_189 = arith.constant dense<0.000000e+00> : vector<128x256xf32>
    %271 = tpu.matmul %2, %270, %cst_189 {dimension_numbers = #tpu.dot_dimension_numbers<[1], [0], [0], [1], [0, 0, 1, 1], [], []>} : vector<128x128xbf16>, vector<128x256xbf16>, vector<128x256xf32> -> vector<128x256xf32>
    %272 = arith.truncf %271 : vector<128x256xf32> to vector<128x256xbf16>
    %cst_190 = arith.constant dense<0.000000e+00> : vector<128x256xf32>
    %273 = tpu.matmul %3, %270, %cst_190 {dimension_numbers = #tpu.dot_dimension_numbers<[1], [0], [0], [1], [0, 0, 1, 1], [], []>} : vector<128x128xbf16>, vector<128x256xbf16>, vector<128x256xf32> -> vector<128x256xf32>
    %274 = arith.truncf %273 : vector<128x256xf32> to vector<128x256xbf16>
    %c5 = arith.constant 5 : index
    %c0_191 = arith.constant 0 : index
    %c0_192 = arith.constant 0 : index
    %c0_193 = arith.constant 0 : index
    %275 = vector.load %arg3[%c5, %c0_191, %c0_192, %c0_193] : memref<6x3x256x256xbf16, #tpu.memory_space<vmem>>, vector<1x1x256x256xbf16>
    %276 = vector.shape_cast %275 : vector<1x1x256x256xbf16> to vector<256x256xbf16>
    %cst_194 = arith.constant dense<0.000000e+00> : vector<128x256xf32>
    %277 = tpu.matmul %272, %276, %cst_194 {dimension_numbers = #tpu.dot_dimension_numbers<[1], [0], [0], [1], [0, 0, 1, 1], [], []>} : vector<128x256xbf16>, vector<256x256xbf16>, vector<128x256xf32> -> vector<128x256xf32>
    %c5_195 = arith.constant 5 : index
    %c1_196 = arith.constant 1 : index
    %c0_197 = arith.constant 0 : index
    %c0_198 = arith.constant 0 : index
    %278 = vector.load %arg3[%c5_195, %c1_196, %c0_197, %c0_198] : memref<6x3x256x256xbf16, #tpu.memory_space<vmem>>, vector<1x1x256x256xbf16>
    %279 = vector.shape_cast %278 : vector<1x1x256x256xbf16> to vector<256x256xbf16>
    %cst_199 = arith.constant dense<0.000000e+00> : vector<128x256xf32>
    %280 = tpu.matmul %270, %279, %cst_199 {dimension_numbers = #tpu.dot_dimension_numbers<[1], [0], [0], [1], [0, 0, 1, 1], [], []>} : vector<128x256xbf16>, vector<256x256xbf16>, vector<128x256xf32> -> vector<128x256xf32>
    %281 = arith.addf %277, %280 : vector<128x256xf32>
    %c5_200 = arith.constant 5 : index
    %c2_201 = arith.constant 2 : index
    %c0_202 = arith.constant 0 : index
    %c0_203 = arith.constant 0 : index
    %282 = vector.load %arg3[%c5_200, %c2_201, %c0_202, %c0_203] : memref<6x3x256x256xbf16, #tpu.memory_space<vmem>>, vector<1x1x256x256xbf16>
    %283 = vector.shape_cast %282 : vector<1x1x256x256xbf16> to vector<256x256xbf16>
    %cst_204 = arith.constant dense<0.000000e+00> : vector<128x256xf32>
    %284 = tpu.matmul %274, %283, %cst_204 {dimension_numbers = #tpu.dot_dimension_numbers<[1], [0], [0], [1], [0, 0, 1, 1], [], []>} : vector<128x256xbf16>, vector<256x256xbf16>, vector<128x256xf32> -> vector<128x256xf32>
    %285 = arith.addf %281, %284 : vector<128x256xf32>
    %c5_205 = arith.constant 5 : index
    %c0_206 = arith.constant 0 : index
    %c0_207 = arith.constant 0 : index
    %286 = vector.load %arg4[%c5_205, %c0_206, %c0_207] : memref<6x1x256xf32, #tpu.memory_space<vmem>>, vector<1x1x256xf32>
    %287 = vector.shape_cast %286 : vector<1x1x256xf32> to vector<1x256xf32>
    %288 = vector.broadcast %287 : vector<1x256xf32> to vector<128x256xf32>
    %289 = arith.addf %285, %288 : vector<128x256xf32>
    %cst_208 = arith.constant dense<0.000000e+00> : vector<256xf32>
    %290 = vector.multi_reduction <add>, %289, %cst_208 [0] : vector<128x256xf32> to vector<256xf32>
    %291 = vector.shape_cast %290 : vector<256xf32> to vector<1x256xf32>
    %cst_209 = arith.constant 1.280000e+02 : f32
    %292 = vector.broadcast %cst_209 : f32 to vector<1x256xf32>
    %293 = arith.divf %291, %292 : vector<1x256xf32>
    %294 = vector.broadcast %293 : vector<1x256xf32> to vector<128x256xf32>
    %295 = arith.subf %289, %294 : vector<128x256xf32>
    %296 = arith.mulf %295, %295 : vector<128x256xf32>
    %cst_210 = arith.constant dense<0.000000e+00> : vector<256xf32>
    %297 = vector.multi_reduction <add>, %296, %cst_210 [0] : vector<128x256xf32> to vector<256xf32>
    %298 = vector.shape_cast %297 : vector<256xf32> to vector<1x256xf32>
    %cst_211 = arith.constant 1.280000e+02 : f32
    %299 = vector.broadcast %cst_211 : f32 to vector<1x256xf32>
    %300 = arith.divf %298, %299 : vector<1x256xf32>
    %301 = vector.broadcast %293 : vector<1x256xf32> to vector<128x256xf32>
    %302 = arith.subf %289, %301 : vector<128x256xf32>
    %cst_212 = arith.constant 9.99999974E-6 : f32
    %303 = vector.broadcast %cst_212 : f32 to vector<1x256xf32>
    %304 = arith.addf %300, %303 : vector<1x256xf32>
    %305 = math.rsqrt %304 : vector<1x256xf32>
    %306 = vector.broadcast %305 : vector<1x256xf32> to vector<128x256xf32>
    %307 = arith.mulf %302, %306 : vector<128x256xf32>
    %c5_213 = arith.constant 5 : index
    %c0_214 = arith.constant 0 : index
    %c0_215 = arith.constant 0 : index
    %308 = vector.load %arg5[%c5_213, %c0_214, %c0_215] : memref<6x1x256xf32, #tpu.memory_space<vmem>>, vector<1x1x256xf32>
    %309 = vector.shape_cast %308 : vector<1x1x256xf32> to vector<1x256xf32>
    %310 = vector.broadcast %309 : vector<1x256xf32> to vector<128x256xf32>
    %311 = arith.mulf %307, %310 : vector<128x256xf32>
    %c5_216 = arith.constant 5 : index
    %c0_217 = arith.constant 0 : index
    %c0_218 = arith.constant 0 : index
    %312 = vector.load %arg6[%c5_216, %c0_217, %c0_218] : memref<6x1x256xf32, #tpu.memory_space<vmem>>, vector<1x1x256xf32>
    %313 = vector.shape_cast %312 : vector<1x1x256xf32> to vector<1x256xf32>
    %314 = vector.broadcast %313 : vector<1x256xf32> to vector<128x256xf32>
    %315 = arith.addf %311, %314 : vector<128x256xf32>
    %cst_219 = arith.constant 0.000000e+00 : f32
    %316 = vector.broadcast %cst_219 : f32 to vector<128x256xf32>
    %317 = arith.cmpf oge, %315, %316 : vector<128x256xf32>
    %cst_220 = arith.constant 2.000000e-01 : f32
    %318 = vector.broadcast %cst_220 : f32 to vector<128x256xf32>
    %319 = arith.mulf %318, %315 : vector<128x256xf32>
    %320 = arith.select %317, %315, %319 : vector<128x256xi1>, vector<128x256xf32>
    %c0_221 = arith.constant 0 : index
    %c0_222 = arith.constant 0 : index
    %321 = vector.load %arg10[%c0_221, %c0_222] : memref<128x256xf32, #tpu.memory_space<vmem>>, vector<128x256xf32>
    tpu.vector_store %arg10[%c0_221, %c0_222], %320 {strides = array<i32>} : memref<128x256xf32, #tpu.memory_space<vmem>>, vector<128x256xf32>,
    %c0_223 = arith.constant 0 : index
    %c0_224 = arith.constant 0 : index
    %322 = vector.load %arg10[%c0_223, %c0_224] : memref<128x256xf32, #tpu.memory_space<vmem>>, vector<128x256xf32>
    %323 = arith.truncf %322 : vector<128x256xf32> to vector<128x256xbf16>
    %c0_225 = arith.constant 0 : index
    %c0_226 = arith.constant 0 : index
    %324 = vector.load %arg7[%c0_225, %c0_226] : memref<256x8xbf16, #tpu.memory_space<vmem>>, vector<256x8xbf16>
    %cst_227 = arith.constant dense<0.000000e+00> : vector<128x8xf32>
    %325 = tpu.matmul %323, %324, %cst_227 {dimension_numbers = #tpu.dot_dimension_numbers<[1], [0], [0], [1], [0, 0, 1, 1], [], []>} : vector<128x256xbf16>, vector<256x8xbf16>, vector<128x8xf32> -> vector<128x8xf32>
    %c0_228 = arith.constant 0 : index
    %c0_229 = arith.constant 0 : index
    %326 = vector.load %arg8[%c0_228, %c0_229] : memref<1x8xf32, #tpu.memory_space<vmem>>, vector<1x8xf32>
    %327 = vector.broadcast %326 : vector<1x8xf32> to vector<128x8xf32>
    %328 = arith.addf %325, %327 : vector<128x8xf32>
    %c0_230 = arith.constant 0 : index
    %c0_231 = arith.constant 0 : index
    %329 = vector.load %arg9[%c0_230, %c0_231] : memref<128x8xf32, #tpu.memory_space<vmem>>, vector<128x8xf32>
    tpu.vector_store %arg9[%c0_230, %c0_231], %328 {strides = array<i32>} : memref<128x8xf32, #tpu.memory_space<vmem>>, vector<128x8xf32>,
    return
  }
}

</mosaic_0001>

<llo_original>
// kernel: cluster_classify.1
$region0: #{cluster_classify.1}
  #allocation0 [shape = 'u32[]', space=smem, size = 0x4, offset = 0x4, fixed_abs, tag = 'smem constant byte address 0x4 - core index']
  #allocation1 [shape = 'u32[144,128]{1,0:T(1,128)}', space=vmem, size = 0x12000, scoped, tag = 'internal scratch']
  #allocation2 [shape = 'f32[128,256]{1,0:T(8,128)}', space=vmem, size = 0x20000, scoped, tag = 'scratch operand']
  %s0 = inlined_call_operand.hbm [shape: f32[128,256], index: 0, kind: input, shape index: {}]
  %s1 = inlined_call_operand.vmem [shape: bf16[128,128], index: 1, kind: input, shape index: {}]
  %s2 = inlined_call_operand.vmem [shape: bf16[128,128], index: 2, kind: input, shape index: {}]
  %s3 = inlined_call_operand.hbm [shape: bf16[6,3,256,256], index: 3, kind: input, shape index: {}]
  %s4 = inlined_call_operand.hbm [shape: f32[6,1,256], index: 4, kind: input, shape index: {}]
  %s5 = inlined_call_operand.hbm [shape: f32[6,1,256], index: 5, kind: input, shape index: {}]
  %s6 = inlined_call_operand.hbm [shape: f32[6,1,256], index: 6, kind: input, shape index: {}]
  %s7 = inlined_call_operand.vmem [shape: bf16[256,8], index: 7, kind: input, shape index: {}]
  %s8 = inlined_call_operand.hbm [shape: f32[1,8], index: 8, kind: input, shape index: {}]
  %s9 = inlined_call_operand.vmem [shape: f32[128,8], index: 9, kind: output, shape index: {}]
  %s10 = sld [smem:[#allocation0]]
  $region70: #{cluster_classify.1} parent=0
    _
  %s12 = ssub.s32 1, %s10
  %s13 = scalar_select 0, %s12, %s10
  $region1: #{cluster_classify.1} parent=0
    #allocation3 [shape = 'u8[131072]{0}', space=vmem, size = 0x20000, scoped, tag = 'input window, operand 0, single buffered']
    #allocation4 [shape = 's32[1]{0}', space=sflag, size = 0x4, scoped, tag = 'scoped memory for cluster_classify.1']
    #allocation5 [shape = 'u8[2359296]{0}', space=vmem, size = 0x240000, scoped, tag = 'input window, operand 3, single buffered']
    #allocation6 [shape = 's32[1]{0}', space=sflag, size = 0x4, scoped, tag = 'scoped memory for cluster_classify.1']
    #allocation7 [shape = 'u8[6144]{0}', space=vmem, size = 0x1800, scoped, tag = 'input window, operand 4, single buffered']
    #allocation8 [shape = 'u8[6144]{0}', space=vmem, size = 0x1800, scoped, tag = 'input window, operand 5, single buffered']
    #allocation9 [shape = 's32[1]{0}', space=sflag, size = 0x4, scoped, tag = 'scoped memory for cluster_classify.1']
    #allocation10 [shape = 'u8[6144]{0}', space=vmem, size = 0x1800, scoped, tag = 'input window, operand 6, single buffered']
    #allocation11 [shape = 'u8[512]{0}', space=vmem, size = 0x400, scoped, tag = 'input window, operand 8, single buffered']
    #allocation12 [shape = 's32[1]{0}', space=sflag, size = 0x4, scoped, tag = 'scoped memory for cluster_classify.1']
    %14 = vsyncpa [#allocation4], 0
    %15 = vsyncpa [#allocation6], 0
    %16 = vsyncpa [#allocation9], 0
    %17 = vsyncpa [#allocation12], 0
    // Predicated region
    $region2: #{cluster_classify.1} parent=1 // pred_check
      _
    $region3: #{cluster_classify.1} parent=1 // pred_check_branch
      %19 = sbr.rel (0) target = $region5
    $region4: #{cluster_classify.1} parent=1 // pred_region
      %s21 = ssub.s32 4096, 4096
      %22 = vsyncadd [#allocation4], %s21
      %s23 = sshll.u32 [#allocation3], 4
      %s24 = int_to_ptr.vmem [resolvable:$true] %s23
      %29 = dma.hbm_to_vmem [thread:$0]  %s0, 4096, %s24, [#allocation4], 256, 256, 16
    $region5: #{cluster_classify.1} parent=1 // pred_fallthru
      _
    // Predicated region
    $region6: #{cluster_classify.1} parent=1 // pred_check
      _
    $region7: #{cluster_classify.1} parent=1 // pred_check_branch
      %31 = sbr.rel (0) target = $region9
    $region8: #{cluster_classify.1} parent=1 // pred_region
      _
    $region9: #{cluster_classify.1} parent=1 // pred_fallthru
      _
    // Predicated region
    $region10: #{cluster_classify.1} parent=1 // pred_check
      _
    $region11: #{cluster_classify.1} parent=1 // pred_check_branch
      %33 = sbr.rel (0) target = $region13
    $region12: #{cluster_classify.1} parent=1 // pred_region
      _
    $region13: #{cluster_classify.1} parent=1 // pred_fallthru
      _
    // Predicated region
    $region14: #{cluster_classify.1} parent=1 // pred_check
      _
    $region15: #{cluster_classify.1} parent=1 // pred_check_branch
      %35 = sbr.rel (0) target = $region17
    $region16: #{cluster_classify.1} parent=1 // pred_region
      %s37 = ssub.s32 73728, 73728
      %38 = vsyncadd [#allocation6], %s37
      %s39 = sshll.u32 [#allocation5], 4
      %s40 = int_to_ptr.vmem [resolvable:$true] %s39
      %45 = dma.hbm_to_vmem [thread:$0]  %s3, 73728, %s40, [#allocation6], 128, 128, 8
    $region17: #{cluster_classify.1} parent=1 // pred_fallthru
      _
    // Predicated region
    $region18: #{cluster_classify.1} parent=1 // pred_check
      _
    $region19: #{cluster_classify.1} parent=1 // pred_check_branch
      %47 = sbr.rel (0) target = $region21
    $region20: #{cluster_classify.1} parent=1 // pred_region
      %s49 = ssub.s32 192, 192
      %50 = vsyncadd [#allocation6], %s49
      %s51 = sshll.u32 [#allocation7], 4
      %s52 = int_to_ptr.vmem [resolvable:$true] %s51
      %57 = dma.hbm_to_vmem [thread:$0]  %s4, 192, %s52, [#allocation6], 32, 32, 2
    $region21: #{cluster_classify.1} parent=1 // pred_fallthru
      _
    // Predicated region
    $region22: #{cluster_classify.1} parent=1 // pred_check
      _
    $region23: #{cluster_classify.1} parent=1 // pred_check_branch
      %59 = sbr.rel (0) target = $region25
    $region24: #{cluster_classify.1} parent=1 // pred_region
      %s61 = ssub.s32 192, 192
      %62 = vsyncadd [#allocation9], %s61
      %s63 = sshll.u32 [#allocation8], 4
      %s64 = int_to_ptr.vmem [resolvable:$true] %s63
      %69 = dma.hbm_to_vmem [thread:$0]  %s5, 192, %s64, [#allocation9], 32, 32, 2
    $region25: #{cluster_classify.1} parent=1 // pred_fallthru
      _
    // Predicated region
    $region26: #{cluster_classify.1} parent=1 // pred_check
      _
    $region27: #{cluster_classify.1} parent=1 // pred_check_branch
      %71 = sbr.rel (0) target = $region29
    $region28: #{cluster_classify.1} parent=1 // pred_region
      %s73 = ssub.s32 192, 192
      %74 = vsyncadd [#allocation9], %s73
      %s75 = sshll.u32 [#allocation10], 4
      %s76 = int_to_ptr.vmem [resolvable:$true] %s75
      %81 = dma.hbm_to_vmem [thread:$0]  %s6, 192, %s76, [#allocation9], 32, 32, 2
    $region29: #{cluster_classify.1} parent=1 // pred_fallthru
      _
    // Predicated region
    $region30: #{cluster_classify.1} parent=1 // pred_check
      _
    $region31: #{cluster_classify.1} parent=1 // pred_check_branch
      %83 = sbr.rel (0) target = $region33
    $region32: #{cluster_classify.1} parent=1 // pred_region
      _
    $region33: #{cluster_classify.1} parent=1 // pred_fallthru
      _
    // Predicated region
    $region34: #{cluster_classify.1} parent=1 // pred_check
      _
    $region35: #{cluster_classify.1} parent=1 // pred_check_branch
      %85 = sbr.rel (0) target = $region37
    $region36: #{cluster_classify.1} parent=1 // pred_region
      %s87 = ssub.s32 16, 16
      %88 = vsyncadd [#allocation12], %s87
      %s90 = sshll.u32 [#allocation11], 4
      %s91 = int_to_ptr.vmem [resolvable:$true] %s90
      %93 = dma.hbm_to_vmem [thread:$0]  %s8, 16, %s91, [#allocation12]
    $region37: #{cluster_classify.1} parent=1 // pred_fallthru
      _
    // Predicated region
    $region38: #{cluster_classify.1} parent=1 // pred_check
      _
    $region39: #{cluster_classify.1} parent=1 // pred_check_branch
      %95 = sbr.rel (0) target = $region41
    $region40: #{cluster_classify.1} parent=1 // pred_region
      %96 = dma.done [#allocation4], 4096
    $region41: #{cluster_classify.1} parent=1 // pred_fallthru
      _
    // Predicated region
    $region42: #{cluster_classify.1} parent=1 // pred_check
      _
    $region43: #{cluster_classify.1} parent=1 // pred_check_branch
      %98 = sbr.rel (0) target = $region45
    $region44: #{cluster_classify.1} parent=1 // pred_region
      %99 = dma.done [#allocation6], 73728
    $region45: #{cluster_classify.1} parent=1 // pred_fallthru
      _
    // Predicated region
    $region46: #{cluster_classify.1} parent=1 // pred_check
      _
    $region47: #{cluster_classify.1} parent=1 // pred_check_branch
      %101 = sbr.rel (0) target = $region49
    $region48: #{cluster_classify.1} parent=1 // pred_region
      %102 = dma.done [#allocation6], 192
    $region49: #{cluster_classify.1} parent=1 // pred_fallthru
      _
    // Predicated region
    $region50: #{cluster_classify.1} parent=1 // pred_check
      _
    $region51: #{cluster_classify.1} parent=1 // pred_check_branch
      %104 = sbr.rel (0) target = $region53
    $region52: #{cluster_classify.1} parent=1 // pred_region
      %105 = dma.done [#allocation9], 192
    $region53: #{cluster_classify.1} parent=1 // pred_fallthru
      _
    // Predicated region
    $region54: #{cluster_classify.1} parent=1 // pred_check
      _
    $region55: #{cluster_classify.1} parent=1 // pred_check_branch
      %107 = sbr.rel (0) target = $region57
    $region56: #{cluster_classify.1} parent=1 // pred_region
      %108 = dma.done [#allocation9], 192
    $region57: #{cluster_classify.1} parent=1 // pred_fallthru
      _
    // Predicated region
    $region58: #{cluster_classify.1} parent=1 // pred_check
      _
    $region59: #{cluster_classify.1} parent=1 // pred_check_branch
      %110 = sbr.rel (0) target = $region61
    $region60: #{cluster_classify.1} parent=1 // pred_region
      %111 = dma.done [#allocation12], 16
    $region61: #{cluster_classify.1} parent=1 // pred_fallthru
      _
    %v113 = vld [vmem:[#allocation3] sm:$0xff]
    %v114 = vld [vmem:[#allocation3 + $0x8] sm:$0xff]
    %v115 = vld [vmem:[#allocation3 + $0x10] sm:$0xff]
    %v116 = vld [vmem:[#allocation3 + $0x18] sm:$0xff]
    %v117 = vld [vmem:[#allocation3 + $0x20] sm:$0xff]
    %v118 = vld [vmem:[#allocation3 + $0x28] sm:$0xff]
    %v119 = vld [vmem:[#allocation3 + $0x30] sm:$0xff]
    %v120 = vld [vmem:[#allocation3 + $0x38] sm:$0xff]
    %v121 = vld [vmem:[#allocation3 + $0x40] sm:$0xff]
    %v122 = vld [vmem:[#allocation3 + $0x48] sm:$0xff]
    %v123 = vld [vmem:[#allocation3 + $0x50] sm:$0xff]
    %v124 = vld [vmem:[#allocation3 + $0x58] sm:$0xff]
    %v125 = vld [vmem:[#allocation3 + $0x60] sm:$0xff]
    %v126 = vld [vmem:[#allocation3 + $0x68] sm:$0xff]
    %v127 = vld [vmem:[#allocation3 + $0x70] sm:$0xff]
    %v128 = vld [vmem:[#allocation3 + $0x78] sm:$0xff]
    %v129 = vld [vmem:[#allocation3 + $0x80] sm:$0xff]
    %v130 = vld [vmem:[#allocation3 + $0x88] sm:$0xff]
    %v131 = vld [vmem:[#allocation3 + $0x90] sm:$0xff]
    %v132 = vld [vmem:[#allocation3 + $0x98] sm:$0xff]
    %v133 = vld [vmem:[#allocation3 + $0xa0] sm:$0xff]
    %v134 = vld [vmem:[#allocation3 + $0xa8] sm:$0xff]
    %v135 = vld [vmem:[#allocation3 + $0xb0] sm:$0xff]
    %v136 = vld [vmem:[#allocation3 + $0xb8] sm:$0xff]
    %v137 = vld [vmem:[#allocation3 + $0xc0] sm:$0xff]
    %v138 = vld [vmem:[#allocation3 + $0xc8] sm:$0xff]
    %v139 = vld [vmem:[#allocation3 + $0xd0] sm:$0xff]
    %v140 = vld [vmem:[#allocation3 + $0xd8] sm:$0xff]
    %v141 = vld [vmem:[#allocation3 + $0xe0] sm:$0xff]
    %v142 = vld [vmem:[#allocation3 + $0xe8] sm:$0xff]
    %v143 = vld [vmem:[#allocation3 + $0xf0] sm:$0xff]
    %v144 = vld [vmem:[#allocation3 + $0xf8] sm:$0xff]
    %145 = vst [vmem:[#allocation2] sm:$0xff] %v113
    %146 = vst [vmem:[#allocation2 + $0x8] sm:$0xff] %v114
    %147 = vst [vmem:[#allocation2 + $0x10] sm:$0xff] %v115
    %148 = vst [vmem:[#allocation2 + $0x18] sm:$0xff] %v116
    %149 = vst [vmem:[#allocation2 + $0x20] sm:$0xff] %v117
    %150 = vst [vmem:[#allocation2 + $0x28] sm:$0xff] %v118
    %151 = vst [vmem:[#allocation2 + $0x30] sm:$0xff] %v119
    %152 = vst [vmem:[#allocation2 + $0x38] sm:$0xff] %v120
    %153 = vst [vmem:[#allocation2 + $0x40] sm:$0xff] %v121
    %154 = vst [vmem:[#allocation2 + $0x48] sm:$0xff] %v122
    %155 = vst [vmem:[#allocation2 + $0x50] sm:$0xff] %v123
    %156 = vst [vmem:[#allocation2 + $0x58] sm:$0xff] %v124
    %157 = vst [vmem:[#allocation2 + $0x60] sm:$0xff] %v125
    %158 = vst [vmem:[#allocation2 + $0x68] sm:$0xff] %v126
    %159 = vst [vmem:[#allocation2 + $0x70] sm:$0xff] %v127
    %160 = vst [vmem:[#allocation2 + $0x78] sm:$0xff] %v128
    %161 = vst [vmem:[#allocation2 + $0x80] sm:$0xff] %v129
    %162 = vst [vmem:[#allocation2 + $0x88] sm:$0xff] %v130
    %163 = vst [vmem:[#allocation2 + $0x90] sm:$0xff] %v131
    %164 = vst [vmem:[#allocation2 + $0x98] sm:$0xff] %v132
    %165 = vst [vmem:[#allocation2 + $0xa0] sm:$0xff] %v133
    %166 = vst [vmem:[#allocation2 + $0xa8] sm:$0xff] %v134
    %167 = vst [vmem:[#allocation2 + $0xb0] sm:$0xff] %v135
    %168 = vst [vmem:[#allocation2 + $0xb8] sm:$0xff] %v136
    %169 = vst [vmem:[#allocation2 + $0xc0] sm:$0xff] %v137
    %170 = vst [vmem:[#allocation2 + $0xc8] sm:$0xff] %v138
    %171 = vst [vmem:[#allocation2 + $0xd0] sm:$0xff] %v139
    %172 = vst [vmem:[#allocation2 + $0xd8] sm:$0xff] %v140
    %173 = vst [vmem:[#allocation2 + $0xe0] sm:$0xff] %v141
    %174 = vst [vmem:[#allocation2 + $0xe8] sm:$0xff] %v142
    %175 = vst [vmem:[#allocation2 + $0xf0] sm:$0xff] %v143
    %176 = vst [vmem:[#allocation2 + $0xf8] sm:$0xff] %v144
    %v177 = vld [vmem:[%s1] sm:$0xf]
    %v178 = vld [vmem:[%s1 + $0x4] sm:$0xf]
    %v179 = vld [vmem:[%s1 + $0x8] sm:$0xf]
    %v180 = vld [vmem:[%s1 + $0xc] sm:$0xf]
    %v181 = vld [vmem:[%s1 + $0x10] sm:$0xf]
    %v182 = vld [vmem:[%s1 + $0x14] sm:$0xf]
    %v183 = vld [vmem:[%s1 + $0x18] sm:$0xf]
    %v184 = vld [vmem:[%s1 + $0x1c] sm:$0xf]
    %v185 = vld [vmem:[%s1 + $0x20] sm:$0xf]
    %v186 = vld [vmem:[%s1 + $0x24] sm:$0xf]
    %v187 = vld [vmem:[%s1 + $0x28] sm:$0xf]
    %v188 = vld [vmem:[%s1 + $0x2c] sm:$0xf]
    %v189 = vld [vmem:[%s1 + $0x30] sm:$0xf]
    %v190 = vld [vmem:[%s1 + $0x34] sm:$0xf]
    %v191 = vld [vmem:[%s1 + $0x38] sm:$0xf]
    %v192 = vld [vmem:[%s1 + $0x3c] sm:$0xf]
    %v193 = vld [vmem:[%s2] sm:$0xf]
    %v194 = vld [vmem:[%s2 + $0x4] sm:$0xf]
    %v195 = vld [vmem:[%s2 + $0x8] sm:$0xf]
    %v196 = vld [vmem:[%s2 + $0xc] sm:$0xf]
    %v197 = vld [vmem:[%s2 + $0x10] sm:$0xf]
    %v198 = vld [vmem:[%s2 + $0x14] sm:$0xf]
    %v199 = vld [vmem:[%s2 + $0x18] sm:$0xf]
    %v200 = vld [vmem:[%s2 + $0x1c] sm:$0xf]
    %v201 = vld [vmem:[%s2 + $0x20] sm:$0xf]
    %v202 = vld [vmem:[%s2 + $0x24] sm:$0xf]
    %v203 = vld [vmem:[%s2 + $0x28] sm:$0xf]
    %v204 = vld [vmem:[%s2 + $0x2c] sm:$0xf]
    %v205 = vld [vmem:[%s2 + $0x30] sm:$0xf]
    %v206 = vld [vmem:[%s2 + $0x34] sm:$0xf]
    %v207 = vld [vmem:[%s2 + $0x38] sm:$0xf]
    %v208 = vld [vmem:[%s2 + $0x3c] sm:$0xf]
    %v209 = vld [vmem:[#allocation2] sm:$0xff]
    %v210 = vld [vmem:[#allocation2 + $0x8] sm:$0xff]
    %v211 = vld [vmem:[#allocation2 + $0x10] sm:$0xff]
    %v212 = vld [vmem:[#allocation2 + $0x18] sm:$0xff]
    %v213 = vld [vmem:[#allocation2 + $0x20] sm:$0xff]
    %v214 = vld [vmem:[#allocation2 + $0x28] sm:$0xff]
    %v215 = vld [vmem:[#allocation2 + $0x30] sm:$0xff]
    %v216 = vld [vmem:[#allocation2 + $0x38] sm:$0xff]
    %v217 = vld [vmem:[#allocation2 + $0x40] sm:$0xff]
    %v218 = vld [vmem:[#allocation2 + $0x48] sm:$0xff]
    %v219 = vld [vmem:[#allocation2 + $0x50] sm:$0xff]
    %v220 = vld [vmem:[#allocation2 + $0x58] sm:$0xff]
    %v221 = vld [vmem:[#allocation2 + $0x60] sm:$0xff]
    %v222 = vld [vmem:[#allocation2 + $0x68] sm:$0xff]
    %v223 = vld [vmem:[#allocation2 + $0x70] sm:$0xff]
    %v224 = vld [vmem:[#allocation2 + $0x78] sm:$0xff]
    %v225 = vld [vmem:[#allocation2 + $0x80] sm:$0xff]
    %v226 = vld [vmem:[#allocation2 + $0x88] sm:$0xff]
    %v227 = vld [vmem:[#allocation2 + $0x90] sm:$0xff]
    %v228 = vld [vmem:[#allocation2 + $0x98] sm:$0xff]
    %v229 = vld [vmem:[#allocation2 + $0xa0] sm:$0xff]
    %v230 = vld [vmem:[#allocation2 + $0xa8] sm:$0xff]
    %v231 = vld [vmem:[#allocation2 + $0xb0] sm:$0xff]
    %v232 = vld [vmem:[#allocation2 + $0xb8] sm:$0xff]
    %v233 = vld [vmem:[#allocation2 + $0xc0] sm:$0xff]
    %v234 = vld [vmem:[#allocation2 + $0xc8] sm:$0xff]
    %v235 = vld [vmem:[#allocation2 + $0xd0] sm:$0xff]
    %v236 = vld [vmem:[#allocation2 + $0xd8] sm:$0xff]
    %v237 = vld [vmem:[#allocation2 + $0xe0] sm:$0xff]
    %v238 = vld [vmem:[#allocation2 + $0xe8] sm:$0xff]
    %v239 = vld [vmem:[#allocation2 + $0xf0] sm:$0xff]
    %v240 = vld [vmem:[#allocation2 + $0xf8] sm:$0xff]
    %v241 = vpack.c.bf16 %v211, %v209
    %v242 = vpack.c.bf16 %v212, %v210
    %v243 = vpack.c.bf16 %v215, %v213
    %v244 = vpack.c.bf16 %v216, %v214
    %v245 = vpack.c.bf16 %v219, %v217
    %v246 = vpack.c.bf16 %v220, %v218
    %v247 = vpack.c.bf16 %v223, %v221
    %v248 = vpack.c.bf16 %v224, %v222
    %v249 = vpack.c.bf16 %v227, %v225
    %v250 = vpack.c.bf16 %v228, %v226
    %v251 = vpack.c.bf16 %v231, %v229
    %v252 = vpack.c.bf16 %v232, %v230
    %v253 = vpack.c.bf16 %v235, %v233
    %v254 = vpack.c.bf16 %v236, %v234
    %v255 = vpack.c.bf16 %v239, %v237
    %v256 = vpack.c.bf16 %v240, %v238
    %v273 = vunpack.c.l.b16 %v177
    %v274 = vunpack.c.l.b16 %v178
    %v275 = vunpack.c.l.b16 %v179
    %v276 = vunpack.c.l.b16 %v180
    %v277 = vunpack.c.l.b16 %v181
    %v278 = vunpack.c.l.b16 %v182
    %v279 = vunpack.c.l.b16 %v183
    %v280 = vunpack.c.l.b16 %v184
    %v281 = vunpack.c.l.b16 %v185
    %v282 = vunpack.c.l.b16 %v186
    %v283 = vunpack.c.l.b16 %v187
    %v284 = vunpack.c.l.b16 %v188
    %v285 = vunpack.c.l.b16 %v189
    %v286 = vunpack.c.l.b16 %v190
    %v287 = vunpack.c.l.b16 %v191
    %v288 = vunpack.c.l.b16 %v192
    %v289 = vpack.c.b16 %v274, %v273
    %v290 = vpack.c.b16 %v276, %v275
    %v291 = vpack.c.b16 %v278, %v277
    %v292 = vpack.c.b16 %v280, %v279
    %v293 = vpack.c.b16 %v282, %v281
    %v294 = vpack.c.b16 %v284, %v283
    %v295 = vpack.c.b16 %v286, %v285
    %v296 = vpack.c.b16 %v288, %v287
    %305 = vmatprep.subr.bf16.mxu0 %v242
    %306 = vmatpush1.bf16.msra.mxu0 %v241
    %307 = vmatprep.subr.bf16.mxu0 %v244
    %308 = vmatpush1.bf16.msra.mxu0 %v243
    %309 = vmatprep.subr.bf16.mxu0 %v246
    %310 = vmatpush1.bf16.msra.mxu0 %v245
    %311 = vmatprep.subr.bf16.mxu0 %v248
    %312 = vmatpush1.bf16.msra.mxu0 %v247
    %313 = vmatprep.subr.bf16.mxu0 %v250
    %314 = vmatpush1.bf16.msra.mxu0 %v249
    %315 = vmatprep.subr.bf16.mxu0 %v252
    %316 = vmatpush1.bf16.msra.mxu0 %v251
    %317 = vmatprep.subr.bf16.mxu0 %v254
    %318 = vmatpush1.bf16.msra.mxu0 %v253
    %319 = vmatprep.subr.bf16.mxu0 %v256
    %320 = vmatpush1.bf16.msra.mxu0 %v255
    %321 = vmatprep.subr.bf16.mxu0 0
    %322 = vmatpush1.bf16.msra.mxu0 0
    %323 = vmatprep.subr.bf16.mxu0 0
    %324 = vmatpush1.bf16.msra.mxu0 0
    %325 = vmatprep.subr.bf16.mxu0 0
    %326 = vmatpush1.bf16.msra.mxu0 0
    %327 = vmatprep.subr.bf16.mxu0 0
    %328 = vmatpush1.bf16.msra.mxu0 0
    %329 = vmatprep.subr.bf16.mxu0 0
    %330 = vmatpush1.bf16.msra.mxu0 0
    %331 = vmatprep.subr.bf16.mxu0 0
    %332 = vmatpush1.bf16.msra.mxu0 0
    %333 = vmatprep.subr.bf16.mxu0 0
    %334 = vmatpush1.bf16.msra.mxu0 0
    %335 = vmatprep.subr.bf16.mxu0 0
    %336 = vmatpush1.bf16.msra.mxu0 0
    %337 = vmatprep.mubr.bf16.mxu0 0
    %338 = vmatmul.mubr.bf16.gmra.mrb[0].mxu0 %v289
    %v339 = vpop.f32.mrb[0].mxu0
    %v340 = vadd.f32 0.0, %v339
    %v341 = vpop.f32.mrb[0].mxu0
    %v342 = vadd.f32 0.0, %v341
    %v343 = vpop.f32.mrb[0].mxu0
    %v344 = vadd.f32 0.0, %v343
    %v345 = vpop.f32.mrb[0].mxu0
    %v346 = vadd.f32 0.0, %v345
    %347 = vmatprep.mubr.bf16.mxu0 0
    %348 = vmatmul.mubr.bf16.gmra.mrb[0].mxu0 %v290
    %v349 = vpop.f32.mrb[0].mxu0
    %v350 = vadd.f32 0.0, %v349
    %v351 = vpop.f32.mrb[0].mxu0
    %v352 = vadd.f32 0.0, %v351
    %v353 = vpop.f32.mrb[0].mxu0
    %v354 = vadd.f32 0.0, %v353
    %v355 = vpop.f32.mrb[0].mxu0
    %v356 = vadd.f32 0.0, %v355
    %357 = vmatprep.mubr.bf16.mxu0 0
    %358 = vmatmul.mubr.bf16.gmra.mrb[0].mxu0 %v291
    %v359 = vpop.f32.mrb[0].mxu0
    %v360 = vadd.f32 0.0, %v359
    %v361 = vpop.f32.mrb[0].mxu0
    %v362 = vadd.f32 0.0, %v361
    %v363 = vpop.f32.mrb[0].mxu0
    %v364 = vadd.f32 0.0, %v363
    %v365 = vpop.f32.mrb[0].mxu0
    %v366 = vadd.f32 0.0, %v365
    %367 = vmatprep.mubr.bf16.mxu0 0
    %368 = vmatmul.mubr.bf16.gmra.mrb[0].mxu0 %v292
    %v369 = vpop.f32.mrb[0].mxu0
    %v370 = vadd.f32 0.0, %v369
    %v371 = vpop.f32.mrb[0].mxu0
    %v372 = vadd.f32 0.0, %v371
    %v373 = vpop.f32.mrb[0].mxu0
    %v374 = vadd.f32 0.0, %v373
    %v375 = vpop.f32.mrb[0].mxu0
    %v376 = vadd.f32 0.0, %v375
    %377 = vmatprep.mubr.bf16.mxu0 0
    %378 = vmatmul.mubr.bf16.gmra.mrb[0].mxu0 %v293
    %v379 = vpop.f32.mrb[0].mxu0
    %v380 = vadd.f32 0.0, %v379
    %v381 = vpop.f32.mrb[0].mxu0
    %v382 = vadd.f32 0.0, %v381
    %v383 = vpop.f32.mrb[0].mxu0
    %v384 = vadd.f32 0.0, %v383
    %v385 = vpop.f32.mrb[0].mxu0
    %v386 = vadd.f32 0.0, %v385
    %387 = vmatprep.mubr.bf16.mxu0 0
    %388 = vmatmul.mubr.bf16.gmra.mrb[0].mxu0 %v294
    %v389 = vpop.f32.mrb[0].mxu0
    %v390 = vadd.f32 0.0, %v389
    %v391 = vpop.f32.mrb[0].mxu0
    %v392 = vadd.f32 0.0, %v391
    %v393 = vpop.f32.mrb[0].mxu0
    %v394 = vadd.f32 0.0, %v393
    %v395 = vpop.f32.mrb[0].mxu0
    %v396 = vadd.f32 0.0, %v395
    %397 = vmatprep.mubr.bf16.mxu0 0
    %398 = vmatmul.mubr.bf16.gmra.mrb[0].mxu0 %v295
    %v399 = vpop.f32.mrb[0].mxu0
    %v400 = vadd.f32 0.0, %v399
    %v401 = vpop.f32.mrb[0].mxu0
    %v402 = vadd.f32 0.0, %v401
    %v403 = vpop.f32.mrb[0].mxu0
    %v404 = vadd.f32 0.0, %v403
    %v405 = vpop.f32.mrb[0].mxu0
    %v406 = vadd.f32 0.0, %v405
    %407 = vmatprep.mubr.bf16.mxu0 0
    %408 = vmatmul.mubr.bf16.gmra.mrb[0].mxu0 %v296
    %v409 = vpop.f32.mrb[0].mxu0
    %v410 = vadd.f32 0.0, %v409
    %v411 = vpop.f32.mrb[0].mxu0
    %v412 = vadd.f32 0.0, %v411
    %v413 = vpop.f32.mrb[0].mxu0
    %v414 = vadd.f32 0.0, %v413
    %v415 = vpop.f32.mrb[0].mxu0
    %v416 = vadd.f32 0.0, %v415
    %417 = vdwg.mxu0
    %v418 = vpack.c.bf16 %v344, %v340
    %v419 = vpack.c.bf16 %v346, %v342
    %v420 = vpack.c.bf16 %v354, %v350
    %v421 = vpack.c.bf16 %v356, %v352
    %v422 = vpack.c.bf16 %v364, %v360
    %v423 = vpack.c.bf16 %v366, %v362
    %v424 = vpack.c.bf16 %v374, %v370
    %v425 = vpack.c.bf16 %v376, %v372
    %v426 = vpack.c.bf16 %v384, %v380
    %v427 = vpack.c.bf16 %v386, %v382
    %v428 = vpack.c.bf16 %v394, %v390
    %v429 = vpack.c.bf16 %v396, %v392
    %v430 = vpack.c.bf16 %v404, %v400
    %v431 = vpack.c.bf16 %v406, %v402
    %v432 = vpack.c.bf16 %v414, %v410
    %v433 = vpack.c.bf16 %v416, %v412
    %v450 = vunpack.c.l.b16 %v193
    %v451 = vunpack.c.l.b16 %v194
    %v452 = vunpack.c.l.b16 %v195
    %v453 = vunpack.c.l.b16 %v196
    %v454 = vunpack.c.l.b16 %v197
    %v455 = vunpack.c.l.b16 %v198
    %v456 = vunpack.c.l.b16 %v199
    %v457 = vunpack.c.l.b16 %v200
    %v458 = vunpack.c.l.b16 %v201
    %v459 = vunpack.c.l.b16 %v202
    %v460 = vunpack.c.l.b16 %v203
    %v461 = vunpack.c.l.b16 %v204
    %v462 = vunpack.c.l.b16 %v205
    %v463 = vunpack.c.l.b16 %v206
    %v464 = vunpack.c.l.b16 %v207
    %v465 = vunpack.c.l.b16 %v208
    %v466 = vpack.c.b16 %v451, %v450
    %v467 = vpack.c.b16 %v453, %v452
    %v468 = vpack.c.b16 %v455, %v454
    %v469 = vpack.c.b16 %v457, %v456
    %v470 = vpack.c.b16 %v459, %v458
    %v471 = vpack.c.b16 %v461, %v460
    %v472 = vpack.c.b16 %v463, %v462
    %v473 = vpack.c.b16 %v465, %v464
    %482 = vmatprep.subr.bf16.mxu0 %v242
    %483 = vmatpush1.bf16.msra.mxu0 %v241
    %484 = vmatprep.subr.bf16.mxu0 %v244
    %485 = vmatpush1.bf16.msra.mxu0 %v243
    %486 = vmatprep.subr.bf16.mxu0 %v246
    %487 = vmatpush1.bf16.msra.mxu0 %v245
    %488 = vmatprep.subr.bf16.mxu0 %v248
    %489 = vmatpush1.bf16.msra.mxu0 %v247
    %490 = vmatprep.subr.bf16.mxu0 %v250
    %491 = vmatpush1.bf16.msra.mxu0 %v249
    %492 = vmatprep.subr.bf16.mxu0 %v252
    %493 = vmatpush1.bf16.msra.mxu0 %v251
    %494 = vmatprep.subr.bf16.mxu0 %v254
    %495 = vmatpush1.bf16.msra.mxu0 %v253
    %496 = vmatprep.subr.bf16.mxu0 %v256
    %497 = vmatpush1.bf16.msra.mxu0 %v255
    %498 = vmatprep.subr.bf16.mxu0 0
    %499 = vmatpush1.bf16.msra.mxu0 0
    %500 = vmatprep.subr.bf16.mxu0 0
    %501 = vmatpush1.bf16.msra.mxu0 0
    %502 = vmatprep.subr.bf16.mxu0 0
    %503 = vmatpush1.bf16.msra.mxu0 0
    %504 = vmatprep.subr.bf16.mxu0 0
    %505 = vmatpush1.bf16.msra.mxu0 0
    %506 = vmatprep.subr.bf16.mxu0 0
    %507 = vmatpush1.bf16.msra.mxu0 0
    %508 = vmatprep.subr.bf16.mxu0 0
    %509 = vmatpush1.bf16.msra.mxu0 0
    %510 = vmatprep.subr.bf16.mxu0 0
    %511 = vmatpush1.bf16.msra.mxu0 0
    %512 = vmatprep.subr.bf16.mxu0 0
    %513 = vmatpush1.bf16.msra.mxu0 0
    %514 = vmatprep.mubr.bf16.mxu0 0
    %515 = vmatmul.mubr.bf16.gmra.mrb[0].mxu0 %v466
    %v516 = vpop.f32.mrb[0].mxu0
    %v517 = vadd.f32 0.0, %v516
    %v518 = vpop.f32.mrb[0].mxu0
    %v519 = vadd.f32 0.0, %v518
    %v520 = vpop.f32.mrb[0].mxu0
    %v521 = vadd.f32 0.0, %v520
    %v522 = vpop.f32.mrb[0].mxu0
    %v523 = vadd.f32 0.0, %v522
    %524 = vmatprep.mubr.bf16.mxu0 0
    %525 = vmatmul.mubr.bf16.gmra.mrb[0].mxu0 %v467
    %v526 = vpop.f32.mrb[0].mxu0
    %v527 = vadd.f32 0.0, %v526
    %v528 = vpop.f32.mrb[0].mxu0
    %v529 = vadd.f32 0.0, %v528
    %v530 = vpop.f32.mrb[0].mxu0
    %v531 = vadd.f32 0.0, %v530
    %v532 = vpop.f32.mrb[0].mxu0
    %v533 = vadd.f32 0.0, %v532
    %534 = vmatprep.mubr.bf16.mxu0 0
    %535 = vmatmul.mubr.bf16.gmra.mrb[0].mxu0 %v468
    %v536 = vpop.f32.mrb[0].mxu0
    %v537 = vadd.f32 0.0, %v536
    %v538 = vpop.f32.mrb[0].mxu0
    %v539 = vadd.f32 0.0, %v538
    %v540 = vpop.f32.mrb[0].mxu0
    %v541 = vadd.f32 0.0, %v540
    %v542 = vpop.f32.mrb[0].mxu0
    %v543 = vadd.f32 0.0, %v542
    %544 = vmatprep.mubr.bf16.mxu0 0
    %545 = vmatmul.mubr.bf16.gmra.mrb[0].mxu0 %v469
    %v546 = vpop.f32.mrb[0].mxu0
    %v547 = vadd.f32 0.0, %v546
    %v548 = vpop.f32.mrb[0].mxu0
    %v549 = vadd.f32 0.0, %v548
    %v550 = vpop.f32.mrb[0].mxu0
    %v551 = vadd.f32 0.0, %v550
    %v552 = vpop.f32.mrb[0].mxu0
    %v553 = vadd.f32 0.0, %v552
    %554 = vmatprep.mubr.bf16.mxu0 0
    %555 = vmatmul.mubr.bf16.gmra.mrb[0].mxu0 %v470
    %v556 = vpop.f32.mrb[0].mxu0
    %v557 = vadd.f32 0.0, %v556
    %v558 = vpop.f32.mrb[0].mxu0
    %v559 = vadd.f32 0.0, %v558
    %v560 = vpop.f32.mrb[0].mxu0
    %v561 = vadd.f32 0.0, %v560
    %v562 = vpop.f32.mrb[0].mxu0
    %v563 = vadd.f32 0.0, %v562
    %564 = vmatprep.mubr.bf16.mxu0 0
    %565 = vmatmul.mubr.bf16.gmra.mrb[0].mxu0 %v471
    %v566 = vpop.f32.mrb[0].mxu0
    %v567 = vadd.f32 0.0, %v566
    %v568 = vpop.f32.mrb[0].mxu0
    %v569 = vadd.f32 0.0, %v568
    %v570 = vpop.f32.mrb[0].mxu0
    %v571 = vadd.f32 0.0, %v570
    %v572 = vpop.f32.mrb[0].mxu0
    %v573 = vadd.f32 0.0, %v572
    %574 = vmatprep.mubr.bf16.mxu0 0
    %575 = vmatmul.mubr.bf16.gmra.mrb[0].mxu0 %v472
    %v576 = vpop.f32.mrb[0].mxu0
    %v577 = vadd.f32 0.0, %v576
    %v578 = vpop.f32.mrb[0].mxu0
    %v579 = vadd.f32 0.0, %v578
    %v580 = vpop.f32.mrb[0].mxu0
    %v581 = vadd.f32 0.0, %v580
    %v582 = vpop.f32.mrb[0].mxu0
    %v583 = vadd.f32 0.0, %v582
    %584 = vmatprep.mubr.bf16.mxu0 0
    %585 = vmatmul.mubr.bf16.gmra.mrb[0].mxu0 %v473
    %v586 = vpop.f32.mrb[0].mxu0
    %v587 = vadd.f32 0.0, %v586
    %v588 = vpop.f32.mrb[0].mxu0
    %v589 = vadd.f32 0.0, %v588
    %v590 = vpop.f32.mrb[0].mxu0
    %v591 = vadd.f32 0.0, %v590
    %v592 = vpop.f32.mrb[0].mxu0
    %v593 = vadd.f32 0.0, %v592
    %594 = vdwg.mxu0
    %v595 = vpack.c.bf16 %v521, %v517
    %v596 = vpack.c.bf16 %v523, %v519
    %v597 = vpack.c.bf16 %v531, %v527
    %v598 = vpack.c.bf16 %v533, %v529
    %v599 = vpack.c.bf16 %v541, %v537
    %v600 = vpack.c.bf16 %v543, %v539
    %v601 = vpack.c.bf16 %v551, %v547
    %v602 = vpack.c.bf16 %v553, %v549
    %v603 = vpack.c.bf16 %v561, %v557
    %v604 = vpack.c.bf16 %v563, %v559
    %v605 = vpack.c.bf16 %v571, %v567
    %v606 = vpack.c.bf16 %v573, %v569
    %v607 = vpack.c.bf16 %v581, %v577
    %v608 = vpack.c.bf16 %v583, %v579
    %v609 = vpack.c.bf16 %v591, %v587
    %v610 = vpack.c.bf16 %v593, %v589
    %v611 = vld [vmem:[#allocation5] sm:$0xff]
    %v612 = vld [vmem:[#allocation5 + $0x8] sm:$0xff]
    %v613 = vld [vmem:[#allocation5 + $0x10] sm:$0xff]
    %v614 = vld [vmem:[#allocation5 + $0x18] sm:$0xff]
    %v615 = vld [vmem:[#allocation5 + $0x20] sm:$0xff]
    %v616 = vld [vmem:[#allocation5 + $0x28] sm:$0xff]
    %v617 = vld [vmem:[#allocation5 + $0x30] sm:$0xff]
    %v618 = vld [vmem:[#allocation5 + $0x38] sm:$0xff]
    %v619 = vld [vmem:[#allocation5 + $0x40] sm:$0xff]
    %v620 = vld [vmem:[#allocation5 + $0x48] sm:$0xff]
    %v621 = vld [vmem:[#allocation5 + $0x50] sm:$0xff]
    %v622 = vld [vmem:[#allocation5 + $0x58] sm:$0xff]
    %v623 = vld [vmem:[#allocation5 + $0x60] sm:$0xff]
    %v624 = vld [vmem:[#allocation5 + $0x68] sm:$0xff]
    %v625 = vld [vmem:[#allocation5 + $0x70] sm:$0xff]
    %v626 = vld [vmem:[#allocation5 + $0x78] sm:$0xff]
    %v627 = vld [vmem:[#allocation5 + $0x80] sm:$0xff]
    %v628 = vld [vmem:[#allocation5 + $0x88] sm:$0xff]
    %v629 = vld [vmem:[#allocation5 + $0x90] sm:$0xff]
    %v630 = vld [vmem:[#allocation5 + $0x98] sm:$0xff]
    %v631 = vld [vmem:[#allocation5 + $0xa0] sm:$0xff]
    %v632 = vld [vmem:[#allocation5 + $0xa8] sm:$0xff]
    %v633 = vld [vmem:[#allocation5 + $0xb0] sm:$0xff]
    %v634 = vld [vmem:[#allocation5 + $0xb8] sm:$0xff]
    %v635 = vld [vmem:[#allocation5 + $0xc0] sm:$0xff]
    %v636 = vld [vmem:[#allocation5 + $0xc8] sm:$0xff]
    %v637 = vld [vmem:[#allocation5 + $0xd0] sm:$0xff]
    %v638 = vld [vmem:[#allocation5 + $0xd8] sm:$0xff]
    %v639 = vld [vmem:[#allocation5 + $0xe0] sm:$0xff]
    %v640 = vld [vmem:[#allocation5 + $0xe8] sm:$0xff]
    %v641 = vld [vmem:[#allocation5 + $0xf0] sm:$0xff]
    %v642 = vld [vmem:[#allocation5 + $0xf8] sm:$0xff]
    %s643 = scalar_lea.vmem [#allocation5], 256
    %v644 = vld [vmem:[%s643] sm:$0xff]
    %v645 = vld [vmem:[%s643 + $0x8] sm:$0xff]
    %v646 = vld [vmem:[%s643 + $0x10] sm:$0xff]
    %v647 = vld [vmem:[%s643 + $0x18] sm:$0xff]
    %v648 = vld [vmem:[%s643 + $0x20] sm:$0xff]
    %v649 = vld [vmem:[%s643 + $0x28] sm:$0xff]
    %v650 = vld [vmem:[%s643 + $0x30] sm:$0xff]
    %v651 = vld [vmem:[%s643 + $0x38] sm:$0xff]
    %v652 = vld [vmem:[%s643 + $0x40] sm:$0xff]
    %v653 = vld [vmem:[%s643 + $0x48] sm:$0xff]
    %v654 = vld [vmem:[%s643 + $0x50] sm:$0xff]
    %v655 = vld [vmem:[%s643 + $0x58] sm:$0xff]
    %v656 = vld [vmem:[%s643 + $0x60] sm:$0xff]
    %v657 = vld [vmem:[%s643 + $0x68] sm:$0xff]
    %v658 = vld [vmem:[%s643 + $0x70] sm:$0xff]
    %v659 = vld [vmem:[%s643 + $0x78] sm:$0xff]
    %v660 = vld [vmem:[%s643 + $0x80] sm:$0xff]
    %v661 = vld [vmem:[%s643 + $0x88] sm:$0xff]
    %v662 = vld [vmem:[%s643 + $0x90] sm:$0xff]
    %v663 = vld [vmem:[%s643 + $0x98] sm:$0xff]
    %v664 = vld [vmem:[%s643 + $0xa0] sm:$0xff]
    %v665 = vld [vmem:[%s643 + $0xa8] sm:$0xff]
    %v666 = vld [vmem:[%s643 + $0xb0] sm:$0xff]
    %v667 = vld [vmem:[%s643 + $0xb8] sm:$0xff]
    %v668 = vld [vmem:[%s643 + $0xc0] sm:$0xff]
    %v669 = vld [vmem:[%s643 + $0xc8] sm:$0xff]
    %v670 = vld [vmem:[%s643 + $0xd0] sm:$0xff]
    %v671 = vld [vmem:[%s643 + $0xd8] sm:$0xff]
    %v672 = vld [vmem:[%s643 + $0xe0] sm:$0xff]
    %v673 = vld [vmem:[%s643 + $0xe8] sm:$0xff]
    %v674 = vld [vmem:[%s643 + $0xf0] sm:$0xff]
    %v675 = vld [vmem:[%s643 + $0xf8] sm:$0xff]
    %v708 = vunpack.c.l.b16 %v644
    %v709 = vunpack.c.h.b16 %v644
    %v710 = vunpack.c.l.b16 %v645
    %v711 = vunpack.c.h.b16 %v645
    %v712 = vunpack.c.l.b16 %v646
    %v713 = vunpack.c.h.b16 %v646
    %v714 = vunpack.c.l.b16 %v647
    %v715 = vunpack.c.h.b16 %v647
    %v716 = vunpack.c.l.b16 %v648
    %v717 = vunpack.c.h.b16 %v648
    %v718 = vunpack.c.l.b16 %v649
    %v719 = vunpack.c.h.b16 %v649
    %v720 = vunpack.c.l.b16 %v650
    %v721 = vunpack.c.h.b16 %v650
    %v722 = vunpack.c.l.b16 %v651
    %v723 = vunpack.c.h.b16 %v651
    %v724 = vunpack.c.l.b16 %v652
    %v725 = vunpack.c.h.b16 %v652
    %v726 = vunpack.c.l.b16 %v653
    %v727 = vunpack.c.h.b16 %v653
    %v728 = vunpack.c.l.b16 %v654
    %v729 = vunpack.c.h.b16 %v654
    %v730 = vunpack.c.l.b16 %v655
    %v731 = vunpack.c.h.b16 %v655
    %v732 = vunpack.c.l.b16 %v656
    %v733 = vunpack.c.h.b16 %v656
    %v734 = vunpack.c.l.b16 %v657
    %v735 = vunpack.c.h.b16 %v657
    %v736 = vunpack.c.l.b16 %v658
    %v737 = vunpack.c.h.b16 %v658
    %v738 = vunpack.c.l.b16 %v659
    %v739 = vunpack.c.h.b16 %v659
    %v740 = vunpack.c.l.b16 %v660
    %v741 = vunpack.c.h.b16 %v660
    %v742 = vunpack.c.l.b16 %v661
    %v743 = vunpack.c.h.b16 %v661
    %v744 = vunpack.c.l.b16 %v662
    %v745 = vunpack.c.h.b16 %v662
    %v746 = vunpack.c.l.b16 %v663
    %v747 = vunpack.c.h.b16 %v663
    %v748 = vunpack.c.l.b16 %v664
    %v749 = vunpack.c.h.b16 %v664
    %v750 = vunpack.c.l.b16 %v665
    %v751 = vunpack.c.h.b16 %v665
    %v752 = vunpack.c.l.b16 %v666
    %v753 = vunpack.c.h.b16 %v666
    %v754 = vunpack.c.l.b16 %v667
    %v755 = vunpack.c.h.b16 %v667
    %v756 = vunpack.c.l.b16 %v668
    %v757 = vunpack.c.h.b16 %v668
    %v758 = vunpack.c.l.b16 %v669
    %v759 = vunpack.c.h.b16 %v669
    %v760 = vunpack.c.l.b16 %v670
    %v761 = vunpack.c.h.b16 %v670
    %v762 = vunpack.c.l.b16 %v671
    %v763 = vunpack.c.h.b16 %v671
    %v764 = vunpack.c.l.b16 %v672
    %v765 = vunpack.c.h.b16 %v672
    %v766 = vunpack.c.l.b16 %v673
    %v767 = vunpack.c.h.b16 %v673
    %v768 = vunpack.c.l.b16 %v674
    %v769 = vunpack.c.h.b16 %v674
    %v770 = vunpack.c.l.b16 %v675
    %v771 = vunpack.c.h.b16 %v675
    %v772 = vpack.c.b16 %v710, %v708
    %v773 = vpack.c.b16 %v711, %v709
    %v774 = vpack.c.b16 %v714, %v712
    %v775 = vpack.c.b16 %v715, %v713
    %v776 = vpack.c.b16 %v718, %v716
    %v777 = vpack.c.b16 %v719, %v717
    %v778 = vpack.c.b16 %v722, %v720
    %v779 = vpack.c.b16 %v723, %v721
    %v780 = vpack.c.b16 %v726, %v724
    %v781 = vpack.c.b16 %v727, %v725
    %v782 = vpack.c.b16 %v730, %v728
    %v783 = vpack.c.b16 %v731, %v729
    %v784 = vpack.c.b16 %v734, %v732
    %v785 = vpack.c.b16 %v735, %v733
    %v786 = vpack.c.b16 %v738, %v736
    %v787 = vpack.c.b16 %v739, %v737
    %v788 = vpack.c.b16 %v742, %v740
    %v789 = vpack.c.b16 %v743, %v741
    %v790 = vpack.c.b16 %v746, %v744
    %v791 = vpack.c.b16 %v747, %v745
    %v792 = vpack.c.b16 %v750, %v748
    %v793 = vpack.c.b16 %v751, %v749
    %v794 = vpack.c.b16 %v754, %v752
    %v795 = vpack.c.b16 %v755, %v753
    %v796 = vpack.c.b16 %v758, %v756
    %v797 = vpack.c.b16 %v759, %v757
    %v798 = vpack.c.b16 %v762, %v760
    %v799 = vpack.c.b16 %v763, %v761
    %v800 = vpack.c.b16 %v766, %v764
    %v801 = vpack.c.b16 %v767, %v765
    %v802 = vpack.c.b16 %v770, %v768
    %v803 = vpack.c.b16 %v771, %v769
    %836 = vmatprep.subr.bf16.mxu0 %v773
    %837 = vmatpush1.bf16.msra.mxu0 %v772
    %838 = vmatprep.subr.bf16.mxu0 %v775
    %839 = vmatpush1.bf16.msra.mxu0 %v774
    %840 = vmatprep.subr.bf16.mxu0 %v777
    %841 = vmatpush1.bf16.msra.mxu0 %v776
    %842 = vmatprep.subr.bf16.mxu0 %v779
    %843 = vmatpush1.bf16.msra.mxu0 %v778
    %844 = vmatprep.subr.bf16.mxu0 %v781
    %845 = vmatpush1.bf16.msra.mxu0 %v780
    %846 = vmatprep.subr.bf16.mxu0 %v783
    %847 = vmatpush1.bf16.msra.mxu0 %v782
    %848 = vmatprep.subr.bf16.mxu0 %v785
    %849 = vmatpush1.bf16.msra.mxu0 %v784
    %850 = vmatprep.subr.bf16.mxu0 %v787
    %851 = vmatpush1.bf16.msra.mxu0 %v786
    %852 = vmatprep.subr.bf16.mxu0 %v789
    %853 = vmatpush1.bf16.msra.mxu0 %v788
    %854 = vmatprep.subr.bf16.mxu0 %v791
    %855 = vmatpush1.bf16.msra.mxu0 %v790
    %856 = vmatprep.subr.bf16.mxu0 %v793
    %857 = vmatpush1.bf16.msra.mxu0 %v792
    %858 = vmatprep.subr.bf16.mxu0 %v795
    %859 = vmatpush1.bf16.msra.mxu0 %v794
    %860 = vmatprep.subr.bf16.mxu0 %v797
    %861 = vmatpush1.bf16.msra.mxu0 %v796
    %862 = vmatprep.subr.bf16.mxu0 %v799
    %863 = vmatpush1.bf16.msra.mxu0 %v798
    %864 = vmatprep.subr.bf16.mxu0 %v801
    %865 = vmatpush1.bf16.msra.mxu0 %v800
    %866 = vmatprep.subr.bf16.mxu0 %v803
    %867 = vmatpush1.bf16.msra.mxu0 %v802
    %868 = vmatprep.mubr.bf16.mxu0 %v242
    %869 = vmatmul.mubr.bf16.gmra.mrb[0].mxu0 %v241
    %v870 = vpop.f32.mrb[0].mxu0
    %v871 = vadd.f32 0.0, %v870
    %v872 = vpop.f32.mrb[0].mxu0
    %v873 = vadd.f32 0.0, %v872
    %v874 = vpop.f32.mrb[0].mxu0
    %v875 = vadd.f32 0.0, %v874
    %v876 = vpop.f32.mrb[0].mxu0
    %v877 = vadd.f32 0.0, %v876
    %878 = vmatprep.mubr.bf16.mxu0 %v244
    %879 = vmatmul.mubr.bf16.gmra.mrb[0].mxu0 %v243
    %v880 = vpop.f32.mrb[0].mxu0
    %v881 = vadd.f32 0.0, %v880
    %v882 = vpop.f32.mrb[0].mxu0
    %v883 = vadd.f32 0.0, %v882
    %v884 = vpop.f32.mrb[0].mxu0
    %v885 = vadd.f32 0.0, %v884
    %v886 = vpop.f32.mrb[0].mxu0
    %v887 = vadd.f32 0.0, %v886
    %888 = vmatprep.mubr.bf16.mxu0 %v246
    %889 = vmatmul.mubr.bf16.gmra.mrb[0].mxu0 %v245
    %v890 = vpop.f32.mrb[0].mxu0
    %v891 = vadd.f32 0.0, %v890
    %v892 = vpop.f32.mrb[0].mxu0
    %v893 = vadd.f32 0.0, %v892
    %v894 = vpop.f32.mrb[0].mxu0
    %v895 = vadd.f32 0.0, %v894
    %v896 = vpop.f32.mrb[0].mxu0
    %v897 = vadd.f32 0.0, %v896
    %898 = vmatprep.mubr.bf16.mxu0 %v248
    %899 = vmatmul.mubr.bf16.gmra.mrb[0].mxu0 %v247
    %v900 = vpop.f32.mrb[0].mxu0
    %v901 = vadd.f32 0.0, %v900
    %v902 = vpop.f32.mrb[0].mxu0
    %v903 = vadd.f32 0.0, %v902
    %v904 = vpop.f32.mrb[0].mxu0
    %v905 = vadd.f32 0.0, %v904
    %v906 = vpop.f32.mrb[0].mxu0
    %v907 = vadd.f32 0.0, %v906
    %908 = vmatprep.mubr.bf16.mxu0 %v250
    %909 = vmatmul.mubr.bf16.gmra.mrb[0].mxu0 %v249
    %v910 = vpop.f32.mrb[0].mxu0
    %v911 = vadd.f32 0.0, %v910
    %v912 = vpop.f32.mrb[0].mxu0
    %v913 = vadd.f32 0.0, %v912
    %v914 = vpop.f32.mrb[0].mxu0
    %v915 = vadd.f32 0.0, %v914
    %v916 = vpop.f32.mrb[0].mxu0
    %v917 = vadd.f32 0.0, %v916
    %918 = vmatprep.mubr.bf16.mxu0 %v252
    %919 = vmatmul.mubr.bf16.gmra.mrb[0].mxu0 %v251
    %v920 = vpop.f32.mrb[0].mxu0
    %v921 = vadd.f32 0.0, %v920
    %v922 = vpop.f32.mrb[0].mxu0
    %v923 = vadd.f32 0.0, %v922
    %v924 = vpop.f32.mrb[0].mxu0
    %v925 = vadd.f32 0.0, %v924
    %v926 = vpop.f32.mrb[0].mxu0
    %v927 = vadd.f32 0.0, %v926
    %928 = vmatprep.mubr.bf16.mxu0 %v254
    %929 = vmatmul.mubr.bf16.gmra.mrb[0].mxu0 %v253
    %v930 = vpop.f32.mrb[0].mxu0
    %v931 = vadd.f32 0.0, %v930
    %v932 = vpop.f32.mrb[0].mxu0
    %v933 = vadd.f32 0.0, %v932
    %v934 = vpop.f32.mrb[0].mxu0
    %v935 = vadd.f32 0.0, %v934
    %v936 = vpop.f32.mrb[0].mxu0
    %v937 = vadd.f32 0.0, %v936
    %938 = vmatprep.mubr.bf16.mxu0 %v256
    %939 = vmatmul.mubr.bf16.gmra.mrb[0].mxu0 %v255
    %v940 = vpop.f32.mrb[0].mxu0
    %v941 = vadd.f32 0.0, %v940
    %v942 = vpop.f32.mrb[0].mxu0
    %v943 = vadd.f32 0.0, %v942
    %v944 = vpop.f32.mrb[0].mxu0
    %v945 = vadd.f32 0.0, %v944
    %v946 = vpop.f32.mrb[0].mxu0
    %v947 = vadd.f32 0.0, %v946
    %948 = vdwg.mxu0
    %v981 = vunpack.c.l.b16 %v611
    %v982 = vunpack.c.h.b16 %v611
    %v983 = vunpack.c.l.b16 %v612
    %v984 = vunpack.c.h.b16 %v612
    %v985 = vunpack.c.l.b16 %v613
    %v986 = vunpack.c.h.b16 %v613
    %v987 = vunpack.c.l.b16 %v614
    %v988 = vunpack.c.h.b16 %v614
    %v989 = vunpack.c.l.b16 %v615
    %v990 = vunpack.c.h.b16 %v615
    %v991 = vunpack.c.l.b16 %v616
    %v992 = vunpack.c.h.b16 %v616
    %v993 = vunpack.c.l.b16 %v617
    %v994 = vunpack.c.h.b16 %v617
    %v995 = vunpack.c.l.b16 %v618
    %v996 = vunpack.c.h.b16 %v618
    %v997 = vunpack.c.l.b16 %v619
    %v998 = vunpack.c.h.b16 %v619
    %v999 = vunpack.c.l.b16 %v620
    %v1000 = vunpack.c.h.b16 %v620
    %v1001 = vunpack.c.l.b16 %v621
    %v1002 = vunpack.c.h.b16 %v621
    %v1003 = vunpack.c.l.b16 %v622
    %v1004 = vunpack.c.h.b16 %v622
    %v1005 = vunpack.c.l.b16 %v623
    %v1006 = vunpack.c.h.b16 %v623
    %v1007 = vunpack.c.l.b16 %v624
    %v1008 = vunpack.c.h.b16 %v624
    %v1009 = vunpack.c.l.b16 %v625
    %v1010 = vunpack.c.h.b16 %v625
    %v1011 = vunpack.c.l.b16 %v626
    %v1012 = vunpack.c.h.b16 %v626
    %v1013 = vunpack.c.l.b16 %v627
    %v1014 = vunpack.c.h.b16 %v627
    %v1015 = vunpack.c.l.b16 %v628
    %v1016 = vunpack.c.h.b16 %v628
    %v1017 = vunpack.c.l.b16 %v629
    %v1018 = vunpack.c.h.b16 %v629
    %v1019 = vunpack.c.l.b16 %v630
    %v1020 = vunpack.c.h.b16 %v630
    %v1021 = vunpack.c.l.b16 %v631
    %v1022 = vunpack.c.h.b16 %v631
    %v1023 = vunpack.c.l.b16 %v632
    %v1024 = vunpack.c.h.b16 %v632
    %v1025 = vunpack.c.l.b16 %v633
    %v1026 = vunpack.c.h.b16 %v633
    %v1027 = vunpack.c.l.b16 %v634
    %v1028 = vunpack.c.h.b16 %v634
    %v1029 = vunpack.c.l.b16 %v635
    %v1030 = vunpack.c.h.b16 %v635
    %v1031 = vunpack.c.l.b16 %v636
    %v1032 = vunpack.c.h.b16 %v636
    %v1033 = vunpack.c.l.b16 %v637
    %v1034 = vunpack.c.h.b16 %v637
    %v1035 = vunpack.c.l.b16 %v638
    %v1036 = vunpack.c.h.b16 %v638
    %v1037 = vunpack.c.l.b16 %v639
    %v1038 = vunpack.c.h.b16 %v639
    %v1039 = vunpack.c.l.b16 %v640
    %v1040 = vunpack.c.h.b16 %v640
    %v1041 = vunpack.c.l.b16 %v641
    %v1042 = vunpack.c.h.b16 %v641
    %v1043 = vunpack.c.l.b16 %v642
    %v1044 = vunpack.c.h.b16 %v642
    %v1045 = vpack.c.b16 %v983, %v981
    %v1046 = vpack.c.b16 %v984, %v982
    %v1047 = vpack.c.b16 %v987, %v985
    %v1048 = vpack.c.b16 %v988, %v986
    %v1049 = vpack.c.b16 %v991, %v989
    %v1050 = vpack.c.b16 %v992, %v990
    %v1051 = vpack.c.b16 %v995, %v993
    %v1052 = vpack.c.b16 %v996, %v994
    %v1053 = vpack.c.b16 %v999, %v997
    %v1054 = vpack.c.b16 %v1000, %v998
    %v1055 = vpack.c.b16 %v1003, %v1001
    %v1056 = vpack.c.b16 %v1004, %v1002
    %v1057 = vpack.c.b16 %v1007, %v1005
    %v1058 = vpack.c.b16 %v1008, %v1006
    %v1059 = vpack.c.b16 %v1011, %v1009
    %v1060 = vpack.c.b16 %v1012, %v1010
    %v1061 = vpack.c.b16 %v1015, %v1013
    %v1062 = vpack.c.b16 %v1016, %v1014
    %v1063 = vpack.c.b16 %v1019, %v1017
    %v1064 = vpack.c.b16 %v1020, %v1018
    %v1065 = vpack.c.b16 %v1023, %v1021
    %v1066 = vpack.c.b16 %v1024, %v1022
    %v1067 = vpack.c.b16 %v1027, %v1025
    %v1068 = vpack.c.b16 %v1028, %v1026
    %v1069 = vpack.c.b16 %v1031, %v1029
    %v1070 = vpack.c.b16 %v1032, %v1030
    %v1071 = vpack.c.b16 %v1035, %v1033
    %v1072 = vpack.c.b16 %v1036, %v1034
    %v1073 = vpack.c.b16 %v1039, %v1037
    %v1074 = vpack.c.b16 %v1040, %v1038
    %v1075 = vpack.c.b16 %v1043, %v1041
    %v1076 = vpack.c.b16 %v1044, %v1042
    %1109 = vmatprep.subr.bf16.mxu0 %v1046
    %1110 = vmatpush1.bf16.msra.mxu0 %v1045
    %1111 = vmatprep.subr.bf16.mxu0 %v1048
    %1112 = vmatpush1.bf16.msra.mxu0 %v1047
    %1113 = vmatprep.subr.bf16.mxu0 %v1050
    %1114 = vmatpush1.bf16.msra.mxu0 %v1049
    %1115 = vmatprep.subr.bf16.mxu0 %v1052
    %1116 = vmatpush1.bf16.msra.mxu0 %v1051
    %1117 = vmatprep.subr.bf16.mxu0 %v1054
    %1118 = vmatpush1.bf16.msra.mxu0 %v1053
    %1119 = vmatprep.subr.bf16.mxu0 %v1056
    %1120 = vmatpush1.bf16.msra.mxu0 %v1055
    %1121 = vmatprep.subr.bf16.mxu0 %v1058
    %1122 = vmatpush1.bf16.msra.mxu0 %v1057
    %1123 = vmatprep.subr.bf16.mxu0 %v1060
    %1124 = vmatpush1.bf16.msra.mxu0 %v1059
    %1125 = vmatprep.subr.bf16.mxu0 %v1062
    %1126 = vmatpush1.bf16.msra.mxu0 %v1061
    %1127 = vmatprep.subr.bf16.mxu0 %v1064
    %1128 = vmatpush1.bf16.msra.mxu0 %v1063
    %1129 = vmatprep.subr.bf16.mxu0 %v1066
    %1130 = vmatpush1.bf16.msra.mxu0 %v1065
    %1131 = vmatprep.subr.bf16.mxu0 %v1068
    %1132 = vmatpush1.bf16.msra.mxu0 %v1067
    %1133 = vmatprep.subr.bf16.mxu0 %v1070
    %1134 = vmatpush1.bf16.msra.mxu0 %v1069
    %1135 = vmatprep.subr.bf16.mxu0 %v1072
    %1136 = vmatpush1.bf16.msra.mxu0 %v1071
    %1137 = vmatprep.subr.bf16.mxu0 %v1074
    %1138 = vmatpush1.bf16.msra.mxu0 %v1073
    %1139 = vmatprep.subr.bf16.mxu0 %v1076
    %1140 = vmatpush1.bf16.msra.mxu0 %v1075
    %1141 = vmatprep.mubr.bf16.mxu0 %v419
    %1142 = vmatmul.mubr.bf16.gmra.mrb[0].mxu0 %v418
    %v1143 = vpop.f32.mrb[0].mxu0
    %v1144 = vadd.f32 %v871, %v1143
    %v1145 = vpop.f32.mrb[0].mxu0
    %v1146 = vadd.f32 %v873, %v1145
    %v1147 = vpop.f32.mrb[0].mxu0
    %v1148 = vadd.f32 %v875, %v1147
    %v1149 = vpop.f32.mrb[0].mxu0
    %v1150 = vadd.f32 %v877, %v1149
    %1151 = vmatprep.mubr.bf16.mxu0 %v421
    %1152 = vmatmul.mubr.bf16.gmra.mrb[0].mxu0 %v420
    %v1153 = vpop.f32.mrb[0].mxu0
    %v1154 = vadd.f32 %v881, %v1153
    %v1155 = vpop.f32.mrb[0].mxu0
    %v1156 = vadd.f32 %v883, %v1155
    %v1157 = vpop.f32.mrb[0].mxu0
    %v1158 = vadd.f32 %v885, %v1157
    %v1159 = vpop.f32.mrb[0].mxu0
    %v1160 = vadd.f32 %v887, %v1159
    %1161 = vmatprep.mubr.bf16.mxu0 %v423
    %1162 = vmatmul.mubr.bf16.gmra.mrb[0].mxu0 %v422
    %v1163 = vpop.f32.mrb[0].mxu0
    %v1164 = vadd.f32 %v891, %v1163
    %v1165 = vpop.f32.mrb[0].mxu0
    %v1166 = vadd.f32 %v893, %v1165
    %v1167 = vpop.f32.mrb[0].mxu0
    %v1168 = vadd.f32 %v895, %v1167
    %v1169 = vpop.f32.mrb[0].mxu0
    %v1170 = vadd.f32 %v897, %v1169
    %1171 = vmatprep.mubr.bf16.mxu0 %v425
    %1172 = vmatmul.mubr.bf16.gmra.mrb[0].mxu0 %v424
    %v1173 = vpop.f32.mrb[0].mxu0
    %v1174 = vadd.f32 %v901, %v1173
    %v1175 = vpop.f32.mrb[0].mxu0
    %v1176 = vadd.f32 %v903, %v1175
    %v1177 = vpop.f32.mrb[0].mxu0
    %v1178 = vadd.f32 %v905, %v1177
    %v1179 = vpop.f32.mrb[0].mxu0
    %v1180 = vadd.f32 %v907, %v1179
    %1181 = vmatprep.mubr.bf16.mxu0 %v427
    %1182 = vmatmul.mubr.bf16.gmra.mrb[0].mxu0 %v426
    %v1183 = vpop.f32.mrb[0].mxu0
    %v1184 = vadd.f32 %v911, %v1183
    %v1185 = vpop.f32.mrb[0].mxu0
    %v1186 = vadd.f32 %v913, %v1185
    %v1187 = vpop.f32.mrb[0].mxu0
    %v1188 = vadd.f32 %v915, %v1187
    %v1189 = vpop.f32.mrb[0].mxu0
    %v1190 = vadd.f32 %v917, %v1189
    %1191 = vmatprep.mubr.bf16.mxu0 %v429
    %1192 = vmatmul.mubr.bf16.gmra.mrb[0].mxu0 %v428
    %v1193 = vpop.f32.mrb[0].mxu0
    %v1194 = vadd.f32 %v921, %v1193
    %v1195 = vpop.f32.mrb[0].mxu0
    %v1196 = vadd.f32 %v923, %v1195
    %v1197 = vpop.f32.mrb[0].mxu0
    %v1198 = vadd.f32 %v925, %v1197
    %v1199 = vpop.f32.mrb[0].mxu0
    %v1200 = vadd.f32 %v927, %v1199
    %1201 = vmatprep.mubr.bf16.mxu0 %v431
    %1202 = vmatmul.mubr.bf16.gmra.mrb[0].mxu0 %v430
    %v1203 = vpop.f32.mrb[0].mxu0
    %v1204 = vadd.f32 %v931, %v1203
    %v1205 = vpop.f32.mrb[0].mxu0
    %v1206 = vadd.f32 %v933, %v1205
    %v1207 = vpop.f32.mrb[0].mxu0
    %v1208 = vadd.f32 %v935, %v1207
    %v1209 = vpop.f32.mrb[0].mxu0
    %v1210 = vadd.f32 %v937, %v1209
    %1211 = vmatprep.mubr.bf16.mxu0 %v433
    %1212 = vmatmul.mubr.bf16.gmra.mrb[0].mxu0 %v432
    %v1213 = vpop.f32.mrb[0].mxu0
    %v1214 = vadd.f32 %v941, %v1213
    %v1215 = vpop.f32.mrb[0].mxu0
    %v1216 = vadd.f32 %v943, %v1215
    %v1217 = vpop.f32.mrb[0].mxu0
    %v1218 = vadd.f32 %v945, %v1217
    %v1219 = vpop.f32.mrb[0].mxu0
    %v1220 = vadd.f32 %v947, %v1219
    %1221 = vdwg.mxu0
    %s1222 = scalar_lea.vmem [#allocation5], 512
    %v1223 = vld [vmem:[%s1222] sm:$0xff]
    %v1224 = vld [vmem:[%s1222 + $0x8] sm:$0xff]
    %v1225 = vld [vmem:[%s1222 + $0x10] sm:$0xff]
    %v1226 = vld [vmem:[%s1222 + $0x18] sm:$0xff]
    %v1227 = vld [vmem:[%s1222 + $0x20] sm:$0xff]
    %v1228 = vld [vmem:[%s1222 + $0x28] sm:$0xff]
    %v1229 = vld [vmem:[%s1222 + $0x30] sm:$0xff]
    %v1230 = vld [vmem:[%s1222 + $0x38] sm:$0xff]
    %v1231 = vld [vmem:[%s1222 + $0x40] sm:$0xff]
    %v1232 = vld [vmem:[%s1222 + $0x48] sm:$0xff]
    %v1233 = vld [vmem:[%s1222 + $0x50] sm:$0xff]
    %v1234 = vld [vmem:[%s1222 + $0x58] sm:$0xff]
    %v1235 = vld [vmem:[%s1222 + $0x60] sm:$0xff]
    %v1236 = vld [vmem:[%s1222 + $0x68] sm:$0xff]
    %v1237 = vld [vmem:[%s1222 + $0x70] sm:$0xff]
    %v1238 = vld [vmem:[%s1222 + $0x78] sm:$0xff]
    %v1239 = vld [vmem:[%s1222 + $0x80] sm:$0xff]
    %v1240 = vld [vmem:[%s1222 + $0x88] sm:$0xff]
    %v1241 = vld [vmem:[%s1222 + $0x90] sm:$0xff]
    %v1242 = vld [vmem:[%s1222 + $0x98] sm:$0xff]
    %v1243 = vld [vmem:[%s1222 + $0xa0] sm:$0xff]
    %v1244 = vld [vmem:[%s1222 + $0xa8] sm:$0xff]
    %v1245 = vld [vmem:[%s1222 + $0xb0] sm:$0xff]
    %v1246 = vld [vmem:[%s1222 + $0xb8] sm:$0xff]
    %v1247 = vld [vmem:[%s1222 + $0xc0] sm:$0xff]
    %v1248 = vld [vmem:[%s1222 + $0xc8] sm:$0xff]
    %v1249 = vld [vmem:[%s1222 + $0xd0] sm:$0xff]
    %v1250 = vld [vmem:[%s1222 + $0xd8] sm:$0xff]
    %v1251 = vld [vmem:[%s1222 + $0xe0] sm:$0xff]
    %v1252 = vld [vmem:[%s1222 + $0xe8] sm:$0xff]
    %v1253 = vld [vmem:[%s1222 + $0xf0] sm:$0xff]
    %v1254 = vld [vmem:[%s1222 + $0xf8] sm:$0xff]
    %v1287 = vunpack.c.l.b16 %v1223
    %v1288 = vunpack.c.h.b16 %v1223
    %v1289 = vunpack.c.l.b16 %v1224
    %v1290 = vunpack.c.h.b16 %v1224
    %v1291 = vunpack.c.l.b16 %v1225
    %v1292 = vunpack.c.h.b16 %v1225
    %v1293 = vunpack.c.l.b16 %v1226
    %v1294 = vunpack.c.h.b16 %v1226
    %v1295 = vunpack.c.l.b16 %v1227
    %v1296 = vunpack.c.h.b16 %v1227
    %v1297 = vunpack.c.l.b16 %v1228
    %v1298 = vunpack.c.h.b16 %v1228
    %v1299 = vunpack.c.l.b16 %v1229
    %v1300 = vunpack.c.h.b16 %v1229
    %v1301 = vunpack.c.l.b16 %v1230
    %v1302 = vunpack.c.h.b16 %v1230
    %v1303 = vunpack.c.l.b16 %v1231
    %v1304 = vunpack.c.h.b16 %v1231
    %v1305 = vunpack.c.l.b16 %v1232
    %v1306 = vunpack.c.h.b16 %v1232
    %v1307 = vunpack.c.l.b16 %v1233
    %v1308 = vunpack.c.h.b16 %v1233
    %v1309 = vunpack.c.l.b16 %v1234
    %v1310 = vunpack.c.h.b16 %v1234
    %v1311 = vunpack.c.l.b16 %v1235
    %v1312 = vunpack.c.h.b16 %v1235
    %v1313 = vunpack.c.l.b16 %v1236
    %v1314 = vunpack.c.h.b16 %v1236
    %v1315 = vunpack.c.l.b16 %v1237
    %v1316 = vunpack.c.h.b16 %v1237
    %v1317 = vunpack.c.l.b16 %v1238
    %v1318 = vunpack.c.h.b16 %v1238
    %v1319 = vunpack.c.l.b16 %v1239
    %v1320 = vunpack.c.h.b16 %v1239
    %v1321 = vunpack.c.l.b16 %v1240
    %v1322 = vunpack.c.h.b16 %v1240
    %v1323 = vunpack.c.l.b16 %v1241
    %v1324 = vunpack.c.h.b16 %v1241
    %v1325 = vunpack.c.l.b16 %v1242
    %v1326 = vunpack.c.h.b16 %v1242
    %v1327 = vunpack.c.l.b16 %v1243
    %v1328 = vunpack.c.h.b16 %v1243
    %v1329 = vunpack.c.l.b16 %v1244
    %v1330 = vunpack.c.h.b16 %v1244
    %v1331 = vunpack.c.l.b16 %v1245
    %v1332 = vunpack.c.h.b16 %v1245
    %v1333 = vunpack.c.l.b16 %v1246
    %v1334 = vunpack.c.h.b16 %v1246
    %v1335 = vunpack.c.l.b16 %v1247
    %v1336 = vunpack.c.h.b16 %v1247
    %v1337 = vunpack.c.l.b16 %v1248
    %v1338 = vunpack.c.h.b16 %v1248
    %v1339 = vunpack.c.l.b16 %v1249
    %v1340 = vunpack.c.h.b16 %v1249
    %v1341 = vunpack.c.l.b16 %v1250
    %v1342 = vunpack.c.h.b16 %v1250
    %v1343 = vunpack.c.l.b16 %v1251
    %v1344 = vunpack.c.h.b16 %v1251
    %v1345 = vunpack.c.l.b16 %v1252
    %v1346 = vunpack.c.h.b16 %v1252
    %v1347 = vunpack.c.l.b16 %v1253
    %v1348 = vunpack.c.h.b16 %v1253
    %v1349 = vunpack.c.l.b16 %v1254
    %v1350 = vunpack.c.h.b16 %v1254
    %v1351 = vpack.c.b16 %v1289, %v1287
    %v1352 = vpack.c.b16 %v1290, %v1288
    %v1353 = vpack.c.b16 %v1293, %v1291
    %v1354 = vpack.c.b16 %v1294, %v1292
    %v1355 = vpack.c.b16 %v1297, %v1295
    %v1356 = vpack.c.b16 %v1298, %v1296
    %v1357 = vpack.c.b16 %v1301, %v1299
    %v1358 = vpack.c.b16 %v1302, %v1300
    %v1359 = vpack.c.b16 %v1305, %v1303
    %v1360 = vpack.c.b16 %v1306, %v1304
    %v1361 = vpack.c.b16 %v1309, %v1307
    %v1362 = vpack.c.b16 %v1310, %v1308
    %v1363 = vpack.c.b16 %v1313, %v1311
    %v1364 = vpack.c.b16 %v1314, %v1312
    %v1365 = vpack.c.b16 %v1317, %v1315
    %v1366 = vpack.c.b16 %v1318, %v1316
    %v1367 = vpack.c.b16 %v1321, %v1319
    %v1368 = vpack.c.b16 %v1322, %v1320
    %v1369 = vpack.c.b16 %v1325, %v1323
    %v1370 = vpack.c.b16 %v1326, %v1324
    %v1371 = vpack.c.b16 %v1329, %v1327
    %v1372 = vpack.c.b16 %v1330, %v1328
    %v1373 = vpack.c.b16 %v1333, %v1331
    %v1374 = vpack.c.b16 %v1334, %v1332
    %v1375 = vpack.c.b16 %v1337, %v1335
    %v1376 = vpack.c.b16 %v1338, %v1336
    %v1377 = vpack.c.b16 %v1341, %v1339
    %v1378 = vpack.c.b16 %v1342, %v1340
    %v1379 = vpack.c.b16 %v1345, %v1343
    %v1380 = vpack.c.b16 %v1346, %v1344
    %v1381 = vpack.c.b16 %v1349, %v1347
    %v1382 = vpack.c.b16 %v1350, %v1348
    %1415 = vmatprep.subr.bf16.mxu0 %v1352
    %1416 = vmatpush1.bf16.msra.mxu0 %v1351
    %1417 = vmatprep.subr.bf16.mxu0 %v1354
    %1418 = vmatpush1.bf16.msra.mxu0 %v1353
    %1419 = vmatprep.subr.bf16.mxu0 %v1356
    %1420 = vmatpush1.bf16.msra.mxu0 %v1355
    %1421 = vmatprep.subr.bf16.mxu0 %v1358
    %1422 = vmatpush1.bf16.msra.mxu0 %v1357
    %1423 = vmatprep.subr.bf16.mxu0 %v1360
    %1424 = vmatpush1.bf16.msra.mxu0 %v1359
    %1425 = vmatprep.subr.bf16.mxu0 %v1362
    %1426 = vmatpush1.bf16.msra.mxu0 %v1361
    %1427 = vmatprep.subr.bf16.mxu0 %v1364
    %1428 = vmatpush1.bf16.msra.mxu0 %v1363
    %1429 = vmatprep.subr.bf16.mxu0 %v1366
    %1430 = vmatpush1.bf16.msra.mxu0 %v1365
    %1431 = vmatprep.subr.bf16.mxu0 %v1368
    %1432 = vmatpush1.bf16.msra.mxu0 %v1367
    %1433 = vmatprep.subr.bf16.mxu0 %v1370
    %1434 = vmatpush1.bf16.msra.mxu0 %v1369
    %1435 = vmatprep.subr.bf16.mxu0 %v1372
    %1436 = vmatpush1.bf16.msra.mxu0 %v1371
    %1437 = vmatprep.subr.bf16.mxu0 %v1374
    %1438 = vmatpush1.bf16.msra.mxu0 %v1373
    %1439 = vmatprep.subr.bf16.mxu0 %v1376
    %1440 = vmatpush1.bf16.msra.mxu0 %v1375
    %1441 = vmatprep.subr.bf16.mxu0 %v1378
    %1442 = vmatpush1.bf16.msra.mxu0 %v1377
    %1443 = vmatprep.subr.bf16.mxu0 %v1380
    %1444 = vmatpush1.bf16.msra.mxu0 %v1379
    %1445 = vmatprep.subr.bf16.mxu0 %v1382
    %1446 = vmatpush1.bf16.msra.mxu0 %v1381
    %1447 = vmatprep.mubr.bf16.mxu0 %v596
    %1448 = vmatmul.mubr.bf16.gmra.mrb[0].mxu0 %v595
    %v1449 = vpop.f32.mrb[0].mxu0
    %v1450 = vadd.f32 0.0, %v1449
    %v1451 = vpop.f32.mrb[0].mxu0
    %v1452 = vadd.f32 0.0, %v1451
    %v1453 = vpop.f32.mrb[0].mxu0
    %v1454 = vadd.f32 0.0, %v1453
    %v1455 = vpop.f32.mrb[0].mxu0
    %v1456 = vadd.f32 0.0, %v1455
    %1457 = vmatprep.mubr.bf16.mxu0 %v598
    %1458 = vmatmul.mubr.bf16.gmra.mrb[0].mxu0 %v597
    %v1459 = vpop.f32.mrb[0].mxu0
    %v1460 = vadd.f32 0.0, %v1459
    %v1461 = vpop.f32.mrb[0].mxu0
    %v1462 = vadd.f32 0.0, %v1461
    %v1463 = vpop.f32.mrb[0].mxu0
    %v1464 = vadd.f32 0.0, %v1463
    %v1465 = vpop.f32.mrb[0].mxu0
    %v1466 = vadd.f32 0.0, %v1465
    %1467 = vmatprep.mubr.bf16.mxu0 %v600
    %1468 = vmatmul.mubr.bf16.gmra.mrb[0].mxu0 %v599
    %v1469 = vpop.f32.mrb[0].mxu0
    %v1470 = vadd.f32 0.0, %v1469
    %v1471 = vpop.f32.mrb[0].mxu0
    %v1472 = vadd.f32 0.0, %v1471
    %v1473 = vpop.f32.mrb[0].mxu0
    %v1474 = vadd.f32 0.0, %v1473
    %v1475 = vpop.f32.mrb[0].mxu0
    %v1476 = vadd.f32 0.0, %v1475
    %1477 = vmatprep.mubr.bf16.mxu0 %v602
    %1478 = vmatmul.mubr.bf16.gmra.mrb[0].mxu0 %v601
    %v1479 = vpop.f32.mrb[0].mxu0
    %v1480 = vadd.f32 0.0, %v1479
    %v1481 = vpop.f32.mrb[0].mxu0
    %v1482 = vadd.f32 0.0, %v1481
    %v1483 = vpop.f32.mrb[0].mxu0
    %v1484 = vadd.f32 0.0, %v1483
    %v1485 = vpop.f32.mrb[0].mxu0
    %v1486 = vadd.f32 0.0, %v1485
    %1487 = vmatprep.mubr.bf16.mxu0 %v604
    %1488 = vmatmul.mubr.bf16.gmra.mrb[0].mxu0 %v603
    %v1489 = vpop.f32.mrb[0].mxu0
    %v1490 = vadd.f32 0.0, %v1489
    %v1491 = vpop.f32.mrb[0].mxu0
    %v1492 = vadd.f32 0.0, %v1491
    %v1493 = vpop.f32.mrb[0].mxu0
    %v1494 = vadd.f32 0.0, %v1493
    %v1495 = vpop.f32.mrb[0].mxu0
    %v1496 = vadd.f32 0.0, %v1495
    %1497 = vmatprep.mubr.bf16.mxu0 %v606
    %1498 = vmatmul.mubr.bf16.gmra.mrb[0].mxu0 %v605
    %v1499 = vpop.f32.mrb[0].mxu0
    %v1500 = vadd.f32 0.0, %v1499
    %v1501 = vpop.f32.mrb[0].mxu0
    %v1502 = vadd.f32 0.0, %v1501
    %v1503 = vpop.f32.mrb[0].mxu0
    %v1504 = vadd.f32 0.0, %v1503
    %v1505 = vpop.f32.mrb[0].mxu0
    %v1506 = vadd.f32 0.0, %v1505
    %1507 = vmatprep.mubr.bf16.mxu0 %v608
    %1508 = vmatmul.mubr.bf16.gmra.mrb[0].mxu0 %v607
    %v1509 = vpop.f32.mrb[0].mxu0
    %v1510 = vadd.f32 0.0, %v1509
    %v1511 = vpop.f32.mrb[0].mxu0
    %v1512 = vadd.f32 0.0, %v1511
    %v1513 = vpop.f32.mrb[0].mxu0
    %v1514 = vadd.f32 0.0, %v1513
    %v1515 = vpop.f32.mrb[0].mxu0
    %v1516 = vadd.f32 0.0, %v1515
    %1517 = vmatprep.mubr.bf16.mxu0 %v610
    %1518 = vmatmul.mubr.bf16.gmra.mrb[0].mxu0 %v609
    %v1519 = vpop.f32.mrb[0].mxu0
    %v1520 = vadd.f32 0.0, %v1519
    %v1521 = vpop.f32.mrb[0].mxu0
    %v1522 = vadd.f32 0.0, %v1521
    %v1523 = vpop.f32.mrb[0].mxu0
    %v1524 = vadd.f32 0.0, %v1523
    %v1525 = vpop.f32.mrb[0].mxu0
    %v1526 = vadd.f32 0.0, %v1525
    %1527 = vdwg.mxu0
    %v1528 = vadd.f32 %v1144, %v1450
    %v1529 = vadd.f32 %v1146, %v1452
    %v1530 = vadd.f32 %v1148, %v1454
    %v1531 = vadd.f32 %v1150, %v1456
    %v1532 = vadd.f32 %v1154, %v1460
    %v1533 = vadd.f32 %v1156, %v1462
    %v1534 = vadd.f32 %v1158, %v1464
    %v1535 = vadd.f32 %v1160, %v1466
    %v1536 = vadd.f32 %v1164, %v1470
    %v1537 = vadd.f32 %v1166, %v1472
    %v1538 = vadd.f32 %v1168, %v1474
    %v1539 = vadd.f32 %v1170, %v1476
    %v1540 = vadd.f32 %v1174, %v1480
    %v1541 = vadd.f32 %v1176, %v1482
    %v1542 = vadd.f32 %v1178, %v1484
    %v1543 = vadd.f32 %v1180, %v1486
    %v1544 = vadd.f32 %v1184, %v1490
    %v1545 = vadd.f32 %v1186, %v1492
    %v1546 = vadd.f32 %v1188, %v1494
    %v1547 = vadd.f32 %v1190, %v1496
    %v1548 = vadd.f32 %v1194, %v1500
    %v1549 = vadd.f32 %v1196, %v1502
    %v1550 = vadd.f32 %v1198, %v1504
    %v1551 = vadd.f32 %v1200, %v1506
    %v1552 = vadd.f32 %v1204, %v1510
    %v1553 = vadd.f32 %v1206, %v1512
    %v1554 = vadd.f32 %v1208, %v1514
    %v1555 = vadd.f32 %v1210, %v1516
    %v1556 = vadd.f32 %v1214, %v1520
    %v1557 = vadd.f32 %v1216, %v1522
    %v1558 = vadd.f32 %v1218, %v1524
    %v1559 = vadd.f32 %v1220, %v1526
    %v1560 = vld [vmem:[#allocation7] sm:$0x3]
    %v1562 = vlaneseq
    %v1563 = vshrl.u32 %v1562, 7
    %v1564 = vsub.s32 0, %v1563
    %v1565 = vrot.slane %v1560, %v1564
    %v1566 = vlaneseq
    %v1567 = vshrl.u32 %v1566, 7
    %v1568 = vsub.s32 1, %v1567
    %v1569 = vrot.slane %v1560, %v1568
    %v1572 = vadd.f32 %v1528, %v1565
    %v1573 = vadd.f32 %v1529, %v1569
    %v1574 = vadd.f32 %v1530, %v1565
    %v1575 = vadd.f32 %v1531, %v1569
    %v1576 = vadd.f32 %v1532, %v1565
    %v1577 = vadd.f32 %v1533, %v1569
    %v1578 = vadd.f32 %v1534, %v1565
    %v1579 = vadd.f32 %v1535, %v1569
    %v1580 = vadd.f32 %v1536, %v1565
    %v1581 = vadd.f32 %v1537, %v1569
    %v1582 = vadd.f32 %v1538, %v1565
    %v1583 = vadd.f32 %v1539, %v1569
    %v1584 = vadd.f32 %v1540, %v1565
    %v1585 = vadd.f32 %v1541, %v1569
    %v1586 = vadd.f32 %v1542, %v1565
    %v1587 = vadd.f32 %v1543, %v1569
    %v1588 = vadd.f32 %v1544, %v1565
    %v1589 = vadd.f32 %v1545, %v1569
    %v1590 = vadd.f32 %v1546, %v1565
    %v1591 = vadd.f32 %v1547, %v1569
    %v1592 = vadd.f32 %v1548, %v1565
    %v1593 = vadd.f32 %v1549, %v1569
    %v1594 = vadd.f32 %v1550, %v1565
    %v1595 = vadd.f32 %v1551, %v1569
    %v1596 = vadd.f32 %v1552, %v1565
    %v1597 = vadd.f32 %v1553, %v1569
    %v1598 = vadd.f32 %v1554, %v1565
    %v1599 = vadd.f32 %v1555, %v1569
    %v1600 = vadd.f32 %v1556, %v1565
    %v1601 = vadd.f32 %v1557, %v1569
    %v1602 = vadd.f32 %v1558, %v1565
    %v1603 = vadd.f32 %v1559, %v1569
    %v1604 = vadd.f32 %v1572, %v1574
    %v1605 = vadd.f32 %v1604, %v1576
    %v1606 = vadd.f32 %v1605, %v1578
    %v1607 = vadd.f32 %v1606, %v1580
    %v1608 = vadd.f32 %v1607, %v1582
    %v1609 = vadd.f32 %v1608, %v1584
    %v1610 = vadd.f32 %v1609, %v1586
    %v1611 = vadd.f32 %v1610, %v1588
    %v1612 = vadd.f32 %v1611, %v1590
    %v1613 = vadd.f32 %v1612, %v1592
    %v1614 = vadd.f32 %v1613, %v1594
    %v1615 = vadd.f32 %v1614, %v1596
    %v1616 = vadd.f32 %v1615, %v1598
    %v1617 = vadd.f32 %v1616, %v1600
    %v1618 = vadd.f32 %v1617, %v1602
    %v1619 = vrot.slane %v1618, 4
    %v1620 = vadd.f32 %v1618, %v1619
    %v1621 = vrot.slane %v1620, 2
    %v1622 = vadd.f32 %v1620, %v1621
    %v1623 = vrot.slane %v1622, 1
    %v1624 = vadd.f32 %v1622, %v1623
    %v1625 = vadd.f32 %v1573, %v1575
    %v1626 = vadd.f32 %v1625, %v1577
    %v1627 = vadd.f32 %v1626, %v1579
    %v1628 = vadd.f32 %v1627, %v1581
    %v1629 = vadd.f32 %v1628, %v1583
    %v1630 = vadd.f32 %v1629, %v1585
    %v1631 = vadd.f32 %v1630, %v1587
    %v1632 = vadd.f32 %v1631, %v1589
    %v1633 = vadd.f32 %v1632, %v1591
    %v1634 = vadd.f32 %v1633, %v1593
    %v1635 = vadd.f32 %v1634, %v1595
    %v1636 = vadd.f32 %v1635, %v1597
    %v1637 = vadd.f32 %v1636, %v1599
    %v1638 = vadd.f32 %v1637, %v1601
    %v1639 = vadd.f32 %v1638, %v1603
    %v1640 = vrot.slane %v1639, 4
    %v1641 = vadd.f32 %v1639, %v1640
    %v1642 = vrot.slane %v1641, 2
    %v1643 = vadd.f32 %v1641, %v1642
    %v1644 = vrot.slane %v1643, 1
    %v1645 = vadd.f32 %v1643, %v1644
    %v1646 = vrcp.pop 128.0
    %v1647 = vmul.f32 %v1624, %v1646
    %v1648 = vmul.f32 %v1645, %v1646
    %v1649 = vsub.f32 %v1572, %v1647
    %v1650 = vsub.f32 %v1573, %v1648
    %v1651 = vsub.f32 %v1574, %v1647
    %v1652 = vsub.f32 %v1575, %v1648
    %v1653 = vsub.f32 %v1576, %v1647
    %v1654 = vsub.f32 %v1577, %v1648
    %v1655 = vsub.f32 %v1578, %v1647
    %v1656 = vsub.f32 %v1579, %v1648
    %v1657 = vsub.f32 %v1580, %v1647
    %v1658 = vsub.f32 %v1581, %v1648
    %v1659 = vsub.f32 %v1582, %v1647
    %v1660 = vsub.f32 %v1583, %v1648
    %v1661 = vsub.f32 %v1584, %v1647
    %v1662 = vsub.f32 %v1585, %v1648
    %v1663 = vsub.f32 %v1586, %v1647
    %v1664 = vsub.f32 %v1587, %v1648
    %v1665 = vsub.f32 %v1588, %v1647
    %v1666 = vsub.f32 %v1589, %v1648
    %v1667 = vsub.f32 %v1590, %v1647
    %v1668 = vsub.f32 %v1591, %v1648
    %v1669 = vsub.f32 %v1592, %v1647
    %v1670 = vsub.f32 %v1593, %v1648
    %v1671 = vsub.f32 %v1594, %v1647
    %v1672 = vsub.f32 %v1595, %v1648
    %v1673 = vsub.f32 %v1596, %v1647
    %v1674 = vsub.f32 %v1597, %v1648
    %v1675 = vsub.f32 %v1598, %v1647
    %v1676 = vsub.f32 %v1599, %v1648
    %v1677 = vsub.f32 %v1600, %v1647
    %v1678 = vsub.f32 %v1601, %v1648
    %v1679 = vsub.f32 %v1602, %v1647
    %v1680 = vsub.f32 %v1603, %v1648
    %v1681 = vmul.f32 %v1649, %v1649
    %v1682 = vmul.f32 %v1650, %v1650
    %v1683 = vmul.f32 %v1651, %v1651
    %v1684 = vmul.f32 %v1652, %v1652
    %v1685 = vmul.f32 %v1653, %v1653
    %v1686 = vmul.f32 %v1654, %v1654
    %v1687 = vmul.f32 %v1655, %v1655
    %v1688 = vmul.f32 %v1656, %v1656
    %v1689 = vmul.f32 %v1657, %v1657
    %v1690 = vmul.f32 %v1658, %v1658
    %v1691 = vmul.f32 %v1659, %v1659
    %v1692 = vmul.f32 %v1660, %v1660
    %v1693 = vmul.f32 %v1661, %v1661
    %v1694 = vmul.f32 %v1662, %v1662
    %v1695 = vmul.f32 %v1663, %v1663
    %v1696 = vmul.f32 %v1664, %v1664
    %v1697 = vmul.f32 %v1665, %v1665
    %v1698 = vmul.f32 %v1666, %v1666
    %v1699 = vmul.f32 %v1667, %v1667
    %v1700 = vmul.f32 %v1668, %v1668
    %v1701 = vmul.f32 %v1669, %v1669
    %v1702 = vmul.f32 %v1670, %v1670
    %v1703 = vmul.f32 %v1671, %v1671
    %v1704 = vmul.f32 %v1672, %v1672
    %v1705 = vmul.f32 %v1673, %v1673
    %v1706 = vmul.f32 %v1674, %v1674
    %v1707 = vmul.f32 %v1675, %v1675
    %v1708 = vmul.f32 %v1676, %v1676
    %v1709 = vmul.f32 %v1677, %v1677
    %v1710 = vmul.f32 %v1678, %v1678
    %v1711 = vmul.f32 %v1679, %v1679
    %v1712 = vmul.f32 %v1680, %v1680
    %v1713 = vadd.f32 %v1681, %v1683
    %v1714 = vadd.f32 %v1713, %v1685
    %v1715 = vadd.f32 %v1714, %v1687
    %v1716 = vadd.f32 %v1715, %v1689
    %v1717 = vadd.f32 %v1716, %v1691
    %v1718 = vadd.f32 %v1717, %v1693
    %v1719 = vadd.f32 %v1718, %v1695
    %v1720 = vadd.f32 %v1719, %v1697
    %v1721 = vadd.f32 %v1720, %v1699
    %v1722 = vadd.f32 %v1721, %v1701
    %v1723 = vadd.f32 %v1722, %v1703
    %v1724 = vadd.f32 %v1723, %v1705
    %v1725 = vadd.f32 %v1724, %v1707
    %v1726 = vadd.f32 %v1725, %v1709
    %v1727 = vadd.f32 %v1726, %v1711
    %v1728 = vrot.slane %v1727, 4
    %v1729 = vadd.f32 %v1727, %v1728
    %v1730 = vrot.slane %v1729, 2
    %v1731 = vadd.f32 %v1729, %v1730
    %v1732 = vrot.slane %v1731, 1
    %v1733 = vadd.f32 %v1731, %v1732
    %v1734 = vadd.f32 %v1682, %v1684
    %v1735 = vadd.f32 %v1734, %v1686
    %v1736 = vadd.f32 %v1735, %v1688
    %v1737 = vadd.f32 %v1736, %v1690
    %v1738 = vadd.f32 %v1737, %v1692
    %v1739 = vadd.f32 %v1738, %v1694
    %v1740 = vadd.f32 %v1739, %v1696
    %v1741 = vadd.f32 %v1740, %v1698
    %v1742 = vadd.f32 %v1741, %v1700
    %v1743 = vadd.f32 %v1742, %v1702
    %v1744 = vadd.f32 %v1743, %v1704
    %v1745 = vadd.f32 %v1744, %v1706
    %v1746 = vadd.f32 %v1745, %v1708
    %v1747 = vadd.f32 %v1746, %v1710
    %v1748 = vadd.f32 %v1747, %v1712
    %v1749 = vrot.slane %v1748, 4
    %v1750 = vadd.f32 %v1748, %v1749
    %v1751 = vrot.slane %v1750, 2
    %v1752 = vadd.f32 %v1750, %v1751
    %v1753 = vrot.slane %v1752, 1
    %v1754 = vadd.f32 %v1752, %v1753
    %v1755 = vmul.f32 %v1733, %v1646
    %v1756 = vmul.f32 %v1754, %v1646
    %v1757 = vadd.f32 %v1755, 1e-05
    %v1758 = vadd.f32 %v1756, 1e-05
    %v1759 = vrsqrt.pop %v1757
    %v1760 = vrsqrt.pop %v1758
    %v1761 = vmul.f32 %v1649, %v1759
    %v1762 = vmul.f32 %v1650, %v1760
    %v1763 = vmul.f32 %v1651, %v1759
    %v1764 = vmul.f32 %v1652, %v1760
    %v1765 = vmul.f32 %v1653, %v1759
    %v1766 = vmul.f32 %v1654, %v1760
    %v1767 = vmul.f32 %v1655, %v1759
    %v1768 = vmul.f32 %v1656, %v1760
    %v1769 = vmul.f32 %v1657, %v1759
    %v1770 = vmul.f32 %v1658, %v1760
    %v1771 = vmul.f32 %v1659, %v1759
    %v1772 = vmul.f32 %v1660, %v1760
    %v1773 = vmul.f32 %v1661, %v1759
    %v1774 = vmul.f32 %v1662, %v1760
    %v1775 = vmul.f32 %v1663, %v1759
    %v1776 = vmul.f32 %v1664, %v1760
    %v1777 = vmul.f32 %v1665, %v1759
    %v1778 = vmul.f32 %v1666, %v1760
    %v1779 = vmul.f32 %v1667, %v1759
    %v1780 = vmul.f32 %v1668, %v1760
    %v1781 = vmul.f32 %v1669, %v1759
    %v1782 = vmul.f32 %v1670, %v1760
    %v1783 = vmul.f32 %v1671, %v1759
    %v1784 = vmul.f32 %v1672, %v1760
    %v1785 = vmul.f32 %v1673, %v1759
    %v1786 = vmul.f32 %v1674, %v1760
    %v1787 = vmul.f32 %v1675, %v1759
    %v1788 = vmul.f32 %v1676, %v1760
    %v1789 = vmul.f32 %v1677, %v1759
    %v1790 = vmul.f32 %v1678, %v1760
    %v1791 = vmul.f32 %v1679, %v1759
    %v1792 = vmul.f32 %v1680, %v1760
    %v1793 = vld [vmem:[#allocation8] sm:$0x3]
    %v1795 = vlaneseq
    %v1796 = vshrl.u32 %v1795, 7
    %v1797 = vsub.s32 0, %v1796
    %v1798 = vrot.slane %v1793, %v1797
    %v1799 = vlaneseq
    %v1800 = vshrl.u32 %v1799, 7
    %v1801 = vsub.s32 1, %v1800
    %v1802 = vrot.slane %v1793, %v1801
    %v1805 = vmul.f32 %v1761, %v1798
    %v1806 = vmul.f32 %v1762, %v1802
    %v1807 = vmul.f32 %v1763, %v1798
    %v1808 = vmul.f32 %v1764, %v1802
    %v1809 = vmul.f32 %v1765, %v1798
    %v1810 = vmul.f32 %v1766, %v1802
    %v1811 = vmul.f32 %v1767, %v1798
    %v1812 = vmul.f32 %v1768, %v1802
    %v1813 = vmul.f32 %v1769, %v1798
    %v1814 = vmul.f32 %v1770, %v1802
    %v1815 = vmul.f32 %v1771, %v1798
    %v1816 = vmul.f32 %v1772, %v1802
    %v1817 = vmul.f32 %v1773, %v1798
    %v1818 = vmul.f32 %v1774, %v1802
    %v1819 = vmul.f32 %v1775, %v1798
    %v1820 = vmul.f32 %v1776, %v1802
    %v1821 = vmul.f32 %v1777, %v1798
    %v1822 = vmul.f32 %v1778, %v1802
    %v1823 = vmul.f32 %v1779, %v1798
    %v1824 = vmul.f32 %v1780, %v1802
    %v1825 = vmul.f32 %v1781, %v1798
    %v1826 = vmul.f32 %v1782, %v1802
    %v1827 = vmul.f32 %v1783, %v1798
    %v1828 = vmul.f32 %v1784, %v1802
    %v1829 = vmul.f32 %v1785, %v1798
    %v1830 = vmul.f32 %v1786, %v1802
    %v1831 = vmul.f32 %v1787, %v1798
    %v1832 = vmul.f32 %v1788, %v1802
    %v1833 = vmul.f32 %v1789, %v1798
    %v1834 = vmul.f32 %v1790, %v1802
    %v1835 = vmul.f32 %v1791, %v1798
    %v1836 = vmul.f32 %v1792, %v1802
    %v1837 = vld [vmem:[#allocation10] sm:$0x3]
    %v1839 = vlaneseq
    %v1840 = vshrl.u32 %v1839, 7
    %v1841 = vsub.s32 0, %v1840
    %v1842 = vrot.slane %v1837, %v1841
    %v1843 = vlaneseq
    %v1844 = vshrl.u32 %v1843, 7
    %v1845 = vsub.s32 1, %v1844
    %v1846 = vrot.slane %v1837, %v1845
    %v1849 = vadd.f32 %v1805, %v1842
    %v1850 = vadd.f32 %v1806, %v1846
    %v1851 = vadd.f32 %v1807, %v1842
    %v1852 = vadd.f32 %v1808, %v1846
    %v1853 = vadd.f32 %v1809, %v1842
    %v1854 = vadd.f32 %v1810, %v1846
    %v1855 = vadd.f32 %v1811, %v1842
    %v1856 = vadd.f32 %v1812, %v1846
    %v1857 = vadd.f32 %v1813, %v1842
    %v1858 = vadd.f32 %v1814, %v1846
    %v1859 = vadd.f32 %v1815, %v1842
    %v1860 = vadd.f32 %v1816, %v1846
    %v1861 = vadd.f32 %v1817, %v1842
    %v1862 = vadd.f32 %v1818, %v1846
    %v1863 = vadd.f32 %v1819, %v1842
    %v1864 = vadd.f32 %v1820, %v1846
    %v1865 = vadd.f32 %v1821, %v1842
    %v1866 = vadd.f32 %v1822, %v1846
    %v1867 = vadd.f32 %v1823, %v1842
    %v1868 = vadd.f32 %v1824, %v1846
    %v1869 = vadd.f32 %v1825, %v1842
    %v1870 = vadd.f32 %v1826, %v1846
    %v1871 = vadd.f32 %v1827, %v1842
    %v1872 = vadd.f32 %v1828, %v1846
    %v1873 = vadd.f32 %v1829, %v1842
    %v1874 = vadd.f32 %v1830, %v1846
    %v1875 = vadd.f32 %v1831, %v1842
    %v1876 = vadd.f32 %v1832, %v1846
    %v1877 = vadd.f32 %v1833, %v1842
    %v1878 = vadd.f32 %v1834, %v1846
    %v1879 = vadd.f32 %v1835, %v1842
    %v1880 = vadd.f32 %v1836, %v1846
    %vm1881 = vcmp.ge.f32.partialorder %v1849, 0.0
    %vm1882 = vcmp.ge.f32.partialorder %v1850, 0.0
    %vm1883 = vcmp.ge.f32.partialorder %v1851, 0.0
    %vm1884 = vcmp.ge.f32.partialorder %v1852, 0.0
    %vm1885 = vcmp.ge.f32.partialorder %v1853, 0.0
    %vm1886 = vcmp.ge.f32.partialorder %v1854, 0.0
    %vm1887 = vcmp.ge.f32.partialorder %v1855, 0.0
    %vm1888 = vcmp.ge.f32.partialorder %v1856, 0.0
    %vm1889 = vcmp.ge.f32.partialorder %v1857, 0.0
    %vm1890 = vcmp.ge.f32.partialorder %v1858, 0.0
    %vm1891 = vcmp.ge.f32.partialorder %v1859, 0.0
    %vm1892 = vcmp.ge.f32.partialorder %v1860, 0.0
    %vm1893 = vcmp.ge.f32.partialorder %v1861, 0.0
    %vm1894 = vcmp.ge.f32.partialorder %v1862, 0.0
    %vm1895 = vcmp.ge.f32.partialorder %v1863, 0.0
    %vm1896 = vcmp.ge.f32.partialorder %v1864, 0.0
    %vm1897 = vcmp.ge.f32.partialorder %v1865, 0.0
    %vm1898 = vcmp.ge.f32.partialorder %v1866, 0.0
    %vm1899 = vcmp.ge.f32.partialorder %v1867, 0.0
    %vm1900 = vcmp.ge.f32.partialorder %v1868, 0.0
    %vm1901 = vcmp.ge.f32.partialorder %v1869, 0.0
    %vm1902 = vcmp.ge.f32.partialorder %v1870, 0.0
    %vm1903 = vcmp.ge.f32.partialorder %v1871, 0.0
    %vm1904 = vcmp.ge.f32.partialorder %v1872, 0.0
    %vm1905 = vcmp.ge.f32.partialorder %v1873, 0.0
    %vm1906 = vcmp.ge.f32.partialorder %v1874, 0.0
    %vm1907 = vcmp.ge.f32.partialorder %v1875, 0.0
    %vm1908 = vcmp.ge.f32.partialorder %v1876, 0.0
    %vm1909 = vcmp.ge.f32.partialorder %v1877, 0.0
    %vm1910 = vcmp.ge.f32.partialorder %v1878, 0.0
    %vm1911 = vcmp.ge.f32.partialorder %v1879, 0.0
    %vm1912 = vcmp.ge.f32.partialorder %v1880, 0.0
    %v1913 = vmul.f32 %v1849, 0.2
    %v1914 = vmul.f32 %v1850, 0.2
    %v1915 = vmul.f32 %v1851, 0.2
    %v1916 = vmul.f32 %v1852, 0.2
    %v1917 = vmul.f32 %v1853, 0.2
    %v1918 = vmul.f32 %v1854, 0.2
    %v1919 = vmul.f32 %v1855, 0.2
    %v1920 = vmul.f32 %v1856, 0.2
    %v1921 = vmul.f32 %v1857, 0.2
    %v1922 = vmul.f32 %v1858, 0.2
    %v1923 = vmul.f32 %v1859, 0.2
    %v1924 = vmul.f32 %v1860, 0.2
    %v1925 = vmul.f32 %v1861, 0.2
    %v1926 = vmul.f32 %v1862, 0.2
    %v1927 = vmul.f32 %v1863, 0.2
    %v1928 = vmul.f32 %v1864, 0.2
    %v1929 = vmul.f32 %v1865, 0.2
    %v1930 = vmul.f32 %v1866, 0.2
    %v1931 = vmul.f32 %v1867, 0.2
    %v1932 = vmul.f32 %v1868, 0.2
    %v1933 = vmul.f32 %v1869, 0.2
    %v1934 = vmul.f32 %v1870, 0.2
    %v1935 = vmul.f32 %v1871, 0.2
    %v1936 = vmul.f32 %v1872, 0.2
    %v1937 = vmul.f32 %v1873, 0.2
    %v1938 = vmul.f32 %v1874, 0.2
    %v1939 = vmul.f32 %v1875, 0.2
    %v1940 = vmul.f32 %v1876, 0.2
    %v1941 = vmul.f32 %v1877, 0.2
    %v1942 = vmul.f32 %v1878, 0.2
    %v1943 = vmul.f32 %v1879, 0.2
    %v1944 = vmul.f32 %v1880, 0.2
    %v1945 = vsel %vm1881, %v1849, %v1913
    %v1946 = vsel %vm1882, %v1850, %v1914
    %v1947 = vsel %vm1883, %v1851, %v1915
    %v1948 = vsel %vm1884, %v1852, %v1916
    %v1949 = vsel %vm1885, %v1853, %v1917
    %v1950 = vsel %vm1886, %v1854, %v1918
    %v1951 = vsel %vm1887, %v1855, %v1919
    %v1952 = vsel %vm1888, %v1856, %v1920
    %v1953 = vsel %vm1889, %v1857, %v1921
    %v1954 = vsel %vm1890, %v1858, %v1922
    %v1955 = vsel %vm1891, %v1859, %v1923
    %v1956 = vsel %vm1892, %v1860, %v1924
    %v1957 = vsel %vm1893, %v1861, %v1925
    %v1958 = vsel %vm1894, %v1862, %v1926
    %v1959 = vsel %vm1895, %v1863, %v1927
    %v1960 = vsel %vm1896, %v1864, %v1928
    %v1961 = vsel %vm1897, %v1865, %v1929
    %v1962 = vsel %vm1898, %v1866, %v1930
    %v1963 = vsel %vm1899, %v1867, %v1931
    %v1964 = vsel %vm1900, %v1868, %v1932
    %v1965 = vsel %vm1901, %v1869, %v1933
    %v1966 = vsel %vm1902, %v1870, %v1934
    %v1967 = vsel %vm1903, %v1871, %v1935
    %v1968 = vsel %vm1904, %v1872, %v1936
    %v1969 = vsel %vm1905, %v1873, %v1937
    %v1970 = vsel %vm1906, %v1874, %v1938
    %v1971 = vsel %vm1907, %v1875, %v1939
    %v1972 = vsel %vm1908, %v1876, %v1940
    %v1973 = vsel %vm1909, %v1877, %v1941
    %v1974 = vsel %vm1910, %v1878, %v1942
    %v1975 = vsel %vm1911, %v1879, %v1943
    %v1976 = vsel %vm1912, %v1880, %v1944
    %1977 = vst [vmem:[#allocation2] sm:$0xff] %v1945
    %1978 = vst [vmem:[#allocation2 + $0x8] sm:$0xff] %v1946
    %1979 = vst [vmem:[#allocation2 + $0x10] sm:$0xff] %v1947
    %1980 = vst [vmem:[#allocation2 + $0x18] sm:$0xff] %v1948
    %1981 = vst [vmem:[#allocation2 + $0x20] sm:$0xff] %v1949
    %1982 = vst [vmem:[#allocation2 + $0x28] sm:$0xff] %v1950
    %1983 = vst [vmem:[#allocation2 + $0x30] sm:$0xff] %v1951
    %1984 = vst [vmem:[#allocation2 + $0x38] sm:$0xff] %v1952
    %1985 = vst [vmem:[#allocation2 + $0x40] sm:$0xff] %v1953
    %1986 = vst [vmem:[#allocation2 + $0x48] sm:$0xff] %v1954
    %1987 = vst [vmem:[#allocation2 + $0x50] sm:$0xff] %v1955
    %1988 = vst [vmem:[#allocation2 + $0x58] sm:$0xff] %v1956
    %1989 = vst [vmem:[#allocation2 + $0x60] sm:$0xff] %v1957
    %1990 = vst [vmem:[#allocation2 + $0x68] sm:$0xff] %v1958
    %1991 = vst [vmem:[#allocation2 + $0x70] sm:$0xff] %v1959
    %1992 = vst [vmem:[#allocation2 + $0x78] sm:$0xff] %v1960
    %1993 = vst [vmem:[#allocation2 + $0x80] sm:$0xff] %v1961
    %1994 = vst [vmem:[#allocation2 + $0x88] sm:$0xff] %v1962
    %1995 = vst [vmem:[#allocation2 + $0x90] sm:$0xff] %v1963
    %1996 = vst [vmem:[#allocation2 + $0x98] sm:$0xff] %v1964
    %1997 = vst [vmem:[#allocation2 + $0xa0] sm:$0xff] %v1965
    %1998 = vst [vmem:[#allocation2 + $0xa8] sm:$0xff] %v1966
    %1999 = vst [vmem:[#allocation2 + $0xb0] sm:$0xff] %v1967
    %2000 = vst [vmem:[#allocation2 + $0xb8] sm:$0xff] %v1968
    %2001 = vst [vmem:[#allocation2 + $0xc0] sm:$0xff] %v1969
    %2002 = vst [vmem:[#allocation2 + $0xc8] sm:$0xff] %v1970
    %2003 = vst [vmem:[#allocation2 + $0xd0] sm:$0xff] %v1971
    %2004 = vst [vmem:[#allocation2 + $0xd8] sm:$0xff] %v1972
    %2005 = vst [vmem:[#allocation2 + $0xe0] sm:$0xff] %v1973
    %2006 = vst [vmem:[#allocation2 + $0xe8] sm:$0xff] %v1974
    %2007 = vst [vmem:[#allocation2 + $0xf0] sm:$0xff] %v1975
    %2008 = vst [vmem:[#allocation2 + $0xf8] sm:$0xff] %v1976
    %v2009 = vld [vmem:[#allocation2] sm:$0xff]
    %v2010 = vld [vmem:[#allocation2 + $0x8] sm:$0xff]
    %v2011 = vld [vmem:[#allocation2 + $0x10] sm:$0xff]
    %v2012 = vld [vmem:[#allocation2 + $0x18] sm:$0xff]
    %v2013 = vld [vmem:[#allocation2 + $0x20] sm:$0xff]
    %v2014 = vld [vmem:[#allocation2 + $0x28] sm:$0xff]
    %v2015 = vld [vmem:[#allocation2 + $0x30] sm:$0xff]
    %v2016 = vld [vmem:[#allocation2 + $0x38] sm:$0xff]
    %v2017 = vld [vmem:[#allocation2 + $0x40] sm:$0xff]
    %v2018 = vld [vmem:[#allocation2 + $0x48] sm:$0xff]
    %v2019 = vld [vmem:[#allocation2 + $0x50] sm:$0xff]
    %v2020 = vld [vmem:[#allocation2 + $0x58] sm:$0xff]
    %v2021 = vld [vmem:[#allocation2 + $0x60] sm:$0xff]
    %v2022 = vld [vmem:[#allocation2 + $0x68] sm:$0xff]
    %v2023 = vld [vmem:[#allocation2 + $0x70] sm:$0xff]
    %v2024 = vld [vmem:[#allocation2 + $0x78] sm:$0xff]
    %v2025 = vld [vmem:[#allocation2 + $0x80] sm:$0xff]
    %v2026 = vld [vmem:[#allocation2 + $0x88] sm:$0xff]
    %v2027 = vld [vmem:[#allocation2 + $0x90] sm:$0xff]
    %v2028 = vld [vmem:[#allocation2 + $0x98] sm:$0xff]
    %v2029 = vld [vmem:[#allocation2 + $0xa0] sm:$0xff]
    %v2030 = vld [vmem:[#allocation2 + $0xa8] sm:$0xff]
    %v2031 = vld [vmem:[#allocation2 + $0xb0] sm:$0xff]
    %v2032 = vld [vmem:[#allocation2 + $0xb8] sm:$0xff]
    %v2033 = vld [vmem:[#allocation2 + $0xc0] sm:$0xff]
    %v2034 = vld [vmem:[#allocation2 + $0xc8] sm:$0xff]
    %v2035 = vld [vmem:[#allocation2 + $0xd0] sm:$0xff]
    %v2036 = vld [vmem:[#allocation2 + $0xd8] sm:$0xff]
    %v2037 = vld [vmem:[#allocation2 + $0xe0] sm:$0xff]
    %v2038 = vld [vmem:[#allocation2 + $0xe8] sm:$0xff]
    %v2039 = vld [vmem:[#allocation2 + $0xf0] sm:$0xff]
    %v2040 = vld [vmem:[#allocation2 + $0xf8] sm:$0xff]
    %v2041 = vpack.c.bf16 %v2011, %v2009
    %v2042 = vpack.c.bf16 %v2012, %v2010
    %v2043 = vpack.c.bf16 %v2015, %v2013
    %v2044 = vpack.c.bf16 %v2016, %v2014
    %v2045 = vpack.c.bf16 %v2019, %v2017
    %v2046 = vpack.c.bf16 %v2020, %v2018
    %v2047 = vpack.c.bf16 %v2023, %v2021
    %v2048 = vpack.c.bf16 %v2024, %v2022
    %v2049 = vpack.c.bf16 %v2027, %v2025
    %v2050 = vpack.c.bf16 %v2028, %v2026
    %v2051 = vpack.c.bf16 %v2031, %v2029
    %v2052 = vpack.c.bf16 %v2032, %v2030
    %v2053 = vpack.c.bf16 %v2035, %v2033
    %v2054 = vpack.c.bf16 %v2036, %v2034
    %v2055 = vpack.c.bf16 %v2039, %v2037
    %v2056 = vpack.c.bf16 %v2040, %v2038
    %2057 = vmatprep.subr.bf16.mxu0 %v2042
    %2058 = vmatpush1.bf16.msra.mxu0 %v2041
    %2059 = vmatprep.subr.bf16.mxu0 %v2044
    %2060 = vmatpush1.bf16.msra.mxu0 %v2043
    %2061 = vmatprep.subr.bf16.mxu0 %v2046
    %2062 = vmatpush1.bf16.msra.mxu0 %v2045
    %2063 = vmatprep.subr.bf16.mxu0 %v2048
    %2064 = vmatpush1.bf16.msra.mxu0 %v2047
    %2065 = vmatprep.subr.bf16.mxu0 %v2050
    %2066 = vmatpush1.bf16.msra.mxu0 %v2049
    %2067 = vmatprep.subr.bf16.mxu0 %v2052
    %2068 = vmatpush1.bf16.msra.mxu0 %v2051
    %2069 = vmatprep.subr.bf16.mxu0 %v2054
    %2070 = vmatpush1.bf16.msra.mxu0 %v2053
    %2071 = vmatprep.subr.bf16.mxu0 %v2056
    %2072 = vmatpush1.bf16.msra.mxu0 %v2055
    %2073 = vmatprep.subr.bf16.mxu0 0
    %2074 = vmatpush1.bf16.msra.mxu0 0
    %2075 = vmatprep.subr.bf16.mxu0 0
    %2076 = vmatpush1.bf16.msra.mxu0 0
    %2077 = vmatprep.subr.bf16.mxu0 0
    %2078 = vmatpush1.bf16.msra.mxu0 0
    %2079 = vmatprep.subr.bf16.mxu0 0
    %2080 = vmatpush1.bf16.msra.mxu0 0
    %2081 = vmatprep.subr.bf16.mxu0 0
    %2082 = vmatpush1.bf16.msra.mxu0 0
    %2083 = vmatprep.subr.bf16.mxu0 0
    %2084 = vmatpush1.bf16.msra.mxu0 0
    %2085 = vmatprep.subr.bf16.mxu0 0
    %2086 = vmatpush1.bf16.msra.mxu0 0
    %2087 = vmatprep.subr.bf16.mxu0 0
    %2088 = vmatpush1.bf16.msra.mxu0 0
    %2089 = vmatprep.mubr.bf16.mxu0 0
    %2090 = vmatmul.mubr.bf16.gmra.mrb[0].mxu0 %v289
    %v2091 = vpop.f32.mrb[0].mxu0
    %v2092 = vadd.f32 0.0, %v2091
    %v2093 = vpop.f32.mrb[0].mxu0
    %v2094 = vadd.f32 0.0, %v2093
    %v2095 = vpop.f32.mrb[0].mxu0
    %v2096 = vadd.f32 0.0, %v2095
    %v2097 = vpop.f32.mrb[0].mxu0
    %v2098 = vadd.f32 0.0, %v2097
    %2099 = vmatprep.mubr.bf16.mxu0 0
    %2100 = vmatmul.mubr.bf16.gmra.mrb[0].mxu0 %v290
    %v2101 = vpop.f32.mrb[0].mxu0
    %v2102 = vadd.f32 0.0, %v2101
    %v2103 = vpop.f32.mrb[0].mxu0
    %v2104 = vadd.f32 0.0, %v2103
    %v2105 = vpop.f32.mrb[0].mxu0
    %v2106 = vadd.f32 0.0, %v2105
    %v2107 = vpop.f32.mrb[0].mxu0
    %v2108 = vadd.f32 0.0, %v2107
    %2109 = vmatprep.mubr.bf16.mxu0 0
    %2110 = vmatmul.mubr.bf16.gmra.mrb[0].mxu0 %v291
    %v2111 = vpop.f32.mrb[0].mxu0
    %v2112 = vadd.f32 0.0, %v2111
    %v2113 = vpop.f32.mrb[0].mxu0
    %v2114 = vadd.f32 0.0, %v2113
    %v2115 = vpop.f32.mrb[0].mxu0
    %v2116 = vadd.f32 0.0, %v2115
    %v2117 = vpop.f32.mrb[0].mxu0
    %v2118 = vadd.f32 0.0, %v2117
    %2119 = vmatprep.mubr.bf16.mxu0 0
    %2120 = vmatmul.mubr.bf16.gmra.mrb[0].mxu0 %v292
    %v2121 = vpop.f32.mrb[0].mxu0
    %v2122 = vadd.f32 0.0, %v2121
    %v2123 = vpop.f32.mrb[0].mxu0
    %v2124 = vadd.f32 0.0, %v2123
    %v2125 = vpop.f32.mrb[0].mxu0
    %v2126 = vadd.f32 0.0, %v2125
    %v2127 = vpop.f32.mrb[0].mxu0
    %v2128 = vadd.f32 0.0, %v2127
    %2129 = vmatprep.mubr.bf16.mxu0 0
    %2130 = vmatmul.mubr.bf16.gmra.mrb[0].mxu0 %v293
    %v2131 = vpop.f32.mrb[0].mxu0
    %v2132 = vadd.f32 0.0, %v2131
    %v2133 = vpop.f32.mrb[0].mxu0
    %v2134 = vadd.f32 0.0, %v2133
    %v2135 = vpop.f32.mrb[0].mxu0
    %v2136 = vadd.f32 0.0, %v2135
    %v2137 = vpop.f32.mrb[0].mxu0
    %v2138 = vadd.f32 0.0, %v2137
    %2139 = vmatprep.mubr.bf16.mxu0 0
    %2140 = vmatmul.mubr.bf16.gmra.mrb[0].mxu0 %v294
    %v2141 = vpop.f32.mrb[0].mxu0
    %v2142 = vadd.f32 0.0, %v2141
    %v2143 = vpop.f32.mrb[0].mxu0
    %v2144 = vadd.f32 0.0, %v2143
    %v2145 = vpop.f32.mrb[0].mxu0
    %v2146 = vadd.f32 0.0, %v2145
    %v2147 = vpop.f32.mrb[0].mxu0
    %v2148 = vadd.f32 0.0, %v2147
    %2149 = vmatprep.mubr.bf16.mxu0 0
    %2150 = vmatmul.mubr.bf16.gmra.mrb[0].mxu0 %v295
    %v2151 = vpop.f32.mrb[0].mxu0
    %v2152 = vadd.f32 0.0, %v2151
    %v2153 = vpop.f32.mrb[0].mxu0
    %v2154 = vadd.f32 0.0, %v2153
    %v2155 = vpop.f32.mrb[0].mxu0
    %v2156 = vadd.f32 0.0, %v2155
    %v2157 = vpop.f32.mrb[0].mxu0
    %v2158 = vadd.f32 0.0, %v2157
    %2159 = vmatprep.mubr.bf16.mxu0 0
    %2160 = vmatmul.mubr.bf16.gmra.mrb[0].mxu0 %v296
    %v2161 = vpop.f32.mrb[0].mxu0
    %v2162 = vadd.f32 0.0, %v2161
    %v2163 = vpop.f32.mrb[0].mxu0
    %v2164 = vadd.f32 0.0, %v2163
    %v2165 = vpop.f32.mrb[0].mxu0
    %v2166 = vadd.f32 0.0, %v2165
    %v2167 = vpop.f32.mrb[0].mxu0
    %v2168 = vadd.f32 0.0, %v2167
    %2169 = vdwg.mxu0
    %v2170 = vpack.c.bf16 %v2096, %v2092
    %v2171 = vpack.c.bf16 %v2098, %v2094
    %v2172 = vpack.c.bf16 %v2106, %v2102
    %v2173 = vpack.c.bf16 %v2108, %v2104
    %v2174 = vpack.c.bf16 %v2116, %v2112
    %v2175 = vpack.c.bf16 %v2118, %v2114
    %v2176 = vpack.c.bf16 %v2126, %v2122
    %v2177 = vpack.c.bf16 %v2128, %v2124
    %v2178 = vpack.c.bf16 %v2136, %v2132
    %v2179 = vpack.c.bf16 %v2138, %v2134
    %v2180 = vpack.c.bf16 %v2146, %v2142
    %v2181 = vpack.c.bf16 %v2148, %v2144
    %v2182 = vpack.c.bf16 %v2156, %v2152
    %v2183 = vpack.c.bf16 %v2158, %v2154
    %v2184 = vpack.c.bf16 %v2166, %v2162
    %v2185 = vpack.c.bf16 %v2168, %v2164
    %2186 = vmatprep.subr.bf16.mxu0 %v2042
    %2187 = vmatpush1.bf16.msra.mxu0 %v2041
    %2188 = vmatprep.subr.bf16.mxu0 %v2044
    %2189 = vmatpush1.bf16.msra.mxu0 %v2043
    %2190 = vmatprep.subr.bf16.mxu0 %v2046
    %2191 = vmatpush1.bf16.msra.mxu0 %v2045
    %2192 = vmatprep.subr.bf16.mxu0 %v2048
    %2193 = vmatpush1.bf16.msra.mxu0 %v2047
    %2194 = vmatprep.subr.bf16.mxu0 %v2050
    %2195 = vmatpush1.bf16.msra.mxu0 %v2049
    %2196 = vmatprep.subr.bf16.mxu0 %v2052
    %2197 = vmatpush1.bf16.msra.mxu0 %v2051
    %2198 = vmatprep.subr.bf16.mxu0 %v2054
    %2199 = vmatpush1.bf16.msra.mxu0 %v2053
    %2200 = vmatprep.subr.bf16.mxu0 %v2056
    %2201 = vmatpush1.bf16.msra.mxu0 %v2055
    %2202 = vmatprep.subr.bf16.mxu0 0
    %2203 = vmatpush1.bf16.msra.mxu0 0
    %2204 = vmatprep.subr.bf16.mxu0 0
    %2205 = vmatpush1.bf16.msra.mxu0 0
    %2206 = vmatprep.subr.bf16.mxu0 0
    %2207 = vmatpush1.bf16.msra.mxu0 0
    %2208 = vmatprep.subr.bf16.mxu0 0
    %2209 = vmatpush1.bf16.msra.mxu0 0
    %2210 = vmatprep.subr.bf16.mxu0 0
    %2211 = vmatpush1.bf16.msra.mxu0 0
    %2212 = vmatprep.subr.bf16.mxu0 0
    %2213 = vmatpush1.bf16.msra.mxu0 0
    %2214 = vmatprep.subr.bf16.mxu0 0
    %2215 = vmatpush1.bf16.msra.mxu0 0
    %2216 = vmatprep.subr.bf16.mxu0 0
    %2217 = vmatpush1.bf16.msra.mxu0 0
    %2218 = vmatprep.mubr.bf16.mxu0 0
    %2219 = vmatmul.mubr.bf16.gmra.mrb[0].mxu0 %v466
    %v2220 = vpop.f32.mrb[0].mxu0
    %v2221 = vadd.f32 0.0, %v2220
    %v2222 = vpop.f32.mrb[0].mxu0
    %v2223 = vadd.f32 0.0, %v2222
    %v2224 = vpop.f32.mrb[0].mxu0
    %v2225 = vadd.f32 0.0, %v2224
    %v2226 = vpop.f32.mrb[0].mxu0
    %v2227 = vadd.f32 0.0, %v2226
    %2228 = vmatprep.mubr.bf16.mxu0 0
    %2229 = vmatmul.mubr.bf16.gmra.mrb[0].mxu0 %v467
    %v2230 = vpop.f32.mrb[0].mxu0
    %v2231 = vadd.f32 0.0, %v2230
    %v2232 = vpop.f32.mrb[0].mxu0
    %v2233 = vadd.f32 0.0, %v2232
    %v2234 = vpop.f32.mrb[0].mxu0
    %v2235 = vadd.f32 0.0, %v2234
    %v2236 = vpop.f32.mrb[0].mxu0
    %v2237 = vadd.f32 0.0, %v2236
    %2238 = vmatprep.mubr.bf16.mxu0 0
    %2239 = vmatmul.mubr.bf16.gmra.mrb[0].mxu0 %v468
    %v2240 = vpop.f32.mrb[0].mxu0
    %v2241 = vadd.f32 0.0, %v2240
    %v2242 = vpop.f32.mrb[0].mxu0
    %v2243 = vadd.f32 0.0, %v2242
    %v2244 = vpop.f32.mrb[0].mxu0
    %v2245 = vadd.f32 0.0, %v2244
    %v2246 = vpop.f32.mrb[0].mxu0
    %v2247 = vadd.f32 0.0, %v2246
    %2248 = vmatprep.mubr.bf16.mxu0 0
    %2249 = vmatmul.mubr.bf16.gmra.mrb[0].mxu0 %v469
    %v2250 = vpop.f32.mrb[0].mxu0
    %v2251 = vadd.f32 0.0, %v2250
    %v2252 = vpop.f32.mrb[0].mxu0
    %v2253 = vadd.f32 0.0, %v2252
    %v2254 = vpop.f32.mrb[0].mxu0
    %v2255 = vadd.f32 0.0, %v2254
    %v2256 = vpop.f32.mrb[0].mxu0
    %v2257 = vadd.f32 0.0, %v2256
    %2258 = vmatprep.mubr.bf16.mxu0 0
    %2259 = vmatmul.mubr.bf16.gmra.mrb[0].mxu0 %v470
    %v2260 = vpop.f32.mrb[0].mxu0
    %v2261 = vadd.f32 0.0, %v2260
    %v2262 = vpop.f32.mrb[0].mxu0
    %v2263 = vadd.f32 0.0, %v2262
    %v2264 = vpop.f32.mrb[0].mxu0
    %v2265 = vadd.f32 0.0, %v2264
    %v2266 = vpop.f32.mrb[0].mxu0
    %v2267 = vadd.f32 0.0, %v2266
    %2268 = vmatprep.mubr.bf16.mxu0 0
    %2269 = vmatmul.mubr.bf16.gmra.mrb[0].mxu0 %v471
    %v2270 = vpop.f32.mrb[0].mxu0
    %v2271 = vadd.f32 0.0, %v2270
    %v2272 = vpop.f32.mrb[0].mxu0
    %v2273 = vadd.f32 0.0, %v2272
    %v2274 = vpop.f32.mrb[0].mxu0
    %v2275 = vadd.f32 0.0, %v2274
    %v2276 = vpop.f32.mrb[0].mxu0
    %v2277 = vadd.f32 0.0, %v2276
    %2278 = vmatprep.mubr.bf16.mxu0 0
    %2279 = vmatmul.mubr.bf16.gmra.mrb[0].mxu0 %v472
    %v2280 = vpop.f32.mrb[0].mxu0
    %v2281 = vadd.f32 0.0, %v2280
    %v2282 = vpop.f32.mrb[0].mxu0
    %v2283 = vadd.f32 0.0, %v2282
    %v2284 = vpop.f32.mrb[0].mxu0
    %v2285 = vadd.f32 0.0, %v2284
    %v2286 = vpop.f32.mrb[0].mxu0
    %v2287 = vadd.f32 0.0, %v2286
    %2288 = vmatprep.mubr.bf16.mxu0 0
    %2289 = vmatmul.mubr.bf16.gmra.mrb[0].mxu0 %v473
    %v2290 = vpop.f32.mrb[0].mxu0
    %v2291 = vadd.f32 0.0, %v2290
    %v2292 = vpop.f32.mrb[0].mxu0
    %v2293 = vadd.f32 0.0, %v2292
    %v2294 = vpop.f32.mrb[0].mxu0
    %v2295 = vadd.f32 0.0, %v2294
    %v2296 = vpop.f32.mrb[0].mxu0
    %v2297 = vadd.f32 0.0, %v2296
    %2298 = vdwg.mxu0
    %v2299 = vpack.c.bf16 %v2225, %v2221
    %v2300 = vpack.c.bf16 %v2227, %v2223
    %v2301 = vpack.c.bf16 %v2235, %v2231
    %v2302 = vpack.c.bf16 %v2237, %v2233
    %v2303 = vpack.c.bf16 %v2245, %v2241
    %v2304 = vpack.c.bf16 %v2247, %v2243
    %v2305 = vpack.c.bf16 %v2255, %v2251
    %v2306 = vpack.c.bf16 %v2257, %v2253
    %v2307 = vpack.c.bf16 %v2265, %v2261
    %v2308 = vpack.c.bf16 %v2267, %v2263
    %v2309 = vpack.c.bf16 %v2275, %v2271
    %v2310 = vpack.c.bf16 %v2277, %v2273
    %v2311 = vpack.c.bf16 %v2285, %v2281
    %v2312 = vpack.c.bf16 %v2287, %v2283
    %v2313 = vpack.c.bf16 %v2295, %v2291
    %v2314 = vpack.c.bf16 %v2297, %v2293
    %s2315 = scalar_lea.vmem [#allocation5], 768
    %v2316 = vld [vmem:[%s2315] sm:$0xff]
    %v2317 = vld [vmem:[%s2315 + $0x8] sm:$0xff]
    %v2318 = vld [vmem:[%s2315 + $0x10] sm:$0xff]
    %v2319 = vld [vmem:[%s2315 + $0x18] sm:$0xff]
    %v2320 = vld [vmem:[%s2315 + $0x20] sm:$0xff]
    %v2321 = vld [vmem:[%s2315 + $0x28] sm:$0xff]
    %v2322 = vld [vmem:[%s2315 + $0x30] sm:$0xff]
    %v2323 = vld [vmem:[%s2315 + $0x38] sm:$0xff]
    %v2324 = vld [vmem:[%s2315 + $0x40] sm:$0xff]
    %v2325 = vld [vmem:[%s2315 + $0x48] sm:$0xff]
    %v2326 = vld [vmem:[%s2315 + $0x50] sm:$0xff]
    %v2327 = vld [vmem:[%s2315 + $0x58] sm:$0xff]
    %v2328 = vld [vmem:[%s2315 + $0x60] sm:$0xff]
    %v2329 = vld [vmem:[%s2315 + $0x68] sm:$0xff]
    %v2330 = vld [vmem:[%s2315 + $0x70] sm:$0xff]
    %v2331 = vld [vmem:[%s2315 + $0x78] sm:$0xff]
    %v2332 = vld [vmem:[%s2315 + $0x80] sm:$0xff]
    %v2333 = vld [vmem:[%s2315 + $0x88] sm:$0xff]
    %v2334 = vld [vmem:[%s2315 + $0x90] sm:$0xff]
    %v2335 = vld [vmem:[%s2315 + $0x98] sm:$0xff]
    %v2336 = vld [vmem:[%s2315 + $0xa0] sm:$0xff]
    %v2337 = vld [vmem:[%s2315 + $0xa8] sm:$0xff]
    %v2338 = vld [vmem:[%s2315 + $0xb0] sm:$0xff]
    %v2339 = vld [vmem:[%s2315 + $0xb8] sm:$0xff]
    %v2340 = vld [vmem:[%s2315 + $0xc0] sm:$0xff]
    %v2341 = vld [vmem:[%s2315 + $0xc8] sm:$0xff]
    %v2342 = vld [vmem:[%s2315 + $0xd0] sm:$0xff]
    %v2343 = vld [vmem:[%s2315 + $0xd8] sm:$0xff]
    %v2344 = vld [vmem:[%s2315 + $0xe0] sm:$0xff]
    %v2345 = vld [vmem:[%s2315 + $0xe8] sm:$0xff]
    %v2346 = vld [vmem:[%s2315 + $0xf0] sm:$0xff]
    %v2347 = vld [vmem:[%s2315 + $0xf8] sm:$0xff]
    %s2348 = scalar_lea.vmem [#allocation5], 1024
    %v2349 = vld [vmem:[%s2348] sm:$0xff]
    %v2350 = vld [vmem:[%s2348 + $0x8] sm:$0xff]
    %v2351 = vld [vmem:[%s2348 + $0x10] sm:$0xff]
    %v2352 = vld [vmem:[%s2348 + $0x18] sm:$0xff]
    %v2353 = vld [vmem:[%s2348 + $0x20] sm:$0xff]
    %v2354 = vld [vmem:[%s2348 + $0x28] sm:$0xff]
    %v2355 = vld [vmem:[%s2348 + $0x30] sm:$0xff]
    %v2356 = vld [vmem:[%s2348 + $0x38] sm:$0xff]
    %v2357 = vld [vmem:[%s2348 + $0x40] sm:$0xff]
    %v2358 = vld [vmem:[%s2348 + $0x48] sm:$0xff]
    %v2359 = vld [vmem:[%s2348 + $0x50] sm:$0xff]
    %v2360 = vld [vmem:[%s2348 + $0x58] sm:$0xff]
    %v2361 = vld [vmem:[%s2348 + $0x60] sm:$0xff]
    %v2362 = vld [vmem:[%s2348 + $0x68] sm:$0xff]
    %v2363 = vld [vmem:[%s2348 + $0x70] sm:$0xff]
    %v2364 = vld [vmem:[%s2348 + $0x78] sm:$0xff]
    %v2365 = vld [vmem:[%s2348 + $0x80] sm:$0xff]
    %v2366 = vld [vmem:[%s2348 + $0x88] sm:$0xff]
    %v2367 = vld [vmem:[%s2348 + $0x90] sm:$0xff]
    %v2368 = vld [vmem:[%s2348 + $0x98] sm:$0xff]
    %v2369 = vld [vmem:[%s2348 + $0xa0] sm:$0xff]
    %v2370 = vld [vmem:[%s2348 + $0xa8] sm:$0xff]
    %v2371 = vld [vmem:[%s2348 + $0xb0] sm:$0xff]
    %v2372 = vld [vmem:[%s2348 + $0xb8] sm:$0xff]
    %v2373 = vld [vmem:[%s2348 + $0xc0] sm:$0xff]
    %v2374 = vld [vmem:[%s2348 + $0xc8] sm:$0xff]
    %v2375 = vld [vmem:[%s2348 + $0xd0] sm:$0xff]
    %v2376 = vld [vmem:[%s2348 + $0xd8] sm:$0xff]
    %v2377 = vld [vmem:[%s2348 + $0xe0] sm:$0xff]
    %v2378 = vld [vmem:[%s2348 + $0xe8] sm:$0xff]
    %v2379 = vld [vmem:[%s2348 + $0xf0] sm:$0xff]
    %v2380 = vld [vmem:[%s2348 + $0xf8] sm:$0xff]
    %v2413 = vunpack.c.l.b16 %v2349
    %v2414 = vunpack.c.h.b16 %v2349
    %v2415 = vunpack.c.l.b16 %v2350
    %v2416 = vunpack.c.h.b16 %v2350
    %v2417 = vunpack.c.l.b16 %v2351
    %v2418 = vunpack.c.h.b16 %v2351
    %v2419 = vunpack.c.l.b16 %v2352
    %v2420 = vunpack.c.h.b16 %v2352
    %v2421 = vunpack.c.l.b16 %v2353
    %v2422 = vunpack.c.h.b16 %v2353
    %v2423 = vunpack.c.l.b16 %v2354
    %v2424 = vunpack.c.h.b16 %v2354
    %v2425 = vunpack.c.l.b16 %v2355
    %v2426 = vunpack.c.h.b16 %v2355
    %v2427 = vunpack.c.l.b16 %v2356
    %v2428 = vunpack.c.h.b16 %v2356
    %v2429 = vunpack.c.l.b16 %v2357
    %v2430 = vunpack.c.h.b16 %v2357
    %v2431 = vunpack.c.l.b16 %v2358
    %v2432 = vunpack.c.h.b16 %v2358
    %v2433 = vunpack.c.l.b16 %v2359
    %v2434 = vunpack.c.h.b16 %v2359
    %v2435 = vunpack.c.l.b16 %v2360
    %v2436 = vunpack.c.h.b16 %v2360
    %v2437 = vunpack.c.l.b16 %v2361
    %v2438 = vunpack.c.h.b16 %v2361
    %v2439 = vunpack.c.l.b16 %v2362
    %v2440 = vunpack.c.h.b16 %v2362
    %v2441 = vunpack.c.l.b16 %v2363
    %v2442 = vunpack.c.h.b16 %v2363
    %v2443 = vunpack.c.l.b16 %v2364
    %v2444 = vunpack.c.h.b16 %v2364
    %v2445 = vunpack.c.l.b16 %v2365
    %v2446 = vunpack.c.h.b16 %v2365
    %v2447 = vunpack.c.l.b16 %v2366
    %v2448 = vunpack.c.h.b16 %v2366
    %v2449 = vunpack.c.l.b16 %v2367
    %v2450 = vunpack.c.h.b16 %v2367
    %v2451 = vunpack.c.l.b16 %v2368
    %v2452 = vunpack.c.h.b16 %v2368
    %v2453 = vunpack.c.l.b16 %v2369
    %v2454 = vunpack.c.h.b16 %v2369
    %v2455 = vunpack.c.l.b16 %v2370
    %v2456 = vunpack.c.h.b16 %v2370
    %v2457 = vunpack.c.l.b16 %v2371
    %v2458 = vunpack.c.h.b16 %v2371
    %v2459 = vunpack.c.l.b16 %v2372
    %v2460 = vunpack.c.h.b16 %v2372
    %v2461 = vunpack.c.l.b16 %v2373
    %v2462 = vunpack.c.h.b16 %v2373
    %v2463 = vunpack.c.l.b16 %v2374
    %v2464 = vunpack.c.h.b16 %v2374
    %v2465 = vunpack.c.l.b16 %v2375
    %v2466 = vunpack.c.h.b16 %v2375
    %v2467 = vunpack.c.l.b16 %v2376
    %v2468 = vunpack.c.h.b16 %v2376
    %v2469 = vunpack.c.l.b16 %v2377
    %v2470 = vunpack.c.h.b16 %v2377
    %v2471 = vunpack.c.l.b16 %v2378
    %v2472 = vunpack.c.h.b16 %v2378
    %v2473 = vunpack.c.l.b16 %v2379
    %v2474 = vunpack.c.h.b16 %v2379
    %v2475 = vunpack.c.l.b16 %v2380
    %v2476 = vunpack.c.h.b16 %v2380
    %v2477 = vpack.c.b16 %v2415, %v2413
    %v2478 = vpack.c.b16 %v2416, %v2414
    %v2479 = vpack.c.b16 %v2419, %v2417
    %v2480 = vpack.c.b16 %v2420, %v2418
    %v2481 = vpack.c.b16 %v2423, %v2421
    %v2482 = vpack.c.b16 %v2424, %v2422
    %v2483 = vpack.c.b16 %v2427, %v2425
    %v2484 = vpack.c.b16 %v2428, %v2426
    %v2485 = vpack.c.b16 %v2431, %v2429
    %v2486 = vpack.c.b16 %v2432, %v2430
    %v2487 = vpack.c.b16 %v2435, %v2433
    %v2488 = vpack.c.b16 %v2436, %v2434
    %v2489 = vpack.c.b16 %v2439, %v2437
    %v2490 = vpack.c.b16 %v2440, %v2438
    %v2491 = vpack.c.b16 %v2443, %v2441
    %v2492 = vpack.c.b16 %v2444, %v2442
    %v2493 = vpack.c.b16 %v2447, %v2445
    %v2494 = vpack.c.b16 %v2448, %v2446
    %v2495 = vpack.c.b16 %v2451, %v2449
    %v2496 = vpack.c.b16 %v2452, %v2450
    %v2497 = vpack.c.b16 %v2455, %v2453
    %v2498 = vpack.c.b16 %v2456, %v2454
    %v2499 = vpack.c.b16 %v2459, %v2457
    %v2500 = vpack.c.b16 %v2460, %v2458
    %v2501 = vpack.c.b16 %v2463, %v2461
    %v2502 = vpack.c.b16 %v2464, %v2462
    %v2503 = vpack.c.b16 %v2467, %v2465
    %v2504 = vpack.c.b16 %v2468, %v2466
    %v2505 = vpack.c.b16 %v2471, %v2469
    %v2506 = vpack.c.b16 %v2472, %v2470
    %v2507 = vpack.c.b16 %v2475, %v2473
    %v2508 = vpack.c.b16 %v2476, %v2474
    %2541 = vmatprep.subr.bf16.mxu0 %v2478
    %2542 = vmatpush1.bf16.msra.mxu0 %v2477
    %2543 = vmatprep.subr.bf16.mxu0 %v2480
    %2544 = vmatpush1.bf16.msra.mxu0 %v2479
    %2545 = vmatprep.subr.bf16.mxu0 %v2482
    %2546 = vmatpush1.bf16.msra.mxu0 %v2481
    %2547 = vmatprep.subr.bf16.mxu0 %v2484
    %2548 = vmatpush1.bf16.msra.mxu0 %v2483
    %2549 = vmatprep.subr.bf16.mxu0 %v2486
    %2550 = vmatpush1.bf16.msra.mxu0 %v2485
    %2551 = vmatprep.subr.bf16.mxu0 %v2488
    %2552 = vmatpush1.bf16.msra.mxu0 %v2487
    %2553 = vmatprep.subr.bf16.mxu0 %v2490
    %2554 = vmatpush1.bf16.msra.mxu0 %v2489
    %2555 = vmatprep.subr.bf16.mxu0 %v2492
    %2556 = vmatpush1.bf16.msra.mxu0 %v2491
    %2557 = vmatprep.subr.bf16.mxu0 %v2494
    %2558 = vmatpush1.bf16.msra.mxu0 %v2493
    %2559 = vmatprep.subr.bf16.mxu0 %v2496
    %2560 = vmatpush1.bf16.msra.mxu0 %v2495
    %2561 = vmatprep.subr.bf16.mxu0 %v2498
    %2562 = vmatpush1.bf16.msra.mxu0 %v2497
    %2563 = vmatprep.subr.bf16.mxu0 %v2500
    %2564 = vmatpush1.bf16.msra.mxu0 %v2499
    %2565 = vmatprep.subr.bf16.mxu0 %v2502
    %2566 = vmatpush1.bf16.msra.mxu0 %v2501
    %2567 = vmatprep.subr.bf16.mxu0 %v2504
    %2568 = vmatpush1.bf16.msra.mxu0 %v2503
    %2569 = vmatprep.subr.bf16.mxu0 %v2506
    %2570 = vmatpush1.bf16.msra.mxu0 %v2505
    %2571 = vmatprep.subr.bf16.mxu0 %v2508
    %2572 = vmatpush1.bf16.msra.mxu0 %v2507
    %2573 = vmatprep.mubr.bf16.mxu0 %v2042
    %2574 = vmatmul.mubr.bf16.gmra.mrb[0].mxu0 %v2041
    %v2575 = vpop.f32.mrb[0].mxu0
    %v2576 = vadd.f32 0.0, %v2575
    %v2577 = vpop.f32.mrb[0].mxu0
    %v2578 = vadd.f32 0.0, %v2577
    %v2579 = vpop.f32.mrb[0].mxu0
    %v2580 = vadd.f32 0.0, %v2579
    %v2581 = vpop.f32.mrb[0].mxu0
    %v2582 = vadd.f32 0.0, %v2581
    %2583 = vmatprep.mubr.bf16.mxu0 %v2044
    %2584 = vmatmul.mubr.bf16.gmra.mrb[0].mxu0 %v2043
    %v2585 = vpop.f32.mrb[0].mxu0
    %v2586 = vadd.f32 0.0, %v2585
    %v2587 = vpop.f32.mrb[0].mxu0
    %v2588 = vadd.f32 0.0, %v2587
    %v2589 = vpop.f32.mrb[0].mxu0
    %v2590 = vadd.f32 0.0, %v2589
    %v2591 = vpop.f32.mrb[0].mxu0
    %v2592 = vadd.f32 0.0, %v2591
    %2593 = vmatprep.mubr.bf16.mxu0 %v2046
    %2594 = vmatmul.mubr.bf16.gmra.mrb[0].mxu0 %v2045
    %v2595 = vpop.f32.mrb[0].mxu0
    %v2596 = vadd.f32 0.0, %v2595
    %v2597 = vpop.f32.mrb[0].mxu0
    %v2598 = vadd.f32 0.0, %v2597
    %v2599 = vpop.f32.mrb[0].mxu0
    %v2600 = vadd.f32 0.0, %v2599
    %v2601 = vpop.f32.mrb[0].mxu0
    %v2602 = vadd.f32 0.0, %v2601
    %2603 = vmatprep.mubr.bf16.mxu0 %v2048
    %2604 = vmatmul.mubr.bf16.gmra.mrb[0].mxu0 %v2047
    %v2605 = vpop.f32.mrb[0].mxu0
    %v2606 = vadd.f32 0.0, %v2605
    %v2607 = vpop.f32.mrb[0].mxu0
    %v2608 = vadd.f32 0.0, %v2607
    %v2609 = vpop.f32.mrb[0].mxu0
    %v2610 = vadd.f32 0.0, %v2609
    %v2611 = vpop.f32.mrb[0].mxu0
    %v2612 = vadd.f32 0.0, %v2611
    %2613 = vmatprep.mubr.bf16.mxu0 %v2050
    %2614 = vmatmul.mubr.bf16.gmra.mrb[0].mxu0 %v2049
    %v2615 = vpop.f32.mrb[0].mxu0
    %v2616 = vadd.f32 0.0, %v2615
    %v2617 = vpop.f32.mrb[0].mxu0
    %v2618 = vadd.f32 0.0, %v2617
    %v2619 = vpop.f32.mrb[0].mxu0
    %v2620 = vadd.f32 0.0, %v2619
    %v2621 = vpop.f32.mrb[0].mxu0
    %v2622 = vadd.f32 0.0, %v2621
    %2623 = vmatprep.mubr.bf16.mxu0 %v2052
    %2624 = vmatmul.mubr.bf16.gmra.mrb[0].mxu0 %v2051
    %v2625 = vpop.f32.mrb[0].mxu0
    %v2626 = vadd.f32 0.0, %v2625
    %v2627 = vpop.f32.mrb[0].mxu0
    %v2628 = vadd.f32 0.0, %v2627
    %v2629 = vpop.f32.mrb[0].mxu0
    %v2630 = vadd.f32 0.0, %v2629
    %v2631 = vpop.f32.mrb[0].mxu0
    %v2632 = vadd.f32 0.0, %v2631
    %2633 = vmatprep.mubr.bf16.mxu0 %v2054
    %2634 = vmatmul.mubr.bf16.gmra.mrb[0].mxu0 %v2053
    %v2635 = vpop.f32.mrb[0].mxu0
    %v2636 = vadd.f32 0.0, %v2635
    %v2637 = vpop.f32.mrb[0].mxu0
    %v2638 = vadd.f32 0.0, %v2637
    %v2639 = vpop.f32.mrb[0].mxu0
    %v2640 = vadd.f32 0.0, %v2639
    %v2641 = vpop.f32.mrb[0].mxu0
    %v2642 = vadd.f32 0.0, %v2641
    %2643 = vmatprep.mubr.bf16.mxu0 %v2056
    %2644 = vmatmul.mubr.bf16.gmra.mrb[0].mxu0 %v2055
    %v2645 = vpop.f32.mrb[0].mxu0
    %v2646 = vadd.f32 0.0, %v2645
    %v2647 = vpop.f32.mrb[0].mxu0
    %v2648 = vadd.f32 0.0, %v2647
    %v2649 = vpop.f32.mrb[0].mxu0
    %v2650 = vadd.f32 0.0, %v2649
    %v2651 = vpop.f32.mrb[0].mxu0
    %v2652 = vadd.f32 0.0, %v2651
    %2653 = vdwg.mxu0
    %v2686 = vunpack.c.l.b16 %v2316
    %v2687 = vunpack.c.h.b16 %v2316
    %v2688 = vunpack.c.l.b16 %v2317
    %v2689 = vunpack.c.h.b16 %v2317
    %v2690 = vunpack.c.l.b16 %v2318
    %v2691 = vunpack.c.h.b16 %v2318
    %v2692 = vunpack.c.l.b16 %v2319
    %v2693 = vunpack.c.h.b16 %v2319
    %v2694 = vunpack.c.l.b16 %v2320
    %v2695 = vunpack.c.h.b16 %v2320
    %v2696 = vunpack.c.l.b16 %v2321
    %v2697 = vunpack.c.h.b16 %v2321
    %v2698 = vunpack.c.l.b16 %v2322
    %v2699 = vunpack.c.h.b16 %v2322
    %v2700 = vunpack.c.l.b16 %v2323
    %v2701 = vunpack.c.h.b16 %v2323
    %v2702 = vunpack.c.l.b16 %v2324
    %v2703 = vunpack.c.h.b16 %v2324
    %v2704 = vunpack.c.l.b16 %v2325
    %v2705 = vunpack.c.h.b16 %v2325
    %v2706 = vunpack.c.l.b16 %v2326
    %v2707 = vunpack.c.h.b16 %v2326
    %v2708 = vunpack.c.l.b16 %v2327
    %v2709 = vunpack.c.h.b16 %v2327
    %v2710 = vunpack.c.l.b16 %v2328
    %v2711 = vunpack.c.h.b16 %v2328
    %v2712 = vunpack.c.l.b16 %v2329
    %v2713 = vunpack.c.h.b16 %v2329
    %v2714 = vunpack.c.l.b16 %v2330
    %v2715 = vunpack.c.h.b16 %v2330
    %v2716 = vunpack.c.l.b16 %v2331
    %v2717 = vunpack.c.h.b16 %v2331
    %v2718 = vunpack.c.l.b16 %v2332
    %v2719 = vunpack.c.h.b16 %v2332
    %v2720 = vunpack.c.l.b16 %v2333
    %v2721 = vunpack.c.h.b16 %v2333
    %v2722 = vunpack.c.l.b16 %v2334
    %v2723 = vunpack.c.h.b16 %v2334
    %v2724 = vunpack.c.l.b16 %v2335
    %v2725 = vunpack.c.h.b16 %v2335
    %v2726 = vunpack.c.l.b16 %v2336
    %v2727 = vunpack.c.h.b16 %v2336
    %v2728 = vunpack.c.l.b16 %v2337
    %v2729 = vunpack.c.h.b16 %v2337
    %v2730 = vunpack.c.l.b16 %v2338
    %v2731 = vunpack.c.h.b16 %v2338
    %v2732 = vunpack.c.l.b16 %v2339
    %v2733 = vunpack.c.h.b16 %v2339
    %v2734 = vunpack.c.l.b16 %v2340
    %v2735 = vunpack.c.h.b16 %v2340
    %v2736 = vunpack.c.l.b16 %v2341
    %v2737 = vunpack.c.h.b16 %v2341
    %v2738 = vunpack.c.l.b16 %v2342
    %v2739 = vunpack.c.h.b16 %v2342
    %v2740 = vunpack.c.l.b16 %v2343
    %v2741 = vunpack.c.h.b16 %v2343
    %v2742 = vunpack.c.l.b16 %v2344
    %v2743 = vunpack.c.h.b16 %v2344
    %v2744 = vunpack.c.l.b16 %v2345
    %v2745 = vunpack.c.h.b16 %v2345
    %v2746 = vunpack.c.l.b16 %v2346
    %v2747 = vunpack.c.h.b16 %v2346
    %v2748 = vunpack.c.l.b16 %v2347
    %v2749 = vunpack.c.h.b16 %v2347
    %v2750 = vpack.c.b16 %v2688, %v2686
    %v2751 = vpack.c.b16 %v2689, %v2687
    %v2752 = vpack.c.b16 %v2692, %v2690
    %v2753 = vpack.c.b16 %v2693, %v2691
    %v2754 = vpack.c.b16 %v2696, %v2694
    %v2755 = vpack.c.b16 %v2697, %v2695
    %v2756 = vpack.c.b16 %v2700, %v2698
    %v2757 = vpack.c.b16 %v2701, %v2699
    %v2758 = vpack.c.b16 %v2704, %v2702
    %v2759 = vpack.c.b16 %v2705, %v2703
    %v2760 = vpack.c.b16 %v2708, %v2706
    %v2761 = vpack.c.b16 %v2709, %v2707
    %v2762 = vpack.c.b16 %v2712, %v2710
    %v2763 = vpack.c.b16 %v2713, %v2711
    %v2764 = vpack.c.b16 %v2716, %v2714
    %v2765 = vpack.c.b16 %v2717, %v2715
    %v2766 = vpack.c.b16 %v2720, %v2718
    %v2767 = vpack.c.b16 %v2721, %v2719
    %v2768 = vpack.c.b16 %v2724, %v2722
    %v2769 = vpack.c.b16 %v2725, %v2723
    %v2770 = vpack.c.b16 %v2728, %v2726
    %v2771 = vpack.c.b16 %v2729, %v2727
    %v2772 = vpack.c.b16 %v2732, %v2730
    %v2773 = vpack.c.b16 %v2733, %v2731
    %v2774 = vpack.c.b16 %v2736, %v2734
    %v2775 = vpack.c.b16 %v2737, %v2735
    %v2776 = vpack.c.b16 %v2740, %v2738
    %v2777 = vpack.c.b16 %v2741, %v2739
    %v2778 = vpack.c.b16 %v2744, %v2742
    %v2779 = vpack.c.b16 %v2745, %v2743
    %v2780 = vpack.c.b16 %v2748, %v2746
    %v2781 = vpack.c.b16 %v2749, %v2747
    %2814 = vmatprep.subr.bf16.mxu0 %v2751
    %2815 = vmatpush1.bf16.msra.mxu0 %v2750
    %2816 = vmatprep.subr.bf16.mxu0 %v2753
    %2817 = vmatpush1.bf16.msra.mxu0 %v2752
    %2818 = vmatprep.subr.bf16.mxu0 %v2755
    %2819 = vmatpush1.bf16.msra.mxu0 %v2754
    %2820 = vmatprep.subr.bf16.mxu0 %v2757
    %2821 = vmatpush1.bf16.msra.mxu0 %v2756
    %2822 = vmatprep.subr.bf16.mxu0 %v2759
    %2823 = vmatpush1.bf16.msra.mxu0 %v2758
    %2824 = vmatprep.subr.bf16.mxu0 %v2761
    %2825 = vmatpush1.bf16.msra.mxu0 %v2760
    %2826 = vmatprep.subr.bf16.mxu0 %v2763
    %2827 = vmatpush1.bf16.msra.mxu0 %v2762
    %2828 = vmatprep.subr.bf16.mxu0 %v2765
    %2829 = vmatpush1.bf16.msra.mxu0 %v2764
    %2830 = vmatprep.subr.bf16.mxu0 %v2767
    %2831 = vmatpush1.bf16.msra.mxu0 %v2766
    %2832 = vmatprep.subr.bf16.mxu0 %v2769
    %2833 = vmatpush1.bf16.msra.mxu0 %v2768
    %2834 = vmatprep.subr.bf16.mxu0 %v2771
    %2835 = vmatpush1.bf16.msra.mxu0 %v2770
    %2836 = vmatprep.subr.bf16.mxu0 %v2773
    %2837 = vmatpush1.bf16.msra.mxu0 %v2772
    %2838 = vmatprep.subr.bf16.mxu0 %v2775
    %2839 = vmatpush1.bf16.msra.mxu0 %v2774
    %2840 = vmatprep.subr.bf16.mxu0 %v2777
    %2841 = vmatpush1.bf16.msra.mxu0 %v2776
    %2842 = vmatprep.subr.bf16.mxu0 %v2779
    %2843 = vmatpush1.bf16.msra.mxu0 %v2778
    %2844 = vmatprep.subr.bf16.mxu0 %v2781
    %2845 = vmatpush1.bf16.msra.mxu0 %v2780
    %2846 = vmatprep.mubr.bf16.mxu0 %v2171
    %2847 = vmatmul.mubr.bf16.gmra.mrb[0].mxu0 %v2170
    %v2848 = vpop.f32.mrb[0].mxu0
    %v2849 = vadd.f32 %v2576, %v2848
    %v2850 = vpop.f32.mrb[0].mxu0
    %v2851 = vadd.f32 %v2578, %v2850
    %v2852 = vpop.f32.mrb[0].mxu0
    %v2853 = vadd.f32 %v2580, %v2852
    %v2854 = vpop.f32.mrb[0].mxu0
    %v2855 = vadd.f32 %v2582, %v2854
    %2856 = vmatprep.mubr.bf16.mxu0 %v2173
    %2857 = vmatmul.mubr.bf16.gmra.mrb[0].mxu0 %v2172
    %v2858 = vpop.f32.mrb[0].mxu0
    %v2859 = vadd.f32 %v2586, %v2858
    %v2860 = vpop.f32.mrb[0].mxu0
    %v2861 = vadd.f32 %v2588, %v2860
    %v2862 = vpop.f32.mrb[0].mxu0
    %v2863 = vadd.f32 %v2590, %v2862
    %v2864 = vpop.f32.mrb[0].mxu0
    %v2865 = vadd.f32 %v2592, %v2864
    %2866 = vmatprep.mubr.bf16.mxu0 %v2175
    %2867 = vmatmul.mubr.bf16.gmra.mrb[0].mxu0 %v2174
    %v2868 = vpop.f32.mrb[0].mxu0
    %v2869 = vadd.f32 %v2596, %v2868
    %v2870 = vpop.f32.mrb[0].mxu0
    %v2871 = vadd.f32 %v2598, %v2870
    %v2872 = vpop.f32.mrb[0].mxu0
    %v2873 = vadd.f32 %v2600, %v2872
    %v2874 = vpop.f32.mrb[0].mxu0
    %v2875 = vadd.f32 %v2602, %v2874
    %2876 = vmatprep.mubr.bf16.mxu0 %v2177
    %2877 = vmatmul.mubr.bf16.gmra.mrb[0].mxu0 %v2176
    %v2878 = vpop.f32.mrb[0].mxu0
    %v2879 = vadd.f32 %v2606, %v2878
    %v2880 = vpop.f32.mrb[0].mxu0
    %v2881 = vadd.f32 %v2608, %v2880
    %v2882 = vpop.f32.mrb[0].mxu0
    %v2883 = vadd.f32 %v2610, %v2882
    %v2884 = vpop.f32.mrb[0].mxu0
    %v2885 = vadd.f32 %v2612, %v2884
    %2886 = vmatprep.mubr.bf16.mxu0 %v2179
    %2887 = vmatmul.mubr.bf16.gmra.mrb[0].mxu0 %v2178
    %v2888 = vpop.f32.mrb[0].mxu0
    %v2889 = vadd.f32 %v2616, %v2888
    %v2890 = vpop.f32.mrb[0].mxu0
    %v2891 = vadd.f32 %v2618, %v2890
    %v2892 = vpop.f32.mrb[0].mxu0
    %v2893 = vadd.f32 %v2620, %v2892
    %v2894 = vpop.f32.mrb[0].mxu0
    %v2895 = vadd.f32 %v2622, %v2894
    %2896 = vmatprep.mubr.bf16.mxu0 %v2181
    %2897 = vmatmul.mubr.bf16.gmra.mrb[0].mxu0 %v2180
    %v2898 = vpop.f32.mrb[0].mxu0
    %v2899 = vadd.f32 %v2626, %v2898
    %v2900 = vpop.f32.mrb[0].mxu0
    %v2901 = vadd.f32 %v2628, %v2900
    %v2902 = vpop.f32.mrb[0].mxu0
    %v2903 = vadd.f32 %v2630, %v2902
    %v2904 = vpop.f32.mrb[0].mxu0
    %v2905 = vadd.f32 %v2632, %v2904
    %2906 = vmatprep.mubr.bf16.mxu0 %v2183
    %2907 = vmatmul.mubr.bf16.gmra.mrb[0].mxu0 %v2182
    %v2908 = vpop.f32.mrb[0].mxu0
    %v2909 = vadd.f32 %v2636, %v2908
    %v2910 = vpop.f32.mrb[0].mxu0
    %v2911 = vadd.f32 %v2638, %v2910
    %v2912 = vpop.f32.mrb[0].mxu0
    %v2913 = vadd.f32 %v2640, %v2912
    %v2914 = vpop.f32.mrb[0].mxu0
    %v2915 = vadd.f32 %v2642, %v2914
    %2916 = vmatprep.mubr.bf16.mxu0 %v2185
    %2917 = vmatmul.mubr.bf16.gmra.mrb[0].mxu0 %v2184
    %v2918 = vpop.f32.mrb[0].mxu0
    %v2919 = vadd.f32 %v2646, %v2918
    %v2920 = vpop.f32.mrb[0].mxu0
    %v2921 = vadd.f32 %v2648, %v2920
    %v2922 = vpop.f32.mrb[0].mxu0
    %v2923 = vadd.f32 %v2650, %v2922
    %v2924 = vpop.f32.mrb[0].mxu0
    %v2925 = vadd.f32 %v2652, %v2924
    %2926 = vdwg.mxu0
    %s2927 = scalar_lea.vmem [#allocation5], 1280
    %v2928 = vld [vmem:[%s2927] sm:$0xff]
    %v2929 = vld [vmem:[%s2927 + $0x8] sm:$0xff]
    %v2930 = vld [vmem:[%s2927 + $0x10] sm:$0xff]
    %v2931 = vld [vmem:[%s2927 + $0x18] sm:$0xff]
    %v2932 = vld [vmem:[%s2927 + $0x20] sm:$0xff]
    %v2933 = vld [vmem:[%s2927 + $0x28] sm:$0xff]
    %v2934 = vld [vmem:[%s2927 + $0x30] sm:$0xff]
    %v2935 = vld [vmem:[%s2927 + $0x38] sm:$0xff]
    %v2936 = vld [vmem:[%s2927 + $0x40] sm:$0xff]
    %v2937 = vld [vmem:[%s2927 + $0x48] sm:$0xff]
    %v2938 = vld [vmem:[%s2927 + $0x50] sm:$0xff]
    %v2939 = vld [vmem:[%s2927 + $0x58] sm:$0xff]
    %v2940 = vld [vmem:[%s2927 + $0x60] sm:$0xff]
    %v2941 = vld [vmem:[%s2927 + $0x68] sm:$0xff]
    %v2942 = vld [vmem:[%s2927 + $0x70] sm:$0xff]
    %v2943 = vld [vmem:[%s2927 + $0x78] sm:$0xff]
    %v2944 = vld [vmem:[%s2927 + $0x80] sm:$0xff]
    %v2945 = vld [vmem:[%s2927 + $0x88] sm:$0xff]
    %v2946 = vld [vmem:[%s2927 + $0x90] sm:$0xff]
    %v2947 = vld [vmem:[%s2927 + $0x98] sm:$0xff]
    %v2948 = vld [vmem:[%s2927 + $0xa0] sm:$0xff]
    %v2949 = vld [vmem:[%s2927 + $0xa8] sm:$0xff]
    %v2950 = vld [vmem:[%s2927 + $0xb0] sm:$0xff]
    %v2951 = vld [vmem:[%s2927 + $0xb8] sm:$0xff]
    %v2952 = vld [vmem:[%s2927 + $0xc0] sm:$0xff]
    %v2953 = vld [vmem:[%s2927 + $0xc8] sm:$0xff]
    %v2954 = vld [vmem:[%s2927 + $0xd0] sm:$0xff]
    %v2955 = vld [vmem:[%s2927 + $0xd8] sm:$0xff]
    %v2956 = vld [vmem:[%s2927 + $0xe0] sm:$0xff]
    %v2957 = vld [vmem:[%s2927 + $0xe8] sm:$0xff]
    %v2958 = vld [vmem:[%s2927 + $0xf0] sm:$0xff]
    %v2959 = vld [vmem:[%s2927 + $0xf8] sm:$0xff]
    %v2992 = vunpack.c.l.b16 %v2928
    %v2993 = vunpack.c.h.b16 %v2928
    %v2994 = vunpack.c.l.b16 %v2929
    %v2995 = vunpack.c.h.b16 %v2929
    %v2996 = vunpack.c.l.b16 %v2930
    %v2997 = vunpack.c.h.b16 %v2930
    %v2998 = vunpack.c.l.b16 %v2931
    %v2999 = vunpack.c.h.b16 %v2931
    %v3000 = vunpack.c.l.b16 %v2932
    %v3001 = vunpack.c.h.b16 %v2932
    %v3002 = vunpack.c.l.b16 %v2933
    %v3003 = vunpack.c.h.b16 %v2933
    %v3004 = vunpack.c.l.b16 %v2934
    %v3005 = vunpack.c.h.b16 %v2934
    %v3006 = vunpack.c.l.b16 %v2935
    %v3007 = vunpack.c.h.b16 %v2935
    %v3008 = vunpack.c.l.b16 %v2936
    %v3009 = vunpack.c.h.b16 %v2936
    %v3010 = vunpack.c.l.b16 %v2937
    %v3011 = vunpack.c.h.b16 %v2937
    %v3012 = vunpack.c.l.b16 %v2938
    %v3013 = vunpack.c.h.b16 %v2938
    %v3014 = vunpack.c.l.b16 %v2939
    %v3015 = vunpack.c.h.b16 %v2939
    %v3016 = vunpack.c.l.b16 %v2940
    %v3017 = vunpack.c.h.b16 %v2940
    %v3018 = vunpack.c.l.b16 %v2941
    %v3019 = vunpack.c.h.b16 %v2941
    %v3020 = vunpack.c.l.b16 %v2942
    %v3021 = vunpack.c.h.b16 %v2942
    %v3022 = vunpack.c.l.b16 %v2943
    %v3023 = vunpack.c.h.b16 %v2943
    %v3024 = vunpack.c.l.b16 %v2944
    %v3025 = vunpack.c.h.b16 %v2944
    %v3026 = vunpack.c.l.b16 %v2945
    %v3027 = vunpack.c.h.b16 %v2945
    %v3028 = vunpack.c.l.b16 %v2946
    %v3029 = vunpack.c.h.b16 %v2946
    %v3030 = vunpack.c.l.b16 %v2947
    %v3031 = vunpack.c.h.b16 %v2947
    %v3032 = vunpack.c.l.b16 %v2948
    %v3033 = vunpack.c.h.b16 %v2948
    %v3034 = vunpack.c.l.b16 %v2949
    %v3035 = vunpack.c.h.b16 %v2949
    %v3036 = vunpack.c.l.b16 %v2950
    %v3037 = vunpack.c.h.b16 %v2950
    %v3038 = vunpack.c.l.b16 %v2951
    %v3039 = vunpack.c.h.b16 %v2951
    %v3040 = vunpack.c.l.b16 %v2952
    %v3041 = vunpack.c.h.b16 %v2952
    %v3042 = vunpack.c.l.b16 %v2953
    %v3043 = vunpack.c.h.b16 %v2953
    %v3044 = vunpack.c.l.b16 %v2954
    %v3045 = vunpack.c.h.b16 %v2954
    %v3046 = vunpack.c.l.b16 %v2955
    %v3047 = vunpack.c.h.b16 %v2955
    %v3048 = vunpack.c.l.b16 %v2956
    %v3049 = vunpack.c.h.b16 %v2956
    %v3050 = vunpack.c.l.b16 %v2957
    %v3051 = vunpack.c.h.b16 %v2957
    %v3052 = vunpack.c.l.b16 %v2958
    %v3053 = vunpack.c.h.b16 %v2958
    %v3054 = vunpack.c.l.b16 %v2959
    %v3055 = vunpack.c.h.b16 %v2959
    %v3056 = vpack.c.b16 %v2994, %v2992
    %v3057 = vpack.c.b16 %v2995, %v2993
    %v3058 = vpack.c.b16 %v2998, %v2996
    %v3059 = vpack.c.b16 %v2999, %v2997
    %v3060 = vpack.c.b16 %v3002, %v3000
    %v3061 = vpack.c.b16 %v3003, %v3001
    %v3062 = vpack.c.b16 %v3006, %v3004
    %v3063 = vpack.c.b16 %v3007, %v3005
    %v3064 = vpack.c.b16 %v3010, %v3008
    %v3065 = vpack.c.b16 %v3011, %v3009
    %v3066 = vpack.c.b16 %v3014, %v3012
    %v3067 = vpack.c.b16 %v3015, %v3013
    %v3068 = vpack.c.b16 %v3018, %v3016
    %v3069 = vpack.c.b16 %v3019, %v3017
    %v3070 = vpack.c.b16 %v3022, %v3020
    %v3071 = vpack.c.b16 %v3023, %v3021
    %v3072 = vpack.c.b16 %v3026, %v3024
    %v3073 = vpack.c.b16 %v3027, %v3025
    %v3074 = vpack.c.b16 %v3030, %v3028
    %v3075 = vpack.c.b16 %v3031, %v3029
    %v3076 = vpack.c.b16 %v3034, %v3032
    %v3077 = vpack.c.b16 %v3035, %v3033
    %v3078 = vpack.c.b16 %v3038, %v3036
    %v3079 = vpack.c.b16 %v3039, %v3037
    %v3080 = vpack.c.b16 %v3042, %v3040
    %v3081 = vpack.c.b16 %v3043, %v3041
    %v3082 = vpack.c.b16 %v3046, %v3044
    %v3083 = vpack.c.b16 %v3047, %v3045
    %v3084 = vpack.c.b16 %v3050, %v3048
    %v3085 = vpack.c.b16 %v3051, %v3049
    %v3086 = vpack.c.b16 %v3054, %v3052
    %v3087 = vpack.c.b16 %v3055, %v3053
    %3120 = vmatprep.subr.bf16.mxu0 %v3057
    %3121 = vmatpush1.bf16.msra.mxu0 %v3056
    %3122 = vmatprep.subr.bf16.mxu0 %v3059
    %3123 = vmatpush1.bf16.msra.mxu0 %v3058
    %3124 = vmatprep.subr.bf16.mxu0 %v3061
    %3125 = vmatpush1.bf16.msra.mxu0 %v3060
    %3126 = vmatprep.subr.bf16.mxu0 %v3063
    %3127 = vmatpush1.bf16.msra.mxu0 %v3062
    %3128 = vmatprep.subr.bf16.mxu0 %v3065
    %3129 = vmatpush1.bf16.msra.mxu0 %v3064
    %3130 = vmatprep.subr.bf16.mxu0 %v3067
    %3131 = vmatpush1.bf16.msra.mxu0 %v3066
    %3132 = vmatprep.subr.bf16.mxu0 %v3069
    %3133 = vmatpush1.bf16.msra.mxu0 %v3068
    %3134 = vmatprep.subr.bf16.mxu0 %v3071
    %3135 = vmatpush1.bf16.msra.mxu0 %v3070
    %3136 = vmatprep.subr.bf16.mxu0 %v3073
    %3137 = vmatpush1.bf16.msra.mxu0 %v3072
    %3138 = vmatprep.subr.bf16.mxu0 %v3075
    %3139 = vmatpush1.bf16.msra.mxu0 %v3074
    %3140 = vmatprep.subr.bf16.mxu0 %v3077
    %3141 = vmatpush1.bf16.msra.mxu0 %v3076
    %3142 = vmatprep.subr.bf16.mxu0 %v3079
    %3143 = vmatpush1.bf16.msra.mxu0 %v3078
    %3144 = vmatprep.subr.bf16.mxu0 %v3081
    %3145 = vmatpush1.bf16.msra.mxu0 %v3080
    %3146 = vmatprep.subr.bf16.mxu0 %v3083
    %3147 = vmatpush1.bf16.msra.mxu0 %v3082
    %3148 = vmatprep.subr.bf16.mxu0 %v3085
    %3149 = vmatpush1.bf16.msra.mxu0 %v3084
    %3150 = vmatprep.subr.bf16.mxu0 %v3087
    %3151 = vmatpush1.bf16.msra.mxu0 %v3086
    %3152 = vmatprep.mubr.bf16.mxu0 %v2300
    %3153 = vmatmul.mubr.bf16.gmra.mrb[0].mxu0 %v2299
    %v3154 = vpop.f32.mrb[0].mxu0
    %v3155 = vadd.f32 0.0, %v3154
    %v3156 = vpop.f32.mrb[0].mxu0
    %v3157 = vadd.f32 0.0, %v3156
    %v3158 = vpop.f32.mrb[0].mxu0
    %v3159 = vadd.f32 0.0, %v3158
    %v3160 = vpop.f32.mrb[0].mxu0
    %v3161 = vadd.f32 0.0, %v3160
    %3162 = vmatprep.mubr.bf16.mxu0 %v2302
    %3163 = vmatmul.mubr.bf16.gmra.mrb[0].mxu0 %v2301
    %v3164 = vpop.f32.mrb[0].mxu0
    %v3165 = vadd.f32 0.0, %v3164
    %v3166 = vpop.f32.mrb[0].mxu0
    %v3167 = vadd.f32 0.0, %v3166
    %v3168 = vpop.f32.mrb[0].mxu0
    %v3169 = vadd.f32 0.0, %v3168
    %v3170 = vpop.f32.mrb[0].mxu0
    %v3171 = vadd.f32 0.0, %v3170
    %3172 = vmatprep.mubr.bf16.mxu0 %v2304
    %3173 = vmatmul.mubr.bf16.gmra.mrb[0].mxu0 %v2303
    %v3174 = vpop.f32.mrb[0].mxu0
    %v3175 = vadd.f32 0.0, %v3174
    %v3176 = vpop.f32.mrb[0].mxu0
    %v3177 = vadd.f32 0.0, %v3176
    %v3178 = vpop.f32.mrb[0].mxu0
    %v3179 = vadd.f32 0.0, %v3178
    %v3180 = vpop.f32.mrb[0].mxu0
    %v3181 = vadd.f32 0.0, %v3180
    %3182 = vmatprep.mubr.bf16.mxu0 %v2306
    %3183 = vmatmul.mubr.bf16.gmra.mrb[0].mxu0 %v2305
    %v3184 = vpop.f32.mrb[0].mxu0
    %v3185 = vadd.f32 0.0, %v3184
    %v3186 = vpop.f32.mrb[0].mxu0
    %v3187 = vadd.f32 0.0, %v3186
    %v3188 = vpop.f32.mrb[0].mxu0
    %v3189 = vadd.f32 0.0, %v3188
    %v3190 = vpop.f32.mrb[0].mxu0
    %v3191 = vadd.f32 0.0, %v3190
    %3192 = vmatprep.mubr.bf16.mxu0 %v2308
    %3193 = vmatmul.mubr.bf16.gmra.mrb[0].mxu0 %v2307
    %v3194 = vpop.f32.mrb[0].mxu0
    %v3195 = vadd.f32 0.0, %v3194
    %v3196 = vpop.f32.mrb[0].mxu0
    %v3197 = vadd.f32 0.0, %v3196
    %v3198 = vpop.f32.mrb[0].mxu0
    %v3199 = vadd.f32 0.0, %v3198
    %v3200 = vpop.f32.mrb[0].mxu0
    %v3201 = vadd.f32 0.0, %v3200
    %3202 = vmatprep.mubr.bf16.mxu0 %v2310
    %3203 = vmatmul.mubr.bf16.gmra.mrb[0].mxu0 %v2309
    %v3204 = vpop.f32.mrb[0].mxu0
    %v3205 = vadd.f32 0.0, %v3204
    %v3206 = vpop.f32.mrb[0].mxu0
    %v3207 = vadd.f32 0.0, %v3206
    %v3208 = vpop.f32.mrb[0].mxu0
    %v3209 = vadd.f32 0.0, %v3208
    %v3210 = vpop.f32.mrb[0].mxu0
    %v3211 = vadd.f32 0.0, %v3210
    %3212 = vmatprep.mubr.bf16.mxu0 %v2312
    %3213 = vmatmul.mubr.bf16.gmra.mrb[0].mxu0 %v2311
    %v3214 = vpop.f32.mrb[0].mxu0
    %v3215 = vadd.f32 0.0, %v3214
    %v3216 = vpop.f32.mrb[0].mxu0
    %v3217 = vadd.f32 0.0, %v3216
    %v3218 = vpop.f32.mrb[0].mxu0
    %v3219 = vadd.f32 0.0, %v3218
    %v3220 = vpop.f32.mrb[0].mxu0
    %v3221 = vadd.f32 0.0, %v3220
    %3222 = vmatprep.mubr.bf16.mxu0 %v2314
    %3223 = vmatmul.mubr.bf16.gmra.mrb[0].mxu0 %v2313
    %v3224 = vpop.f32.mrb[0].mxu0
    %v3225 = vadd.f32 0.0, %v3224
    %v3226 = vpop.f32.mrb[0].mxu0
    %v3227 = vadd.f32 0.0, %v3226
    %v3228 = vpop.f32.mrb[0].mxu0
    %v3229 = vadd.f32 0.0, %v3228
    %v3230 = vpop.f32.mrb[0].mxu0
    %v3231 = vadd.f32 0.0, %v3230
    %3232 = vdwg.mxu0
    %v3233 = vadd.f32 %v2849, %v3155
    %v3234 = vadd.f32 %v2851, %v3157
    %v3235 = vadd.f32 %v2853, %v3159
    %v3236 = vadd.f32 %v2855, %v3161
    %v3237 = vadd.f32 %v2859, %v3165
    %v3238 = vadd.f32 %v2861, %v3167
    %v3239 = vadd.f32 %v2863, %v3169
    %v3240 = vadd.f32 %v2865, %v3171
    %v3241 = vadd.f32 %v2869, %v3175
    %v3242 = vadd.f32 %v2871, %v3177
    %v3243 = vadd.f32 %v2873, %v3179
    %v3244 = vadd.f32 %v2875, %v3181
    %v3245 = vadd.f32 %v2879, %v3185
    %v3246 = vadd.f32 %v2881, %v3187
    %v3247 = vadd.f32 %v2883, %v3189
    %v3248 = vadd.f32 %v2885, %v3191
    %v3249 = vadd.f32 %v2889, %v3195
    %v3250 = vadd.f32 %v2891, %v3197
    %v3251 = vadd.f32 %v2893, %v3199
    %v3252 = vadd.f32 %v2895, %v3201
    %v3253 = vadd.f32 %v2899, %v3205
    %v3254 = vadd.f32 %v2901, %v3207
    %v3255 = vadd.f32 %v2903, %v3209
    %v3256 = vadd.f32 %v2905, %v3211
    %v3257 = vadd.f32 %v2909, %v3215
    %v3258 = vadd.f32 %v2911, %v3217
    %v3259 = vadd.f32 %v2913, %v3219
    %v3260 = vadd.f32 %v2915, %v3221
    %v3261 = vadd.f32 %v2919, %v3225
    %v3262 = vadd.f32 %v2921, %v3227
    %v3263 = vadd.f32 %v2923, %v3229
    %v3264 = vadd.f32 %v2925, %v3231
    %s3265 = scalar_lea.vmem [#allocation7], 2
    %v3266 = vld [vmem:[%s3265] sm:$0x3]
    %v3268 = vlaneseq
    %v3269 = vshrl.u32 %v3268, 7
    %v3270 = vsub.s32 0, %v3269
    %v3271 = vrot.slane %v3266, %v3270
    %v3272 = vlaneseq
    %v3273 = vshrl.u32 %v3272, 7
    %v3274 = vsub.s32 1, %v3273
    %v3275 = vrot.slane %v3266, %v3274
    %v3278 = vadd.f32 %v3233, %v3271
    %v3279 = vadd.f32 %v3234, %v3275
    %v3280 = vadd.f32 %v3235, %v3271
    %v3281 = vadd.f32 %v3236, %v3275
    %v3282 = vadd.f32 %v3237, %v3271
    %v3283 = vadd.f32 %v3238, %v3275
    %v3284 = vadd.f32 %v3239, %v3271
    %v3285 = vadd.f32 %v3240, %v3275
    %v3286 = vadd.f32 %v3241, %v3271
    %v3287 = vadd.f32 %v3242, %v3275
    %v3288 = vadd.f32 %v3243, %v3271
    %v3289 = vadd.f32 %v3244, %v3275
    %v3290 = vadd.f32 %v3245, %v3271
    %v3291 = vadd.f32 %v3246, %v3275
    %v3292 = vadd.f32 %v3247, %v3271
    %v3293 = vadd.f32 %v3248, %v3275
    %v3294 = vadd.f32 %v3249, %v3271
    %v3295 = vadd.f32 %v3250, %v3275
    %v3296 = vadd.f32 %v3251, %v3271
    %v3297 = vadd.f32 %v3252, %v3275
    %v3298 = vadd.f32 %v3253, %v3271
    %v3299 = vadd.f32 %v3254, %v3275
    %v3300 = vadd.f32 %v3255, %v3271
    %v3301 = vadd.f32 %v3256, %v3275
    %v3302 = vadd.f32 %v3257, %v3271
    %v3303 = vadd.f32 %v3258, %v3275
    %v3304 = vadd.f32 %v3259, %v3271
    %v3305 = vadd.f32 %v3260, %v3275
    %v3306 = vadd.f32 %v3261, %v3271
    %v3307 = vadd.f32 %v3262, %v3275
    %v3308 = vadd.f32 %v3263, %v3271
    %v3309 = vadd.f32 %v3264, %v3275
    %v3310 = vadd.f32 %v3278, %v3280
    %v3311 = vadd.f32 %v3310, %v3282
    %v3312 = vadd.f32 %v3311, %v3284
    %v3313 = vadd.f32 %v3312, %v3286
    %v3314 = vadd.f32 %v3313, %v3288
    %v3315 = vadd.f32 %v3314, %v3290
    %v3316 = vadd.f32 %v3315, %v3292
    %v3317 = vadd.f32 %v3316, %v3294
    %v3318 = vadd.f32 %v3317, %v3296
    %v3319 = vadd.f32 %v3318, %v3298
    %v3320 = vadd.f32 %v3319, %v3300
    %v3321 = vadd.f32 %v3320, %v3302
    %v3322 = vadd.f32 %v3321, %v3304
    %v3323 = vadd.f32 %v3322, %v3306
    %v3324 = vadd.f32 %v3323, %v3308
    %v3325 = vrot.slane %v3324, 4
    %v3326 = vadd.f32 %v3324, %v3325
    %v3327 = vrot.slane %v3326, 2
    %v3328 = vadd.f32 %v3326, %v3327
    %v3329 = vrot.slane %v3328, 1
    %v3330 = vadd.f32 %v3328, %v3329
    %v3331 = vadd.f32 %v3279, %v3281
    %v3332 = vadd.f32 %v3331, %v3283
    %v3333 = vadd.f32 %v3332, %v3285
    %v3334 = vadd.f32 %v3333, %v3287
    %v3335 = vadd.f32 %v3334, %v3289
    %v3336 = vadd.f32 %v3335, %v3291
    %v3337 = vadd.f32 %v3336, %v3293
    %v3338 = vadd.f32 %v3337, %v3295
    %v3339 = vadd.f32 %v3338, %v3297
    %v3340 = vadd.f32 %v3339, %v3299
    %v3341 = vadd.f32 %v3340, %v3301
    %v3342 = vadd.f32 %v3341, %v3303
    %v3343 = vadd.f32 %v3342, %v3305
    %v3344 = vadd.f32 %v3343, %v3307
    %v3345 = vadd.f32 %v3344, %v3309
    %v3346 = vrot.slane %v3345, 4
    %v3347 = vadd.f32 %v3345, %v3346
    %v3348 = vrot.slane %v3347, 2
    %v3349 = vadd.f32 %v3347, %v3348
    %v3350 = vrot.slane %v3349, 1
    %v3351 = vadd.f32 %v3349, %v3350
    %v3352 = vmul.f32 %v3330, %v1646
    %v3353 = vmul.f32 %v3351, %v1646
    %v3354 = vsub.f32 %v3278, %v3352
    %v3355 = vsub.f32 %v3279, %v3353
    %v3356 = vsub.f32 %v3280, %v3352
    %v3357 = vsub.f32 %v3281, %v3353
    %v3358 = vsub.f32 %v3282, %v3352
    %v3359 = vsub.f32 %v3283, %v3353
    %v3360 = vsub.f32 %v3284, %v3352
    %v3361 = vsub.f32 %v3285, %v3353
    %v3362 = vsub.f32 %v3286, %v3352
    %v3363 = vsub.f32 %v3287, %v3353
    %v3364 = vsub.f32 %v3288, %v3352
    %v3365 = vsub.f32 %v3289, %v3353
    %v3366 = vsub.f32 %v3290, %v3352
    %v3367 = vsub.f32 %v3291, %v3353
    %v3368 = vsub.f32 %v3292, %v3352
    %v3369 = vsub.f32 %v3293, %v3353
    %v3370 = vsub.f32 %v3294, %v3352
    %v3371 = vsub.f32 %v3295, %v3353
    %v3372 = vsub.f32 %v3296, %v3352
    %v3373 = vsub.f32 %v3297, %v3353
    %v3374 = vsub.f32 %v3298, %v3352
    %v3375 = vsub.f32 %v3299, %v3353
    %v3376 = vsub.f32 %v3300, %v3352
    %v3377 = vsub.f32 %v3301, %v3353
    %v3378 = vsub.f32 %v3302, %v3352
    %v3379 = vsub.f32 %v3303, %v3353
    %v3380 = vsub.f32 %v3304, %v3352
    %v3381 = vsub.f32 %v3305, %v3353
    %v3382 = vsub.f32 %v3306, %v3352
    %v3383 = vsub.f32 %v3307, %v3353
    %v3384 = vsub.f32 %v3308, %v3352
    %v3385 = vsub.f32 %v3309, %v3353
    %v3386 = vmul.f32 %v3354, %v3354
    %v3387 = vmul.f32 %v3355, %v3355
    %v3388 = vmul.f32 %v3356, %v3356
    %v3389 = vmul.f32 %v3357, %v3357
    %v3390 = vmul.f32 %v3358, %v3358
    %v3391 = vmul.f32 %v3359, %v3359
    %v3392 = vmul.f32 %v3360, %v3360
    %v3393 = vmul.f32 %v3361, %v3361
    %v3394 = vmul.f32 %v3362, %v3362
    %v3395 = vmul.f32 %v3363, %v3363
    %v3396 = vmul.f32 %v3364, %v3364
    %v3397 = vmul.f32 %v3365, %v3365
    %v3398 = vmul.f32 %v3366, %v3366
    %v3399 = vmul.f32 %v3367, %v3367
    %v3400 = vmul.f32 %v3368, %v3368
    %v3401 = vmul.f32 %v3369, %v3369
    %v3402 = vmul.f32 %v3370, %v3370
    %v3403 = vmul.f32 %v3371, %v3371
    %v3404 = vmul.f32 %v3372, %v3372
    %v3405 = vmul.f32 %v3373, %v3373
    %v3406 = vmul.f32 %v3374, %v3374
    %v3407 = vmul.f32 %v3375, %v3375
    %v3408 = vmul.f32 %v3376, %v3376
    %v3409 = vmul.f32 %v3377, %v3377
    %v3410 = vmul.f32 %v3378, %v3378
    %v3411 = vmul.f32 %v3379, %v3379
    %v3412 = vmul.f32 %v3380, %v3380
    %v3413 = vmul.f32 %v3381, %v3381
    %v3414 = vmul.f32 %v3382, %v3382
    %v3415 = vmul.f32 %v3383, %v3383
    %v3416 = vmul.f32 %v3384, %v3384
    %v3417 = vmul.f32 %v3385, %v3385
    %v3418 = vadd.f32 %v3386, %v3388
    %v3419 = vadd.f32 %v3418, %v3390
    %v3420 = vadd.f32 %v3419, %v3392
    %v3421 = vadd.f32 %v3420, %v3394
    %v3422 = vadd.f32 %v3421, %v3396
    %v3423 = vadd.f32 %v3422, %v3398
    %v3424 = vadd.f32 %v3423, %v3400
    %v3425 = vadd.f32 %v3424, %v3402
    %v3426 = vadd.f32 %v3425, %v3404
    %v3427 = vadd.f32 %v3426, %v3406
    %v3428 = vadd.f32 %v3427, %v3408
    %v3429 = vadd.f32 %v3428, %v3410
    %v3430 = vadd.f32 %v3429, %v3412
    %v3431 = vadd.f32 %v3430, %v3414
    %v3432 = vadd.f32 %v3431, %v3416
    %v3433 = vrot.slane %v3432, 4
    %v3434 = vadd.f32 %v3432, %v3433
    %v3435 = vrot.slane %v3434, 2
    %v3436 = vadd.f32 %v3434, %v3435
    %v3437 = vrot.slane %v3436, 1
    %v3438 = vadd.f32 %v3436, %v3437
    %v3439 = vadd.f32 %v3387, %v3389
    %v3440 = vadd.f32 %v3439, %v3391
    %v3441 = vadd.f32 %v3440, %v3393
    %v3442 = vadd.f32 %v3441, %v3395
    %v3443 = vadd.f32 %v3442, %v3397
    %v3444 = vadd.f32 %v3443, %v3399
    %v3445 = vadd.f32 %v3444, %v3401
    %v3446 = vadd.f32 %v3445, %v3403
    %v3447 = vadd.f32 %v3446, %v3405
    %v3448 = vadd.f32 %v3447, %v3407
    %v3449 = vadd.f32 %v3448, %v3409
    %v3450 = vadd.f32 %v3449, %v3411
    %v3451 = vadd.f32 %v3450, %v3413
    %v3452 = vadd.f32 %v3451, %v3415
    %v3453 = vadd.f32 %v3452, %v3417
    %v3454 = vrot.slane %v3453, 4
    %v3455 = vadd.f32 %v3453, %v3454
    %v3456 = vrot.slane %v3455, 2
    %v3457 = vadd.f32 %v3455, %v3456
    %v3458 = vrot.slane %v3457, 1
    %v3459 = vadd.f32 %v3457, %v3458
    %v3460 = vmul.f32 %v3438, %v1646
    %v3461 = vmul.f32 %v3459, %v1646
    %v3462 = vadd.f32 %v3460, 1e-05
    %v3463 = vadd.f32 %v3461, 1e-05
    %v3464 = vrsqrt.pop %v3462
    %v3465 = vrsqrt.pop %v3463
    %v3466 = vmul.f32 %v3354, %v3464
    %v3467 = vmul.f32 %v3355, %v3465
    %v3468 = vmul.f32 %v3356, %v3464
    %v3469 = vmul.f32 %v3357, %v3465
    %v3470 = vmul.f32 %v3358, %v3464
    %v3471 = vmul.f32 %v3359, %v3465
    %v3472 = vmul.f32 %v3360, %v3464
    %v3473 = vmul.f32 %v3361, %v3465
    %v3474 = vmul.f32 %v3362, %v3464
    %v3475 = vmul.f32 %v3363, %v3465
    %v3476 = vmul.f32 %v3364, %v3464
    %v3477 = vmul.f32 %v3365, %v3465
    %v3478 = vmul.f32 %v3366, %v3464
    %v3479 = vmul.f32 %v3367, %v3465
    %v3480 = vmul.f32 %v3368, %v3464
    %v3481 = vmul.f32 %v3369, %v3465
    %v3482 = vmul.f32 %v3370, %v3464
    %v3483 = vmul.f32 %v3371, %v3465
    %v3484 = vmul.f32 %v3372, %v3464
    %v3485 = vmul.f32 %v3373, %v3465
    %v3486 = vmul.f32 %v3374, %v3464
    %v3487 = vmul.f32 %v3375, %v3465
    %v3488 = vmul.f32 %v3376, %v3464
    %v3489 = vmul.f32 %v3377, %v3465
    %v3490 = vmul.f32 %v3378, %v3464
    %v3491 = vmul.f32 %v3379, %v3465
    %v3492 = vmul.f32 %v3380, %v3464
    %v3493 = vmul.f32 %v3381, %v3465
    %v3494 = vmul.f32 %v3382, %v3464
    %v3495 = vmul.f32 %v3383, %v3465
    %v3496 = vmul.f32 %v3384, %v3464
    %v3497 = vmul.f32 %v3385, %v3465
    %s3498 = scalar_lea.vmem [#allocation8], 2
    %v3499 = vld [vmem:[%s3498] sm:$0x3]
    %v3501 = vlaneseq
    %v3502 = vshrl.u32 %v3501, 7
    %v3503 = vsub.s32 0, %v3502
    %v3504 = vrot.slane %v3499, %v3503
    %v3505 = vlaneseq
    %v3506 = vshrl.u32 %v3505, 7
    %v3507 = vsub.s32 1, %v3506
    %v3508 = vrot.slane %v3499, %v3507
    %v3511 = vmul.f32 %v3466, %v3504
    %v3512 = vmul.f32 %v3467, %v3508
    %v3513 = vmul.f32 %v3468, %v3504
    %v3514 = vmul.f32 %v3469, %v3508
    %v3515 = vmul.f32 %v3470, %v3504
    %v3516 = vmul.f32 %v3471, %v3508
    %v3517 = vmul.f32 %v3472, %v3504
    %v3518 = vmul.f32 %v3473, %v3508
    %v3519 = vmul.f32 %v3474, %v3504
    %v3520 = vmul.f32 %v3475, %v3508
    %v3521 = vmul.f32 %v3476, %v3504
    %v3522 = vmul.f32 %v3477, %v3508
    %v3523 = vmul.f32 %v3478, %v3504
    %v3524 = vmul.f32 %v3479, %v3508
    %v3525 = vmul.f32 %v3480, %v3504
    %v3526 = vmul.f32 %v3481, %v3508
    %v3527 = vmul.f32 %v3482, %v3504
    %v3528 = vmul.f32 %v3483, %v3508
    %v3529 = vmul.f32 %v3484, %v3504
    %v3530 = vmul.f32 %v3485, %v3508
    %v3531 = vmul.f32 %v3486, %v3504
    %v3532 = vmul.f32 %v3487, %v3508
    %v3533 = vmul.f32 %v3488, %v3504
    %v3534 = vmul.f32 %v3489, %v3508
    %v3535 = vmul.f32 %v3490, %v3504
    %v3536 = vmul.f32 %v3491, %v3508
    %v3537 = vmul.f32 %v3492, %v3504
    %v3538 = vmul.f32 %v3493, %v3508
    %v3539 = vmul.f32 %v3494, %v3504
    %v3540 = vmul.f32 %v3495, %v3508
    %v3541 = vmul.f32 %v3496, %v3504
    %v3542 = vmul.f32 %v3497, %v3508
    %s3543 = scalar_lea.vmem [#allocation10], 2
    %v3544 = vld [vmem:[%s3543] sm:$0x3]
    %v3546 = vlaneseq
    %v3547 = vshrl.u32 %v3546, 7
    %v3548 = vsub.s32 0, %v3547
    %v3549 = vrot.slane %v3544, %v3548
    %v3550 = vlaneseq
    %v3551 = vshrl.u32 %v3550, 7
    %v3552 = vsub.s32 1, %v3551
    %v3553 = vrot.slane %v3544, %v3552
    %v3556 = vadd.f32 %v3511, %v3549
    %v3557 = vadd.f32 %v3512, %v3553
    %v3558 = vadd.f32 %v3513, %v3549
    %v3559 = vadd.f32 %v3514, %v3553
    %v3560 = vadd.f32 %v3515, %v3549
    %v3561 = vadd.f32 %v3516, %v3553
    %v3562 = vadd.f32 %v3517, %v3549
    %v3563 = vadd.f32 %v3518, %v3553
    %v3564 = vadd.f32 %v3519, %v3549
    %v3565 = vadd.f32 %v3520, %v3553
    %v3566 = vadd.f32 %v3521, %v3549
    %v3567 = vadd.f32 %v3522, %v3553
    %v3568 = vadd.f32 %v3523, %v3549
    %v3569 = vadd.f32 %v3524, %v3553
    %v3570 = vadd.f32 %v3525, %v3549
    %v3571 = vadd.f32 %v3526, %v3553
    %v3572 = vadd.f32 %v3527, %v3549
    %v3573 = vadd.f32 %v3528, %v3553
    %v3574 = vadd.f32 %v3529, %v3549
    %v3575 = vadd.f32 %v3530, %v3553
    %v3576 = vadd.f32 %v3531, %v3549
    %v3577 = vadd.f32 %v3532, %v3553
    %v3578 = vadd.f32 %v3533, %v3549
    %v3579 = vadd.f32 %v3534, %v3553
    %v3580 = vadd.f32 %v3535, %v3549
    %v3581 = vadd.f32 %v3536, %v3553
    %v3582 = vadd.f32 %v3537, %v3549
    %v3583 = vadd.f32 %v3538, %v3553
    %v3584 = vadd.f32 %v3539, %v3549
    %v3585 = vadd.f32 %v3540, %v3553
    %v3586 = vadd.f32 %v3541, %v3549
    %v3587 = vadd.f32 %v3542, %v3553
    %vm3588 = vcmp.ge.f32.partialorder %v3556, 0.0
    %vm3589 = vcmp.ge.f32.partialorder %v3557, 0.0
    %vm3590 = vcmp.ge.f32.partialorder %v3558, 0.0
    %vm3591 = vcmp.ge.f32.partialorder %v3559, 0.0
    %vm3592 = vcmp.ge.f32.partialorder %v3560, 0.0
    %vm3593 = vcmp.ge.f32.partialorder %v3561, 0.0
    %vm3594 = vcmp.ge.f32.partialorder %v3562, 0.0
    %vm3595 = vcmp.ge.f32.partialorder %v3563, 0.0
    %vm3596 = vcmp.ge.f32.partialorder %v3564, 0.0
    %vm3597 = vcmp.ge.f32.partialorder %v3565, 0.0
    %vm3598 = vcmp.ge.f32.partialorder %v3566, 0.0
    %vm3599 = vcmp.ge.f32.partialorder %v3567, 0.0
    %vm3600 = vcmp.ge.f32.partialorder %v3568, 0.0
    %vm3601 = vcmp.ge.f32.partialorder %v3569, 0.0
    %vm3602 = vcmp.ge.f32.partialorder %v3570, 0.0
    %vm3603 = vcmp.ge.f32.partialorder %v3571, 0.0
    %vm3604 = vcmp.ge.f32.partialorder %v3572, 0.0
    %vm3605 = vcmp.ge.f32.partialorder %v3573, 0.0
    %vm3606 = vcmp.ge.f32.partialorder %v3574, 0.0
    %vm3607 = vcmp.ge.f32.partialorder %v3575, 0.0
    %vm3608 = vcmp.ge.f32.partialorder %v3576, 0.0
    %vm3609 = vcmp.ge.f32.partialorder %v3577, 0.0
    %vm3610 = vcmp.ge.f32.partialorder %v3578, 0.0
    %vm3611 = vcmp.ge.f32.partialorder %v3579, 0.0
    %vm3612 = vcmp.ge.f32.partialorder %v3580, 0.0
    %vm3613 = vcmp.ge.f32.partialorder %v3581, 0.0
    %vm3614 = vcmp.ge.f32.partialorder %v3582, 0.0
    %vm3615 = vcmp.ge.f32.partialorder %v3583, 0.0
    %vm3616 = vcmp.ge.f32.partialorder %v3584, 0.0
    %vm3617 = vcmp.ge.f32.partialorder %v3585, 0.0
    %vm3618 = vcmp.ge.f32.partialorder %v3586, 0.0
    %vm3619 = vcmp.ge.f32.partialorder %v3587, 0.0
    %v3620 = vmul.f32 %v3556, 0.2
    %v3621 = vmul.f32 %v3557, 0.2
    %v3622 = vmul.f32 %v3558, 0.2
    %v3623 = vmul.f32 %v3559, 0.2
    %v3624 = vmul.f32 %v3560, 0.2
    %v3625 = vmul.f32 %v3561, 0.2
    %v3626 = vmul.f32 %v3562, 0.2
    %v3627 = vmul.f32 %v3563, 0.2
    %v3628 = vmul.f32 %v3564, 0.2
    %v3629 = vmul.f32 %v3565, 0.2
    %v3630 = vmul.f32 %v3566, 0.2
    %v3631 = vmul.f32 %v3567, 0.2
    %v3632 = vmul.f32 %v3568, 0.2
    %v3633 = vmul.f32 %v3569, 0.2
    %v3634 = vmul.f32 %v3570, 0.2
    %v3635 = vmul.f32 %v3571, 0.2
    %v3636 = vmul.f32 %v3572, 0.2
    %v3637 = vmul.f32 %v3573, 0.2
    %v3638 = vmul.f32 %v3574, 0.2
    %v3639 = vmul.f32 %v3575, 0.2
    %v3640 = vmul.f32 %v3576, 0.2
    %v3641 = vmul.f32 %v3577, 0.2
    %v3642 = vmul.f32 %v3578, 0.2
    %v3643 = vmul.f32 %v3579, 0.2
    %v3644 = vmul.f32 %v3580, 0.2
    %v3645 = vmul.f32 %v3581, 0.2
    %v3646 = vmul.f32 %v3582, 0.2
    %v3647 = vmul.f32 %v3583, 0.2
    %v3648 = vmul.f32 %v3584, 0.2
    %v3649 = vmul.f32 %v3585, 0.2
    %v3650 = vmul.f32 %v3586, 0.2
    %v3651 = vmul.f32 %v3587, 0.2
    %v3652 = vsel %vm3588, %v3556, %v3620
    %v3653 = vsel %vm3589, %v3557, %v3621
    %v3654 = vsel %vm3590, %v3558, %v3622
    %v3655 = vsel %vm3591, %v3559, %v3623
    %v3656 = vsel %vm3592, %v3560, %v3624
    %v3657 = vsel %vm3593, %v3561, %v3625
    %v3658 = vsel %vm3594, %v3562, %v3626
    %v3659 = vsel %vm3595, %v3563, %v3627
    %v3660 = vsel %vm3596, %v3564, %v3628
    %v3661 = vsel %vm3597, %v3565, %v3629
    %v3662 = vsel %vm3598, %v3566, %v3630
    %v3663 = vsel %vm3599, %v3567, %v3631
    %v3664 = vsel %vm3600, %v3568, %v3632
    %v3665 = vsel %vm3601, %v3569, %v3633
    %v3666 = vsel %vm3602, %v3570, %v3634
    %v3667 = vsel %vm3603, %v3571, %v3635
    %v3668 = vsel %vm3604, %v3572, %v3636
    %v3669 = vsel %vm3605, %v3573, %v3637
    %v3670 = vsel %vm3606, %v3574, %v3638
    %v3671 = vsel %vm3607, %v3575, %v3639
    %v3672 = vsel %vm3608, %v3576, %v3640
    %v3673 = vsel %vm3609, %v3577, %v3641
    %v3674 = vsel %vm3610, %v3578, %v3642
    %v3675 = vsel %vm3611, %v3579, %v3643
    %v3676 = vsel %vm3612, %v3580, %v3644
    %v3677 = vsel %vm3613, %v3581, %v3645
    %v3678 = vsel %vm3614, %v3582, %v3646
    %v3679 = vsel %vm3615, %v3583, %v3647
    %v3680 = vsel %vm3616, %v3584, %v3648
    %v3681 = vsel %vm3617, %v3585, %v3649
    %v3682 = vsel %vm3618, %v3586, %v3650
    %v3683 = vsel %vm3619, %v3587, %v3651
    %3684 = vst [vmem:[#allocation2] sm:$0xff] %v3652
    %3685 = vst [vmem:[#allocation2 + $0x8] sm:$0xff] %v3653
    %3686 = vst [vmem:[#allocation2 + $0x10] sm:$0xff] %v3654
    %3687 = vst [vmem:[#allocation2 + $0x18] sm:$0xff] %v3655
    %3688 = vst [vmem:[#allocation2 + $0x20] sm:$0xff] %v3656
    %3689 = vst [vmem:[#allocation2 + $0x28] sm:$0xff] %v3657
    %3690 = vst [vmem:[#allocation2 + $0x30] sm:$0xff] %v3658
    %3691 = vst [vmem:[#allocation2 + $0x38] sm:$0xff] %v3659
    %3692 = vst [vmem:[#allocation2 + $0x40] sm:$0xff] %v3660
    %3693 = vst [vmem:[#allocation2 + $0x48] sm:$0xff] %v3661
    %3694 = vst [vmem:[#allocation2 + $0x50] sm:$0xff] %v3662
    %3695 = vst [vmem:[#allocation2 + $0x58] sm:$0xff] %v3663
    %3696 = vst [vmem:[#allocation2 + $0x60] sm:$0xff] %v3664
    %3697 = vst [vmem:[#allocation2 + $0x68] sm:$0xff] %v3665
    %3698 = vst [vmem:[#allocation2 + $0x70] sm:$0xff] %v3666
    %3699 = vst [vmem:[#allocation2 + $0x78] sm:$0xff] %v3667
    %3700 = vst [vmem:[#allocation2 + $0x80] sm:$0xff] %v3668
    %3701 = vst [vmem:[#allocation2 + $0x88] sm:$0xff] %v3669
    %3702 = vst [vmem:[#allocation2 + $0x90] sm:$0xff] %v3670
    %3703 = vst [vmem:[#allocation2 + $0x98] sm:$0xff] %v3671
    %3704 = vst [vmem:[#allocation2 + $0xa0] sm:$0xff] %v3672
    %3705 = vst [vmem:[#allocation2 + $0xa8] sm:$0xff] %v3673
    %3706 = vst [vmem:[#allocation2 + $0xb0] sm:$0xff] %v3674
    %3707 = vst [vmem:[#allocation2 + $0xb8] sm:$0xff] %v3675
    %3708 = vst [vmem:[#allocation2 + $0xc0] sm:$0xff] %v3676
    %3709 = vst [vmem:[#allocation2 + $0xc8] sm:$0xff] %v3677
    %3710 = vst [vmem:[#allocation2 + $0xd0] sm:$0xff] %v3678
    %3711 = vst [vmem:[#allocation2 + $0xd8] sm:$0xff] %v3679
    %3712 = vst [vmem:[#allocation2 + $0xe0] sm:$0xff] %v3680
    %3713 = vst [vmem:[#allocation2 + $0xe8] sm:$0xff] %v3681
    %3714 = vst [vmem:[#allocation2 + $0xf0] sm:$0xff] %v3682
    %3715 = vst [vmem:[#allocation2 + $0xf8] sm:$0xff] %v3683
    %v3716 = vld [vmem:[#allocation2] sm:$0xff]
    %v3717 = vld [vmem:[#allocation2 + $0x8] sm:$0xff]
    %v3718 = vld [vmem:[#allocation2 + $0x10] sm:$0xff]
    %v3719 = vld [vmem:[#allocation2 + $0x18] sm:$0xff]
    %v3720 = vld [vmem:[#allocation2 + $0x20] sm:$0xff]
    %v3721 = vld [vmem:[#allocation2 + $0x28] sm:$0xff]
    %v3722 = vld [vmem:[#allocation2 + $0x30] sm:$0xff]
    %v3723 = vld [vmem:[#allocation2 + $0x38] sm:$0xff]
    %v3724 = vld [vmem:[#allocation2 + $0x40] sm:$0xff]
    %v3725 = vld [vmem:[#allocation2 + $0x48] sm:$0xff]
    %v3726 = vld [vmem:[#allocation2 + $0x50] sm:$0xff]
    %v3727 = vld [vmem:[#allocation2 + $0x58] sm:$0xff]
    %v3728 = vld [vmem:[#allocation2 + $0x60] sm:$0xff]
    %v3729 = vld [vmem:[#allocation2 + $0x68] sm:$0xff]
    %v3730 = vld [vmem:[#allocation2 + $0x70] sm:$0xff]
    %v3731 = vld [vmem:[#allocation2 + $0x78] sm:$0xff]
    %v3732 = vld [vmem:[#allocation2 + $0x80] sm:$0xff]
    %v3733 = vld [vmem:[#allocation2 + $0x88] sm:$0xff]
    %v3734 = vld [vmem:[#allocation2 + $0x90] sm:$0xff]
    %v3735 = vld [vmem:[#allocation2 + $0x98] sm:$0xff]
    %v3736 = vld [vmem:[#allocation2 + $0xa0] sm:$0xff]
    %v3737 = vld [vmem:[#allocation2 + $0xa8] sm:$0xff]
    %v3738 = vld [vmem:[#allocation2 + $0xb0] sm:$0xff]
    %v3739 = vld [vmem:[#allocation2 + $0xb8] sm:$0xff]
    %v3740 = vld [vmem:[#allocation2 + $0xc0] sm:$0xff]
    %v3741 = vld [vmem:[#allocation2 + $0xc8] sm:$0xff]
    %v3742 = vld [vmem:[#allocation2 + $0xd0] sm:$0xff]
    %v3743 = vld [vmem:[#allocation2 + $0xd8] sm:$0xff]
    %v3744 = vld [vmem:[#allocation2 + $0xe0] sm:$0xff]
    %v3745 = vld [vmem:[#allocation2 + $0xe8] sm:$0xff]
    %v3746 = vld [vmem:[#allocation2 + $0xf0] sm:$0xff]
    %v3747 = vld [vmem:[#allocation2 + $0xf8] sm:$0xff]
    %v3748 = vpack.c.bf16 %v3718, %v3716
    %v3749 = vpack.c.bf16 %v3719, %v3717
    %v3750 = vpack.c.bf16 %v3722, %v3720
    %v3751 = vpack.c.bf16 %v3723, %v3721
    %v3752 = vpack.c.bf16 %v3726, %v3724
    %v3753 = vpack.c.bf16 %v3727, %v3725
    %v3754 = vpack.c.bf16 %v3730, %v3728
    %v3755 = vpack.c.bf16 %v3731, %v3729
    %v3756 = vpack.c.bf16 %v3734, %v3732
    %v3757 = vpack.c.bf16 %v3735, %v3733
    %v3758 = vpack.c.bf16 %v3738, %v3736
    %v3759 = vpack.c.bf16 %v3739, %v3737
    %v3760 = vpack.c.bf16 %v3742, %v3740
    %v3761 = vpack.c.bf16 %v3743, %v3741
    %v3762 = vpack.c.bf16 %v3746, %v3744
    %v3763 = vpack.c.bf16 %v3747, %v3745
    %3764 = vmatprep.subr.bf16.mxu0 %v3749
    %3765 = vmatpush1.bf16.msra.mxu0 %v3748
    %3766 = vmatprep.subr.bf16.mxu0 %v3751
    %3767 = vmatpush1.bf16.msra.mxu0 %v3750
    %3768 = vmatprep.subr.bf16.mxu0 %v3753
    %3769 = vmatpush1.bf16.msra.mxu0 %v3752
    %3770 = vmatprep.subr.bf16.mxu0 %v3755
    %3771 = vmatpush1.bf16.msra.mxu0 %v3754
    %3772 = vmatprep.subr.bf16.mxu0 %v3757
    %3773 = vmatpush1.bf16.msra.mxu0 %v3756
    %3774 = vmatprep.subr.bf16.mxu0 %v3759
    %3775 = vmatpush1.bf16.msra.mxu0 %v3758
    %3776 = vmatprep.subr.bf16.mxu0 %v3761
    %3777 = vmatpush1.bf16.msra.mxu0 %v3760
    %3778 = vmatprep.subr.bf16.mxu0 %v3763
    %3779 = vmatpush1.bf16.msra.mxu0 %v3762
    %3780 = vmatprep.subr.bf16.mxu0 0
    %3781 = vmatpush1.bf16.msra.mxu0 0
    %3782 = vmatprep.subr.bf16.mxu0 0
    %3783 = vmatpush1.bf16.msra.mxu0 0
    %3784 = vmatprep.subr.bf16.mxu0 0
    %3785 = vmatpush1.bf16.msra.mxu0 0
    %3786 = vmatprep.subr.bf16.mxu0 0
    %3787 = vmatpush1.bf16.msra.mxu0 0
    %3788 = vmatprep.subr.bf16.mxu0 0
    %3789 = vmatpush1.bf16.msra.mxu0 0
    %3790 = vmatprep.subr.bf16.mxu0 0
    %3791 = vmatpush1.bf16.msra.mxu0 0
    %3792 = vmatprep.subr.bf16.mxu0 0
    %3793 = vmatpush1.bf16.msra.mxu0 0
    %3794 = vmatprep.subr.bf16.mxu0 0
    %3795 = vmatpush1.bf16.msra.mxu0 0
    %3796 = vmatprep.mubr.bf16.mxu0 0
    %3797 = vmatmul.mubr.bf16.gmra.mrb[0].mxu0 %v289
    %v3798 = vpop.f32.mrb[0].mxu0
    %v3799 = vadd.f32 0.0, %v3798
    %v3800 = vpop.f32.mrb[0].mxu0
    %v3801 = vadd.f32 0.0, %v3800
    %v3802 = vpop.f32.mrb[0].mxu0
    %v3803 = vadd.f32 0.0, %v3802
    %v3804 = vpop.f32.mrb[0].mxu0
    %v3805 = vadd.f32 0.0, %v3804
    %3806 = vmatprep.mubr.bf16.mxu0 0
    %3807 = vmatmul.mubr.bf16.gmra.mrb[0].mxu0 %v290
    %v3808 = vpop.f32.mrb[0].mxu0
    %v3809 = vadd.f32 0.0, %v3808
    %v3810 = vpop.f32.mrb[0].mxu0
    %v3811 = vadd.f32 0.0, %v3810
    %v3812 = vpop.f32.mrb[0].mxu0
    %v3813 = vadd.f32 0.0, %v3812
    %v3814 = vpop.f32.mrb[0].mxu0
    %v3815 = vadd.f32 0.0, %v3814
    %3816 = vmatprep.mubr.bf16.mxu0 0
    %3817 = vmatmul.mubr.bf16.gmra.mrb[0].mxu0 %v291
    %v3818 = vpop.f32.mrb[0].mxu0
    %v3819 = vadd.f32 0.0, %v3818
    %v3820 = vpop.f32.mrb[0].mxu0
    %v3821 = vadd.f32 0.0, %v3820
    %v3822 = vpop.f32.mrb[0].mxu0
    %v3823 = vadd.f32 0.0, %v3822
    %v3824 = vpop.f32.mrb[0].mxu0
    %v3825 = vadd.f32 0.0, %v3824
    %3826 = vmatprep.mubr.bf16.mxu0 0
    %3827 = vmatmul.mubr.bf16.gmra.mrb[0].mxu0 %v292
    %v3828 = vpop.f32.mrb[0].mxu0
    %v3829 = vadd.f32 0.0, %v3828
    %v3830 = vpop.f32.mrb[0].mxu0
    %v3831 = vadd.f32 0.0, %v3830
    %v3832 = vpop.f32.mrb[0].mxu0
    %v3833 = vadd.f32 0.0, %v3832
    %v3834 = vpop.f32.mrb[0].mxu0
    %v3835 = vadd.f32 0.0, %v3834
    %3836 = vmatprep.mubr.bf16.mxu0 0
    %3837 = vmatmul.mubr.bf16.gmra.mrb[0].mxu0 %v293
    %v3838 = vpop.f32.mrb[0].mxu0
    %v3839 = vadd.f32 0.0, %v3838
    %v3840 = vpop.f32.mrb[0].mxu0
    %v3841 = vadd.f32 0.0, %v3840
    %v3842 = vpop.f32.mrb[0].mxu0
    %v3843 = vadd.f32 0.0, %v3842
    %v3844 = vpop.f32.mrb[0].mxu0
    %v3845 = vadd.f32 0.0, %v3844
    %3846 = vmatprep.mubr.bf16.mxu0 0
    %3847 = vmatmul.mubr.bf16.gmra.mrb[0].mxu0 %v294
    %v3848 = vpop.f32.mrb[0].mxu0
    %v3849 = vadd.f32 0.0, %v3848
    %v3850 = vpop.f32.mrb[0].mxu0
    %v3851 = vadd.f32 0.0, %v3850
    %v3852 = vpop.f32.mrb[0].mxu0
    %v3853 = vadd.f32 0.0, %v3852
    %v3854 = vpop.f32.mrb[0].mxu0
    %v3855 = vadd.f32 0.0, %v3854
    %3856 = vmatprep.mubr.bf16.mxu0 0
    %3857 = vmatmul.mubr.bf16.gmra.mrb[0].mxu0 %v295
    %v3858 = vpop.f32.mrb[0].mxu0
    %v3859 = vadd.f32 0.0, %v3858
    %v3860 = vpop.f32.mrb[0].mxu0
    %v3861 = vadd.f32 0.0, %v3860
    %v3862 = vpop.f32.mrb[0].mxu0
    %v3863 = vadd.f32 0.0, %v3862
    %v3864 = vpop.f32.mrb[0].mxu0
    %v3865 = vadd.f32 0.0, %v3864
    %3866 = vmatprep.mubr.bf16.mxu0 0
    %3867 = vmatmul.mubr.bf16.gmra.mrb[0].mxu0 %v296
    %v3868 = vpop.f32.mrb[0].mxu0
    %v3869 = vadd.f32 0.0, %v3868
    %v3870 = vpop.f32.mrb[0].mxu0
    %v3871 = vadd.f32 0.0, %v3870
    %v3872 = vpop.f32.mrb[0].mxu0
    %v3873 = vadd.f32 0.0, %v3872
    %v3874 = vpop.f32.mrb[0].mxu0
    %v3875 = vadd.f32 0.0, %v3874
    %3876 = vdwg.mxu0
    %v3877 = vpack.c.bf16 %v3803, %v3799
    %v3878 = vpack.c.bf16 %v3805, %v3801
    %v3879 = vpack.c.bf16 %v3813, %v3809
    %v3880 = vpack.c.bf16 %v3815, %v3811
    %v3881 = vpack.c.bf16 %v3823, %v3819
    %v3882 = vpack.c.bf16 %v3825, %v3821
    %v3883 = vpack.c.bf16 %v3833, %v3829
    %v3884 = vpack.c.bf16 %v3835, %v3831
    %v3885 = vpack.c.bf16 %v3843, %v3839
    %v3886 = vpack.c.bf16 %v3845, %v3841
    %v3887 = vpack.c.bf16 %v3853, %v3849
    %v3888 = vpack.c.bf16 %v3855, %v3851
    %v3889 = vpack.c.bf16 %v3863, %v3859
    %v3890 = vpack.c.bf16 %v3865, %v3861
    %v3891 = vpack.c.bf16 %v3873, %v3869
    %v3892 = vpack.c.bf16 %v3875, %v3871
    %3893 = vmatprep.subr.bf16.mxu0 %v3749
    %3894 = vmatpush1.bf16.msra.mxu0 %v3748
    %3895 = vmatprep.subr.bf16.mxu0 %v3751
    %3896 = vmatpush1.bf16.msra.mxu0 %v3750
    %3897 = vmatprep.subr.bf16.mxu0 %v3753
    %3898 = vmatpush1.bf16.msra.mxu0 %v3752
    %3899 = vmatprep.subr.bf16.mxu0 %v3755
    %3900 = vmatpush1.bf16.msra.mxu0 %v3754
    %3901 = vmatprep.subr.bf16.mxu0 %v3757
    %3902 = vmatpush1.bf16.msra.mxu0 %v3756
    %3903 = vmatprep.subr.bf16.mxu0 %v3759
    %3904 = vmatpush1.bf16.msra.mxu0 %v3758
    %3905 = vmatprep.subr.bf16.mxu0 %v3761
    %3906 = vmatpush1.bf16.msra.mxu0 %v3760
    %3907 = vmatprep.subr.bf16.mxu0 %v3763
    %3908 = vmatpush1.bf16.msra.mxu0 %v3762
    %3909 = vmatprep.subr.bf16.mxu0 0
    %3910 = vmatpush1.bf16.msra.mxu0 0
    %3911 = vmatprep.subr.bf16.mxu0 0
    %3912 = vmatpush1.bf16.msra.mxu0 0
    %3913 = vmatprep.subr.bf16.mxu0 0
    %3914 = vmatpush1.bf16.msra.mxu0 0
    %3915 = vmatprep.subr.bf16.mxu0 0
    %3916 = vmatpush1.bf16.msra.mxu0 0
    %3917 = vmatprep.subr.bf16.mxu0 0
    %3918 = vmatpush1.bf16.msra.mxu0 0
    %3919 = vmatprep.subr.bf16.mxu0 0
    %3920 = vmatpush1.bf16.msra.mxu0 0
    %3921 = vmatprep.subr.bf16.mxu0 0
    %3922 = vmatpush1.bf16.msra.mxu0 0
    %3923 = vmatprep.subr.bf16.mxu0 0
    %3924 = vmatpush1.bf16.msra.mxu0 0
    %3925 = vmatprep.mubr.bf16.mxu0 0
    %3926 = vmatmul.mubr.bf16.gmra.mrb[0].mxu0 %v466
    %v3927 = vpop.f32.mrb[0].mxu0
    %v3928 = vadd.f32 0.0, %v3927
    %v3929 = vpop.f32.mrb[0].mxu0
    %v3930 = vadd.f32 0.0, %v3929
    %v3931 = vpop.f32.mrb[0].mxu0
    %v3932 = vadd.f32 0.0, %v3931
    %v3933 = vpop.f32.mrb[0].mxu0
    %v3934 = vadd.f32 0.0, %v3933
    %3935 = vmatprep.mubr.bf16.mxu0 0
    %3936 = vmatmul.mubr.bf16.gmra.mrb[0].mxu0 %v467
    %v3937 = vpop.f32.mrb[0].mxu0
    %v3938 = vadd.f32 0.0, %v3937
    %v3939 = vpop.f32.mrb[0].mxu0
    %v3940 = vadd.f32 0.0, %v3939
    %v3941 = vpop.f32.mrb[0].mxu0
    %v3942 = vadd.f32 0.0, %v3941
    %v3943 = vpop.f32.mrb[0].mxu0
    %v3944 = vadd.f32 0.0, %v3943
    %3945 = vmatprep.mubr.bf16.mxu0 0
    %3946 = vmatmul.mubr.bf16.gmra.mrb[0].mxu0 %v468
    %v3947 = vpop.f32.mrb[0].mxu0
    %v3948 = vadd.f32 0.0, %v3947
    %v3949 = vpop.f32.mrb[0].mxu0
    %v3950 = vadd.f32 0.0, %v3949
    %v3951 = vpop.f32.mrb[0].mxu0
    %v3952 = vadd.f32 0.0, %v3951
    %v3953 = vpop.f32.mrb[0].mxu0
    %v3954 = vadd.f32 0.0, %v3953
    %3955 = vmatprep.mubr.bf16.mxu0 0
    %3956 = vmatmul.mubr.bf16.gmra.mrb[0].mxu0 %v469
    %v3957 = vpop.f32.mrb[0].mxu0
    %v3958 = vadd.f32 0.0, %v3957
    %v3959 = vpop.f32.mrb[0].mxu0
    %v3960 = vadd.f32 0.0, %v3959
    %v3961 = vpop.f32.mrb[0].mxu0
    %v3962 = vadd.f32 0.0, %v3961
    %v3963 = vpop.f32.mrb[0].mxu0
    %v3964 = vadd.f32 0.0, %v3963
    %3965 = vmatprep.mubr.bf16.mxu0 0
    %3966 = vmatmul.mubr.bf16.gmra.mrb[0].mxu0 %v470
    %v3967 = vpop.f32.mrb[0].mxu0
    %v3968 = vadd.f32 0.0, %v3967
    %v3969 = vpop.f32.mrb[0].mxu0
    %v3970 = vadd.f32 0.0, %v3969
    %v3971 = vpop.f32.mrb[0].mxu0
    %v3972 = vadd.f32 0.0, %v3971
    %v3973 = vpop.f32.mrb[0].mxu0
    %v3974 = vadd.f32 0.0, %v3973
    %3975 = vmatprep.mubr.bf16.mxu0 0
    %3976 = vmatmul.mubr.bf16.gmra.mrb[0].mxu0 %v471
    %v3977 = vpop.f32.mrb[0].mxu0
    %v3978 = vadd.f32 0.0, %v3977
    %v3979 = vpop.f32.mrb[0].mxu0
    %v3980 = vadd.f32 0.0, %v3979
    %v3981 = vpop.f32.mrb[0].mxu0
    %v3982 = vadd.f32 0.0, %v3981
    %v3983 = vpop.f32.mrb[0].mxu0
    %v3984 = vadd.f32 0.0, %v3983
    %3985 = vmatprep.mubr.bf16.mxu0 0
    %3986 = vmatmul.mubr.bf16.gmra.mrb[0].mxu0 %v472
    %v3987 = vpop.f32.mrb[0].mxu0
    %v3988 = vadd.f32 0.0, %v3987
    %v3989 = vpop.f32.mrb[0].mxu0
    %v3990 = vadd.f32 0.0, %v3989
    %v3991 = vpop.f32.mrb[0].mxu0
    %v3992 = vadd.f32 0.0, %v3991
    %v3993 = vpop.f32.mrb[0].mxu0
    %v3994 = vadd.f32 0.0, %v3993
    %3995 = vmatprep.mubr.bf16.mxu0 0
    %3996 = vmatmul.mubr.bf16.gmra.mrb[0].mxu0 %v473
    %v3997 = vpop.f32.mrb[0].mxu0
    %v3998 = vadd.f32 0.0, %v3997
    %v3999 = vpop.f32.mrb[0].mxu0
    %v4000 = vadd.f32 0.0, %v3999
    %v4001 = vpop.f32.mrb[0].mxu0
    %v4002 = vadd.f32 0.0, %v4001
    %v4003 = vpop.f32.mrb[0].mxu0
    %v4004 = vadd.f32 0.0, %v4003
    %4005 = vdwg.mxu0
    %v4006 = vpack.c.bf16 %v3932, %v3928
    %v4007 = vpack.c.bf16 %v3934, %v3930
    %v4008 = vpack.c.bf16 %v3942, %v3938
    %v4009 = vpack.c.bf16 %v3944, %v3940
    %v4010 = vpack.c.bf16 %v3952, %v3948
    %v4011 = vpack.c.bf16 %v3954, %v3950
    %v4012 = vpack.c.bf16 %v3962, %v3958
    %v4013 = vpack.c.bf16 %v3964, %v3960
    %v4014 = vpack.c.bf16 %v3972, %v3968
    %v4015 = vpack.c.bf16 %v3974, %v3970
    %v4016 = vpack.c.bf16 %v3982, %v3978
    %v4017 = vpack.c.bf16 %v3984, %v3980
    %v4018 = vpack.c.bf16 %v3992, %v3988
    %v4019 = vpack.c.bf16 %v3994, %v3990
    %v4020 = vpack.c.bf16 %v4002, %v3998
    %v4021 = vpack.c.bf16 %v4004, %v4000
    %s4022 = scalar_lea.vmem [#allocation5], 1536
    %v4023 = vld [vmem:[%s4022] sm:$0xff]
    %v4024 = vld [vmem:[%s4022 + $0x8] sm:$0xff]
    %v4025 = vld [vmem:[%s4022 + $0x10] sm:$0xff]
    %v4026 = vld [vmem:[%s4022 + $0x18] sm:$0xff]
    %v4027 = vld [vmem:[%s4022 + $0x20] sm:$0xff]
    %v4028 = vld [vmem:[%s4022 + $0x28] sm:$0xff]
    %v4029 = vld [vmem:[%s4022 + $0x30] sm:$0xff]
    %v4030 = vld [vmem:[%s4022 + $0x38] sm:$0xff]
    %v4031 = vld [vmem:[%s4022 + $0x40] sm:$0xff]
    %v4032 = vld [vmem:[%s4022 + $0x48] sm:$0xff]
    %v4033 = vld [vmem:[%s4022 + $0x50] sm:$0xff]
    %v4034 = vld [vmem:[%s4022 + $0x58] sm:$0xff]
    %v4035 = vld [vmem:[%s4022 + $0x60] sm:$0xff]
    %v4036 = vld [vmem:[%s4022 + $0x68] sm:$0xff]
    %v4037 = vld [vmem:[%s4022 + $0x70] sm:$0xff]
    %v4038 = vld [vmem:[%s4022 + $0x78] sm:$0xff]
    %v4039 = vld [vmem:[%s4022 + $0x80] sm:$0xff]
    %v4040 = vld [vmem:[%s4022 + $0x88] sm:$0xff]
    %v4041 = vld [vmem:[%s4022 + $0x90] sm:$0xff]
    %v4042 = vld [vmem:[%s4022 + $0x98] sm:$0xff]
    %v4043 = vld [vmem:[%s4022 + $0xa0] sm:$0xff]
    %v4044 = vld [vmem:[%s4022 + $0xa8] sm:$0xff]
    %v4045 = vld [vmem:[%s4022 + $0xb0] sm:$0xff]
    %v4046 = vld [vmem:[%s4022 + $0xb8] sm:$0xff]
    %v4047 = vld [vmem:[%s4022 + $0xc0] sm:$0xff]
    %v4048 = vld [vmem:[%s4022 + $0xc8] sm:$0xff]
    %v4049 = vld [vmem:[%s4022 + $0xd0] sm:$0xff]
    %v4050 = vld [vmem:[%s4022 + $0xd8] sm:$0xff]
    %v4051 = vld [vmem:[%s4022 + $0xe0] sm:$0xff]
    %v4052 = vld [vmem:[%s4022 + $0xe8] sm:$0xff]
    %v4053 = vld [vmem:[%s4022 + $0xf0] sm:$0xff]
    %v4054 = vld [vmem:[%s4022 + $0xf8] sm:$0xff]
    %s4055 = scalar_lea.vmem [#allocation5], 1792
    %v4056 = vld [vmem:[%s4055] sm:$0xff]
    %v4057 = vld [vmem:[%s4055 + $0x8] sm:$0xff]
    %v4058 = vld [vmem:[%s4055 + $0x10] sm:$0xff]
    %v4059 = vld [vmem:[%s4055 + $0x18] sm:$0xff]
    %v4060 = vld [vmem:[%s4055 + $0x20] sm:$0xff]
    %v4061 = vld [vmem:[%s4055 + $0x28] sm:$0xff]
    %v4062 = vld [vmem:[%s4055 + $0x30] sm:$0xff]
    %v4063 = vld [vmem:[%s4055 + $0x38] sm:$0xff]
    %v4064 = vld [vmem:[%s4055 + $0x40] sm:$0xff]
    %v4065 = vld [vmem:[%s4055 + $0x48] sm:$0xff]
    %v4066 = vld [vmem:[%s4055 + $0x50] sm:$0xff]
    %v4067 = vld [vmem:[%s4055 + $0x58] sm:$0xff]
    %v4068 = vld [vmem:[%s4055 + $0x60] sm:$0xff]
    %v4069 = vld [vmem:[%s4055 + $0x68] sm:$0xff]
    %v4070 = vld [vmem:[%s4055 + $0x70] sm:$0xff]
    %v4071 = vld [vmem:[%s4055 + $0x78] sm:$0xff]
    %v4072 = vld [vmem:[%s4055 + $0x80] sm:$0xff]
    %v4073 = vld [vmem:[%s4055 + $0x88] sm:$0xff]
    %v4074 = vld [vmem:[%s4055 + $0x90] sm:$0xff]
    %v4075 = vld [vmem:[%s4055 + $0x98] sm:$0xff]
    %v4076 = vld [vmem:[%s4055 + $0xa0] sm:$0xff]
    %v4077 = vld [vmem:[%s4055 + $0xa8] sm:$0xff]
    %v4078 = vld [vmem:[%s4055 + $0xb0] sm:$0xff]
    %v4079 = vld [vmem:[%s4055 + $0xb8] sm:$0xff]
    %v4080 = vld [vmem:[%s4055 + $0xc0] sm:$0xff]
    %v4081 = vld [vmem:[%s4055 + $0xc8] sm:$0xff]
    %v4082 = vld [vmem:[%s4055 + $0xd0] sm:$0xff]
    %v4083 = vld [vmem:[%s4055 + $0xd8] sm:$0xff]
    %v4084 = vld [vmem:[%s4055 + $0xe0] sm:$0xff]
    %v4085 = vld [vmem:[%s4055 + $0xe8] sm:$0xff]
    %v4086 = vld [vmem:[%s4055 + $0xf0] sm:$0xff]
    %v4087 = vld [vmem:[%s4055 + $0xf8] sm:$0xff]
    %v4120 = vunpack.c.l.b16 %v4056
    %v4121 = vunpack.c.h.b16 %v4056
    %v4122 = vunpack.c.l.b16 %v4057
    %v4123 = vunpack.c.h.b16 %v4057
    %v4124 = vunpack.c.l.b16 %v4058
    %v4125 = vunpack.c.h.b16 %v4058
    %v4126 = vunpack.c.l.b16 %v4059
    %v4127 = vunpack.c.h.b16 %v4059
    %v4128 = vunpack.c.l.b16 %v4060
    %v4129 = vunpack.c.h.b16 %v4060
    %v4130 = vunpack.c.l.b16 %v4061
    %v4131 = vunpack.c.h.b16 %v4061
    %v4132 = vunpack.c.l.b16 %v4062
    %v4133 = vunpack.c.h.b16 %v4062
    %v4134 = vunpack.c.l.b16 %v4063
    %v4135 = vunpack.c.h.b16 %v4063
    %v4136 = vunpack.c.l.b16 %v4064
    %v4137 = vunpack.c.h.b16 %v4064
    %v4138 = vunpack.c.l.b16 %v4065
    %v4139 = vunpack.c.h.b16 %v4065
    %v4140 = vunpack.c.l.b16 %v4066
    %v4141 = vunpack.c.h.b16 %v4066
    %v4142 = vunpack.c.l.b16 %v4067
    %v4143 = vunpack.c.h.b16 %v4067
    %v4144 = vunpack.c.l.b16 %v4068
    %v4145 = vunpack.c.h.b16 %v4068
    %v4146 = vunpack.c.l.b16 %v4069
    %v4147 = vunpack.c.h.b16 %v4069
    %v4148 = vunpack.c.l.b16 %v4070
    %v4149 = vunpack.c.h.b16 %v4070
    %v4150 = vunpack.c.l.b16 %v4071
    %v4151 = vunpack.c.h.b16 %v4071
    %v4152 = vunpack.c.l.b16 %v4072
    %v4153 = vunpack.c.h.b16 %v4072
    %v4154 = vunpack.c.l.b16 %v4073
    %v4155 = vunpack.c.h.b16 %v4073
    %v4156 = vunpack.c.l.b16 %v4074
    %v4157 = vunpack.c.h.b16 %v4074
    %v4158 = vunpack.c.l.b16 %v4075
    %v4159 = vunpack.c.h.b16 %v4075
    %v4160 = vunpack.c.l.b16 %v4076
    %v4161 = vunpack.c.h.b16 %v4076
    %v4162 = vunpack.c.l.b16 %v4077
    %v4163 = vunpack.c.h.b16 %v4077
    %v4164 = vunpack.c.l.b16 %v4078
    %v4165 = vunpack.c.h.b16 %v4078
    %v4166 = vunpack.c.l.b16 %v4079
    %v4167 = vunpack.c.h.b16 %v4079
    %v4168 = vunpack.c.l.b16 %v4080
    %v4169 = vunpack.c.h.b16 %v4080
    %v4170 = vunpack.c.l.b16 %v4081
    %v4171 = vunpack.c.h.b16 %v4081
    %v4172 = vunpack.c.l.b16 %v4082
    %v4173 = vunpack.c.h.b16 %v4082
    %v4174 = vunpack.c.l.b16 %v4083
    %v4175 = vunpack.c.h.b16 %v4083
    %v4176 = vunpack.c.l.b16 %v4084
    %v4177 = vunpack.c.h.b16 %v4084
    %v4178 = vunpack.c.l.b16 %v4085
    %v4179 = vunpack.c.h.b16 %v4085
    %v4180 = vunpack.c.l.b16 %v4086
    %v4181 = vunpack.c.h.b16 %v4086
    %v4182 = vunpack.c.l.b16 %v4087
    %v4183 = vunpack.c.h.b16 %v4087
    %v4184 = vpack.c.b16 %v4122, %v4120
    %v4185 = vpack.c.b16 %v4123, %v4121
    %v4186 = vpack.c.b16 %v4126, %v4124
    %v4187 = vpack.c.b16 %v4127, %v4125
    %v4188 = vpack.c.b16 %v4130, %v4128
    %v4189 = vpack.c.b16 %v4131, %v4129
    %v4190 = vpack.c.b16 %v4134, %v4132
    %v4191 = vpack.c.b16 %v4135, %v4133
    %v4192 = vpack.c.b16 %v4138, %v4136
    %v4193 = vpack.c.b16 %v4139, %v4137
    %v4194 = vpack.c.b16 %v4142, %v4140
    %v4195 = vpack.c.b16 %v4143, %v4141
    %v4196 = vpack.c.b16 %v4146, %v4144
    %v4197 = vpack.c.b16 %v4147, %v4145
    %v4198 = vpack.c.b16 %v4150, %v4148
    %v4199 = vpack.c.b16 %v4151, %v4149
    %v4200 = vpack.c.b16 %v4154, %v4152
    %v4201 = vpack.c.b16 %v4155, %v4153
    %v4202 = vpack.c.b16 %v4158, %v4156
    %v4203 = vpack.c.b16 %v4159, %v4157
    %v4204 = vpack.c.b16 %v4162, %v4160
    %v4205 = vpack.c.b16 %v4163, %v4161
    %v4206 = vpack.c.b16 %v4166, %v4164
    %v4207 = vpack.c.b16 %v4167, %v4165
    %v4208 = vpack.c.b16 %v4170, %v4168
    %v4209 = vpack.c.b16 %v4171, %v4169
    %v4210 = vpack.c.b16 %v4174, %v4172
    %v4211 = vpack.c.b16 %v4175, %v4173
    %v4212 = vpack.c.b16 %v4178, %v4176
    %v4213 = vpack.c.b16 %v4179, %v4177
    %v4214 = vpack.c.b16 %v4182, %v4180
    %v4215 = vpack.c.b16 %v4183, %v4181
    %4248 = vmatprep.subr.bf16.mxu0 %v4185
    %4249 = vmatpush1.bf16.msra.mxu0 %v4184
    %4250 = vmatprep.subr.bf16.mxu0 %v4187
    %4251 = vmatpush1.bf16.msra.mxu0 %v4186
    %4252 = vmatprep.subr.bf16.mxu0 %v4189
    %4253 = vmatpush1.bf16.msra.mxu0 %v4188
    %4254 = vmatprep.subr.bf16.mxu0 %v4191
    %4255 = vmatpush1.bf16.msra.mxu0 %v4190
    %4256 = vmatprep.subr.bf16.mxu0 %v4193
    %4257 = vmatpush1.bf16.msra.mxu0 %v4192
    %4258 = vmatprep.subr.bf16.mxu0 %v4195
    %4259 = vmatpush1.bf16.msra.mxu0 %v4194
    %4260 = vmatprep.subr.bf16.mxu0 %v4197
    %4261 = vmatpush1.bf16.msra.mxu0 %v4196
    %4262 = vmatprep.subr.bf16.mxu0 %v4199
    %4263 = vmatpush1.bf16.msra.mxu0 %v4198
    %4264 = vmatprep.subr.bf16.mxu0 %v4201
    %4265 = vmatpush1.bf16.msra.mxu0 %v4200
    %4266 = vmatprep.subr.bf16.mxu0 %v4203
    %4267 = vmatpush1.bf16.msra.mxu0 %v4202
    %4268 = vmatprep.subr.bf16.mxu0 %v4205
    %4269 = vmatpush1.bf16.msra.mxu0 %v4204
    %4270 = vmatprep.subr.bf16.mxu0 %v4207
    %4271 = vmatpush1.bf16.msra.mxu0 %v4206
    %4272 = vmatprep.subr.bf16.mxu0 %v4209
    %4273 = vmatpush1.bf16.msra.mxu0 %v4208
    %4274 = vmatprep.subr.bf16.mxu0 %v4211
    %4275 = vmatpush1.bf16.msra.mxu0 %v4210
    %4276 = vmatprep.subr.bf16.mxu0 %v4213
    %4277 = vmatpush1.bf16.msra.mxu0 %v4212
    %4278 = vmatprep.subr.bf16.mxu0 %v4215
    %4279 = vmatpush1.bf16.msra.mxu0 %v4214
    %4280 = vmatprep.mubr.bf16.mxu0 %v3749
    %4281 = vmatmul.mubr.bf16.gmra.mrb[0].mxu0 %v3748
    %v4282 = vpop.f32.mrb[0].mxu0
    %v4283 = vadd.f32 0.0, %v4282
    %v4284 = vpop.f32.mrb[0].mxu0
    %v4285 = vadd.f32 0.0, %v4284
    %v4286 = vpop.f32.mrb[0].mxu0
    %v4287 = vadd.f32 0.0, %v4286
    %v4288 = vpop.f32.mrb[0].mxu0
    %v4289 = vadd.f32 0.0, %v4288
    %4290 = vmatprep.mubr.bf16.mxu0 %v3751
    %4291 = vmatmul.mubr.bf16.gmra.mrb[0].mxu0 %v3750
    %v4292 = vpop.f32.mrb[0].mxu0
    %v4293 = vadd.f32 0.0, %v4292
    %v4294 = vpop.f32.mrb[0].mxu0
    %v4295 = vadd.f32 0.0, %v4294
    %v4296 = vpop.f32.mrb[0].mxu0
    %v4297 = vadd.f32 0.0, %v4296
    %v4298 = vpop.f32.mrb[0].mxu0
    %v4299 = vadd.f32 0.0, %v4298
    %4300 = vmatprep.mubr.bf16.mxu0 %v3753
    %4301 = vmatmul.mubr.bf16.gmra.mrb[0].mxu0 %v3752
    %v4302 = vpop.f32.mrb[0].mxu0
    %v4303 = vadd.f32 0.0, %v4302
    %v4304 = vpop.f32.mrb[0].mxu0
    %v4305 = vadd.f32 0.0, %v4304
    %v4306 = vpop.f32.mrb[0].mxu0
    %v4307 = vadd.f32 0.0, %v4306
    %v4308 = vpop.f32.mrb[0].mxu0
    %v4309 = vadd.f32 0.0, %v4308
    %4310 = vmatprep.mubr.bf16.mxu0 %v3755
    %4311 = vmatmul.mubr.bf16.gmra.mrb[0].mxu0 %v3754
    %v4312 = vpop.f32.mrb[0].mxu0
    %v4313 = vadd.f32 0.0, %v4312
    %v4314 = vpop.f32.mrb[0].mxu0
    %v4315 = vadd.f32 0.0, %v4314
    %v4316 = vpop.f32.mrb[0].mxu0
    %v4317 = vadd.f32 0.0, %v4316
    %v4318 = vpop.f32.mrb[0].mxu0
    %v4319 = vadd.f32 0.0, %v4318
    %4320 = vmatprep.mubr.bf16.mxu0 %v3757
    %4321 = vmatmul.mubr.bf16.gmra.mrb[0].mxu0 %v3756
    %v4322 = vpop.f32.mrb[0].mxu0
    %v4323 = vadd.f32 0.0, %v4322
    %v4324 = vpop.f32.mrb[0].mxu0
    %v4325 = vadd.f32 0.0, %v4324
    %v4326 = vpop.f32.mrb[0].mxu0
    %v4327 = vadd.f32 0.0, %v4326
    %v4328 = vpop.f32.mrb[0].mxu0
    %v4329 = vadd.f32 0.0, %v4328
    %4330 = vmatprep.mubr.bf16.mxu0 %v3759
    %4331 = vmatmul.mubr.bf16.gmra.mrb[0].mxu0 %v3758
    %v4332 = vpop.f32.mrb[0].mxu0
    %v4333 = vadd.f32 0.0, %v4332
    %v4334 = vpop.f32.mrb[0].mxu0
    %v4335 = vadd.f32 0.0, %v4334
    %v4336 = vpop.f32.mrb[0].mxu0
    %v4337 = vadd.f32 0.0, %v4336
    %v4338 = vpop.f32.mrb[0].mxu0
    %v4339 = vadd.f32 0.0, %v4338
    %4340 = vmatprep.mubr.bf16.mxu0 %v3761
    %4341 = vmatmul.mubr.bf16.gmra.mrb[0].mxu0 %v3760
    %v4342 = vpop.f32.mrb[0].mxu0
    %v4343 = vadd.f32 0.0, %v4342
    %v4344 = vpop.f32.mrb[0].mxu0
    %v4345 = vadd.f32 0.0, %v4344
    %v4346 = vpop.f32.mrb[0].mxu0
    %v4347 = vadd.f32 0.0, %v4346
    %v4348 = vpop.f32.mrb[0].mxu0
    %v4349 = vadd.f32 0.0, %v4348
    %4350 = vmatprep.mubr.bf16.mxu0 %v3763
    %4351 = vmatmul.mubr.bf16.gmra.mrb[0].mxu0 %v3762
    %v4352 = vpop.f32.mrb[0].mxu0
    %v4353 = vadd.f32 0.0, %v4352
    %v4354 = vpop.f32.mrb[0].mxu0
    %v4355 = vadd.f32 0.0, %v4354
    %v4356 = vpop.f32.mrb[0].mxu0
    %v4357 = vadd.f32 0.0, %v4356
    %v4358 = vpop.f32.mrb[0].mxu0
    %v4359 = vadd.f32 0.0, %v4358
    %4360 = vdwg.mxu0
    %v4393 = vunpack.c.l.b16 %v4023
    %v4394 = vunpack.c.h.b16 %v4023
    %v4395 = vunpack.c.l.b16 %v4024
    %v4396 = vunpack.c.h.b16 %v4024
    %v4397 = vunpack.c.l.b16 %v4025
    %v4398 = vunpack.c.h.b16 %v4025
    %v4399 = vunpack.c.l.b16 %v4026
    %v4400 = vunpack.c.h.b16 %v4026
    %v4401 = vunpack.c.l.b16 %v4027
    %v4402 = vunpack.c.h.b16 %v4027
    %v4403 = vunpack.c.l.b16 %v4028
    %v4404 = vunpack.c.h.b16 %v4028
    %v4405 = vunpack.c.l.b16 %v4029
    %v4406 = vunpack.c.h.b16 %v4029
    %v4407 = vunpack.c.l.b16 %v4030
    %v4408 = vunpack.c.h.b16 %v4030
    %v4409 = vunpack.c.l.b16 %v4031
    %v4410 = vunpack.c.h.b16 %v4031
    %v4411 = vunpack.c.l.b16 %v4032
    %v4412 = vunpack.c.h.b16 %v4032
    %v4413 = vunpack.c.l.b16 %v4033
    %v4414 = vunpack.c.h.b16 %v4033
    %v4415 = vunpack.c.l.b16 %v4034
    %v4416 = vunpack.c.h.b16 %v4034
    %v4417 = vunpack.c.l.b16 %v4035
    %v4418 = vunpack.c.h.b16 %v4035
    %v4419 = vunpack.c.l.b16 %v4036
    %v4420 = vunpack.c.h.b16 %v4036
    %v4421 = vunpack.c.l.b16 %v4037
    %v4422 = vunpack.c.h.b16 %v4037
    %v4423 = vunpack.c.l.b16 %v4038
    %v4424 = vunpack.c.h.b16 %v4038
    %v4425 = vunpack.c.l.b16 %v4039
    %v4426 = vunpack.c.h.b16 %v4039
    %v4427 = vunpack.c.l.b16 %v4040
    %v4428 = vunpack.c.h.b16 %v4040
    %v4429 = vunpack.c.l.b16 %v4041
    %v4430 = vunpack.c.h.b16 %v4041
    %v4431 = vunpack.c.l.b16 %v4042
    %v4432 = vunpack.c.h.b16 %v4042
    %v4433 = vunpack.c.l.b16 %v4043
    %v4434 = vunpack.c.h.b16 %v4043
    %v4435 = vunpack.c.l.b16 %v4044
    %v4436 = vunpack.c.h.b16 %v4044
    %v4437 = vunpack.c.l.b16 %v4045
    %v4438 = vunpack.c.h.b16 %v4045
    %v4439 = vunpack.c.l.b16 %v4046
    %v4440 = vunpack.c.h.b16 %v4046
    %v4441 = vunpack.c.l.b16 %v4047
    %v4442 = vunpack.c.h.b16 %v4047
    %v4443 = vunpack.c.l.b16 %v4048
    %v4444 = vunpack.c.h.b16 %v4048
    %v4445 = vunpack.c.l.b16 %v4049
    %v4446 = vunpack.c.h.b16 %v4049
    %v4447 = vunpack.c.l.b16 %v4050
    %v4448 = vunpack.c.h.b16 %v4050
    %v4449 = vunpack.c.l.b16 %v4051
    %v4450 = vunpack.c.h.b16 %v4051
    %v4451 = vunpack.c.l.b16 %v4052
    %v4452 = vunpack.c.h.b16 %v4052
    %v4453 = vunpack.c.l.b16 %v4053
    %v4454 = vunpack.c.h.b16 %v4053
    %v4455 = vunpack.c.l.b16 %v4054
    %v4456 = vunpack.c.h.b16 %v4054
    %v4457 = vpack.c.b16 %v4395, %v4393
    %v4458 = vpack.c.b16 %v4396, %v4394
    %v4459 = vpack.c.b16 %v4399, %v4397
    %v4460 = vpack.c.b16 %v4400, %v4398
    %v4461 = vpack.c.b16 %v4403, %v4401
    %v4462 = vpack.c.b16 %v4404, %v4402
    %v4463 = vpack.c.b16 %v4407, %v4405
    %v4464 = vpack.c.b16 %v4408, %v4406
    %v4465 = vpack.c.b16 %v4411, %v4409
    %v4466 = vpack.c.b16 %v4412, %v4410
    %v4467 = vpack.c.b16 %v4415, %v4413
    %v4468 = vpack.c.b16 %v4416, %v4414
    %v4469 = vpack.c.b16 %v4419, %v4417
    %v4470 = vpack.c.b16 %v4420, %v4418
    %v4471 = vpack.c.b16 %v4423, %v4421
    %v4472 = vpack.c.b16 %v4424, %v4422
    %v4473 = vpack.c.b16 %v4427, %v4425
    %v4474 = vpack.c.b16 %v4428, %v4426
    %v4475 = vpack.c.b16 %v4431, %v4429
    %v4476 = vpack.c.b16 %v4432, %v4430
    %v4477 = vpack.c.b16 %v4435, %v4433
    %v4478 = vpack.c.b16 %v4436, %v4434
    %v4479 = vpack.c.b16 %v4439, %v4437
    %v4480 = vpack.c.b16 %v4440, %v4438
    %v4481 = vpack.c.b16 %v4443, %v4441
    %v4482 = vpack.c.b16 %v4444, %v4442
    %v4483 = vpack.c.b16 %v4447, %v4445
    %v4484 = vpack.c.b16 %v4448, %v4446
    %v4485 = vpack.c.b16 %v4451, %v4449
    %v4486 = vpack.c.b16 %v4452, %v4450
    %v4487 = vpack.c.b16 %v4455, %v4453
    %v4488 = vpack.c.b16 %v4456, %v4454
    %4521 = vmatprep.subr.bf16.mxu0 %v4458
    %4522 = vmatpush1.bf16.msra.mxu0 %v4457
    %4523 = vmatprep.subr.bf16.mxu0 %v4460
    %4524 = vmatpush1.bf16.msra.mxu0 %v4459
    %4525 = vmatprep.subr.bf16.mxu0 %v4462
    %4526 = vmatpush1.bf16.msra.mxu0 %v4461
    %4527 = vmatprep.subr.bf16.mxu0 %v4464
    %4528 = vmatpush1.bf16.msra.mxu0 %v4463
    %4529 = vmatprep.subr.bf16.mxu0 %v4466
    %4530 = vmatpush1.bf16.msra.mxu0 %v4465
    %4531 = vmatprep.subr.bf16.mxu0 %v4468
    %4532 = vmatpush1.bf16.msra.mxu0 %v4467
    %4533 = vmatprep.subr.bf16.mxu0 %v4470
    %4534 = vmatpush1.bf16.msra.mxu0 %v4469
    %4535 = vmatprep.subr.bf16.mxu0 %v4472
    %4536 = vmatpush1.bf16.msra.mxu0 %v4471
    %4537 = vmatprep.subr.bf16.mxu0 %v4474
    %4538 = vmatpush1.bf16.msra.mxu0 %v4473
    %4539 = vmatprep.subr.bf16.mxu0 %v4476
    %4540 = vmatpush1.bf16.msra.mxu0 %v4475
    %4541 = vmatprep.subr.bf16.mxu0 %v4478
    %4542 = vmatpush1.bf16.msra.mxu0 %v4477
    %4543 = vmatprep.subr.bf16.mxu0 %v4480
    %4544 = vmatpush1.bf16.msra.mxu0 %v4479
    %4545 = vmatprep.subr.bf16.mxu0 %v4482
    %4546 = vmatpush1.bf16.msra.mxu0 %v4481
    %4547 = vmatprep.subr.bf16.mxu0 %v4484
    %4548 = vmatpush1.bf16.msra.mxu0 %v4483
    %4549 = vmatprep.subr.bf16.mxu0 %v4486
    %4550 = vmatpush1.bf16.msra.mxu0 %v4485
    %4551 = vmatprep.subr.bf16.mxu0 %v4488
    %4552 = vmatpush1.bf16.msra.mxu0 %v4487
    %4553 = vmatprep.mubr.bf16.mxu0 %v3878
    %4554 = vmatmul.mubr.bf16.gmra.mrb[0].mxu0 %v3877
    %v4555 = vpop.f32.mrb[0].mxu0
    %v4556 = vadd.f32 %v4283, %v4555
    %v4557 = vpop.f32.mrb[0].mxu0
    %v4558 = vadd.f32 %v4285, %v4557
    %v4559 = vpop.f32.mrb[0].mxu0
    %v4560 = vadd.f32 %v4287, %v4559
    %v4561 = vpop.f32.mrb[0].mxu0
    %v4562 = vadd.f32 %v4289, %v4561
    %4563 = vmatprep.mubr.bf16.mxu0 %v3880
    %4564 = vmatmul.mubr.bf16.gmra.mrb[0].mxu0 %v3879
    %v4565 = vpop.f32.mrb[0].mxu0
    %v4566 = vadd.f32 %v4293, %v4565
    %v4567 = vpop.f32.mrb[0].mxu0
    %v4568 = vadd.f32 %v4295, %v4567
    %v4569 = vpop.f32.mrb[0].mxu0
    %v4570 = vadd.f32 %v4297, %v4569
    %v4571 = vpop.f32.mrb[0].mxu0
    %v4572 = vadd.f32 %v4299, %v4571
    %4573 = vmatprep.mubr.bf16.mxu0 %v3882
    %4574 = vmatmul.mubr.bf16.gmra.mrb[0].mxu0 %v3881
    %v4575 = vpop.f32.mrb[0].mxu0
    %v4576 = vadd.f32 %v4303, %v4575
    %v4577 = vpop.f32.mrb[0].mxu0
    %v4578 = vadd.f32 %v4305, %v4577
    %v4579 = vpop.f32.mrb[0].mxu0
    %v4580 = vadd.f32 %v4307, %v4579
    %v4581 = vpop.f32.mrb[0].mxu0
    %v4582 = vadd.f32 %v4309, %v4581
    %4583 = vmatprep.mubr.bf16.mxu0 %v3884
    %4584 = vmatmul.mubr.bf16.gmra.mrb[0].mxu0 %v3883
    %v4585 = vpop.f32.mrb[0].mxu0
    %v4586 = vadd.f32 %v4313, %v4585
    %v4587 = vpop.f32.mrb[0].mxu0
    %v4588 = vadd.f32 %v4315, %v4587
    %v4589 = vpop.f32.mrb[0].mxu0
    %v4590 = vadd.f32 %v4317, %v4589
    %v4591 = vpop.f32.mrb[0].mxu0
    %v4592 = vadd.f32 %v4319, %v4591
    %4593 = vmatprep.mubr.bf16.mxu0 %v3886
    %4594 = vmatmul.mubr.bf16.gmra.mrb[0].mxu0 %v3885
    %v4595 = vpop.f32.mrb[0].mxu0
    %v4596 = vadd.f32 %v4323, %v4595
    %v4597 = vpop.f32.mrb[0].mxu0
    %v4598 = vadd.f32 %v4325, %v4597
    %v4599 = vpop.f32.mrb[0].mxu0
    %v4600 = vadd.f32 %v4327, %v4599
    %v4601 = vpop.f32.mrb[0].mxu0
    %v4602 = vadd.f32 %v4329, %v4601
    %4603 = vmatprep.mubr.bf16.mxu0 %v3888
    %4604 = vmatmul.mubr.bf16.gmra.mrb[0].mxu0 %v3887
    %v4605 = vpop.f32.mrb[0].mxu0
    %v4606 = vadd.f32 %v4333, %v4605
    %v4607 = vpop.f32.mrb[0].mxu0
    %v4608 = vadd.f32 %v4335, %v4607
    %v4609 = vpop.f32.mrb[0].mxu0
    %v4610 = vadd.f32 %v4337, %v4609
    %v4611 = vpop.f32.mrb[0].mxu0
    %v4612 = vadd.f32 %v4339, %v4611
    %4613 = vmatprep.mubr.bf16.mxu0 %v3890
    %4614 = vmatmul.mubr.bf16.gmra.mrb[0].mxu0 %v3889
    %v4615 = vpop.f32.mrb[0].mxu0
    %v4616 = vadd.f32 %v4343, %v4615
    %v4617 = vpop.f32.mrb[0].mxu0
    %v4618 = vadd.f32 %v4345, %v4617
    %v4619 = vpop.f32.mrb[0].mxu0
    %v4620 = vadd.f32 %v4347, %v4619
    %v4621 = vpop.f32.mrb[0].mxu0
    %v4622 = vadd.f32 %v4349, %v4621
    %4623 = vmatprep.mubr.bf16.mxu0 %v3892
    %4624 = vmatmul.mubr.bf16.gmra.mrb[0].mxu0 %v3891
    %v4625 = vpop.f32.mrb[0].mxu0
    %v4626 = vadd.f32 %v4353, %v4625
    %v4627 = vpop.f32.mrb[0].mxu0
    %v4628 = vadd.f32 %v4355, %v4627
    %v4629 = vpop.f32.mrb[0].mxu0
    %v4630 = vadd.f32 %v4357, %v4629
    %v4631 = vpop.f32.mrb[0].mxu0
    %v4632 = vadd.f32 %v4359, %v4631
    %4633 = vdwg.mxu0
    %s4634 = scalar_lea.vmem [#allocation5], 2048
    %v4635 = vld [vmem:[%s4634] sm:$0xff]
    %v4636 = vld [vmem:[%s4634 + $0x8] sm:$0xff]
    %v4637 = vld [vmem:[%s4634 + $0x10] sm:$0xff]
    %v4638 = vld [vmem:[%s4634 + $0x18] sm:$0xff]
    %v4639 = vld [vmem:[%s4634 + $0x20] sm:$0xff]
    %v4640 = vld [vmem:[%s4634 + $0x28] sm:$0xff]
    %v4641 = vld [vmem:[%s4634 + $0x30] sm:$0xff]
    %v4642 = vld [vmem:[%s4634 + $0x38] sm:$0xff]
    %v4643 = vld [vmem:[%s4634 + $0x40] sm:$0xff]
    %v4644 = vld [vmem:[%s4634 + $0x48] sm:$0xff]
    %v4645 = vld [vmem:[%s4634 + $0x50] sm:$0xff]
    %v4646 = vld [vmem:[%s4634 + $0x58] sm:$0xff]
    %v4647 = vld [vmem:[%s4634 + $0x60] sm:$0xff]
    %v4648 = vld [vmem:[%s4634 + $0x68] sm:$0xff]
    %v4649 = vld [vmem:[%s4634 + $0x70] sm:$0xff]
    %v4650 = vld [vmem:[%s4634 + $0x78] sm:$0xff]
    %v4651 = vld [vmem:[%s4634 + $0x80] sm:$0xff]
    %v4652 = vld [vmem:[%s4634 + $0x88] sm:$0xff]
    %v4653 = vld [vmem:[%s4634 + $0x90] sm:$0xff]
    %v4654 = vld [vmem:[%s4634 + $0x98] sm:$0xff]
    %v4655 = vld [vmem:[%s4634 + $0xa0] sm:$0xff]
    %v4656 = vld [vmem:[%s4634 + $0xa8] sm:$0xff]
    %v4657 = vld [vmem:[%s4634 + $0xb0] sm:$0xff]
    %v4658 = vld [vmem:[%s4634 + $0xb8] sm:$0xff]
    %v4659 = vld [vmem:[%s4634 + $0xc0] sm:$0xff]
    %v4660 = vld [vmem:[%s4634 + $0xc8] sm:$0xff]
    %v4661 = vld [vmem:[%s4634 + $0xd0] sm:$0xff]
    %v4662 = vld [vmem:[%s4634 + $0xd8] sm:$0xff]
    %v4663 = vld [vmem:[%s4634 + $0xe0] sm:$0xff]
    %v4664 = vld [vmem:[%s4634 + $0xe8] sm:$0xff]
    %v4665 = vld [vmem:[%s4634 + $0xf0] sm:$0xff]
    %v4666 = vld [vmem:[%s4634 + $0xf8] sm:$0xff]
    %v4699 = vunpack.c.l.b16 %v4635
    %v4700 = vunpack.c.h.b16 %v4635
    %v4701 = vunpack.c.l.b16 %v4636
    %v4702 = vunpack.c.h.b16 %v4636
    %v4703 = vunpack.c.l.b16 %v4637
    %v4704 = vunpack.c.h.b16 %v4637
    %v4705 = vunpack.c.l.b16 %v4638
    %v4706 = vunpack.c.h.b16 %v4638
    %v4707 = vunpack.c.l.b16 %v4639
    %v4708 = vunpack.c.h.b16 %v4639
    %v4709 = vunpack.c.l.b16 %v4640
    %v4710 = vunpack.c.h.b16 %v4640
    %v4711 = vunpack.c.l.b16 %v4641
    %v4712 = vunpack.c.h.b16 %v4641
    %v4713 = vunpack.c.l.b16 %v4642
    %v4714 = vunpack.c.h.b16 %v4642
    %v4715 = vunpack.c.l.b16 %v4643
    %v4716 = vunpack.c.h.b16 %v4643
    %v4717 = vunpack.c.l.b16 %v4644
    %v4718 = vunpack.c.h.b16 %v4644
    %v4719 = vunpack.c.l.b16 %v4645
    %v4720 = vunpack.c.h.b16 %v4645
    %v4721 = vunpack.c.l.b16 %v4646
    %v4722 = vunpack.c.h.b16 %v4646
    %v4723 = vunpack.c.l.b16 %v4647
    %v4724 = vunpack.c.h.b16 %v4647
    %v4725 = vunpack.c.l.b16 %v4648
    %v4726 = vunpack.c.h.b16 %v4648
    %v4727 = vunpack.c.l.b16 %v4649
    %v4728 = vunpack.c.h.b16 %v4649
    %v4729 = vunpack.c.l.b16 %v4650
    %v4730 = vunpack.c.h.b16 %v4650
    %v4731 = vunpack.c.l.b16 %v4651
    %v4732 = vunpack.c.h.b16 %v4651
    %v4733 = vunpack.c.l.b16 %v4652
    %v4734 = vunpack.c.h.b16 %v4652
    %v4735 = vunpack.c.l.b16 %v4653
    %v4736 = vunpack.c.h.b16 %v4653
    %v4737 = vunpack.c.l.b16 %v4654
    %v4738 = vunpack.c.h.b16 %v4654
    %v4739 = vunpack.c.l.b16 %v4655
    %v4740 = vunpack.c.h.b16 %v4655
    %v4741 = vunpack.c.l.b16 %v4656
    %v4742 = vunpack.c.h.b16 %v4656
    %v4743 = vunpack.c.l.b16 %v4657
    %v4744 = vunpack.c.h.b16 %v4657
    %v4745 = vunpack.c.l.b16 %v4658
    %v4746 = vunpack.c.h.b16 %v4658
    %v4747 = vunpack.c.l.b16 %v4659
    %v4748 = vunpack.c.h.b16 %v4659
    %v4749 = vunpack.c.l.b16 %v4660
    %v4750 = vunpack.c.h.b16 %v4660
    %v4751 = vunpack.c.l.b16 %v4661
    %v4752 = vunpack.c.h.b16 %v4661
    %v4753 = vunpack.c.l.b16 %v4662
    %v4754 = vunpack.c.h.b16 %v4662
    %v4755 = vunpack.c.l.b16 %v4663
    %v4756 = vunpack.c.h.b16 %v4663
    %v4757 = vunpack.c.l.b16 %v4664
    %v4758 = vunpack.c.h.b16 %v4664
    %v4759 = vunpack.c.l.b16 %v4665
    %v4760 = vunpack.c.h.b16 %v4665
    %v4761 = vunpack.c.l.b16 %v4666
    %v4762 = vunpack.c.h.b16 %v4666
    %v4763 = vpack.c.b16 %v4701, %v4699
    %v4764 = vpack.c.b16 %v4702, %v4700
    %v4765 = vpack.c.b16 %v4705, %v4703
    %v4766 = vpack.c.b16 %v4706, %v4704
    %v4767 = vpack.c.b16 %v4709, %v4707
    %v4768 = vpack.c.b16 %v4710, %v4708
    %v4769 = vpack.c.b16 %v4713, %v4711
    %v4770 = vpack.c.b16 %v4714, %v4712
    %v4771 = vpack.c.b16 %v4717, %v4715
    %v4772 = vpack.c.b16 %v4718, %v4716
    %v4773 = vpack.c.b16 %v4721, %v4719
    %v4774 = vpack.c.b16 %v4722, %v4720
    %v4775 = vpack.c.b16 %v4725, %v4723
    %v4776 = vpack.c.b16 %v4726, %v4724
    %v4777 = vpack.c.b16 %v4729, %v4727
    %v4778 = vpack.c.b16 %v4730, %v4728
    %v4779 = vpack.c.b16 %v4733, %v4731
    %v4780 = vpack.c.b16 %v4734, %v4732
    %v4781 = vpack.c.b16 %v4737, %v4735
    %v4782 = vpack.c.b16 %v4738, %v4736
    %v4783 = vpack.c.b16 %v4741, %v4739
    %v4784 = vpack.c.b16 %v4742, %v4740
    %v4785 = vpack.c.b16 %v4745, %v4743
    %v4786 = vpack.c.b16 %v4746, %v4744
    %v4787 = vpack.c.b16 %v4749, %v4747
    %v4788 = vpack.c.b16 %v4750, %v4748
    %v4789 = vpack.c.b16 %v4753, %v4751
    %v4790 = vpack.c.b16 %v4754, %v4752
    %v4791 = vpack.c.b16 %v4757, %v4755
    %v4792 = vpack.c.b16 %v4758, %v4756
    %v4793 = vpack.c.b16 %v4761, %v4759
    %v4794 = vpack.c.b16 %v4762, %v4760
    %4827 = vmatprep.subr.bf16.mxu0 %v4764
    %4828 = vmatpush1.bf16.msra.mxu0 %v4763
    %4829 = vmatprep.subr.bf16.mxu0 %v4766
    %4830 = vmatpush1.bf16.msra.mxu0 %v4765
    %4831 = vmatprep.subr.bf16.mxu0 %v4768
    %4832 = vmatpush1.bf16.msra.mxu0 %v4767
    %4833 = vmatprep.subr.bf16.mxu0 %v4770
    %4834 = vmatpush1.bf16.msra.mxu0 %v4769
    %4835 = vmatprep.subr.bf16.mxu0 %v4772
    %4836 = vmatpush1.bf16.msra.mxu0 %v4771
    %4837 = vmatprep.subr.bf16.mxu0 %v4774
    %4838 = vmatpush1.bf16.msra.mxu0 %v4773
    %4839 = vmatprep.subr.bf16.mxu0 %v4776
    %4840 = vmatpush1.bf16.msra.mxu0 %v4775
    %4841 = vmatprep.subr.bf16.mxu0 %v4778
    %4842 = vmatpush1.bf16.msra.mxu0 %v4777
    %4843 = vmatprep.subr.bf16.mxu0 %v4780
    %4844 = vmatpush1.bf16.msra.mxu0 %v4779
    %4845 = vmatprep.subr.bf16.mxu0 %v4782
    %4846 = vmatpush1.bf16.msra.mxu0 %v4781
    %4847 = vmatprep.subr.bf16.mxu0 %v4784
    %4848 = vmatpush1.bf16.msra.mxu0 %v4783
    %4849 = vmatprep.subr.bf16.mxu0 %v4786
    %4850 = vmatpush1.bf16.msra.mxu0 %v4785
    %4851 = vmatprep.subr.bf16.mxu0 %v4788
    %4852 = vmatpush1.bf16.msra.mxu0 %v4787
    %4853 = vmatprep.subr.bf16.mxu0 %v4790
    %4854 = vmatpush1.bf16.msra.mxu0 %v4789
    %4855 = vmatprep.subr.bf16.mxu0 %v4792
    %4856 = vmatpush1.bf16.msra.mxu0 %v4791
    %4857 = vmatprep.subr.bf16.mxu0 %v4794
    %4858 = vmatpush1.bf16.msra.mxu0 %v4793
    %4859 = vmatprep.mubr.bf16.mxu0 %v4007
    %4860 = vmatmul.mubr.bf16.gmra.mrb[0].mxu0 %v4006
    %v4861 = vpop.f32.mrb[0].mxu0
    %v4862 = vadd.f32 0.0, %v4861
    %v4863 = vpop.f32.mrb[0].mxu0
    %v4864 = vadd.f32 0.0, %v4863
    %v4865 = vpop.f32.mrb[0].mxu0
    %v4866 = vadd.f32 0.0, %v4865
    %v4867 = vpop.f32.mrb[0].mxu0
    %v4868 = vadd.f32 0.0, %v4867
    %4869 = vmatprep.mubr.bf16.mxu0 %v4009
    %4870 = vmatmul.mubr.bf16.gmra.mrb[0].mxu0 %v4008
    %v4871 = vpop.f32.mrb[0].mxu0
    %v4872 = vadd.f32 0.0, %v4871
    %v4873 = vpop.f32.mrb[0].mxu0
    %v4874 = vadd.f32 0.0, %v4873
    %v4875 = vpop.f32.mrb[0].mxu0
    %v4876 = vadd.f32 0.0, %v4875
    %v4877 = vpop.f32.mrb[0].mxu0
    %v4878 = vadd.f32 0.0, %v4877
    %4879 = vmatprep.mubr.bf16.mxu0 %v4011
    %4880 = vmatmul.mubr.bf16.gmra.mrb[0].mxu0 %v4010
    %v4881 = vpop.f32.mrb[0].mxu0
    %v4882 = vadd.f32 0.0, %v4881
    %v4883 = vpop.f32.mrb[0].mxu0
    %v4884 = vadd.f32 0.0, %v4883
    %v4885 = vpop.f32.mrb[0].mxu0
    %v4886 = vadd.f32 0.0, %v4885
    %v4887 = vpop.f32.mrb[0].mxu0
    %v4888 = vadd.f32 0.0, %v4887
    %4889 = vmatprep.mubr.bf16.mxu0 %v4013
    %4890 = vmatmul.mubr.bf16.gmra.mrb[0].mxu0 %v4012
    %v4891 = vpop.f32.mrb[0].mxu0
    %v4892 = vadd.f32 0.0, %v4891
    %v4893 = vpop.f32.mrb[0].mxu0
    %v4894 = vadd.f32 0.0, %v4893
    %v4895 = vpop.f32.mrb[0].mxu0
    %v4896 = vadd.f32 0.0, %v4895
    %v4897 = vpop.f32.mrb[0].mxu0
    %v4898 = vadd.f32 0.0, %v4897
    %4899 = vmatprep.mubr.bf16.mxu0 %v4015
    %4900 = vmatmul.mubr.bf16.gmra.mrb[0].mxu0 %v4014
    %v4901 = vpop.f32.mrb[0].mxu0
    %v4902 = vadd.f32 0.0, %v4901
    %v4903 = vpop.f32.mrb[0].mxu0
    %v4904 = vadd.f32 0.0, %v4903
    %v4905 = vpop.f32.mrb[0].mxu0
    %v4906 = vadd.f32 0.0, %v4905
    %v4907 = vpop.f32.mrb[0].mxu0
    %v4908 = vadd.f32 0.0, %v4907
    %4909 = vmatprep.mubr.bf16.mxu0 %v4017
    %4910 = vmatmul.mubr.bf16.gmra.mrb[0].mxu0 %v4016
    %v4911 = vpop.f32.mrb[0].mxu0
    %v4912 = vadd.f32 0.0, %v4911
    %v4913 = vpop.f32.mrb[0].mxu0
    %v4914 = vadd.f32 0.0, %v4913
    %v4915 = vpop.f32.mrb[0].mxu0
    %v4916 = vadd.f32 0.0, %v4915
    %v4917 = vpop.f32.mrb[0].mxu0
    %v4918 = vadd.f32 0.0, %v4917
    %4919 = vmatprep.mubr.bf16.mxu0 %v4019
    %4920 = vmatmul.mubr.bf16.gmra.mrb[0].mxu0 %v4018
    %v4921 = vpop.f32.mrb[0].mxu0
    %v4922 = vadd.f32 0.0, %v4921
    %v4923 = vpop.f32.mrb[0].mxu0
    %v4924 = vadd.f32 0.0, %v4923
    %v4925 = vpop.f32.mrb[0].mxu0
    %v4926 = vadd.f32 0.0, %v4925
    %v4927 = vpop.f32.mrb[0].mxu0
    %v4928 = vadd.f32 0.0, %v4927
    %4929 = vmatprep.mubr.bf16.mxu0 %v4021
    %4930 = vmatmul.mubr.bf16.gmra.mrb[0].mxu0 %v4020
    %v4931 = vpop.f32.mrb[0].mxu0
    %v4932 = vadd.f32 0.0, %v4931
    %v4933 = vpop.f32.mrb[0].mxu0
    %v4934 = vadd.f32 0.0, %v4933
    %v4935 = vpop.f32.mrb[0].mxu0
    %v4936 = vadd.f32 0.0, %v4935
    %v4937 = vpop.f32.mrb[0].mxu0
    %v4938 = vadd.f32 0.0, %v4937
    %4939 = vdwg.mxu0
    %v4940 = vadd.f32 %v4556, %v4862
    %v4941 = vadd.f32 %v4558, %v4864
    %v4942 = vadd.f32 %v4560, %v4866
    %v4943 = vadd.f32 %v4562, %v4868
    %v4944 = vadd.f32 %v4566, %v4872
    %v4945 = vadd.f32 %v4568, %v4874
    %v4946 = vadd.f32 %v4570, %v4876
    %v4947 = vadd.f32 %v4572, %v4878
    %v4948 = vadd.f32 %v4576, %v4882
    %v4949 = vadd.f32 %v4578, %v4884
    %v4950 = vadd.f32 %v4580, %v4886
    %v4951 = vadd.f32 %v4582, %v4888
    %v4952 = vadd.f32 %v4586, %v4892
    %v4953 = vadd.f32 %v4588, %v4894
    %v4954 = vadd.f32 %v4590, %v4896
    %v4955 = vadd.f32 %v4592, %v4898
    %v4956 = vadd.f32 %v4596, %v4902
    %v4957 = vadd.f32 %v4598, %v4904
    %v4958 = vadd.f32 %v4600, %v4906
    %v4959 = vadd.f32 %v4602, %v4908
    %v4960 = vadd.f32 %v4606, %v4912
    %v4961 = vadd.f32 %v4608, %v4914
    %v4962 = vadd.f32 %v4610, %v4916
    %v4963 = vadd.f32 %v4612, %v4918
    %v4964 = vadd.f32 %v4616, %v4922
    %v4965 = vadd.f32 %v4618, %v4924
    %v4966 = vadd.f32 %v4620, %v4926
    %v4967 = vadd.f32 %v4622, %v4928
    %v4968 = vadd.f32 %v4626, %v4932
    %v4969 = vadd.f32 %v4628, %v4934
    %v4970 = vadd.f32 %v4630, %v4936
    %v4971 = vadd.f32 %v4632, %v4938
    %s4972 = scalar_lea.vmem [#allocation7], 4
    %v4973 = vld [vmem:[%s4972] sm:$0x3]
    %v4975 = vlaneseq
    %v4976 = vshrl.u32 %v4975, 7
    %v4977 = vsub.s32 0, %v4976
    %v4978 = vrot.slane %v4973, %v4977
    %v4979 = vlaneseq
    %v4980 = vshrl.u32 %v4979, 7
    %v4981 = vsub.s32 1, %v4980
    %v4982 = vrot.slane %v4973, %v4981
    %v4985 = vadd.f32 %v4940, %v4978
    %v4986 = vadd.f32 %v4941, %v4982
    %v4987 = vadd.f32 %v4942, %v4978
    %v4988 = vadd.f32 %v4943, %v4982
    %v4989 = vadd.f32 %v4944, %v4978
    %v4990 = vadd.f32 %v4945, %v4982
    %v4991 = vadd.f32 %v4946, %v4978
    %v4992 = vadd.f32 %v4947, %v4982
    %v4993 = vadd.f32 %v4948, %v4978
    %v4994 = vadd.f32 %v4949, %v4982
    %v4995 = vadd.f32 %v4950, %v4978
    %v4996 = vadd.f32 %v4951, %v4982
    %v4997 = vadd.f32 %v4952, %v4978
    %v4998 = vadd.f32 %v4953, %v4982
    %v4999 = vadd.f32 %v4954, %v4978
    %v5000 = vadd.f32 %v4955, %v4982
    %v5001 = vadd.f32 %v4956, %v4978
    %v5002 = vadd.f32 %v4957, %v4982
    %v5003 = vadd.f32 %v4958, %v4978
    %v5004 = vadd.f32 %v4959, %v4982
    %v5005 = vadd.f32 %v4960, %v4978
    %v5006 = vadd.f32 %v4961, %v4982
    %v5007 = vadd.f32 %v4962, %v4978
    %v5008 = vadd.f32 %v4963, %v4982
    %v5009 = vadd.f32 %v4964, %v4978
    %v5010 = vadd.f32 %v4965, %v4982
    %v5011 = vadd.f32 %v4966, %v4978
    %v5012 = vadd.f32 %v4967, %v4982
    %v5013 = vadd.f32 %v4968, %v4978
    %v5014 = vadd.f32 %v4969, %v4982
    %v5015 = vadd.f32 %v4970, %v4978
    %v5016 = vadd.f32 %v4971, %v4982
    %v5017 = vadd.f32 %v4985, %v4987
    %v5018 = vadd.f32 %v5017, %v4989
    %v5019 = vadd.f32 %v5018, %v4991
    %v5020 = vadd.f32 %v5019, %v4993
    %v5021 = vadd.f32 %v5020, %v4995
    %v5022 = vadd.f32 %v5021, %v4997
    %v5023 = vadd.f32 %v5022, %v4999
    %v5024 = vadd.f32 %v5023, %v5001
    %v5025 = vadd.f32 %v5024, %v5003
    %v5026 = vadd.f32 %v5025, %v5005
    %v5027 = vadd.f32 %v5026, %v5007
    %v5028 = vadd.f32 %v5027, %v5009
    %v5029 = vadd.f32 %v5028, %v5011
    %v5030 = vadd.f32 %v5029, %v5013
    %v5031 = vadd.f32 %v5030, %v5015
    %v5032 = vrot.slane %v5031, 4
    %v5033 = vadd.f32 %v5031, %v5032
    %v5034 = vrot.slane %v5033, 2
    %v5035 = vadd.f32 %v5033, %v5034
    %v5036 = vrot.slane %v5035, 1
    %v5037 = vadd.f32 %v5035, %v5036
    %v5038 = vadd.f32 %v4986, %v4988
    %v5039 = vadd.f32 %v5038, %v4990
    %v5040 = vadd.f32 %v5039, %v4992
    %v5041 = vadd.f32 %v5040, %v4994
    %v5042 = vadd.f32 %v5041, %v4996
    %v5043 = vadd.f32 %v5042, %v4998
    %v5044 = vadd.f32 %v5043, %v5000
    %v5045 = vadd.f32 %v5044, %v5002
    %v5046 = vadd.f32 %v5045, %v5004
    %v5047 = vadd.f32 %v5046, %v5006
    %v5048 = vadd.f32 %v5047, %v5008
    %v5049 = vadd.f32 %v5048, %v5010
    %v5050 = vadd.f32 %v5049, %v5012
    %v5051 = vadd.f32 %v5050, %v5014
    %v5052 = vadd.f32 %v5051, %v5016
    %v5053 = vrot.slane %v5052, 4
    %v5054 = vadd.f32 %v5052, %v5053
    %v5055 = vrot.slane %v5054, 2
    %v5056 = vadd.f32 %v5054, %v5055
    %v5057 = vrot.slane %v5056, 1
    %v5058 = vadd.f32 %v5056, %v5057
    %v5059 = vmul.f32 %v5037, %v1646
    %v5060 = vmul.f32 %v5058, %v1646
    %v5061 = vsub.f32 %v4985, %v5059
    %v5062 = vsub.f32 %v4986, %v5060
    %v5063 = vsub.f32 %v4987, %v5059
    %v5064 = vsub.f32 %v4988, %v5060
    %v5065 = vsub.f32 %v4989, %v5059
    %v5066 = vsub.f32 %v4990, %v5060
    %v5067 = vsub.f32 %v4991, %v5059
    %v5068 = vsub.f32 %v4992, %v5060
    %v5069 = vsub.f32 %v4993, %v5059
    %v5070 = vsub.f32 %v4994, %v5060
    %v5071 = vsub.f32 %v4995, %v5059
    %v5072 = vsub.f32 %v4996, %v5060
    %v5073 = vsub.f32 %v4997, %v5059
    %v5074 = vsub.f32 %v4998, %v5060
    %v5075 = vsub.f32 %v4999, %v5059
    %v5076 = vsub.f32 %v5000, %v5060
    %v5077 = vsub.f32 %v5001, %v5059
    %v5078 = vsub.f32 %v5002, %v5060
    %v5079 = vsub.f32 %v5003, %v5059
    %v5080 = vsub.f32 %v5004, %v5060
    %v5081 = vsub.f32 %v5005, %v5059
    %v5082 = vsub.f32 %v5006, %v5060
    %v5083 = vsub.f32 %v5007, %v5059
    %v5084 = vsub.f32 %v5008, %v5060
    %v5085 = vsub.f32 %v5009, %v5059
    %v5086 = vsub.f32 %v5010, %v5060
    %v5087 = vsub.f32 %v5011, %v5059
    %v5088 = vsub.f32 %v5012, %v5060
    %v5089 = vsub.f32 %v5013, %v5059
    %v5090 = vsub.f32 %v5014, %v5060
    %v5091 = vsub.f32 %v5015, %v5059
    %v5092 = vsub.f32 %v5016, %v5060
    %v5093 = vmul.f32 %v5061, %v5061
    %v5094 = vmul.f32 %v5062, %v5062
    %v5095 = vmul.f32 %v5063, %v5063
    %v5096 = vmul.f32 %v5064, %v5064
    %v5097 = vmul.f32 %v5065, %v5065
    %v5098 = vmul.f32 %v5066, %v5066
    %v5099 = vmul.f32 %v5067, %v5067
    %v5100 = vmul.f32 %v5068, %v5068
    %v5101 = vmul.f32 %v5069, %v5069
    %v5102 = vmul.f32 %v5070, %v5070
    %v5103 = vmul.f32 %v5071, %v5071
    %v5104 = vmul.f32 %v5072, %v5072
    %v5105 = vmul.f32 %v5073, %v5073
    %v5106 = vmul.f32 %v5074, %v5074
    %v5107 = vmul.f32 %v5075, %v5075
    %v5108 = vmul.f32 %v5076, %v5076
    %v5109 = vmul.f32 %v5077, %v5077
    %v5110 = vmul.f32 %v5078, %v5078
    %v5111 = vmul.f32 %v5079, %v5079
    %v5112 = vmul.f32 %v5080, %v5080
    %v5113 = vmul.f32 %v5081, %v5081
    %v5114 = vmul.f32 %v5082, %v5082
    %v5115 = vmul.f32 %v5083, %v5083
    %v5116 = vmul.f32 %v5084, %v5084
    %v5117 = vmul.f32 %v5085, %v5085
    %v5118 = vmul.f32 %v5086, %v5086
    %v5119 = vmul.f32 %v5087, %v5087
    %v5120 = vmul.f32 %v5088, %v5088
    %v5121 = vmul.f32 %v5089, %v5089
    %v5122 = vmul.f32 %v5090, %v5090
    %v5123 = vmul.f32 %v5091, %v5091
    %v5124 = vmul.f32 %v5092, %v5092
    %v5125 = vadd.f32 %v5093, %v5095
    %v5126 = vadd.f32 %v5125, %v5097
    %v5127 = vadd.f32 %v5126, %v5099
    %v5128 = vadd.f32 %v5127, %v5101
    %v5129 = vadd.f32 %v5128, %v5103
    %v5130 = vadd.f32 %v5129, %v5105
    %v5131 = vadd.f32 %v5130, %v5107
    %v5132 = vadd.f32 %v5131, %v5109
    %v5133 = vadd.f32 %v5132, %v5111
    %v5134 = vadd.f32 %v5133, %v5113
    %v5135 = vadd.f32 %v5134, %v5115
    %v5136 = vadd.f32 %v5135, %v5117
    %v5137 = vadd.f32 %v5136, %v5119
    %v5138 = vadd.f32 %v5137, %v5121
    %v5139 = vadd.f32 %v5138, %v5123
    %v5140 = vrot.slane %v5139, 4
    %v5141 = vadd.f32 %v5139, %v5140
    %v5142 = vrot.slane %v5141, 2
    %v5143 = vadd.f32 %v5141, %v5142
    %v5144 = vrot.slane %v5143, 1
    %v5145 = vadd.f32 %v5143, %v5144
    %v5146 = vadd.f32 %v5094, %v5096
    %v5147 = vadd.f32 %v5146, %v5098
    %v5148 = vadd.f32 %v5147, %v5100
    %v5149 = vadd.f32 %v5148, %v5102
    %v5150 = vadd.f32 %v5149, %v5104
    %v5151 = vadd.f32 %v5150, %v5106
    %v5152 = vadd.f32 %v5151, %v5108
    %v5153 = vadd.f32 %v5152, %v5110
    %v5154 = vadd.f32 %v5153, %v5112
    %v5155 = vadd.f32 %v5154, %v5114
    %v5156 = vadd.f32 %v5155, %v5116
    %v5157 = vadd.f32 %v5156, %v5118
    %v5158 = vadd.f32 %v5157, %v5120
    %v5159 = vadd.f32 %v5158, %v5122
    %v5160 = vadd.f32 %v5159, %v5124
    %v5161 = vrot.slane %v5160, 4
    %v5162 = vadd.f32 %v5160, %v5161
    %v5163 = vrot.slane %v5162, 2
    %v5164 = vadd.f32 %v5162, %v5163
    %v5165 = vrot.slane %v5164, 1
    %v5166 = vadd.f32 %v5164, %v5165
    %v5167 = vmul.f32 %v5145, %v1646
    %v5168 = vmul.f32 %v5166, %v1646
    %v5169 = vadd.f32 %v5167, 1e-05
    %v5170 = vadd.f32 %v5168, 1e-05
    %v5171 = vrsqrt.pop %v5169
    %v5172 = vrsqrt.pop %v5170
    %v5173 = vmul.f32 %v5061, %v5171
    %v5174 = vmul.f32 %v5062, %v5172
    %v5175 = vmul.f32 %v5063, %v5171
    %v5176 = vmul.f32 %v5064, %v5172
    %v5177 = vmul.f32 %v5065, %v5171
    %v5178 = vmul.f32 %v5066, %v5172
    %v5179 = vmul.f32 %v5067, %v5171
    %v5180 = vmul.f32 %v5068, %v5172
    %v5181 = vmul.f32 %v5069, %v5171
    %v5182 = vmul.f32 %v5070, %v5172
    %v5183 = vmul.f32 %v5071, %v5171
    %v5184 = vmul.f32 %v5072, %v5172
    %v5185 = vmul.f32 %v5073, %v5171
    %v5186 = vmul.f32 %v5074, %v5172
    %v5187 = vmul.f32 %v5075, %v5171
    %v5188 = vmul.f32 %v5076, %v5172
    %v5189 = vmul.f32 %v5077, %v5171
    %v5190 = vmul.f32 %v5078, %v5172
    %v5191 = vmul.f32 %v5079, %v5171
    %v5192 = vmul.f32 %v5080, %v5172
    %v5193 = vmul.f32 %v5081, %v5171
    %v5194 = vmul.f32 %v5082, %v5172
    %v5195 = vmul.f32 %v5083, %v5171
    %v5196 = vmul.f32 %v5084, %v5172
    %v5197 = vmul.f32 %v5085, %v5171
    %v5198 = vmul.f32 %v5086, %v5172
    %v5199 = vmul.f32 %v5087, %v5171
    %v5200 = vmul.f32 %v5088, %v5172
    %v5201 = vmul.f32 %v5089, %v5171
    %v5202 = vmul.f32 %v5090, %v5172
    %v5203 = vmul.f32 %v5091, %v5171
    %v5204 = vmul.f32 %v5092, %v5172
    %s5205 = scalar_lea.vmem [#allocation8], 4
    %v5206 = vld [vmem:[%s5205] sm:$0x3]
    %v5208 = vlaneseq
    %v5209 = vshrl.u32 %v5208, 7
    %v5210 = vsub.s32 0, %v5209
    %v5211 = vrot.slane %v5206, %v5210
    %v5212 = vlaneseq
    %v5213 = vshrl.u32 %v5212, 7
    %v5214 = vsub.s32 1, %v5213
    %v5215 = vrot.slane %v5206, %v5214
    %v5218 = vmul.f32 %v5173, %v5211
    %v5219 = vmul.f32 %v5174, %v5215
    %v5220 = vmul.f32 %v5175, %v5211
    %v5221 = vmul.f32 %v5176, %v5215
    %v5222 = vmul.f32 %v5177, %v5211
    %v5223 = vmul.f32 %v5178, %v5215
    %v5224 = vmul.f32 %v5179, %v5211
    %v5225 = vmul.f32 %v5180, %v5215
    %v5226 = vmul.f32 %v5181, %v5211
    %v5227 = vmul.f32 %v5182, %v5215
    %v5228 = vmul.f32 %v5183, %v5211
    %v5229 = vmul.f32 %v5184, %v5215
    %v5230 = vmul.f32 %v5185, %v5211
    %v5231 = vmul.f32 %v5186, %v5215
    %v5232 = vmul.f32 %v5187, %v5211
    %v5233 = vmul.f32 %v5188, %v5215
    %v5234 = vmul.f32 %v5189, %v5211
    %v5235 = vmul.f32 %v5190, %v5215
    %v5236 = vmul.f32 %v5191, %v5211
    %v5237 = vmul.f32 %v5192, %v5215
    %v5238 = vmul.f32 %v5193, %v5211
    %v5239 = vmul.f32 %v5194, %v5215
    %v5240 = vmul.f32 %v5195, %v5211
    %v5241 = vmul.f32 %v5196, %v5215
    %v5242 = vmul.f32 %v5197, %v5211
    %v5243 = vmul.f32 %v5198, %v5215
    %v5244 = vmul.f32 %v5199, %v5211
    %v5245 = vmul.f32 %v5200, %v5215
    %v5246 = vmul.f32 %v5201, %v5211
    %v5247 = vmul.f32 %v5202, %v5215
    %v5248 = vmul.f32 %v5203, %v5211
    %v5249 = vmul.f32 %v5204, %v5215
    %s5250 = scalar_lea.vmem [#allocation10], 4
    %v5251 = vld [vmem:[%s5250] sm:$0x3]
    %v5253 = vlaneseq
    %v5254 = vshrl.u32 %v5253, 7
    %v5255 = vsub.s32 0, %v5254
    %v5256 = vrot.slane %v5251, %v5255
    %v5257 = vlaneseq
    %v5258 = vshrl.u32 %v5257, 7
    %v5259 = vsub.s32 1, %v5258
    %v5260 = vrot.slane %v5251, %v5259
    %v5263 = vadd.f32 %v5218, %v5256
    %v5264 = vadd.f32 %v5219, %v5260
    %v5265 = vadd.f32 %v5220, %v5256
    %v5266 = vadd.f32 %v5221, %v5260
    %v5267 = vadd.f32 %v5222, %v5256
    %v5268 = vadd.f32 %v5223, %v5260
    %v5269 = vadd.f32 %v5224, %v5256
    %v5270 = vadd.f32 %v5225, %v5260
    %v5271 = vadd.f32 %v5226, %v5256
    %v5272 = vadd.f32 %v5227, %v5260
    %v5273 = vadd.f32 %v5228, %v5256
    %v5274 = vadd.f32 %v5229, %v5260
    %v5275 = vadd.f32 %v5230, %v5256
    %v5276 = vadd.f32 %v5231, %v5260
    %v5277 = vadd.f32 %v5232, %v5256
    %v5278 = vadd.f32 %v5233, %v5260
    %v5279 = vadd.f32 %v5234, %v5256
    %v5280 = vadd.f32 %v5235, %v5260
    %v5281 = vadd.f32 %v5236, %v5256
    %v5282 = vadd.f32 %v5237, %v5260
    %v5283 = vadd.f32 %v5238, %v5256
    %v5284 = vadd.f32 %v5239, %v5260
    %v5285 = vadd.f32 %v5240, %v5256
    %v5286 = vadd.f32 %v5241, %v5260
    %v5287 = vadd.f32 %v5242, %v5256
    %v5288 = vadd.f32 %v5243, %v5260
    %v5289 = vadd.f32 %v5244, %v5256
    %v5290 = vadd.f32 %v5245, %v5260
    %v5291 = vadd.f32 %v5246, %v5256
    %v5292 = vadd.f32 %v5247, %v5260
    %v5293 = vadd.f32 %v5248, %v5256
    %v5294 = vadd.f32 %v5249, %v5260
    %vm5295 = vcmp.ge.f32.partialorder %v5263, 0.0
    %vm5296 = vcmp.ge.f32.partialorder %v5264, 0.0
    %vm5297 = vcmp.ge.f32.partialorder %v5265, 0.0
    %vm5298 = vcmp.ge.f32.partialorder %v5266, 0.0
    %vm5299 = vcmp.ge.f32.partialorder %v5267, 0.0
    %vm5300 = vcmp.ge.f32.partialorder %v5268, 0.0
    %vm5301 = vcmp.ge.f32.partialorder %v5269, 0.0
    %vm5302 = vcmp.ge.f32.partialorder %v5270, 0.0
    %vm5303 = vcmp.ge.f32.partialorder %v5271, 0.0
    %vm5304 = vcmp.ge.f32.partialorder %v5272, 0.0
    %vm5305 = vcmp.ge.f32.partialorder %v5273, 0.0
    %vm5306 = vcmp.ge.f32.partialorder %v5274, 0.0
    %vm5307 = vcmp.ge.f32.partialorder %v5275, 0.0
    %vm5308 = vcmp.ge.f32.partialorder %v5276, 0.0
    %vm5309 = vcmp.ge.f32.partialorder %v5277, 0.0
    %vm5310 = vcmp.ge.f32.partialorder %v5278, 0.0
    %vm5311 = vcmp.ge.f32.partialorder %v5279, 0.0
    %vm5312 = vcmp.ge.f32.partialorder %v5280, 0.0
    %vm5313 = vcmp.ge.f32.partialorder %v5281, 0.0
    %vm5314 = vcmp.ge.f32.partialorder %v5282, 0.0
    %vm5315 = vcmp.ge.f32.partialorder %v5283, 0.0
    %vm5316 = vcmp.ge.f32.partialorder %v5284, 0.0
    %vm5317 = vcmp.ge.f32.partialorder %v5285, 0.0
    %vm5318 = vcmp.ge.f32.partialorder %v5286, 0.0
    %vm5319 = vcmp.ge.f32.partialorder %v5287, 0.0
    %vm5320 = vcmp.ge.f32.partialorder %v5288, 0.0
    %vm5321 = vcmp.ge.f32.partialorder %v5289, 0.0
    %vm5322 = vcmp.ge.f32.partialorder %v5290, 0.0
    %vm5323 = vcmp.ge.f32.partialorder %v5291, 0.0
    %vm5324 = vcmp.ge.f32.partialorder %v5292, 0.0
    %vm5325 = vcmp.ge.f32.partialorder %v5293, 0.0
    %vm5326 = vcmp.ge.f32.partialorder %v5294, 0.0
    %v5327 = vmul.f32 %v5263, 0.2
    %v5328 = vmul.f32 %v5264, 0.2
    %v5329 = vmul.f32 %v5265, 0.2
    %v5330 = vmul.f32 %v5266, 0.2
    %v5331 = vmul.f32 %v5267, 0.2
    %v5332 = vmul.f32 %v5268, 0.2
    %v5333 = vmul.f32 %v5269, 0.2
    %v5334 = vmul.f32 %v5270, 0.2
    %v5335 = vmul.f32 %v5271, 0.2
    %v5336 = vmul.f32 %v5272, 0.2
    %v5337 = vmul.f32 %v5273, 0.2
    %v5338 = vmul.f32 %v5274, 0.2
    %v5339 = vmul.f32 %v5275, 0.2
    %v5340 = vmul.f32 %v5276, 0.2
    %v5341 = vmul.f32 %v5277, 0.2
    %v5342 = vmul.f32 %v5278, 0.2
    %v5343 = vmul.f32 %v5279, 0.2
    %v5344 = vmul.f32 %v5280, 0.2
    %v5345 = vmul.f32 %v5281, 0.2
    %v5346 = vmul.f32 %v5282, 0.2
    %v5347 = vmul.f32 %v5283, 0.2
    %v5348 = vmul.f32 %v5284, 0.2
    %v5349 = vmul.f32 %v5285, 0.2
    %v5350 = vmul.f32 %v5286, 0.2
    %v5351 = vmul.f32 %v5287, 0.2
    %v5352 = vmul.f32 %v5288, 0.2
    %v5353 = vmul.f32 %v5289, 0.2
    %v5354 = vmul.f32 %v5290, 0.2
    %v5355 = vmul.f32 %v5291, 0.2
    %v5356 = vmul.f32 %v5292, 0.2
    %v5357 = vmul.f32 %v5293, 0.2
    %v5358 = vmul.f32 %v5294, 0.2
    %v5359 = vsel %vm5295, %v5263, %v5327
    %v5360 = vsel %vm5296, %v5264, %v5328
    %v5361 = vsel %vm5297, %v5265, %v5329
    %v5362 = vsel %vm5298, %v5266, %v5330
    %v5363 = vsel %vm5299, %v5267, %v5331
    %v5364 = vsel %vm5300, %v5268, %v5332
    %v5365 = vsel %vm5301, %v5269, %v5333
    %v5366 = vsel %vm5302, %v5270, %v5334
    %v5367 = vsel %vm5303, %v5271, %v5335
    %v5368 = vsel %vm5304, %v5272, %v5336
    %v5369 = vsel %vm5305, %v5273, %v5337
    %v5370 = vsel %vm5306, %v5274, %v5338
    %v5371 = vsel %vm5307, %v5275, %v5339
    %v5372 = vsel %vm5308, %v5276, %v5340
    %v5373 = vsel %vm5309, %v5277, %v5341
    %v5374 = vsel %vm5310, %v5278, %v5342
    %v5375 = vsel %vm5311, %v5279, %v5343
    %v5376 = vsel %vm5312, %v5280, %v5344
    %v5377 = vsel %vm5313, %v5281, %v5345
    %v5378 = vsel %vm5314, %v5282, %v5346
    %v5379 = vsel %vm5315, %v5283, %v5347
    %v5380 = vsel %vm5316, %v5284, %v5348
    %v5381 = vsel %vm5317, %v5285, %v5349
    %v5382 = vsel %vm5318, %v5286, %v5350
    %v5383 = vsel %vm5319, %v5287, %v5351
    %v5384 = vsel %vm5320, %v5288, %v5352
    %v5385 = vsel %vm5321, %v5289, %v5353
    %v5386 = vsel %vm5322, %v5290, %v5354
    %v5387 = vsel %vm5323, %v5291, %v5355
    %v5388 = vsel %vm5324, %v5292, %v5356
    %v5389 = vsel %vm5325, %v5293, %v5357
    %v5390 = vsel %vm5326, %v5294, %v5358
    %5391 = vst [vmem:[#allocation2] sm:$0xff] %v5359
    %5392 = vst [vmem:[#allocation2 + $0x8] sm:$0xff] %v5360
    %5393 = vst [vmem:[#allocation2 + $0x10] sm:$0xff] %v5361
    %5394 = vst [vmem:[#allocation2 + $0x18] sm:$0xff] %v5362
    %5395 = vst [vmem:[#allocation2 + $0x20] sm:$0xff] %v5363
    %5396 = vst [vmem:[#allocation2 + $0x28] sm:$0xff] %v5364
    %5397 = vst [vmem:[#allocation2 + $0x30] sm:$0xff] %v5365
    %5398 = vst [vmem:[#allocation2 + $0x38] sm:$0xff] %v5366
    %5399 = vst [vmem:[#allocation2 + $0x40] sm:$0xff] %v5367
    %5400 = vst [vmem:[#allocation2 + $0x48] sm:$0xff] %v5368
    %5401 = vst [vmem:[#allocation2 + $0x50] sm:$0xff] %v5369
    %5402 = vst [vmem:[#allocation2 + $0x58] sm:$0xff] %v5370
    %5403 = vst [vmem:[#allocation2 + $0x60] sm:$0xff] %v5371
    %5404 = vst [vmem:[#allocation2 + $0x68] sm:$0xff] %v5372
    %5405 = vst [vmem:[#allocation2 + $0x70] sm:$0xff] %v5373
    %5406 = vst [vmem:[#allocation2 + $0x78] sm:$0xff] %v5374
    %5407 = vst [vmem:[#allocation2 + $0x80] sm:$0xff] %v5375
    %5408 = vst [vmem:[#allocation2 + $0x88] sm:$0xff] %v5376
    %5409 = vst [vmem:[#allocation2 + $0x90] sm:$0xff] %v5377
    %5410 = vst [vmem:[#allocation2 + $0x98] sm:$0xff] %v5378
    %5411 = vst [vmem:[#allocation2 + $0xa0] sm:$0xff] %v5379
    %5412 = vst [vmem:[#allocation2 + $0xa8] sm:$0xff] %v5380
    %5413 = vst [vmem:[#allocation2 + $0xb0] sm:$0xff] %v5381
    %5414 = vst [vmem:[#allocation2 + $0xb8] sm:$0xff] %v5382
    %5415 = vst [vmem:[#allocation2 + $0xc0] sm:$0xff] %v5383
    %5416 = vst [vmem:[#allocation2 + $0xc8] sm:$0xff] %v5384
    %5417 = vst [vmem:[#allocation2 + $0xd0] sm:$0xff] %v5385
    %5418 = vst [vmem:[#allocation2 + $0xd8] sm:$0xff] %v5386
    %5419 = vst [vmem:[#allocation2 + $0xe0] sm:$0xff] %v5387
    %5420 = vst [vmem:[#allocation2 + $0xe8] sm:$0xff] %v5388
    %5421 = vst [vmem:[#allocation2 + $0xf0] sm:$0xff] %v5389
    %5422 = vst [vmem:[#allocation2 + $0xf8] sm:$0xff] %v5390
    %v5423 = vld [vmem:[#allocation2] sm:$0xff]
    %v5424 = vld [vmem:[#allocation2 + $0x8] sm:$0xff]
    %v5425 = vld [vmem:[#allocation2 + $0x10] sm:$0xff]
    %v5426 = vld [vmem:[#allocation2 + $0x18] sm:$0xff]
    %v5427 = vld [vmem:[#allocation2 + $0x20] sm:$0xff]
    %v5428 = vld [vmem:[#allocation2 + $0x28] sm:$0xff]
    %v5429 = vld [vmem:[#allocation2 + $0x30] sm:$0xff]
    %v5430 = vld [vmem:[#allocation2 + $0x38] sm:$0xff]
    %v5431 = vld [vmem:[#allocation2 + $0x40] sm:$0xff]
    %v5432 = vld [vmem:[#allocation2 + $0x48] sm:$0xff]
    %v5433 = vld [vmem:[#allocation2 + $0x50] sm:$0xff]
    %v5434 = vld [vmem:[#allocation2 + $0x58] sm:$0xff]
    %v5435 = vld [vmem:[#allocation2 + $0x60] sm:$0xff]
    %v5436 = vld [vmem:[#allocation2 + $0x68] sm:$0xff]
    %v5437 = vld [vmem:[#allocation2 + $0x70] sm:$0xff]
    %v5438 = vld [vmem:[#allocation2 + $0x78] sm:$0xff]
    %v5439 = vld [vmem:[#allocation2 + $0x80] sm:$0xff]
    %v5440 = vld [vmem:[#allocation2 + $0x88] sm:$0xff]
    %v5441 = vld [vmem:[#allocation2 + $0x90] sm:$0xff]
    %v5442 = vld [vmem:[#allocation2 + $0x98] sm:$0xff]
    %v5443 = vld [vmem:[#allocation2 + $0xa0] sm:$0xff]
    %v5444 = vld [vmem:[#allocation2 + $0xa8] sm:$0xff]
    %v5445 = vld [vmem:[#allocation2 + $0xb0] sm:$0xff]
    %v5446 = vld [vmem:[#allocation2 + $0xb8] sm:$0xff]
    %v5447 = vld [vmem:[#allocation2 + $0xc0] sm:$0xff]
    %v5448 = vld [vmem:[#allocation2 + $0xc8] sm:$0xff]
    %v5449 = vld [vmem:[#allocation2 + $0xd0] sm:$0xff]
    %v5450 = vld [vmem:[#allocation2 + $0xd8] sm:$0xff]
    %v5451 = vld [vmem:[#allocation2 + $0xe0] sm:$0xff]
    %v5452 = vld [vmem:[#allocation2 + $0xe8] sm:$0xff]
    %v5453 = vld [vmem:[#allocation2 + $0xf0] sm:$0xff]
    %v5454 = vld [vmem:[#allocation2 + $0xf8] sm:$0xff]
    %v5455 = vpack.c.bf16 %v5425, %v5423
    %v5456 = vpack.c.bf16 %v5426, %v5424
    %v5457 = vpack.c.bf16 %v5429, %v5427
    %v5458 = vpack.c.bf16 %v5430, %v5428
    %v5459 = vpack.c.bf16 %v5433, %v5431
    %v5460 = vpack.c.bf16 %v5434, %v5432
    %v5461 = vpack.c.bf16 %v5437, %v5435
    %v5462 = vpack.c.bf16 %v5438, %v5436
    %v5463 = vpack.c.bf16 %v5441, %v5439
    %v5464 = vpack.c.bf16 %v5442, %v5440
    %v5465 = vpack.c.bf16 %v5445, %v5443
    %v5466 = vpack.c.bf16 %v5446, %v5444
    %v5467 = vpack.c.bf16 %v5449, %v5447
    %v5468 = vpack.c.bf16 %v5450, %v5448
    %v5469 = vpack.c.bf16 %v5453, %v5451
    %v5470 = vpack.c.bf16 %v5454, %v5452
    %5471 = vmatprep.subr.bf16.mxu0 %v5456
    %5472 = vmatpush1.bf16.msra.mxu0 %v5455
    %5473 = vmatprep.subr.bf16.mxu0 %v5458
    %5474 = vmatpush1.bf16.msra.mxu0 %v5457
    %5475 = vmatprep.subr.bf16.mxu0 %v5460
    %5476 = vmatpush1.bf16.msra.mxu0 %v5459
    %5477 = vmatprep.subr.bf16.mxu0 %v5462
    %5478 = vmatpush1.bf16.msra.mxu0 %v5461
    %5479 = vmatprep.subr.bf16.mxu0 %v5464
    %5480 = vmatpush1.bf16.msra.mxu0 %v5463
    %5481 = vmatprep.subr.bf16.mxu0 %v5466
    %5482 = vmatpush1.bf16.msra.mxu0 %v5465
    %5483 = vmatprep.subr.bf16.mxu0 %v5468
    %5484 = vmatpush1.bf16.msra.mxu0 %v5467
    %5485 = vmatprep.subr.bf16.mxu0 %v5470
    %5486 = vmatpush1.bf16.msra.mxu0 %v5469
    %5487 = vmatprep.subr.bf16.mxu0 0
    %5488 = vmatpush1.bf16.msra.mxu0 0
    %5489 = vmatprep.subr.bf16.mxu0 0
    %5490 = vmatpush1.bf16.msra.mxu0 0
    %5491 = vmatprep.subr.bf16.mxu0 0
    %5492 = vmatpush1.bf16.msra.mxu0 0
    %5493 = vmatprep.subr.bf16.mxu0 0
    %5494 = vmatpush1.bf16.msra.mxu0 0
    %5495 = vmatprep.subr.bf16.mxu0 0
    %5496 = vmatpush1.bf16.msra.mxu0 0
    %5497 = vmatprep.subr.bf16.mxu0 0
    %5498 = vmatpush1.bf16.msra.mxu0 0
    %5499 = vmatprep.subr.bf16.mxu0 0
    %5500 = vmatpush1.bf16.msra.mxu0 0
    %5501 = vmatprep.subr.bf16.mxu0 0
    %5502 = vmatpush1.bf16.msra.mxu0 0
    %5503 = vmatprep.mubr.bf16.mxu0 0
    %5504 = vmatmul.mubr.bf16.gmra.mrb[0].mxu0 %v289
    %v5505 = vpop.f32.mrb[0].mxu0
    %v5506 = vadd.f32 0.0, %v5505
    %v5507 = vpop.f32.mrb[0].mxu0
    %v5508 = vadd.f32 0.0, %v5507
    %v5509 = vpop.f32.mrb[0].mxu0
    %v5510 = vadd.f32 0.0, %v5509
    %v5511 = vpop.f32.mrb[0].mxu0
    %v5512 = vadd.f32 0.0, %v5511
    %5513 = vmatprep.mubr.bf16.mxu0 0
    %5514 = vmatmul.mubr.bf16.gmra.mrb[0].mxu0 %v290
    %v5515 = vpop.f32.mrb[0].mxu0
    %v5516 = vadd.f32 0.0, %v5515
    %v5517 = vpop.f32.mrb[0].mxu0
    %v5518 = vadd.f32 0.0, %v5517
    %v5519 = vpop.f32.mrb[0].mxu0
    %v5520 = vadd.f32 0.0, %v5519
    %v5521 = vpop.f32.mrb[0].mxu0
    %v5522 = vadd.f32 0.0, %v5521
    %5523 = vmatprep.mubr.bf16.mxu0 0
    %5524 = vmatmul.mubr.bf16.gmra.mrb[0].mxu0 %v291
    %v5525 = vpop.f32.mrb[0].mxu0
    %v5526 = vadd.f32 0.0, %v5525
    %v5527 = vpop.f32.mrb[0].mxu0
    %v5528 = vadd.f32 0.0, %v5527
    %v5529 = vpop.f32.mrb[0].mxu0
    %v5530 = vadd.f32 0.0, %v5529
    %v5531 = vpop.f32.mrb[0].mxu0
    %v5532 = vadd.f32 0.0, %v5531
    %5533 = vmatprep.mubr.bf16.mxu0 0
    %5534 = vmatmul.mubr.bf16.gmra.mrb[0].mxu0 %v292
    %v5535 = vpop.f32.mrb[0].mxu0
    %v5536 = vadd.f32 0.0, %v5535
    %v5537 = vpop.f32.mrb[0].mxu0
    %v5538 = vadd.f32 0.0, %v5537
    %v5539 = vpop.f32.mrb[0].mxu0
    %v5540 = vadd.f32 0.0, %v5539
    %v5541 = vpop.f32.mrb[0].mxu0
    %v5542 = vadd.f32 0.0, %v5541
    %5543 = vmatprep.mubr.bf16.mxu0 0
    %5544 = vmatmul.mubr.bf16.gmra.mrb[0].mxu0 %v293
    %v5545 = vpop.f32.mrb[0].mxu0
    %v5546 = vadd.f32 0.0, %v5545
    %v5547 = vpop.f32.mrb[0].mxu0
    %v5548 = vadd.f32 0.0, %v5547
    %v5549 = vpop.f32.mrb[0].mxu0
    %v5550 = vadd.f32 0.0, %v5549
    %v5551 = vpop.f32.mrb[0].mxu0
    %v5552 = vadd.f32 0.0, %v5551
    %5553 = vmatprep.mubr.bf16.mxu0 0
    %5554 = vmatmul.mubr.bf16.gmra.mrb[0].mxu0 %v294
    %v5555 = vpop.f32.mrb[0].mxu0
    %v5556 = vadd.f32 0.0, %v5555
    %v5557 = vpop.f32.mrb[0].mxu0
    %v5558 = vadd.f32 0.0, %v5557
    %v5559 = vpop.f32.mrb[0].mxu0
    %v5560 = vadd.f32 0.0, %v5559
    %v5561 = vpop.f32.mrb[0].mxu0
    %v5562 = vadd.f32 0.0, %v5561
    %5563 = vmatprep.mubr.bf16.mxu0 0
    %5564 = vmatmul.mubr.bf16.gmra.mrb[0].mxu0 %v295
    %v5565 = vpop.f32.mrb[0].mxu0
    %v5566 = vadd.f32 0.0, %v5565
    %v5567 = vpop.f32.mrb[0].mxu0
    %v5568 = vadd.f32 0.0, %v5567
    %v5569 = vpop.f32.mrb[0].mxu0
    %v5570 = vadd.f32 0.0, %v5569
    %v5571 = vpop.f32.mrb[0].mxu0
    %v5572 = vadd.f32 0.0, %v5571
    %5573 = vmatprep.mubr.bf16.mxu0 0
    %5574 = vmatmul.mubr.bf16.gmra.mrb[0].mxu0 %v296
    %v5575 = vpop.f32.mrb[0].mxu0
    %v5576 = vadd.f32 0.0, %v5575
    %v5577 = vpop.f32.mrb[0].mxu0
    %v5578 = vadd.f32 0.0, %v5577
    %v5579 = vpop.f32.mrb[0].mxu0
    %v5580 = vadd.f32 0.0, %v5579
    %v5581 = vpop.f32.mrb[0].mxu0
    %v5582 = vadd.f32 0.0, %v5581
    %5583 = vdwg.mxu0
    %v5584 = vpack.c.bf16 %v5510, %v5506
    %v5585 = vpack.c.bf16 %v5512, %v5508
    %v5586 = vpack.c.bf16 %v5520, %v5516
    %v5587 = vpack.c.bf16 %v5522, %v5518
    %v5588 = vpack.c.bf16 %v5530, %v5526
    %v5589 = vpack.c.bf16 %v5532, %v5528
    %v5590 = vpack.c.bf16 %v5540, %v5536
    %v5591 = vpack.c.bf16 %v5542, %v5538
    %v5592 = vpack.c.bf16 %v5550, %v5546
    %v5593 = vpack.c.bf16 %v5552, %v5548
    %v5594 = vpack.c.bf16 %v5560, %v5556
    %v5595 = vpack.c.bf16 %v5562, %v5558
    %v5596 = vpack.c.bf16 %v5570, %v5566
    %v5597 = vpack.c.bf16 %v5572, %v5568
    %v5598 = vpack.c.bf16 %v5580, %v5576
    %v5599 = vpack.c.bf16 %v5582, %v5578
    %5600 = vmatprep.subr.bf16.mxu0 %v5456
    %5601 = vmatpush1.bf16.msra.mxu0 %v5455
    %5602 = vmatprep.subr.bf16.mxu0 %v5458
    %5603 = vmatpush1.bf16.msra.mxu0 %v5457
    %5604 = vmatprep.subr.bf16.mxu0 %v5460
    %5605 = vmatpush1.bf16.msra.mxu0 %v5459
    %5606 = vmatprep.subr.bf16.mxu0 %v5462
    %5607 = vmatpush1.bf16.msra.mxu0 %v5461
    %5608 = vmatprep.subr.bf16.mxu0 %v5464
    %5609 = vmatpush1.bf16.msra.mxu0 %v5463
    %5610 = vmatprep.subr.bf16.mxu0 %v5466
    %5611 = vmatpush1.bf16.msra.mxu0 %v5465
    %5612 = vmatprep.subr.bf16.mxu0 %v5468
    %5613 = vmatpush1.bf16.msra.mxu0 %v5467
    %5614 = vmatprep.subr.bf16.mxu0 %v5470
    %5615 = vmatpush1.bf16.msra.mxu0 %v5469
    %5616 = vmatprep.subr.bf16.mxu0 0
    %5617 = vmatpush1.bf16.msra.mxu0 0
    %5618 = vmatprep.subr.bf16.mxu0 0
    %5619 = vmatpush1.bf16.msra.mxu0 0
    %5620 = vmatprep.subr.bf16.mxu0 0
    %5621 = vmatpush1.bf16.msra.mxu0 0
    %5622 = vmatprep.subr.bf16.mxu0 0
    %5623 = vmatpush1.bf16.msra.mxu0 0
    %5624 = vmatprep.subr.bf16.mxu0 0
    %5625 = vmatpush1.bf16.msra.mxu0 0
    %5626 = vmatprep.subr.bf16.mxu0 0
    %5627 = vmatpush1.bf16.msra.mxu0 0
    %5628 = vmatprep.subr.bf16.mxu0 0
    %5629 = vmatpush1.bf16.msra.mxu0 0
    %5630 = vmatprep.subr.bf16.mxu0 0
    %5631 = vmatpush1.bf16.msra.mxu0 0
    %5632 = vmatprep.mubr.bf16.mxu0 0
    %5633 = vmatmul.mubr.bf16.gmra.mrb[0].mxu0 %v466
    %v5634 = vpop.f32.mrb[0].mxu0
    %v5635 = vadd.f32 0.0, %v5634
    %v5636 = vpop.f32.mrb[0].mxu0
    %v5637 = vadd.f32 0.0, %v5636
    %v5638 = vpop.f32.mrb[0].mxu0
    %v5639 = vadd.f32 0.0, %v5638
    %v5640 = vpop.f32.mrb[0].mxu0
    %v5641 = vadd.f32 0.0, %v5640
    %5642 = vmatprep.mubr.bf16.mxu0 0
    %5643 = vmatmul.mubr.bf16.gmra.mrb[0].mxu0 %v467
    %v5644 = vpop.f32.mrb[0].mxu0
    %v5645 = vadd.f32 0.0, %v5644
    %v5646 = vpop.f32.mrb[0].mxu0
    %v5647 = vadd.f32 0.0, %v5646
    %v5648 = vpop.f32.mrb[0].mxu0
    %v5649 = vadd.f32 0.0, %v5648
    %v5650 = vpop.f32.mrb[0].mxu0
    %v5651 = vadd.f32 0.0, %v5650
    %5652 = vmatprep.mubr.bf16.mxu0 0
    %5653 = vmatmul.mubr.bf16.gmra.mrb[0].mxu0 %v468
    %v5654 = vpop.f32.mrb[0].mxu0
    %v5655 = vadd.f32 0.0, %v5654
    %v5656 = vpop.f32.mrb[0].mxu0
    %v5657 = vadd.f32 0.0, %v5656
    %v5658 = vpop.f32.mrb[0].mxu0
    %v5659 = vadd.f32 0.0, %v5658
    %v5660 = vpop.f32.mrb[0].mxu0
    %v5661 = vadd.f32 0.0, %v5660
    %5662 = vmatprep.mubr.bf16.mxu0 0
    %5663 = vmatmul.mubr.bf16.gmra.mrb[0].mxu0 %v469
    %v5664 = vpop.f32.mrb[0].mxu0
    %v5665 = vadd.f32 0.0, %v5664
    %v5666 = vpop.f32.mrb[0].mxu0
    %v5667 = vadd.f32 0.0, %v5666
    %v5668 = vpop.f32.mrb[0].mxu0
    %v5669 = vadd.f32 0.0, %v5668
    %v5670 = vpop.f32.mrb[0].mxu0
    %v5671 = vadd.f32 0.0, %v5670
    %5672 = vmatprep.mubr.bf16.mxu0 0
    %5673 = vmatmul.mubr.bf16.gmra.mrb[0].mxu0 %v470
    %v5674 = vpop.f32.mrb[0].mxu0
    %v5675 = vadd.f32 0.0, %v5674
    %v5676 = vpop.f32.mrb[0].mxu0
    %v5677 = vadd.f32 0.0, %v5676
    %v5678 = vpop.f32.mrb[0].mxu0
    %v5679 = vadd.f32 0.0, %v5678
    %v5680 = vpop.f32.mrb[0].mxu0
    %v5681 = vadd.f32 0.0, %v5680
    %5682 = vmatprep.mubr.bf16.mxu0 0
    %5683 = vmatmul.mubr.bf16.gmra.mrb[0].mxu0 %v471
    %v5684 = vpop.f32.mrb[0].mxu0
    %v5685 = vadd.f32 0.0, %v5684
    %v5686 = vpop.f32.mrb[0].mxu0
    %v5687 = vadd.f32 0.0, %v5686
    %v5688 = vpop.f32.mrb[0].mxu0
    %v5689 = vadd.f32 0.0, %v5688
    %v5690 = vpop.f32.mrb[0].mxu0
    %v5691 = vadd.f32 0.0, %v5690
    %5692 = vmatprep.mubr.bf16.mxu0 0
    %5693 = vmatmul.mubr.bf16.gmra.mrb[0].mxu0 %v472
    %v5694 = vpop.f32.mrb[0].mxu0
    %v5695 = vadd.f32 0.0, %v5694
    %v5696 = vpop.f32.mrb[0].mxu0
    %v5697 = vadd.f32 0.0, %v5696
    %v5698 = vpop.f32.mrb[0].mxu0
    %v5699 = vadd.f32 0.0, %v5698
    %v5700 = vpop.f32.mrb[0].mxu0
    %v5701 = vadd.f32 0.0, %v5700
    %5702 = vmatprep.mubr.bf16.mxu0 0
    %5703 = vmatmul.mubr.bf16.gmra.mrb[0].mxu0 %v473
    %v5704 = vpop.f32.mrb[0].mxu0
    %v5705 = vadd.f32 0.0, %v5704
    %v5706 = vpop.f32.mrb[0].mxu0
    %v5707 = vadd.f32 0.0, %v5706
    %v5708 = vpop.f32.mrb[0].mxu0
    %v5709 = vadd.f32 0.0, %v5708
    %v5710 = vpop.f32.mrb[0].mxu0
    %v5711 = vadd.f32 0.0, %v5710
    %5712 = vdwg.mxu0
    %v5713 = vpack.c.bf16 %v5639, %v5635
    %v5714 = vpack.c.bf16 %v5641, %v5637
    %v5715 = vpack.c.bf16 %v5649, %v5645
    %v5716 = vpack.c.bf16 %v5651, %v5647
    %v5717 = vpack.c.bf16 %v5659, %v5655
    %v5718 = vpack.c.bf16 %v5661, %v5657
    %v5719 = vpack.c.bf16 %v5669, %v5665
    %v5720 = vpack.c.bf16 %v5671, %v5667
    %v5721 = vpack.c.bf16 %v5679, %v5675
    %v5722 = vpack.c.bf16 %v5681, %v5677
    %v5723 = vpack.c.bf16 %v5689, %v5685
    %v5724 = vpack.c.bf16 %v5691, %v5687
    %v5725 = vpack.c.bf16 %v5699, %v5695
    %v5726 = vpack.c.bf16 %v5701, %v5697
    %v5727 = vpack.c.bf16 %v5709, %v5705
    %v5728 = vpack.c.bf16 %v5711, %v5707
    %s5729 = scalar_lea.vmem [#allocation5], 2304
    %v5730 = vld [vmem:[%s5729] sm:$0xff]
    %v5731 = vld [vmem:[%s5729 + $0x8] sm:$0xff]
    %v5732 = vld [vmem:[%s5729 + $0x10] sm:$0xff]
    %v5733 = vld [vmem:[%s5729 + $0x18] sm:$0xff]
    %v5734 = vld [vmem:[%s5729 + $0x20] sm:$0xff]
    %v5735 = vld [vmem:[%s5729 + $0x28] sm:$0xff]
    %v5736 = vld [vmem:[%s5729 + $0x30] sm:$0xff]
    %v5737 = vld [vmem:[%s5729 + $0x38] sm:$0xff]
    %v5738 = vld [vmem:[%s5729 + $0x40] sm:$0xff]
    %v5739 = vld [vmem:[%s5729 + $0x48] sm:$0xff]
    %v5740 = vld [vmem:[%s5729 + $0x50] sm:$0xff]
    %v5741 = vld [vmem:[%s5729 + $0x58] sm:$0xff]
    %v5742 = vld [vmem:[%s5729 + $0x60] sm:$0xff]
    %v5743 = vld [vmem:[%s5729 + $0x68] sm:$0xff]
    %v5744 = vld [vmem:[%s5729 + $0x70] sm:$0xff]
    %v5745 = vld [vmem:[%s5729 + $0x78] sm:$0xff]
    %v5746 = vld [vmem:[%s5729 + $0x80] sm:$0xff]
    %v5747 = vld [vmem:[%s5729 + $0x88] sm:$0xff]
    %v5748 = vld [vmem:[%s5729 + $0x90] sm:$0xff]
    %v5749 = vld [vmem:[%s5729 + $0x98] sm:$0xff]
    %v5750 = vld [vmem:[%s5729 + $0xa0] sm:$0xff]
    %v5751 = vld [vmem:[%s5729 + $0xa8] sm:$0xff]
    %v5752 = vld [vmem:[%s5729 + $0xb0] sm:$0xff]
    %v5753 = vld [vmem:[%s5729 + $0xb8] sm:$0xff]
    %v5754 = vld [vmem:[%s5729 + $0xc0] sm:$0xff]
    %v5755 = vld [vmem:[%s5729 + $0xc8] sm:$0xff]
    %v5756 = vld [vmem:[%s5729 + $0xd0] sm:$0xff]
    %v5757 = vld [vmem:[%s5729 + $0xd8] sm:$0xff]
    %v5758 = vld [vmem:[%s5729 + $0xe0] sm:$0xff]
    %v5759 = vld [vmem:[%s5729 + $0xe8] sm:$0xff]
    %v5760 = vld [vmem:[%s5729 + $0xf0] sm:$0xff]
    %v5761 = vld [vmem:[%s5729 + $0xf8] sm:$0xff]
    %s5762 = scalar_lea.vmem [#allocation5], 2560
    %v5763 = vld [vmem:[%s5762] sm:$0xff]
    %v5764 = vld [vmem:[%s5762 + $0x8] sm:$0xff]
    %v5765 = vld [vmem:[%s5762 + $0x10] sm:$0xff]
    %v5766 = vld [vmem:[%s5762 + $0x18] sm:$0xff]
    %v5767 = vld [vmem:[%s5762 + $0x20] sm:$0xff]
    %v5768 = vld [vmem:[%s5762 + $0x28] sm:$0xff]
    %v5769 = vld [vmem:[%s5762 + $0x30] sm:$0xff]
    %v5770 = vld [vmem:[%s5762 + $0x38] sm:$0xff]
    %v5771 = vld [vmem:[%s5762 + $0x40] sm:$0xff]
    %v5772 = vld [vmem:[%s5762 + $0x48] sm:$0xff]
    %v5773 = vld [vmem:[%s5762 + $0x50] sm:$0xff]
    %v5774 = vld [vmem:[%s5762 + $0x58] sm:$0xff]
    %v5775 = vld [vmem:[%s5762 + $0x60] sm:$0xff]
    %v5776 = vld [vmem:[%s5762 + $0x68] sm:$0xff]
    %v5777 = vld [vmem:[%s5762 + $0x70] sm:$0xff]
    %v5778 = vld [vmem:[%s5762 + $0x78] sm:$0xff]
    %v5779 = vld [vmem:[%s5762 + $0x80] sm:$0xff]
    %v5780 = vld [vmem:[%s5762 + $0x88] sm:$0xff]
    %v5781 = vld [vmem:[%s5762 + $0x90] sm:$0xff]
    %v5782 = vld [vmem:[%s5762 + $0x98] sm:$0xff]
    %v5783 = vld [vmem:[%s5762 + $0xa0] sm:$0xff]
    %v5784 = vld [vmem:[%s5762 + $0xa8] sm:$0xff]
    %v5785 = vld [vmem:[%s5762 + $0xb0] sm:$0xff]
    %v5786 = vld [vmem:[%s5762 + $0xb8] sm:$0xff]
    %v5787 = vld [vmem:[%s5762 + $0xc0] sm:$0xff]
    %v5788 = vld [vmem:[%s5762 + $0xc8] sm:$0xff]
    %v5789 = vld [vmem:[%s5762 + $0xd0] sm:$0xff]
    %v5790 = vld [vmem:[%s5762 + $0xd8] sm:$0xff]
    %v5791 = vld [vmem:[%s5762 + $0xe0] sm:$0xff]
    %v5792 = vld [vmem:[%s5762 + $0xe8] sm:$0xff]
    %v5793 = vld [vmem:[%s5762 + $0xf0] sm:$0xff]
    %v5794 = vld [vmem:[%s5762 + $0xf8] sm:$0xff]
    %v5827 = vunpack.c.l.b16 %v5763
    %v5828 = vunpack.c.h.b16 %v5763
    %v5829 = vunpack.c.l.b16 %v5764
    %v5830 = vunpack.c.h.b16 %v5764
    %v5831 = vunpack.c.l.b16 %v5765
    %v5832 = vunpack.c.h.b16 %v5765
    %v5833 = vunpack.c.l.b16 %v5766
    %v5834 = vunpack.c.h.b16 %v5766
    %v5835 = vunpack.c.l.b16 %v5767
    %v5836 = vunpack.c.h.b16 %v5767
    %v5837 = vunpack.c.l.b16 %v5768
    %v5838 = vunpack.c.h.b16 %v5768
    %v5839 = vunpack.c.l.b16 %v5769
    %v5840 = vunpack.c.h.b16 %v5769
    %v5841 = vunpack.c.l.b16 %v5770
    %v5842 = vunpack.c.h.b16 %v5770
    %v5843 = vunpack.c.l.b16 %v5771
    %v5844 = vunpack.c.h.b16 %v5771
    %v5845 = vunpack.c.l.b16 %v5772
    %v5846 = vunpack.c.h.b16 %v5772
    %v5847 = vunpack.c.l.b16 %v5773
    %v5848 = vunpack.c.h.b16 %v5773
    %v5849 = vunpack.c.l.b16 %v5774
    %v5850 = vunpack.c.h.b16 %v5774
    %v5851 = vunpack.c.l.b16 %v5775
    %v5852 = vunpack.c.h.b16 %v5775
    %v5853 = vunpack.c.l.b16 %v5776
    %v5854 = vunpack.c.h.b16 %v5776
    %v5855 = vunpack.c.l.b16 %v5777
    %v5856 = vunpack.c.h.b16 %v5777
    %v5857 = vunpack.c.l.b16 %v5778
    %v5858 = vunpack.c.h.b16 %v5778
    %v5859 = vunpack.c.l.b16 %v5779
    %v5860 = vunpack.c.h.b16 %v5779
    %v5861 = vunpack.c.l.b16 %v5780
    %v5862 = vunpack.c.h.b16 %v5780
    %v5863 = vunpack.c.l.b16 %v5781
    %v5864 = vunpack.c.h.b16 %v5781
    %v5865 = vunpack.c.l.b16 %v5782
    %v5866 = vunpack.c.h.b16 %v5782
    %v5867 = vunpack.c.l.b16 %v5783
    %v5868 = vunpack.c.h.b16 %v5783
    %v5869 = vunpack.c.l.b16 %v5784
    %v5870 = vunpack.c.h.b16 %v5784
    %v5871 = vunpack.c.l.b16 %v5785
    %v5872 = vunpack.c.h.b16 %v5785
    %v5873 = vunpack.c.l.b16 %v5786
    %v5874 = vunpack.c.h.b16 %v5786
    %v5875 = vunpack.c.l.b16 %v5787
    %v5876 = vunpack.c.h.b16 %v5787
    %v5877 = vunpack.c.l.b16 %v5788
    %v5878 = vunpack.c.h.b16 %v5788
    %v5879 = vunpack.c.l.b16 %v5789
    %v5880 = vunpack.c.h.b16 %v5789
    %v5881 = vunpack.c.l.b16 %v5790
    %v5882 = vunpack.c.h.b16 %v5790
    %v5883 = vunpack.c.l.b16 %v5791
    %v5884 = vunpack.c.h.b16 %v5791
    %v5885 = vunpack.c.l.b16 %v5792
    %v5886 = vunpack.c.h.b16 %v5792
    %v5887 = vunpack.c.l.b16 %v5793
    %v5888 = vunpack.c.h.b16 %v5793
    %v5889 = vunpack.c.l.b16 %v5794
    %v5890 = vunpack.c.h.b16 %v5794
    %v5891 = vpack.c.b16 %v5829, %v5827
    %v5892 = vpack.c.b16 %v5830, %v5828
    %v5893 = vpack.c.b16 %v5833, %v5831
    %v5894 = vpack.c.b16 %v5834, %v5832
    %v5895 = vpack.c.b16 %v5837, %v5835
    %v5896 = vpack.c.b16 %v5838, %v5836
    %v5897 = vpack.c.b16 %v5841, %v5839
    %v5898 = vpack.c.b16 %v5842, %v5840
    %v5899 = vpack.c.b16 %v5845, %v5843
    %v5900 = vpack.c.b16 %v5846, %v5844
    %v5901 = vpack.c.b16 %v5849, %v5847
    %v5902 = vpack.c.b16 %v5850, %v5848
    %v5903 = vpack.c.b16 %v5853, %v5851
    %v5904 = vpack.c.b16 %v5854, %v5852
    %v5905 = vpack.c.b16 %v5857, %v5855
    %v5906 = vpack.c.b16 %v5858, %v5856
    %v5907 = vpack.c.b16 %v5861, %v5859
    %v5908 = vpack.c.b16 %v5862, %v5860
    %v5909 = vpack.c.b16 %v5865, %v5863
    %v5910 = vpack.c.b16 %v5866, %v5864
    %v5911 = vpack.c.b16 %v5869, %v5867
    %v5912 = vpack.c.b16 %v5870, %v5868
    %v5913 = vpack.c.b16 %v5873, %v5871
    %v5914 = vpack.c.b16 %v5874, %v5872
    %v5915 = vpack.c.b16 %v5877, %v5875
    %v5916 = vpack.c.b16 %v5878, %v5876
    %v5917 = vpack.c.b16 %v5881, %v5879
    %v5918 = vpack.c.b16 %v5882, %v5880
    %v5919 = vpack.c.b16 %v5885, %v5883
    %v5920 = vpack.c.b16 %v5886, %v5884
    %v5921 = vpack.c.b16 %v5889, %v5887
    %v5922 = vpack.c.b16 %v5890, %v5888
    %5955 = vmatprep.subr.bf16.mxu0 %v5892
    %5956 = vmatpush1.bf16.msra.mxu0 %v5891
    %5957 = vmatprep.subr.bf16.mxu0 %v5894
    %5958 = vmatpush1.bf16.msra.mxu0 %v5893
    %5959 = vmatprep.subr.bf16.mxu0 %v5896
    %5960 = vmatpush1.bf16.msra.mxu0 %v5895
    %5961 = vmatprep.subr.bf16.mxu0 %v5898
    %5962 = vmatpush1.bf16.msra.mxu0 %v5897
    %5963 = vmatprep.subr.bf16.mxu0 %v5900
    %5964 = vmatpush1.bf16.msra.mxu0 %v5899
    %5965 = vmatprep.subr.bf16.mxu0 %v5902
    %5966 = vmatpush1.bf16.msra.mxu0 %v5901
    %5967 = vmatprep.subr.bf16.mxu0 %v5904
    %5968 = vmatpush1.bf16.msra.mxu0 %v5903
    %5969 = vmatprep.subr.bf16.mxu0 %v5906
    %5970 = vmatpush1.bf16.msra.mxu0 %v5905
    %5971 = vmatprep.subr.bf16.mxu0 %v5908
    %5972 = vmatpush1.bf16.msra.mxu0 %v5907
    %5973 = vmatprep.subr.bf16.mxu0 %v5910
    %5974 = vmatpush1.bf16.msra.mxu0 %v5909
    %5975 = vmatprep.subr.bf16.mxu0 %v5912
    %5976 = vmatpush1.bf16.msra.mxu0 %v5911
    %5977 = vmatprep.subr.bf16.mxu0 %v5914
    %5978 = vmatpush1.bf16.msra.mxu0 %v5913
    %5979 = vmatprep.subr.bf16.mxu0 %v5916
    %5980 = vmatpush1.bf16.msra.mxu0 %v5915
    %5981 = vmatprep.subr.bf16.mxu0 %v5918
    %5982 = vmatpush1.bf16.msra.mxu0 %v5917
    %5983 = vmatprep.subr.bf16.mxu0 %v5920
    %5984 = vmatpush1.bf16.msra.mxu0 %v5919
    %5985 = vmatprep.subr.bf16.mxu0 %v5922
    %5986 = vmatpush1.bf16.msra.mxu0 %v5921
    %5987 = vmatprep.mubr.bf16.mxu0 %v5456
    %5988 = vmatmul.mubr.bf16.gmra.mrb[0].mxu0 %v5455
    %v5989 = vpop.f32.mrb[0].mxu0
    %v5990 = vadd.f32 0.0, %v5989
    %v5991 = vpop.f32.mrb[0].mxu0
    %v5992 = vadd.f32 0.0, %v5991
    %v5993 = vpop.f32.mrb[0].mxu0
    %v5994 = vadd.f32 0.0, %v5993
    %v5995 = vpop.f32.mrb[0].mxu0
    %v5996 = vadd.f32 0.0, %v5995
    %5997 = vmatprep.mubr.bf16.mxu0 %v5458
    %5998 = vmatmul.mubr.bf16.gmra.mrb[0].mxu0 %v5457
    %v5999 = vpop.f32.mrb[0].mxu0
    %v6000 = vadd.f32 0.0, %v5999
    %v6001 = vpop.f32.mrb[0].mxu0
    %v6002 = vadd.f32 0.0, %v6001
    %v6003 = vpop.f32.mrb[0].mxu0
    %v6004 = vadd.f32 0.0, %v6003
    %v6005 = vpop.f32.mrb[0].mxu0
    %v6006 = vadd.f32 0.0, %v6005
    %6007 = vmatprep.mubr.bf16.mxu0 %v5460
    %6008 = vmatmul.mubr.bf16.gmra.mrb[0].mxu0 %v5459
    %v6009 = vpop.f32.mrb[0].mxu0
    %v6010 = vadd.f32 0.0, %v6009
    %v6011 = vpop.f32.mrb[0].mxu0
    %v6012 = vadd.f32 0.0, %v6011
    %v6013 = vpop.f32.mrb[0].mxu0
    %v6014 = vadd.f32 0.0, %v6013
    %v6015 = vpop.f32.mrb[0].mxu0
    %v6016 = vadd.f32 0.0, %v6015
    %6017 = vmatprep.mubr.bf16.mxu0 %v5462
    %6018 = vmatmul.mubr.bf16.gmra.mrb[0].mxu0 %v5461
    %v6019 = vpop.f32.mrb[0].mxu0
    %v6020 = vadd.f32 0.0, %v6019
    %v6021 = vpop.f32.mrb[0].mxu0
    %v6022 = vadd.f32 0.0, %v6021
    %v6023 = vpop.f32.mrb[0].mxu0
    %v6024 = vadd.f32 0.0, %v6023
    %v6025 = vpop.f32.mrb[0].mxu0
    %v6026 = vadd.f32 0.0, %v6025
    %6027 = vmatprep.mubr.bf16.mxu0 %v5464
    %6028 = vmatmul.mubr.bf16.gmra.mrb[0].mxu0 %v5463
    %v6029 = vpop.f32.mrb[0].mxu0
    %v6030 = vadd.f32 0.0, %v6029
    %v6031 = vpop.f32.mrb[0].mxu0
    %v6032 = vadd.f32 0.0, %v6031
    %v6033 = vpop.f32.mrb[0].mxu0
    %v6034 = vadd.f32 0.0, %v6033
    %v6035 = vpop.f32.mrb[0].mxu0
    %v6036 = vadd.f32 0.0, %v6035
    %6037 = vmatprep.mubr.bf16.mxu0 %v5466
    %6038 = vmatmul.mubr.bf16.gmra.mrb[0].mxu0 %v5465
    %v6039 = vpop.f32.mrb[0].mxu0
    %v6040 = vadd.f32 0.0, %v6039
    %v6041 = vpop.f32.mrb[0].mxu0
    %v6042 = vadd.f32 0.0, %v6041
    %v6043 = vpop.f32.mrb[0].mxu0
    %v6044 = vadd.f32 0.0, %v6043
    %v6045 = vpop.f32.mrb[0].mxu0
    %v6046 = vadd.f32 0.0, %v6045
    %6047 = vmatprep.mubr.bf16.mxu0 %v5468
    %6048 = vmatmul.mubr.bf16.gmra.mrb[0].mxu0 %v5467
    %v6049 = vpop.f32.mrb[0].mxu0
    %v6050 = vadd.f32 0.0, %v6049
    %v6051 = vpop.f32.mrb[0].mxu0
    %v6052 = vadd.f32 0.0, %v6051
    %v6053 = vpop.f32.mrb[0].mxu0
    %v6054 = vadd.f32 0.0, %v6053
    %v6055 = vpop.f32.mrb[0].mxu0
    %v6056 = vadd.f32 0.0, %v6055
    %6057 = vmatprep.mubr.bf16.mxu0 %v5470
    %6058 = vmatmul.mubr.bf16.gmra.mrb[0].mxu0 %v5469
    %v6059 = vpop.f32.mrb[0].mxu0
    %v6060 = vadd.f32 0.0, %v6059
    %v6061 = vpop.f32.mrb[0].mxu0
    %v6062 = vadd.f32 0.0, %v6061
    %v6063 = vpop.f32.mrb[0].mxu0
    %v6064 = vadd.f32 0.0, %v6063
    %v6065 = vpop.f32.mrb[0].mxu0
    %v6066 = vadd.f32 0.0, %v6065
    %6067 = vdwg.mxu0
    %v6100 = vunpack.c.l.b16 %v5730
    %v6101 = vunpack.c.h.b16 %v5730
    %v6102 = vunpack.c.l.b16 %v5731
    %v6103 = vunpack.c.h.b16 %v5731
    %v6104 = vunpack.c.l.b16 %v5732
    %v6105 = vunpack.c.h.b16 %v5732
    %v6106 = vunpack.c.l.b16 %v5733
    %v6107 = vunpack.c.h.b16 %v5733
    %v6108 = vunpack.c.l.b16 %v5734
    %v6109 = vunpack.c.h.b16 %v5734
    %v6110 = vunpack.c.l.b16 %v5735
    %v6111 = vunpack.c.h.b16 %v5735
    %v6112 = vunpack.c.l.b16 %v5736
    %v6113 = vunpack.c.h.b16 %v5736
    %v6114 = vunpack.c.l.b16 %v5737
    %v6115 = vunpack.c.h.b16 %v5737
    %v6116 = vunpack.c.l.b16 %v5738
    %v6117 = vunpack.c.h.b16 %v5738
    %v6118 = vunpack.c.l.b16 %v5739
    %v6119 = vunpack.c.h.b16 %v5739
    %v6120 = vunpack.c.l.b16 %v5740
    %v6121 = vunpack.c.h.b16 %v5740
    %v6122 = vunpack.c.l.b16 %v5741
    %v6123 = vunpack.c.h.b16 %v5741
    %v6124 = vunpack.c.l.b16 %v5742
    %v6125 = vunpack.c.h.b16 %v5742
    %v6126 = vunpack.c.l.b16 %v5743
    %v6127 = vunpack.c.h.b16 %v5743
    %v6128 = vunpack.c.l.b16 %v5744
    %v6129 = vunpack.c.h.b16 %v5744
    %v6130 = vunpack.c.l.b16 %v5745
    %v6131 = vunpack.c.h.b16 %v5745
    %v6132 = vunpack.c.l.b16 %v5746
    %v6133 = vunpack.c.h.b16 %v5746
    %v6134 = vunpack.c.l.b16 %v5747
    %v6135 = vunpack.c.h.b16 %v5747
    %v6136 = vunpack.c.l.b16 %v5748
    %v6137 = vunpack.c.h.b16 %v5748
    %v6138 = vunpack.c.l.b16 %v5749
    %v6139 = vunpack.c.h.b16 %v5749
    %v6140 = vunpack.c.l.b16 %v5750
    %v6141 = vunpack.c.h.b16 %v5750
    %v6142 = vunpack.c.l.b16 %v5751
    %v6143 = vunpack.c.h.b16 %v5751
    %v6144 = vunpack.c.l.b16 %v5752
    %v6145 = vunpack.c.h.b16 %v5752
    %v6146 = vunpack.c.l.b16 %v5753
    %v6147 = vunpack.c.h.b16 %v5753
    %v6148 = vunpack.c.l.b16 %v5754
    %v6149 = vunpack.c.h.b16 %v5754
    %v6150 = vunpack.c.l.b16 %v5755
    %v6151 = vunpack.c.h.b16 %v5755
    %v6152 = vunpack.c.l.b16 %v5756
    %v6153 = vunpack.c.h.b16 %v5756
    %v6154 = vunpack.c.l.b16 %v5757
    %v6155 = vunpack.c.h.b16 %v5757
    %v6156 = vunpack.c.l.b16 %v5758
    %v6157 = vunpack.c.h.b16 %v5758
    %v6158 = vunpack.c.l.b16 %v5759
    %v6159 = vunpack.c.h.b16 %v5759
    %v6160 = vunpack.c.l.b16 %v5760
    %v6161 = vunpack.c.h.b16 %v5760
    %v6162 = vunpack.c.l.b16 %v5761
    %v6163 = vunpack.c.h.b16 %v5761
    %v6164 = vpack.c.b16 %v6102, %v6100
    %v6165 = vpack.c.b16 %v6103, %v6101
    %v6166 = vpack.c.b16 %v6106, %v6104
    %v6167 = vpack.c.b16 %v6107, %v6105
    %v6168 = vpack.c.b16 %v6110, %v6108
    %v6169 = vpack.c.b16 %v6111, %v6109
    %v6170 = vpack.c.b16 %v6114, %v6112
    %v6171 = vpack.c.b16 %v6115, %v6113
    %v6172 = vpack.c.b16 %v6118, %v6116
    %v6173 = vpack.c.b16 %v6119, %v6117
    %v6174 = vpack.c.b16 %v6122, %v6120
    %v6175 = vpack.c.b16 %v6123, %v6121
    %v6176 = vpack.c.b16 %v6126, %v6124
    %v6177 = vpack.c.b16 %v6127, %v6125
    %v6178 = vpack.c.b16 %v6130, %v6128
    %v6179 = vpack.c.b16 %v6131, %v6129
    %v6180 = vpack.c.b16 %v6134, %v6132
    %v6181 = vpack.c.b16 %v6135, %v6133
    %v6182 = vpack.c.b16 %v6138, %v6136
    %v6183 = vpack.c.b16 %v6139, %v6137
    %v6184 = vpack.c.b16 %v6142, %v6140
    %v6185 = vpack.c.b16 %v6143, %v6141
    %v6186 = vpack.c.b16 %v6146, %v6144
    %v6187 = vpack.c.b16 %v6147, %v6145
    %v6188 = vpack.c.b16 %v6150, %v6148
    %v6189 = vpack.c.b16 %v6151, %v6149
    %v6190 = vpack.c.b16 %v6154, %v6152
    %v6191 = vpack.c.b16 %v6155, %v6153
    %v6192 = vpack.c.b16 %v6158, %v6156
    %v6193 = vpack.c.b16 %v6159, %v6157
    %v6194 = vpack.c.b16 %v6162, %v6160
    %v6195 = vpack.c.b16 %v6163, %v6161
    %6228 = vmatprep.subr.bf16.mxu0 %v6165
    %6229 = vmatpush1.bf16.msra.mxu0 %v6164
    %6230 = vmatprep.subr.bf16.mxu0 %v6167
    %6231 = vmatpush1.bf16.msra.mxu0 %v6166
    %6232 = vmatprep.subr.bf16.mxu0 %v6169
    %6233 = vmatpush1.bf16.msra.mxu0 %v6168
    %6234 = vmatprep.subr.bf16.mxu0 %v6171
    %6235 = vmatpush1.bf16.msra.mxu0 %v6170
    %6236 = vmatprep.subr.bf16.mxu0 %v6173
    %6237 = vmatpush1.bf16.msra.mxu0 %v6172
    %6238 = vmatprep.subr.bf16.mxu0 %v6175
    %6239 = vmatpush1.bf16.msra.mxu0 %v6174
    %6240 = vmatprep.subr.bf16.mxu0 %v6177
    %6241 = vmatpush1.bf16.msra.mxu0 %v6176
    %6242 = vmatprep.subr.bf16.mxu0 %v6179
    %6243 = vmatpush1.bf16.msra.mxu0 %v6178
    %6244 = vmatprep.subr.bf16.mxu0 %v6181
    %6245 = vmatpush1.bf16.msra.mxu0 %v6180
    %6246 = vmatprep.subr.bf16.mxu0 %v6183
    %6247 = vmatpush1.bf16.msra.mxu0 %v6182
    %6248 = vmatprep.subr.bf16.mxu0 %v6185
    %6249 = vmatpush1.bf16.msra.mxu0 %v6184
    %6250 = vmatprep.subr.bf16.mxu0 %v6187
    %6251 = vmatpush1.bf16.msra.mxu0 %v6186
    %6252 = vmatprep.subr.bf16.mxu0 %v6189
    %6253 = vmatpush1.bf16.msra.mxu0 %v6188
    %6254 = vmatprep.subr.bf16.mxu0 %v6191
    %6255 = vmatpush1.bf16.msra.mxu0 %v6190
    %6256 = vmatprep.subr.bf16.mxu0 %v6193
    %6257 = vmatpush1.bf16.msra.mxu0 %v6192
    %6258 = vmatprep.subr.bf16.mxu0 %v6195
    %6259 = vmatpush1.bf16.msra.mxu0 %v6194
    %6260 = vmatprep.mubr.bf16.mxu0 %v5585
    %6261 = vmatmul.mubr.bf16.gmra.mrb[0].mxu0 %v5584
    %v6262 = vpop.f32.mrb[0].mxu0
    %v6263 = vadd.f32 %v5990, %v6262
    %v6264 = vpop.f32.mrb[0].mxu0
    %v6265 = vadd.f32 %v5992, %v6264
    %v6266 = vpop.f32.mrb[0].mxu0
    %v6267 = vadd.f32 %v5994, %v6266
    %v6268 = vpop.f32.mrb[0].mxu0
    %v6269 = vadd.f32 %v5996, %v6268
    %6270 = vmatprep.mubr.bf16.mxu0 %v5587
    %6271 = vmatmul.mubr.bf16.gmra.mrb[0].mxu0 %v5586
    %v6272 = vpop.f32.mrb[0].mxu0
    %v6273 = vadd.f32 %v6000, %v6272
    %v6274 = vpop.f32.mrb[0].mxu0
    %v6275 = vadd.f32 %v6002, %v6274
    %v6276 = vpop.f32.mrb[0].mxu0
    %v6277 = vadd.f32 %v6004, %v6276
    %v6278 = vpop.f32.mrb[0].mxu0
    %v6279 = vadd.f32 %v6006, %v6278
    %6280 = vmatprep.mubr.bf16.mxu0 %v5589
    %6281 = vmatmul.mubr.bf16.gmra.mrb[0].mxu0 %v5588
    %v6282 = vpop.f32.mrb[0].mxu0
    %v6283 = vadd.f32 %v6010, %v6282
    %v6284 = vpop.f32.mrb[0].mxu0
    %v6285 = vadd.f32 %v6012, %v6284
    %v6286 = vpop.f32.mrb[0].mxu0
    %v6287 = vadd.f32 %v6014, %v6286
    %v6288 = vpop.f32.mrb[0].mxu0
    %v6289 = vadd.f32 %v6016, %v6288
    %6290 = vmatprep.mubr.bf16.mxu0 %v5591
    %6291 = vmatmul.mubr.bf16.gmra.mrb[0].mxu0 %v5590
    %v6292 = vpop.f32.mrb[0].mxu0
    %v6293 = vadd.f32 %v6020, %v6292
    %v6294 = vpop.f32.mrb[0].mxu0
    %v6295 = vadd.f32 %v6022, %v6294
    %v6296 = vpop.f32.mrb[0].mxu0
    %v6297 = vadd.f32 %v6024, %v6296
    %v6298 = vpop.f32.mrb[0].mxu0
    %v6299 = vadd.f32 %v6026, %v6298
    %6300 = vmatprep.mubr.bf16.mxu0 %v5593
    %6301 = vmatmul.mubr.bf16.gmra.mrb[0].mxu0 %v5592
    %v6302 = vpop.f32.mrb[0].mxu0
    %v6303 = vadd.f32 %v6030, %v6302
    %v6304 = vpop.f32.mrb[0].mxu0
    %v6305 = vadd.f32 %v6032, %v6304
    %v6306 = vpop.f32.mrb[0].mxu0
    %v6307 = vadd.f32 %v6034, %v6306
    %v6308 = vpop.f32.mrb[0].mxu0
    %v6309 = vadd.f32 %v6036, %v6308
    %6310 = vmatprep.mubr.bf16.mxu0 %v5595
    %6311 = vmatmul.mubr.bf16.gmra.mrb[0].mxu0 %v5594
    %v6312 = vpop.f32.mrb[0].mxu0
    %v6313 = vadd.f32 %v6040, %v6312
    %v6314 = vpop.f32.mrb[0].mxu0
    %v6315 = vadd.f32 %v6042, %v6314
    %v6316 = vpop.f32.mrb[0].mxu0
    %v6317 = vadd.f32 %v6044, %v6316
    %v6318 = vpop.f32.mrb[0].mxu0
    %v6319 = vadd.f32 %v6046, %v6318
    %6320 = vmatprep.mubr.bf16.mxu0 %v5597
    %6321 = vmatmul.mubr.bf16.gmra.mrb[0].mxu0 %v5596
    %v6322 = vpop.f32.mrb[0].mxu0
    %v6323 = vadd.f32 %v6050, %v6322
    %v6324 = vpop.f32.mrb[0].mxu0
    %v6325 = vadd.f32 %v6052, %v6324
    %v6326 = vpop.f32.mrb[0].mxu0
    %v6327 = vadd.f32 %v6054, %v6326
    %v6328 = vpop.f32.mrb[0].mxu0
    %v6329 = vadd.f32 %v6056, %v6328
    %6330 = vmatprep.mubr.bf16.mxu0 %v5599
    %6331 = vmatmul.mubr.bf16.gmra.mrb[0].mxu0 %v5598
    %v6332 = vpop.f32.mrb[0].mxu0
    %v6333 = vadd.f32 %v6060, %v6332
    %v6334 = vpop.f32.mrb[0].mxu0
    %v6335 = vadd.f32 %v6062, %v6334
    %v6336 = vpop.f32.mrb[0].mxu0
    %v6337 = vadd.f32 %v6064, %v6336
    %v6338 = vpop.f32.mrb[0].mxu0
    %v6339 = vadd.f32 %v6066, %v6338
    %6340 = vdwg.mxu0
    %s6341 = scalar_lea.vmem [#allocation5], 2816
    %v6342 = vld [vmem:[%s6341] sm:$0xff]
    %v6343 = vld [vmem:[%s6341 + $0x8] sm:$0xff]
    %v6344 = vld [vmem:[%s6341 + $0x10] sm:$0xff]
    %v6345 = vld [vmem:[%s6341 + $0x18] sm:$0xff]
    %v6346 = vld [vmem:[%s6341 + $0x20] sm:$0xff]
    %v6347 = vld [vmem:[%s6341 + $0x28] sm:$0xff]
    %v6348 = vld [vmem:[%s6341 + $0x30] sm:$0xff]
    %v6349 = vld [vmem:[%s6341 + $0x38] sm:$0xff]
    %v6350 = vld [vmem:[%s6341 + $0x40] sm:$0xff]
    %v6351 = vld [vmem:[%s6341 + $0x48] sm:$0xff]
    %v6352 = vld [vmem:[%s6341 + $0x50] sm:$0xff]
    %v6353 = vld [vmem:[%s6341 + $0x58] sm:$0xff]
    %v6354 = vld [vmem:[%s6341 + $0x60] sm:$0xff]
    %v6355 = vld [vmem:[%s6341 + $0x68] sm:$0xff]
    %v6356 = vld [vmem:[%s6341 + $0x70] sm:$0xff]
    %v6357 = vld [vmem:[%s6341 + $0x78] sm:$0xff]
    %v6358 = vld [vmem:[%s6341 + $0x80] sm:$0xff]
    %v6359 = vld [vmem:[%s6341 + $0x88] sm:$0xff]
    %v6360 = vld [vmem:[%s6341 + $0x90] sm:$0xff]
    %v6361 = vld [vmem:[%s6341 + $0x98] sm:$0xff]
    %v6362 = vld [vmem:[%s6341 + $0xa0] sm:$0xff]
    %v6363 = vld [vmem:[%s6341 + $0xa8] sm:$0xff]
    %v6364 = vld [vmem:[%s6341 + $0xb0] sm:$0xff]
    %v6365 = vld [vmem:[%s6341 + $0xb8] sm:$0xff]
    %v6366 = vld [vmem:[%s6341 + $0xc0] sm:$0xff]
    %v6367 = vld [vmem:[%s6341 + $0xc8] sm:$0xff]
    %v6368 = vld [vmem:[%s6341 + $0xd0] sm:$0xff]
    %v6369 = vld [vmem:[%s6341 + $0xd8] sm:$0xff]
    %v6370 = vld [vmem:[%s6341 + $0xe0] sm:$0xff]
    %v6371 = vld [vmem:[%s6341 + $0xe8] sm:$0xff]
    %v6372 = vld [vmem:[%s6341 + $0xf0] sm:$0xff]
    %v6373 = vld [vmem:[%s6341 + $0xf8] sm:$0xff]
    %v6406 = vunpack.c.l.b16 %v6342
    %v6407 = vunpack.c.h.b16 %v6342
    %v6408 = vunpack.c.l.b16 %v6343
    %v6409 = vunpack.c.h.b16 %v6343
    %v6410 = vunpack.c.l.b16 %v6344
    %v6411 = vunpack.c.h.b16 %v6344
    %v6412 = vunpack.c.l.b16 %v6345
    %v6413 = vunpack.c.h.b16 %v6345
    %v6414 = vunpack.c.l.b16 %v6346
    %v6415 = vunpack.c.h.b16 %v6346
    %v6416 = vunpack.c.l.b16 %v6347
    %v6417 = vunpack.c.h.b16 %v6347
    %v6418 = vunpack.c.l.b16 %v6348
    %v6419 = vunpack.c.h.b16 %v6348
    %v6420 = vunpack.c.l.b16 %v6349
    %v6421 = vunpack.c.h.b16 %v6349
    %v6422 = vunpack.c.l.b16 %v6350
    %v6423 = vunpack.c.h.b16 %v6350
    %v6424 = vunpack.c.l.b16 %v6351
    %v6425 = vunpack.c.h.b16 %v6351
    %v6426 = vunpack.c.l.b16 %v6352
    %v6427 = vunpack.c.h.b16 %v6352
    %v6428 = vunpack.c.l.b16 %v6353
    %v6429 = vunpack.c.h.b16 %v6353
    %v6430 = vunpack.c.l.b16 %v6354
    %v6431 = vunpack.c.h.b16 %v6354
    %v6432 = vunpack.c.l.b16 %v6355
    %v6433 = vunpack.c.h.b16 %v6355
    %v6434 = vunpack.c.l.b16 %v6356
    %v6435 = vunpack.c.h.b16 %v6356
    %v6436 = vunpack.c.l.b16 %v6357
    %v6437 = vunpack.c.h.b16 %v6357
    %v6438 = vunpack.c.l.b16 %v6358
    %v6439 = vunpack.c.h.b16 %v6358
    %v6440 = vunpack.c.l.b16 %v6359
    %v6441 = vunpack.c.h.b16 %v6359
    %v6442 = vunpack.c.l.b16 %v6360
    %v6443 = vunpack.c.h.b16 %v6360
    %v6444 = vunpack.c.l.b16 %v6361
    %v6445 = vunpack.c.h.b16 %v6361
    %v6446 = vunpack.c.l.b16 %v6362
    %v6447 = vunpack.c.h.b16 %v6362
    %v6448 = vunpack.c.l.b16 %v6363
    %v6449 = vunpack.c.h.b16 %v6363
    %v6450 = vunpack.c.l.b16 %v6364
    %v6451 = vunpack.c.h.b16 %v6364
    %v6452 = vunpack.c.l.b16 %v6365
    %v6453 = vunpack.c.h.b16 %v6365
    %v6454 = vunpack.c.l.b16 %v6366
    %v6455 = vunpack.c.h.b16 %v6366
    %v6456 = vunpack.c.l.b16 %v6367
    %v6457 = vunpack.c.h.b16 %v6367
    %v6458 = vunpack.c.l.b16 %v6368
    %v6459 = vunpack.c.h.b16 %v6368
    %v6460 = vunpack.c.l.b16 %v6369
    %v6461 = vunpack.c.h.b16 %v6369
    %v6462 = vunpack.c.l.b16 %v6370
    %v6463 = vunpack.c.h.b16 %v6370
    %v6464 = vunpack.c.l.b16 %v6371
    %v6465 = vunpack.c.h.b16 %v6371
    %v6466 = vunpack.c.l.b16 %v6372
    %v6467 = vunpack.c.h.b16 %v6372
    %v6468 = vunpack.c.l.b16 %v6373
    %v6469 = vunpack.c.h.b16 %v6373
    %v6470 = vpack.c.b16 %v6408, %v6406
    %v6471 = vpack.c.b16 %v6409, %v6407
    %v6472 = vpack.c.b16 %v6412, %v6410
    %v6473 = vpack.c.b16 %v6413, %v6411
    %v6474 = vpack.c.b16 %v6416, %v6414
    %v6475 = vpack.c.b16 %v6417, %v6415
    %v6476 = vpack.c.b16 %v6420, %v6418
    %v6477 = vpack.c.b16 %v6421, %v6419
    %v6478 = vpack.c.b16 %v6424, %v6422
    %v6479 = vpack.c.b16 %v6425, %v6423
    %v6480 = vpack.c.b16 %v6428, %v6426
    %v6481 = vpack.c.b16 %v6429, %v6427
    %v6482 = vpack.c.b16 %v6432, %v6430
    %v6483 = vpack.c.b16 %v6433, %v6431
    %v6484 = vpack.c.b16 %v6436, %v6434
    %v6485 = vpack.c.b16 %v6437, %v6435
    %v6486 = vpack.c.b16 %v6440, %v6438
    %v6487 = vpack.c.b16 %v6441, %v6439
    %v6488 = vpack.c.b16 %v6444, %v6442
    %v6489 = vpack.c.b16 %v6445, %v6443
    %v6490 = vpack.c.b16 %v6448, %v6446
    %v6491 = vpack.c.b16 %v6449, %v6447
    %v6492 = vpack.c.b16 %v6452, %v6450
    %v6493 = vpack.c.b16 %v6453, %v6451
    %v6494 = vpack.c.b16 %v6456, %v6454
    %v6495 = vpack.c.b16 %v6457, %v6455
    %v6496 = vpack.c.b16 %v6460, %v6458
    %v6497 = vpack.c.b16 %v6461, %v6459
    %v6498 = vpack.c.b16 %v6464, %v6462
    %v6499 = vpack.c.b16 %v6465, %v6463
    %v6500 = vpack.c.b16 %v6468, %v6466
    %v6501 = vpack.c.b16 %v6469, %v6467
    %6534 = vmatprep.subr.bf16.mxu0 %v6471
    %6535 = vmatpush1.bf16.msra.mxu0 %v6470
    %6536 = vmatprep.subr.bf16.mxu0 %v6473
    %6537 = vmatpush1.bf16.msra.mxu0 %v6472
    %6538 = vmatprep.subr.bf16.mxu0 %v6475
    %6539 = vmatpush1.bf16.msra.mxu0 %v6474
    %6540 = vmatprep.subr.bf16.mxu0 %v6477
    %6541 = vmatpush1.bf16.msra.mxu0 %v6476
    %6542 = vmatprep.subr.bf16.mxu0 %v6479
    %6543 = vmatpush1.bf16.msra.mxu0 %v6478
    %6544 = vmatprep.subr.bf16.mxu0 %v6481
    %6545 = vmatpush1.bf16.msra.mxu0 %v6480
    %6546 = vmatprep.subr.bf16.mxu0 %v6483
    %6547 = vmatpush1.bf16.msra.mxu0 %v6482
    %6548 = vmatprep.subr.bf16.mxu0 %v6485
    %6549 = vmatpush1.bf16.msra.mxu0 %v6484
    %6550 = vmatprep.subr.bf16.mxu0 %v6487
    %6551 = vmatpush1.bf16.msra.mxu0 %v6486
    %6552 = vmatprep.subr.bf16.mxu0 %v6489
    %6553 = vmatpush1.bf16.msra.mxu0 %v6488
    %6554 = vmatprep.subr.bf16.mxu0 %v6491
    %6555 = vmatpush1.bf16.msra.mxu0 %v6490
    %6556 = vmatprep.subr.bf16.mxu0 %v6493
    %6557 = vmatpush1.bf16.msra.mxu0 %v6492
    %6558 = vmatprep.subr.bf16.mxu0 %v6495
    %6559 = vmatpush1.bf16.msra.mxu0 %v6494
    %6560 = vmatprep.subr.bf16.mxu0 %v6497
    %6561 = vmatpush1.bf16.msra.mxu0 %v6496
    %6562 = vmatprep.subr.bf16.mxu0 %v6499
    %6563 = vmatpush1.bf16.msra.mxu0 %v6498
    %6564 = vmatprep.subr.bf16.mxu0 %v6501
    %6565 = vmatpush1.bf16.msra.mxu0 %v6500
    %6566 = vmatprep.mubr.bf16.mxu0 %v5714
    %6567 = vmatmul.mubr.bf16.gmra.mrb[0].mxu0 %v5713
    %v6568 = vpop.f32.mrb[0].mxu0
    %v6569 = vadd.f32 0.0, %v6568
    %v6570 = vpop.f32.mrb[0].mxu0
    %v6571 = vadd.f32 0.0, %v6570
    %v6572 = vpop.f32.mrb[0].mxu0
    %v6573 = vadd.f32 0.0, %v6572
    %v6574 = vpop.f32.mrb[0].mxu0
    %v6575 = vadd.f32 0.0, %v6574
    %6576 = vmatprep.mubr.bf16.mxu0 %v5716
    %6577 = vmatmul.mubr.bf16.gmra.mrb[0].mxu0 %v5715
    %v6578 = vpop.f32.mrb[0].mxu0
    %v6579 = vadd.f32 0.0, %v6578
    %v6580 = vpop.f32.mrb[0].mxu0
    %v6581 = vadd.f32 0.0, %v6580
    %v6582 = vpop.f32.mrb[0].mxu0
    %v6583 = vadd.f32 0.0, %v6582
    %v6584 = vpop.f32.mrb[0].mxu0
    %v6585 = vadd.f32 0.0, %v6584
    %6586 = vmatprep.mubr.bf16.mxu0 %v5718
    %6587 = vmatmul.mubr.bf16.gmra.mrb[0].mxu0 %v5717
    %v6588 = vpop.f32.mrb[0].mxu0
    %v6589 = vadd.f32 0.0, %v6588
    %v6590 = vpop.f32.mrb[0].mxu0
    %v6591 = vadd.f32 0.0, %v6590
    %v6592 = vpop.f32.mrb[0].mxu0
    %v6593 = vadd.f32 0.0, %v6592
    %v6594 = vpop.f32.mrb[0].mxu0
    %v6595 = vadd.f32 0.0, %v6594
    %6596 = vmatprep.mubr.bf16.mxu0 %v5720
    %6597 = vmatmul.mubr.bf16.gmra.mrb[0].mxu0 %v5719
    %v6598 = vpop.f32.mrb[0].mxu0
    %v6599 = vadd.f32 0.0, %v6598
    %v6600 = vpop.f32.mrb[0].mxu0
    %v6601 = vadd.f32 0.0, %v6600
    %v6602 = vpop.f32.mrb[0].mxu0
    %v6603 = vadd.f32 0.0, %v6602
    %v6604 = vpop.f32.mrb[0].mxu0
    %v6605 = vadd.f32 0.0, %v6604
    %6606 = vmatprep.mubr.bf16.mxu0 %v5722
    %6607 = vmatmul.mubr.bf16.gmra.mrb[0].mxu0 %v5721
    %v6608 = vpop.f32.mrb[0].mxu0
    %v6609 = vadd.f32 0.0, %v6608
    %v6610 = vpop.f32.mrb[0].mxu0
    %v6611 = vadd.f32 0.0, %v6610
    %v6612 = vpop.f32.mrb[0].mxu0
    %v6613 = vadd.f32 0.0, %v6612
    %v6614 = vpop.f32.mrb[0].mxu0
    %v6615 = vadd.f32 0.0, %v6614
    %6616 = vmatprep.mubr.bf16.mxu0 %v5724
    %6617 = vmatmul.mubr.bf16.gmra.mrb[0].mxu0 %v5723
    %v6618 = vpop.f32.mrb[0].mxu0
    %v6619 = vadd.f32 0.0, %v6618
    %v6620 = vpop.f32.mrb[0].mxu0
    %v6621 = vadd.f32 0.0, %v6620
    %v6622 = vpop.f32.mrb[0].mxu0
    %v6623 = vadd.f32 0.0, %v6622
    %v6624 = vpop.f32.mrb[0].mxu0
    %v6625 = vadd.f32 0.0, %v6624
    %6626 = vmatprep.mubr.bf16.mxu0 %v5726
    %6627 = vmatmul.mubr.bf16.gmra.mrb[0].mxu0 %v5725
    %v6628 = vpop.f32.mrb[0].mxu0
    %v6629 = vadd.f32 0.0, %v6628
    %v6630 = vpop.f32.mrb[0].mxu0
    %v6631 = vadd.f32 0.0, %v6630
    %v6632 = vpop.f32.mrb[0].mxu0
    %v6633 = vadd.f32 0.0, %v6632
    %v6634 = vpop.f32.mrb[0].mxu0
    %v6635 = vadd.f32 0.0, %v6634
    %6636 = vmatprep.mubr.bf16.mxu0 %v5728
    %6637 = vmatmul.mubr.bf16.gmra.mrb[0].mxu0 %v5727
    %v6638 = vpop.f32.mrb[0].mxu0
    %v6639 = vadd.f32 0.0, %v6638
    %v6640 = vpop.f32.mrb[0].mxu0
    %v6641 = vadd.f32 0.0, %v6640
    %v6642 = vpop.f32.mrb[0].mxu0
    %v6643 = vadd.f32 0.0, %v6642
    %v6644 = vpop.f32.mrb[0].mxu0
    %v6645 = vadd.f32 0.0, %v6644
    %6646 = vdwg.mxu0
    %v6647 = vadd.f32 %v6263, %v6569
    %v6648 = vadd.f32 %v6265, %v6571
    %v6649 = vadd.f32 %v6267, %v6573
    %v6650 = vadd.f32 %v6269, %v6575
    %v6651 = vadd.f32 %v6273, %v6579
    %v6652 = vadd.f32 %v6275, %v6581
    %v6653 = vadd.f32 %v6277, %v6583
    %v6654 = vadd.f32 %v6279, %v6585
    %v6655 = vadd.f32 %v6283, %v6589
    %v6656 = vadd.f32 %v6285, %v6591
    %v6657 = vadd.f32 %v6287, %v6593
    %v6658 = vadd.f32 %v6289, %v6595
    %v6659 = vadd.f32 %v6293, %v6599
    %v6660 = vadd.f32 %v6295, %v6601
    %v6661 = vadd.f32 %v6297, %v6603
    %v6662 = vadd.f32 %v6299, %v6605
    %v6663 = vadd.f32 %v6303, %v6609
    %v6664 = vadd.f32 %v6305, %v6611
    %v6665 = vadd.f32 %v6307, %v6613
    %v6666 = vadd.f32 %v6309, %v6615
    %v6667 = vadd.f32 %v6313, %v6619
    %v6668 = vadd.f32 %v6315, %v6621
    %v6669 = vadd.f32 %v6317, %v6623
    %v6670 = vadd.f32 %v6319, %v6625
    %v6671 = vadd.f32 %v6323, %v6629
    %v6672 = vadd.f32 %v6325, %v6631
    %v6673 = vadd.f32 %v6327, %v6633
    %v6674 = vadd.f32 %v6329, %v6635
    %v6675 = vadd.f32 %v6333, %v6639
    %v6676 = vadd.f32 %v6335, %v6641
    %v6677 = vadd.f32 %v6337, %v6643
    %v6678 = vadd.f32 %v6339, %v6645
    %s6679 = scalar_lea.vmem [#allocation7], 6
    %v6680 = vld [vmem:[%s6679] sm:$0x3]
    %v6682 = vlaneseq
    %v6683 = vshrl.u32 %v6682, 7
    %v6684 = vsub.s32 0, %v6683
    %v6685 = vrot.slane %v6680, %v6684
    %v6686 = vlaneseq
    %v6687 = vshrl.u32 %v6686, 7
    %v6688 = vsub.s32 1, %v6687
    %v6689 = vrot.slane %v6680, %v6688
    %v6692 = vadd.f32 %v6647, %v6685
    %v6693 = vadd.f32 %v6648, %v6689
    %v6694 = vadd.f32 %v6649, %v6685
    %v6695 = vadd.f32 %v6650, %v6689
    %v6696 = vadd.f32 %v6651, %v6685
    %v6697 = vadd.f32 %v6652, %v6689
    %v6698 = vadd.f32 %v6653, %v6685
    %v6699 = vadd.f32 %v6654, %v6689
    %v6700 = vadd.f32 %v6655, %v6685
    %v6701 = vadd.f32 %v6656, %v6689
    %v6702 = vadd.f32 %v6657, %v6685
    %v6703 = vadd.f32 %v6658, %v6689
    %v6704 = vadd.f32 %v6659, %v6685
    %v6705 = vadd.f32 %v6660, %v6689
    %v6706 = vadd.f32 %v6661, %v6685
    %v6707 = vadd.f32 %v6662, %v6689
    %v6708 = vadd.f32 %v6663, %v6685
    %v6709 = vadd.f32 %v6664, %v6689
    %v6710 = vadd.f32 %v6665, %v6685
    %v6711 = vadd.f32 %v6666, %v6689
    %v6712 = vadd.f32 %v6667, %v6685
    %v6713 = vadd.f32 %v6668, %v6689
    %v6714 = vadd.f32 %v6669, %v6685
    %v6715 = vadd.f32 %v6670, %v6689
    %v6716 = vadd.f32 %v6671, %v6685
    %v6717 = vadd.f32 %v6672, %v6689
    %v6718 = vadd.f32 %v6673, %v6685
    %v6719 = vadd.f32 %v6674, %v6689
    %v6720 = vadd.f32 %v6675, %v6685
    %v6721 = vadd.f32 %v6676, %v6689
    %v6722 = vadd.f32 %v6677, %v6685
    %v6723 = vadd.f32 %v6678, %v6689
    %v6724 = vadd.f32 %v6692, %v6694
    %v6725 = vadd.f32 %v6724, %v6696
    %v6726 = vadd.f32 %v6725, %v6698
    %v6727 = vadd.f32 %v6726, %v6700
    %v6728 = vadd.f32 %v6727, %v6702
    %v6729 = vadd.f32 %v6728, %v6704
    %v6730 = vadd.f32 %v6729, %v6706
    %v6731 = vadd.f32 %v6730, %v6708
    %v6732 = vadd.f32 %v6731, %v6710
    %v6733 = vadd.f32 %v6732, %v6712
    %v6734 = vadd.f32 %v6733, %v6714
    %v6735 = vadd.f32 %v6734, %v6716
    %v6736 = vadd.f32 %v6735, %v6718
    %v6737 = vadd.f32 %v6736, %v6720
    %v6738 = vadd.f32 %v6737, %v6722
    %v6739 = vrot.slane %v6738, 4
    %v6740 = vadd.f32 %v6738, %v6739
    %v6741 = vrot.slane %v6740, 2
    %v6742 = vadd.f32 %v6740, %v6741
    %v6743 = vrot.slane %v6742, 1
    %v6744 = vadd.f32 %v6742, %v6743
    %v6745 = vadd.f32 %v6693, %v6695
    %v6746 = vadd.f32 %v6745, %v6697
    %v6747 = vadd.f32 %v6746, %v6699
    %v6748 = vadd.f32 %v6747, %v6701
    %v6749 = vadd.f32 %v6748, %v6703
    %v6750 = vadd.f32 %v6749, %v6705
    %v6751 = vadd.f32 %v6750, %v6707
    %v6752 = vadd.f32 %v6751, %v6709
    %v6753 = vadd.f32 %v6752, %v6711
    %v6754 = vadd.f32 %v6753, %v6713
    %v6755 = vadd.f32 %v6754, %v6715
    %v6756 = vadd.f32 %v6755, %v6717
    %v6757 = vadd.f32 %v6756, %v6719
    %v6758 = vadd.f32 %v6757, %v6721
    %v6759 = vadd.f32 %v6758, %v6723
    %v6760 = vrot.slane %v6759, 4
    %v6761 = vadd.f32 %v6759, %v6760
    %v6762 = vrot.slane %v6761, 2
    %v6763 = vadd.f32 %v6761, %v6762
    %v6764 = vrot.slane %v6763, 1
    %v6765 = vadd.f32 %v6763, %v6764
    %v6766 = vmul.f32 %v6744, %v1646
    %v6767 = vmul.f32 %v6765, %v1646
    %v6768 = vsub.f32 %v6692, %v6766
    %v6769 = vsub.f32 %v6693, %v6767
    %v6770 = vsub.f32 %v6694, %v6766
    %v6771 = vsub.f32 %v6695, %v6767
    %v6772 = vsub.f32 %v6696, %v6766
    %v6773 = vsub.f32 %v6697, %v6767
    %v6774 = vsub.f32 %v6698, %v6766
    %v6775 = vsub.f32 %v6699, %v6767
    %v6776 = vsub.f32 %v6700, %v6766
    %v6777 = vsub.f32 %v6701, %v6767
    %v6778 = vsub.f32 %v6702, %v6766
    %v6779 = vsub.f32 %v6703, %v6767
    %v6780 = vsub.f32 %v6704, %v6766
    %v6781 = vsub.f32 %v6705, %v6767
    %v6782 = vsub.f32 %v6706, %v6766
    %v6783 = vsub.f32 %v6707, %v6767
    %v6784 = vsub.f32 %v6708, %v6766
    %v6785 = vsub.f32 %v6709, %v6767
    %v6786 = vsub.f32 %v6710, %v6766
    %v6787 = vsub.f32 %v6711, %v6767
    %v6788 = vsub.f32 %v6712, %v6766
    %v6789 = vsub.f32 %v6713, %v6767
    %v6790 = vsub.f32 %v6714, %v6766
    %v6791 = vsub.f32 %v6715, %v6767
    %v6792 = vsub.f32 %v6716, %v6766
    %v6793 = vsub.f32 %v6717, %v6767
    %v6794 = vsub.f32 %v6718, %v6766
    %v6795 = vsub.f32 %v6719, %v6767
    %v6796 = vsub.f32 %v6720, %v6766
    %v6797 = vsub.f32 %v6721, %v6767
    %v6798 = vsub.f32 %v6722, %v6766
    %v6799 = vsub.f32 %v6723, %v6767
    %v6800 = vmul.f32 %v6768, %v6768
    %v6801 = vmul.f32 %v6769, %v6769
    %v6802 = vmul.f32 %v6770, %v6770
    %v6803 = vmul.f32 %v6771, %v6771
    %v6804 = vmul.f32 %v6772, %v6772
    %v6805 = vmul.f32 %v6773, %v6773
    %v6806 = vmul.f32 %v6774, %v6774
    %v6807 = vmul.f32 %v6775, %v6775
    %v6808 = vmul.f32 %v6776, %v6776
    %v6809 = vmul.f32 %v6777, %v6777
    %v6810 = vmul.f32 %v6778, %v6778
    %v6811 = vmul.f32 %v6779, %v6779
    %v6812 = vmul.f32 %v6780, %v6780
    %v6813 = vmul.f32 %v6781, %v6781
    %v6814 = vmul.f32 %v6782, %v6782
    %v6815 = vmul.f32 %v6783, %v6783
    %v6816 = vmul.f32 %v6784, %v6784
    %v6817 = vmul.f32 %v6785, %v6785
    %v6818 = vmul.f32 %v6786, %v6786
    %v6819 = vmul.f32 %v6787, %v6787
    %v6820 = vmul.f32 %v6788, %v6788
    %v6821 = vmul.f32 %v6789, %v6789
    %v6822 = vmul.f32 %v6790, %v6790
    %v6823 = vmul.f32 %v6791, %v6791
    %v6824 = vmul.f32 %v6792, %v6792
    %v6825 = vmul.f32 %v6793, %v6793
    %v6826 = vmul.f32 %v6794, %v6794
    %v6827 = vmul.f32 %v6795, %v6795
    %v6828 = vmul.f32 %v6796, %v6796
    %v6829 = vmul.f32 %v6797, %v6797
    %v6830 = vmul.f32 %v6798, %v6798
    %v6831 = vmul.f32 %v6799, %v6799
    %v6832 = vadd.f32 %v6800, %v6802
    %v6833 = vadd.f32 %v6832, %v6804
    %v6834 = vadd.f32 %v6833, %v6806
    %v6835 = vadd.f32 %v6834, %v6808
    %v6836 = vadd.f32 %v6835, %v6810
    %v6837 = vadd.f32 %v6836, %v6812
    %v6838 = vadd.f32 %v6837, %v6814
    %v6839 = vadd.f32 %v6838, %v6816
    %v6840 = vadd.f32 %v6839, %v6818
    %v6841 = vadd.f32 %v6840, %v6820
    %v6842 = vadd.f32 %v6841, %v6822
    %v6843 = vadd.f32 %v6842, %v6824
    %v6844 = vadd.f32 %v6843, %v6826
    %v6845 = vadd.f32 %v6844, %v6828
    %v6846 = vadd.f32 %v6845, %v6830
    %v6847 = vrot.slane %v6846, 4
    %v6848 = vadd.f32 %v6846, %v6847
    %v6849 = vrot.slane %v6848, 2
    %v6850 = vadd.f32 %v6848, %v6849
    %v6851 = vrot.slane %v6850, 1
    %v6852 = vadd.f32 %v6850, %v6851
    %v6853 = vadd.f32 %v6801, %v6803
    %v6854 = vadd.f32 %v6853, %v6805
    %v6855 = vadd.f32 %v6854, %v6807
    %v6856 = vadd.f32 %v6855, %v6809
    %v6857 = vadd.f32 %v6856, %v6811
    %v6858 = vadd.f32 %v6857, %v6813
    %v6859 = vadd.f32 %v6858, %v6815
    %v6860 = vadd.f32 %v6859, %v6817
    %v6861 = vadd.f32 %v6860, %v6819
    %v6862 = vadd.f32 %v6861, %v6821
    %v6863 = vadd.f32 %v6862, %v6823
    %v6864 = vadd.f32 %v6863, %v6825
    %v6865 = vadd.f32 %v6864, %v6827
    %v6866 = vadd.f32 %v6865, %v6829
    %v6867 = vadd.f32 %v6866, %v6831
    %v6868 = vrot.slane %v6867, 4
    %v6869 = vadd.f32 %v6867, %v6868
    %v6870 = vrot.slane %v6869, 2
    %v6871 = vadd.f32 %v6869, %v6870
    %v6872 = vrot.slane %v6871, 1
    %v6873 = vadd.f32 %v6871, %v6872
    %v6874 = vmul.f32 %v6852, %v1646
    %v6875 = vmul.f32 %v6873, %v1646
    %v6876 = vadd.f32 %v6874, 1e-05
    %v6877 = vadd.f32 %v6875, 1e-05
    %v6878 = vrsqrt.pop %v6876
    %v6879 = vrsqrt.pop %v6877
    %v6880 = vmul.f32 %v6768, %v6878
    %v6881 = vmul.f32 %v6769, %v6879
    %v6882 = vmul.f32 %v6770, %v6878
    %v6883 = vmul.f32 %v6771, %v6879
    %v6884 = vmul.f32 %v6772, %v6878
    %v6885 = vmul.f32 %v6773, %v6879
    %v6886 = vmul.f32 %v6774, %v6878
    %v6887 = vmul.f32 %v6775, %v6879
    %v6888 = vmul.f32 %v6776, %v6878
    %v6889 = vmul.f32 %v6777, %v6879
    %v6890 = vmul.f32 %v6778, %v6878
    %v6891 = vmul.f32 %v6779, %v6879
    %v6892 = vmul.f32 %v6780, %v6878
    %v6893 = vmul.f32 %v6781, %v6879
    %v6894 = vmul.f32 %v6782, %v6878
    %v6895 = vmul.f32 %v6783, %v6879
    %v6896 = vmul.f32 %v6784, %v6878
    %v6897 = vmul.f32 %v6785, %v6879
    %v6898 = vmul.f32 %v6786, %v6878
    %v6899 = vmul.f32 %v6787, %v6879
    %v6900 = vmul.f32 %v6788, %v6878
    %v6901 = vmul.f32 %v6789, %v6879
    %v6902 = vmul.f32 %v6790, %v6878
    %v6903 = vmul.f32 %v6791, %v6879
    %v6904 = vmul.f32 %v6792, %v6878
    %v6905 = vmul.f32 %v6793, %v6879
    %v6906 = vmul.f32 %v6794, %v6878
    %v6907 = vmul.f32 %v6795, %v6879
    %v6908 = vmul.f32 %v6796, %v6878
    %v6909 = vmul.f32 %v6797, %v6879
    %v6910 = vmul.f32 %v6798, %v6878
    %v6911 = vmul.f32 %v6799, %v6879
    %s6912 = scalar_lea.vmem [#allocation8], 6
    %v6913 = vld [vmem:[%s6912] sm:$0x3]
    %v6915 = vlaneseq
    %v6916 = vshrl.u32 %v6915, 7
    %v6917 = vsub.s32 0, %v6916
    %v6918 = vrot.slane %v6913, %v6917
    %v6919 = vlaneseq
    %v6920 = vshrl.u32 %v6919, 7
    %v6921 = vsub.s32 1, %v6920
    %v6922 = vrot.slane %v6913, %v6921
    %v6925 = vmul.f32 %v6880, %v6918
    %v6926 = vmul.f32 %v6881, %v6922
    %v6927 = vmul.f32 %v6882, %v6918
    %v6928 = vmul.f32 %v6883, %v6922
    %v6929 = vmul.f32 %v6884, %v6918
    %v6930 = vmul.f32 %v6885, %v6922
    %v6931 = vmul.f32 %v6886, %v6918
    %v6932 = vmul.f32 %v6887, %v6922
    %v6933 = vmul.f32 %v6888, %v6918
    %v6934 = vmul.f32 %v6889, %v6922
    %v6935 = vmul.f32 %v6890, %v6918
    %v6936 = vmul.f32 %v6891, %v6922
    %v6937 = vmul.f32 %v6892, %v6918
    %v6938 = vmul.f32 %v6893, %v6922
    %v6939 = vmul.f32 %v6894, %v6918
    %v6940 = vmul.f32 %v6895, %v6922
    %v6941 = vmul.f32 %v6896, %v6918
    %v6942 = vmul.f32 %v6897, %v6922
    %v6943 = vmul.f32 %v6898, %v6918
    %v6944 = vmul.f32 %v6899, %v6922
    %v6945 = vmul.f32 %v6900, %v6918
    %v6946 = vmul.f32 %v6901, %v6922
    %v6947 = vmul.f32 %v6902, %v6918
    %v6948 = vmul.f32 %v6903, %v6922
    %v6949 = vmul.f32 %v6904, %v6918
    %v6950 = vmul.f32 %v6905, %v6922
    %v6951 = vmul.f32 %v6906, %v6918
    %v6952 = vmul.f32 %v6907, %v6922
    %v6953 = vmul.f32 %v6908, %v6918
    %v6954 = vmul.f32 %v6909, %v6922
    %v6955 = vmul.f32 %v6910, %v6918
    %v6956 = vmul.f32 %v6911, %v6922
    %s6957 = scalar_lea.vmem [#allocation10], 6
    %v6958 = vld [vmem:[%s6957] sm:$0x3]
    %v6960 = vlaneseq
    %v6961 = vshrl.u32 %v6960, 7
    %v6962 = vsub.s32 0, %v6961
    %v6963 = vrot.slane %v6958, %v6962
    %v6964 = vlaneseq
    %v6965 = vshrl.u32 %v6964, 7
    %v6966 = vsub.s32 1, %v6965
    %v6967 = vrot.slane %v6958, %v6966
    %v6970 = vadd.f32 %v6925, %v6963
    %v6971 = vadd.f32 %v6926, %v6967
    %v6972 = vadd.f32 %v6927, %v6963
    %v6973 = vadd.f32 %v6928, %v6967
    %v6974 = vadd.f32 %v6929, %v6963
    %v6975 = vadd.f32 %v6930, %v6967
    %v6976 = vadd.f32 %v6931, %v6963
    %v6977 = vadd.f32 %v6932, %v6967
    %v6978 = vadd.f32 %v6933, %v6963
    %v6979 = vadd.f32 %v6934, %v6967
    %v6980 = vadd.f32 %v6935, %v6963
    %v6981 = vadd.f32 %v6936, %v6967
    %v6982 = vadd.f32 %v6937, %v6963
    %v6983 = vadd.f32 %v6938, %v6967
    %v6984 = vadd.f32 %v6939, %v6963
    %v6985 = vadd.f32 %v6940, %v6967
    %v6986 = vadd.f32 %v6941, %v6963
    %v6987 = vadd.f32 %v6942, %v6967
    %v6988 = vadd.f32 %v6943, %v6963
    %v6989 = vadd.f32 %v6944, %v6967
    %v6990 = vadd.f32 %v6945, %v6963
    %v6991 = vadd.f32 %v6946, %v6967
    %v6992 = vadd.f32 %v6947, %v6963
    %v6993 = vadd.f32 %v6948, %v6967
    %v6994 = vadd.f32 %v6949, %v6963
    %v6995 = vadd.f32 %v6950, %v6967
    %v6996 = vadd.f32 %v6951, %v6963
    %v6997 = vadd.f32 %v6952, %v6967
    %v6998 = vadd.f32 %v6953, %v6963
    %v6999 = vadd.f32 %v6954, %v6967
    %v7000 = vadd.f32 %v6955, %v6963
    %v7001 = vadd.f32 %v6956, %v6967
    %vm7002 = vcmp.ge.f32.partialorder %v6970, 0.0
    %vm7003 = vcmp.ge.f32.partialorder %v6971, 0.0
    %vm7004 = vcmp.ge.f32.partialorder %v6972, 0.0
    %vm7005 = vcmp.ge.f32.partialorder %v6973, 0.0
    %vm7006 = vcmp.ge.f32.partialorder %v6974, 0.0
    %vm7007 = vcmp.ge.f32.partialorder %v6975, 0.0
    %vm7008 = vcmp.ge.f32.partialorder %v6976, 0.0
    %vm7009 = vcmp.ge.f32.partialorder %v6977, 0.0
    %vm7010 = vcmp.ge.f32.partialorder %v6978, 0.0
    %vm7011 = vcmp.ge.f32.partialorder %v6979, 0.0
    %vm7012 = vcmp.ge.f32.partialorder %v6980, 0.0
    %vm7013 = vcmp.ge.f32.partialorder %v6981, 0.0
    %vm7014 = vcmp.ge.f32.partialorder %v6982, 0.0
    %vm7015 = vcmp.ge.f32.partialorder %v6983, 0.0
    %vm7016 = vcmp.ge.f32.partialorder %v6984, 0.0
    %vm7017 = vcmp.ge.f32.partialorder %v6985, 0.0
    %vm7018 = vcmp.ge.f32.partialorder %v6986, 0.0
    %vm7019 = vcmp.ge.f32.partialorder %v6987, 0.0
    %vm7020 = vcmp.ge.f32.partialorder %v6988, 0.0
    %vm7021 = vcmp.ge.f32.partialorder %v6989, 0.0
    %vm7022 = vcmp.ge.f32.partialorder %v6990, 0.0
    %vm7023 = vcmp.ge.f32.partialorder %v6991, 0.0
    %vm7024 = vcmp.ge.f32.partialorder %v6992, 0.0
    %vm7025 = vcmp.ge.f32.partialorder %v6993, 0.0
    %vm7026 = vcmp.ge.f32.partialorder %v6994, 0.0
    %vm7027 = vcmp.ge.f32.partialorder %v6995, 0.0
    %vm7028 = vcmp.ge.f32.partialorder %v6996, 0.0
    %vm7029 = vcmp.ge.f32.partialorder %v6997, 0.0
    %vm7030 = vcmp.ge.f32.partialorder %v6998, 0.0
    %vm7031 = vcmp.ge.f32.partialorder %v6999, 0.0
    %vm7032 = vcmp.ge.f32.partialorder %v7000, 0.0
    %vm7033 = vcmp.ge.f32.partialorder %v7001, 0.0
    %v7034 = vmul.f32 %v6970, 0.2
    %v7035 = vmul.f32 %v6971, 0.2
    %v7036 = vmul.f32 %v6972, 0.2
    %v7037 = vmul.f32 %v6973, 0.2
    %v7038 = vmul.f32 %v6974, 0.2
    %v7039 = vmul.f32 %v6975, 0.2
    %v7040 = vmul.f32 %v6976, 0.2
    %v7041 = vmul.f32 %v6977, 0.2
    %v7042 = vmul.f32 %v6978, 0.2
    %v7043 = vmul.f32 %v6979, 0.2
    %v7044 = vmul.f32 %v6980, 0.2
    %v7045 = vmul.f32 %v6981, 0.2
    %v7046 = vmul.f32 %v6982, 0.2
    %v7047 = vmul.f32 %v6983, 0.2
    %v7048 = vmul.f32 %v6984, 0.2
    %v7049 = vmul.f32 %v6985, 0.2
    %v7050 = vmul.f32 %v6986, 0.2
    %v7051 = vmul.f32 %v6987, 0.2
    %v7052 = vmul.f32 %v6988, 0.2
    %v7053 = vmul.f32 %v6989, 0.2
    %v7054 = vmul.f32 %v6990, 0.2
    %v7055 = vmul.f32 %v6991, 0.2
    %v7056 = vmul.f32 %v6992, 0.2
    %v7057 = vmul.f32 %v6993, 0.2
    %v7058 = vmul.f32 %v6994, 0.2
    %v7059 = vmul.f32 %v6995, 0.2
    %v7060 = vmul.f32 %v6996, 0.2
    %v7061 = vmul.f32 %v6997, 0.2
    %v7062 = vmul.f32 %v6998, 0.2
    %v7063 = vmul.f32 %v6999, 0.2
    %v7064 = vmul.f32 %v7000, 0.2
    %v7065 = vmul.f32 %v7001, 0.2
    %v7066 = vsel %vm7002, %v6970, %v7034
    %v7067 = vsel %vm7003, %v6971, %v7035
    %v7068 = vsel %vm7004, %v6972, %v7036
    %v7069 = vsel %vm7005, %v6973, %v7037
    %v7070 = vsel %vm7006, %v6974, %v7038
    %v7071 = vsel %vm7007, %v6975, %v7039
    %v7072 = vsel %vm7008, %v6976, %v7040
    %v7073 = vsel %vm7009, %v6977, %v7041
    %v7074 = vsel %vm7010, %v6978, %v7042
    %v7075 = vsel %vm7011, %v6979, %v7043
    %v7076 = vsel %vm7012, %v6980, %v7044
    %v7077 = vsel %vm7013, %v6981, %v7045
    %v7078 = vsel %vm7014, %v6982, %v7046
    %v7079 = vsel %vm7015, %v6983, %v7047
    %v7080 = vsel %vm7016, %v6984, %v7048
    %v7081 = vsel %vm7017, %v6985, %v7049
    %v7082 = vsel %vm7018, %v6986, %v7050
    %v7083 = vsel %vm7019, %v6987, %v7051
    %v7084 = vsel %vm7020, %v6988, %v7052
    %v7085 = vsel %vm7021, %v6989, %v7053
    %v7086 = vsel %vm7022, %v6990, %v7054
    %v7087 = vsel %vm7023, %v6991, %v7055
    %v7088 = vsel %vm7024, %v6992, %v7056
    %v7089 = vsel %vm7025, %v6993, %v7057
    %v7090 = vsel %vm7026, %v6994, %v7058
    %v7091 = vsel %vm7027, %v6995, %v7059
    %v7092 = vsel %vm7028, %v6996, %v7060
    %v7093 = vsel %vm7029, %v6997, %v7061
    %v7094 = vsel %vm7030, %v6998, %v7062
    %v7095 = vsel %vm7031, %v6999, %v7063
    %v7096 = vsel %vm7032, %v7000, %v7064
    %v7097 = vsel %vm7033, %v7001, %v7065
    %7098 = vst [vmem:[#allocation2] sm:$0xff] %v7066
    %7099 = vst [vmem:[#allocation2 + $0x8] sm:$0xff] %v7067
    %7100 = vst [vmem:[#allocation2 + $0x10] sm:$0xff] %v7068
    %7101 = vst [vmem:[#allocation2 + $0x18] sm:$0xff] %v7069
    %7102 = vst [vmem:[#allocation2 + $0x20] sm:$0xff] %v7070
    %7103 = vst [vmem:[#allocation2 + $0x28] sm:$0xff] %v7071
    %7104 = vst [vmem:[#allocation2 + $0x30] sm:$0xff] %v7072
    %7105 = vst [vmem:[#allocation2 + $0x38] sm:$0xff] %v7073
    %7106 = vst [vmem:[#allocation2 + $0x40] sm:$0xff] %v7074
    %7107 = vst [vmem:[#allocation2 + $0x48] sm:$0xff] %v7075
    %7108 = vst [vmem:[#allocation2 + $0x50] sm:$0xff] %v7076
    %7109 = vst [vmem:[#allocation2 + $0x58] sm:$0xff] %v7077
    %7110 = vst [vmem:[#allocation2 + $0x60] sm:$0xff] %v7078
    %7111 = vst [vmem:[#allocation2 + $0x68] sm:$0xff] %v7079
    %7112 = vst [vmem:[#allocation2 + $0x70] sm:$0xff] %v7080
    %7113 = vst [vmem:[#allocation2 + $0x78] sm:$0xff] %v7081
    %7114 = vst [vmem:[#allocation2 + $0x80] sm:$0xff] %v7082
    %7115 = vst [vmem:[#allocation2 + $0x88] sm:$0xff] %v7083
    %7116 = vst [vmem:[#allocation2 + $0x90] sm:$0xff] %v7084
    %7117 = vst [vmem:[#allocation2 + $0x98] sm:$0xff] %v7085
    %7118 = vst [vmem:[#allocation2 + $0xa0] sm:$0xff] %v7086
    %7119 = vst [vmem:[#allocation2 + $0xa8] sm:$0xff] %v7087
    %7120 = vst [vmem:[#allocation2 + $0xb0] sm:$0xff] %v7088
    %7121 = vst [vmem:[#allocation2 + $0xb8] sm:$0xff] %v7089
    %7122 = vst [vmem:[#allocation2 + $0xc0] sm:$0xff] %v7090
    %7123 = vst [vmem:[#allocation2 + $0xc8] sm:$0xff] %v7091
    %7124 = vst [vmem:[#allocation2 + $0xd0] sm:$0xff] %v7092
    %7125 = vst [vmem:[#allocation2 + $0xd8] sm:$0xff] %v7093
    %7126 = vst [vmem:[#allocation2 + $0xe0] sm:$0xff] %v7094
    %7127 = vst [vmem:[#allocation2 + $0xe8] sm:$0xff] %v7095
    %7128 = vst [vmem:[#allocation2 + $0xf0] sm:$0xff] %v7096
    %7129 = vst [vmem:[#allocation2 + $0xf8] sm:$0xff] %v7097
    %v7130 = vld [vmem:[#allocation2] sm:$0xff]
    %v7131 = vld [vmem:[#allocation2 + $0x8] sm:$0xff]
    %v7132 = vld [vmem:[#allocation2 + $0x10] sm:$0xff]
    %v7133 = vld [vmem:[#allocation2 + $0x18] sm:$0xff]
    %v7134 = vld [vmem:[#allocation2 + $0x20] sm:$0xff]
    %v7135 = vld [vmem:[#allocation2 + $0x28] sm:$0xff]
    %v7136 = vld [vmem:[#allocation2 + $0x30] sm:$0xff]
    %v7137 = vld [vmem:[#allocation2 + $0x38] sm:$0xff]
    %v7138 = vld [vmem:[#allocation2 + $0x40] sm:$0xff]
    %v7139 = vld [vmem:[#allocation2 + $0x48] sm:$0xff]
    %v7140 = vld [vmem:[#allocation2 + $0x50] sm:$0xff]
    %v7141 = vld [vmem:[#allocation2 + $0x58] sm:$0xff]
    %v7142 = vld [vmem:[#allocation2 + $0x60] sm:$0xff]
    %v7143 = vld [vmem:[#allocation2 + $0x68] sm:$0xff]
    %v7144 = vld [vmem:[#allocation2 + $0x70] sm:$0xff]
    %v7145 = vld [vmem:[#allocation2 + $0x78] sm:$0xff]
    %v7146 = vld [vmem:[#allocation2 + $0x80] sm:$0xff]
    %v7147 = vld [vmem:[#allocation2 + $0x88] sm:$0xff]
    %v7148 = vld [vmem:[#allocation2 + $0x90] sm:$0xff]
    %v7149 = vld [vmem:[#allocation2 + $0x98] sm:$0xff]
    %v7150 = vld [vmem:[#allocation2 + $0xa0] sm:$0xff]
    %v7151 = vld [vmem:[#allocation2 + $0xa8] sm:$0xff]
    %v7152 = vld [vmem:[#allocation2 + $0xb0] sm:$0xff]
    %v7153 = vld [vmem:[#allocation2 + $0xb8] sm:$0xff]
    %v7154 = vld [vmem:[#allocation2 + $0xc0] sm:$0xff]
    %v7155 = vld [vmem:[#allocation2 + $0xc8] sm:$0xff]
    %v7156 = vld [vmem:[#allocation2 + $0xd0] sm:$0xff]
    %v7157 = vld [vmem:[#allocation2 + $0xd8] sm:$0xff]
    %v7158 = vld [vmem:[#allocation2 + $0xe0] sm:$0xff]
    %v7159 = vld [vmem:[#allocation2 + $0xe8] sm:$0xff]
    %v7160 = vld [vmem:[#allocation2 + $0xf0] sm:$0xff]
    %v7161 = vld [vmem:[#allocation2 + $0xf8] sm:$0xff]
    %v7162 = vpack.c.bf16 %v7132, %v7130
    %v7163 = vpack.c.bf16 %v7133, %v7131
    %v7164 = vpack.c.bf16 %v7136, %v7134
    %v7165 = vpack.c.bf16 %v7137, %v7135
    %v7166 = vpack.c.bf16 %v7140, %v7138
    %v7167 = vpack.c.bf16 %v7141, %v7139
    %v7168 = vpack.c.bf16 %v7144, %v7142
    %v7169 = vpack.c.bf16 %v7145, %v7143
    %v7170 = vpack.c.bf16 %v7148, %v7146
    %v7171 = vpack.c.bf16 %v7149, %v7147
    %v7172 = vpack.c.bf16 %v7152, %v7150
    %v7173 = vpack.c.bf16 %v7153, %v7151
    %v7174 = vpack.c.bf16 %v7156, %v7154
    %v7175 = vpack.c.bf16 %v7157, %v7155
    %v7176 = vpack.c.bf16 %v7160, %v7158
    %v7177 = vpack.c.bf16 %v7161, %v7159
    %7178 = vmatprep.subr.bf16.mxu0 %v7163
    %7179 = vmatpush1.bf16.msra.mxu0 %v7162
    %7180 = vmatprep.subr.bf16.mxu0 %v7165
    %7181 = vmatpush1.bf16.msra.mxu0 %v7164
    %7182 = vmatprep.subr.bf16.mxu0 %v7167
    %7183 = vmatpush1.bf16.msra.mxu0 %v7166
    %7184 = vmatprep.subr.bf16.mxu0 %v7169
    %7185 = vmatpush1.bf16.msra.mxu0 %v7168
    %7186 = vmatprep.subr.bf16.mxu0 %v7171
    %7187 = vmatpush1.bf16.msra.mxu0 %v7170
    %7188 = vmatprep.subr.bf16.mxu0 %v7173
    %7189 = vmatpush1.bf16.msra.mxu0 %v7172
    %7190 = vmatprep.subr.bf16.mxu0 %v7175
    %7191 = vmatpush1.bf16.msra.mxu0 %v7174
    %7192 = vmatprep.subr.bf16.mxu0 %v7177
    %7193 = vmatpush1.bf16.msra.mxu0 %v7176
    %7194 = vmatprep.subr.bf16.mxu0 0
    %7195 = vmatpush1.bf16.msra.mxu0 0
    %7196 = vmatprep.subr.bf16.mxu0 0
    %7197 = vmatpush1.bf16.msra.mxu0 0
    %7198 = vmatprep.subr.bf16.mxu0 0
    %7199 = vmatpush1.bf16.msra.mxu0 0
    %7200 = vmatprep.subr.bf16.mxu0 0
    %7201 = vmatpush1.bf16.msra.mxu0 0
    %7202 = vmatprep.subr.bf16.mxu0 0
    %7203 = vmatpush1.bf16.msra.mxu0 0
    %7204 = vmatprep.subr.bf16.mxu0 0
    %7205 = vmatpush1.bf16.msra.mxu0 0
    %7206 = vmatprep.subr.bf16.mxu0 0
    %7207 = vmatpush1.bf16.msra.mxu0 0
    %7208 = vmatprep.subr.bf16.mxu0 0
    %7209 = vmatpush1.bf16.msra.mxu0 0
    %7210 = vmatprep.mubr.bf16.mxu0 0
    %7211 = vmatmul.mubr.bf16.gmra.mrb[0].mxu0 %v289
    %v7212 = vpop.f32.mrb[0].mxu0
    %v7213 = vadd.f32 0.0, %v7212
    %v7214 = vpop.f32.mrb[0].mxu0
    %v7215 = vadd.f32 0.0, %v7214
    %v7216 = vpop.f32.mrb[0].mxu0
    %v7217 = vadd.f32 0.0, %v7216
    %v7218 = vpop.f32.mrb[0].mxu0
    %v7219 = vadd.f32 0.0, %v7218
    %7220 = vmatprep.mubr.bf16.mxu0 0
    %7221 = vmatmul.mubr.bf16.gmra.mrb[0].mxu0 %v290
    %v7222 = vpop.f32.mrb[0].mxu0
    %v7223 = vadd.f32 0.0, %v7222
    %v7224 = vpop.f32.mrb[0].mxu0
    %v7225 = vadd.f32 0.0, %v7224
    %v7226 = vpop.f32.mrb[0].mxu0
    %v7227 = vadd.f32 0.0, %v7226
    %v7228 = vpop.f32.mrb[0].mxu0
    %v7229 = vadd.f32 0.0, %v7228
    %7230 = vmatprep.mubr.bf16.mxu0 0
    %7231 = vmatmul.mubr.bf16.gmra.mrb[0].mxu0 %v291
    %v7232 = vpop.f32.mrb[0].mxu0
    %v7233 = vadd.f32 0.0, %v7232
    %v7234 = vpop.f32.mrb[0].mxu0
    %v7235 = vadd.f32 0.0, %v7234
    %v7236 = vpop.f32.mrb[0].mxu0
    %v7237 = vadd.f32 0.0, %v7236
    %v7238 = vpop.f32.mrb[0].mxu0
    %v7239 = vadd.f32 0.0, %v7238
    %7240 = vmatprep.mubr.bf16.mxu0 0
    %7241 = vmatmul.mubr.bf16.gmra.mrb[0].mxu0 %v292
    %v7242 = vpop.f32.mrb[0].mxu0
    %v7243 = vadd.f32 0.0, %v7242
    %v7244 = vpop.f32.mrb[0].mxu0
    %v7245 = vadd.f32 0.0, %v7244
    %v7246 = vpop.f32.mrb[0].mxu0
    %v7247 = vadd.f32 0.0, %v7246
    %v7248 = vpop.f32.mrb[0].mxu0
    %v7249 = vadd.f32 0.0, %v7248
    %7250 = vmatprep.mubr.bf16.mxu0 0
    %7251 = vmatmul.mubr.bf16.gmra.mrb[0].mxu0 %v293
    %v7252 = vpop.f32.mrb[0].mxu0
    %v7253 = vadd.f32 0.0, %v7252
    %v7254 = vpop.f32.mrb[0].mxu0
    %v7255 = vadd.f32 0.0, %v7254
    %v7256 = vpop.f32.mrb[0].mxu0
    %v7257 = vadd.f32 0.0, %v7256
    %v7258 = vpop.f32.mrb[0].mxu0
    %v7259 = vadd.f32 0.0, %v7258
    %7260 = vmatprep.mubr.bf16.mxu0 0
    %7261 = vmatmul.mubr.bf16.gmra.mrb[0].mxu0 %v294
    %v7262 = vpop.f32.mrb[0].mxu0
    %v7263 = vadd.f32 0.0, %v7262
    %v7264 = vpop.f32.mrb[0].mxu0
    %v7265 = vadd.f32 0.0, %v7264
    %v7266 = vpop.f32.mrb[0].mxu0
    %v7267 = vadd.f32 0.0, %v7266
    %v7268 = vpop.f32.mrb[0].mxu0
    %v7269 = vadd.f32 0.0, %v7268
    %7270 = vmatprep.mubr.bf16.mxu0 0
    %7271 = vmatmul.mubr.bf16.gmra.mrb[0].mxu0 %v295
    %v7272 = vpop.f32.mrb[0].mxu0
    %v7273 = vadd.f32 0.0, %v7272
    %v7274 = vpop.f32.mrb[0].mxu0
    %v7275 = vadd.f32 0.0, %v7274
    %v7276 = vpop.f32.mrb[0].mxu0
    %v7277 = vadd.f32 0.0, %v7276
    %v7278 = vpop.f32.mrb[0].mxu0
    %v7279 = vadd.f32 0.0, %v7278
    %7280 = vmatprep.mubr.bf16.mxu0 0
    %7281 = vmatmul.mubr.bf16.gmra.mrb[0].mxu0 %v296
    %v7282 = vpop.f32.mrb[0].mxu0
    %v7283 = vadd.f32 0.0, %v7282
    %v7284 = vpop.f32.mrb[0].mxu0
    %v7285 = vadd.f32 0.0, %v7284
    %v7286 = vpop.f32.mrb[0].mxu0
    %v7287 = vadd.f32 0.0, %v7286
    %v7288 = vpop.f32.mrb[0].mxu0
    %v7289 = vadd.f32 0.0, %v7288
    %7290 = vdwg.mxu0
    %v7291 = vpack.c.bf16 %v7217, %v7213
    %v7292 = vpack.c.bf16 %v7219, %v7215
    %v7293 = vpack.c.bf16 %v7227, %v7223
    %v7294 = vpack.c.bf16 %v7229, %v7225
    %v7295 = vpack.c.bf16 %v7237, %v7233
    %v7296 = vpack.c.bf16 %v7239, %v7235
    %v7297 = vpack.c.bf16 %v7247, %v7243
    %v7298 = vpack.c.bf16 %v7249, %v7245
    %v7299 = vpack.c.bf16 %v7257, %v7253
    %v7300 = vpack.c.bf16 %v7259, %v7255
    %v7301 = vpack.c.bf16 %v7267, %v7263
    %v7302 = vpack.c.bf16 %v7269, %v7265
    %v7303 = vpack.c.bf16 %v7277, %v7273
    %v7304 = vpack.c.bf16 %v7279, %v7275
    %v7305 = vpack.c.bf16 %v7287, %v7283
    %v7306 = vpack.c.bf16 %v7289, %v7285
    %7307 = vmatprep.subr.bf16.mxu0 %v7163
    %7308 = vmatpush1.bf16.msra.mxu0 %v7162
    %7309 = vmatprep.subr.bf16.mxu0 %v7165
    %7310 = vmatpush1.bf16.msra.mxu0 %v7164
    %7311 = vmatprep.subr.bf16.mxu0 %v7167
    %7312 = vmatpush1.bf16.msra.mxu0 %v7166
    %7313 = vmatprep.subr.bf16.mxu0 %v7169
    %7314 = vmatpush1.bf16.msra.mxu0 %v7168
    %7315 = vmatprep.subr.bf16.mxu0 %v7171
    %7316 = vmatpush1.bf16.msra.mxu0 %v7170
    %7317 = vmatprep.subr.bf16.mxu0 %v7173
    %7318 = vmatpush1.bf16.msra.mxu0 %v7172
    %7319 = vmatprep.subr.bf16.mxu0 %v7175
    %7320 = vmatpush1.bf16.msra.mxu0 %v7174
    %7321 = vmatprep.subr.bf16.mxu0 %v7177
    %7322 = vmatpush1.bf16.msra.mxu0 %v7176
    %7323 = vmatprep.subr.bf16.mxu0 0
    %7324 = vmatpush1.bf16.msra.mxu0 0
    %7325 = vmatprep.subr.bf16.mxu0 0
    %7326 = vmatpush1.bf16.msra.mxu0 0
    %7327 = vmatprep.subr.bf16.mxu0 0
    %7328 = vmatpush1.bf16.msra.mxu0 0
    %7329 = vmatprep.subr.bf16.mxu0 0
    %7330 = vmatpush1.bf16.msra.mxu0 0
    %7331 = vmatprep.subr.bf16.mxu0 0
    %7332 = vmatpush1.bf16.msra.mxu0 0
    %7333 = vmatprep.subr.bf16.mxu0 0
    %7334 = vmatpush1.bf16.msra.mxu0 0
    %7335 = vmatprep.subr.bf16.mxu0 0
    %7336 = vmatpush1.bf16.msra.mxu0 0
    %7337 = vmatprep.subr.bf16.mxu0 0
    %7338 = vmatpush1.bf16.msra.mxu0 0
    %7339 = vmatprep.mubr.bf16.mxu0 0
    %7340 = vmatmul.mubr.bf16.gmra.mrb[0].mxu0 %v466
    %v7341 = vpop.f32.mrb[0].mxu0
    %v7342 = vadd.f32 0.0, %v7341
    %v7343 = vpop.f32.mrb[0].mxu0
    %v7344 = vadd.f32 0.0, %v7343
    %v7345 = vpop.f32.mrb[0].mxu0
    %v7346 = vadd.f32 0.0, %v7345
    %v7347 = vpop.f32.mrb[0].mxu0
    %v7348 = vadd.f32 0.0, %v7347
    %7349 = vmatprep.mubr.bf16.mxu0 0
    %7350 = vmatmul.mubr.bf16.gmra.mrb[0].mxu0 %v467
    %v7351 = vpop.f32.mrb[0].mxu0
    %v7352 = vadd.f32 0.0, %v7351
    %v7353 = vpop.f32.mrb[0].mxu0
    %v7354 = vadd.f32 0.0, %v7353
    %v7355 = vpop.f32.mrb[0].mxu0
    %v7356 = vadd.f32 0.0, %v7355
    %v7357 = vpop.f32.mrb[0].mxu0
    %v7358 = vadd.f32 0.0, %v7357
    %7359 = vmatprep.mubr.bf16.mxu0 0
    %7360 = vmatmul.mubr.bf16.gmra.mrb[0].mxu0 %v468
    %v7361 = vpop.f32.mrb[0].mxu0
    %v7362 = vadd.f32 0.0, %v7361
    %v7363 = vpop.f32.mrb[0].mxu0
    %v7364 = vadd.f32 0.0, %v7363
    %v7365 = vpop.f32.mrb[0].mxu0
    %v7366 = vadd.f32 0.0, %v7365
    %v7367 = vpop.f32.mrb[0].mxu0
    %v7368 = vadd.f32 0.0, %v7367
    %7369 = vmatprep.mubr.bf16.mxu0 0
    %7370 = vmatmul.mubr.bf16.gmra.mrb[0].mxu0 %v469
    %v7371 = vpop.f32.mrb[0].mxu0
    %v7372 = vadd.f32 0.0, %v7371
    %v7373 = vpop.f32.mrb[0].mxu0
    %v7374 = vadd.f32 0.0, %v7373
    %v7375 = vpop.f32.mrb[0].mxu0
    %v7376 = vadd.f32 0.0, %v7375
    %v7377 = vpop.f32.mrb[0].mxu0
    %v7378 = vadd.f32 0.0, %v7377
    %7379 = vmatprep.mubr.bf16.mxu0 0
    %7380 = vmatmul.mubr.bf16.gmra.mrb[0].mxu0 %v470
    %v7381 = vpop.f32.mrb[0].mxu0
    %v7382 = vadd.f32 0.0, %v7381
    %v7383 = vpop.f32.mrb[0].mxu0
    %v7384 = vadd.f32 0.0, %v7383
    %v7385 = vpop.f32.mrb[0].mxu0
    %v7386 = vadd.f32 0.0, %v7385
    %v7387 = vpop.f32.mrb[0].mxu0
    %v7388 = vadd.f32 0.0, %v7387
    %7389 = vmatprep.mubr.bf16.mxu0 0
    %7390 = vmatmul.mubr.bf16.gmra.mrb[0].mxu0 %v471
    %v7391 = vpop.f32.mrb[0].mxu0
    %v7392 = vadd.f32 0.0, %v7391
    %v7393 = vpop.f32.mrb[0].mxu0
    %v7394 = vadd.f32 0.0, %v7393
    %v7395 = vpop.f32.mrb[0].mxu0
    %v7396 = vadd.f32 0.0, %v7395
    %v7397 = vpop.f32.mrb[0].mxu0
    %v7398 = vadd.f32 0.0, %v7397
    %7399 = vmatprep.mubr.bf16.mxu0 0
    %7400 = vmatmul.mubr.bf16.gmra.mrb[0].mxu0 %v472
    %v7401 = vpop.f32.mrb[0].mxu0
    %v7402 = vadd.f32 0.0, %v7401
    %v7403 = vpop.f32.mrb[0].mxu0
    %v7404 = vadd.f32 0.0, %v7403
    %v7405 = vpop.f32.mrb[0].mxu0
    %v7406 = vadd.f32 0.0, %v7405
    %v7407 = vpop.f32.mrb[0].mxu0
    %v7408 = vadd.f32 0.0, %v7407
    %7409 = vmatprep.mubr.bf16.mxu0 0
    %7410 = vmatmul.mubr.bf16.gmra.mrb[0].mxu0 %v473
    %v7411 = vpop.f32.mrb[0].mxu0
    %v7412 = vadd.f32 0.0, %v7411
    %v7413 = vpop.f32.mrb[0].mxu0
    %v7414 = vadd.f32 0.0, %v7413
    %v7415 = vpop.f32.mrb[0].mxu0
    %v7416 = vadd.f32 0.0, %v7415
    %v7417 = vpop.f32.mrb[0].mxu0
    %v7418 = vadd.f32 0.0, %v7417
    %7419 = vdwg.mxu0
    %v7420 = vpack.c.bf16 %v7346, %v7342
    %v7421 = vpack.c.bf16 %v7348, %v7344
    %v7422 = vpack.c.bf16 %v7356, %v7352
    %v7423 = vpack.c.bf16 %v7358, %v7354
    %v7424 = vpack.c.bf16 %v7366, %v7362
    %v7425 = vpack.c.bf16 %v7368, %v7364
    %v7426 = vpack.c.bf16 %v7376, %v7372
    %v7427 = vpack.c.bf16 %v7378, %v7374
    %v7428 = vpack.c.bf16 %v7386, %v7382
    %v7429 = vpack.c.bf16 %v7388, %v7384
    %v7430 = vpack.c.bf16 %v7396, %v7392
    %v7431 = vpack.c.bf16 %v7398, %v7394
    %v7432 = vpack.c.bf16 %v7406, %v7402
    %v7433 = vpack.c.bf16 %v7408, %v7404
    %v7434 = vpack.c.bf16 %v7416, %v7412
    %v7435 = vpack.c.bf16 %v7418, %v7414
    %s7436 = scalar_lea.vmem [#allocation5], 3072
    %v7437 = vld [vmem:[%s7436] sm:$0xff]
    %v7438 = vld [vmem:[%s7436 + $0x8] sm:$0xff]
    %v7439 = vld [vmem:[%s7436 + $0x10] sm:$0xff]
    %v7440 = vld [vmem:[%s7436 + $0x18] sm:$0xff]
    %v7441 = vld [vmem:[%s7436 + $0x20] sm:$0xff]
    %v7442 = vld [vmem:[%s7436 + $0x28] sm:$0xff]
    %v7443 = vld [vmem:[%s7436 + $0x30] sm:$0xff]
    %v7444 = vld [vmem:[%s7436 + $0x38] sm:$0xff]
    %v7445 = vld [vmem:[%s7436 + $0x40] sm:$0xff]
    %v7446 = vld [vmem:[%s7436 + $0x48] sm:$0xff]
    %v7447 = vld [vmem:[%s7436 + $0x50] sm:$0xff]
    %v7448 = vld [vmem:[%s7436 + $0x58] sm:$0xff]
    %v7449 = vld [vmem:[%s7436 + $0x60] sm:$0xff]
    %v7450 = vld [vmem:[%s7436 + $0x68] sm:$0xff]
    %v7451 = vld [vmem:[%s7436 + $0x70] sm:$0xff]
    %v7452 = vld [vmem:[%s7436 + $0x78] sm:$0xff]
    %v7453 = vld [vmem:[%s7436 + $0x80] sm:$0xff]
    %v7454 = vld [vmem:[%s7436 + $0x88] sm:$0xff]
    %v7455 = vld [vmem:[%s7436 + $0x90] sm:$0xff]
    %v7456 = vld [vmem:[%s7436 + $0x98] sm:$0xff]
    %v7457 = vld [vmem:[%s7436 + $0xa0] sm:$0xff]
    %v7458 = vld [vmem:[%s7436 + $0xa8] sm:$0xff]
    %v7459 = vld [vmem:[%s7436 + $0xb0] sm:$0xff]
    %v7460 = vld [vmem:[%s7436 + $0xb8] sm:$0xff]
    %v7461 = vld [vmem:[%s7436 + $0xc0] sm:$0xff]
    %v7462 = vld [vmem:[%s7436 + $0xc8] sm:$0xff]
    %v7463 = vld [vmem:[%s7436 + $0xd0] sm:$0xff]
    %v7464 = vld [vmem:[%s7436 + $0xd8] sm:$0xff]
    %v7465 = vld [vmem:[%s7436 + $0xe0] sm:$0xff]
    %v7466 = vld [vmem:[%s7436 + $0xe8] sm:$0xff]
    %v7467 = vld [vmem:[%s7436 + $0xf0] sm:$0xff]
    %v7468 = vld [vmem:[%s7436 + $0xf8] sm:$0xff]
    %s7469 = scalar_lea.vmem [#allocation5], 3328
    %v7470 = vld [vmem:[%s7469] sm:$0xff]
    %v7471 = vld [vmem:[%s7469 + $0x8] sm:$0xff]
    %v7472 = vld [vmem:[%s7469 + $0x10] sm:$0xff]
    %v7473 = vld [vmem:[%s7469 + $0x18] sm:$0xff]
    %v7474 = vld [vmem:[%s7469 + $0x20] sm:$0xff]
    %v7475 = vld [vmem:[%s7469 + $0x28] sm:$0xff]
    %v7476 = vld [vmem:[%s7469 + $0x30] sm:$0xff]
    %v7477 = vld [vmem:[%s7469 + $0x38] sm:$0xff]
    %v7478 = vld [vmem:[%s7469 + $0x40] sm:$0xff]
    %v7479 = vld [vmem:[%s7469 + $0x48] sm:$0xff]
    %v7480 = vld [vmem:[%s7469 + $0x50] sm:$0xff]
    %v7481 = vld [vmem:[%s7469 + $0x58] sm:$0xff]
    %v7482 = vld [vmem:[%s7469 + $0x60] sm:$0xff]
    %v7483 = vld [vmem:[%s7469 + $0x68] sm:$0xff]
    %v7484 = vld [vmem:[%s7469 + $0x70] sm:$0xff]
    %v7485 = vld [vmem:[%s7469 + $0x78] sm:$0xff]
    %v7486 = vld [vmem:[%s7469 + $0x80] sm:$0xff]
    %v7487 = vld [vmem:[%s7469 + $0x88] sm:$0xff]
    %v7488 = vld [vmem:[%s7469 + $0x90] sm:$0xff]
    %v7489 = vld [vmem:[%s7469 + $0x98] sm:$0xff]
    %v7490 = vld [vmem:[%s7469 + $0xa0] sm:$0xff]
    %v7491 = vld [vmem:[%s7469 + $0xa8] sm:$0xff]
    %v7492 = vld [vmem:[%s7469 + $0xb0] sm:$0xff]
    %v7493 = vld [vmem:[%s7469 + $0xb8] sm:$0xff]
    %v7494 = vld [vmem:[%s7469 + $0xc0] sm:$0xff]
    %v7495 = vld [vmem:[%s7469 + $0xc8] sm:$0xff]
    %v7496 = vld [vmem:[%s7469 + $0xd0] sm:$0xff]
    %v7497 = vld [vmem:[%s7469 + $0xd8] sm:$0xff]
    %v7498 = vld [vmem:[%s7469 + $0xe0] sm:$0xff]
    %v7499 = vld [vmem:[%s7469 + $0xe8] sm:$0xff]
    %v7500 = vld [vmem:[%s7469 + $0xf0] sm:$0xff]
    %v7501 = vld [vmem:[%s7469 + $0xf8] sm:$0xff]
    %v7534 = vunpack.c.l.b16 %v7470
    %v7535 = vunpack.c.h.b16 %v7470
    %v7536 = vunpack.c.l.b16 %v7471
    %v7537 = vunpack.c.h.b16 %v7471
    %v7538 = vunpack.c.l.b16 %v7472
    %v7539 = vunpack.c.h.b16 %v7472
    %v7540 = vunpack.c.l.b16 %v7473
    %v7541 = vunpack.c.h.b16 %v7473
    %v7542 = vunpack.c.l.b16 %v7474
    %v7543 = vunpack.c.h.b16 %v7474
    %v7544 = vunpack.c.l.b16 %v7475
    %v7545 = vunpack.c.h.b16 %v7475
    %v7546 = vunpack.c.l.b16 %v7476
    %v7547 = vunpack.c.h.b16 %v7476
    %v7548 = vunpack.c.l.b16 %v7477
    %v7549 = vunpack.c.h.b16 %v7477
    %v7550 = vunpack.c.l.b16 %v7478
    %v7551 = vunpack.c.h.b16 %v7478
    %v7552 = vunpack.c.l.b16 %v7479
    %v7553 = vunpack.c.h.b16 %v7479
    %v7554 = vunpack.c.l.b16 %v7480
    %v7555 = vunpack.c.h.b16 %v7480
    %v7556 = vunpack.c.l.b16 %v7481
    %v7557 = vunpack.c.h.b16 %v7481
    %v7558 = vunpack.c.l.b16 %v7482
    %v7559 = vunpack.c.h.b16 %v7482
    %v7560 = vunpack.c.l.b16 %v7483
    %v7561 = vunpack.c.h.b16 %v7483
    %v7562 = vunpack.c.l.b16 %v7484
    %v7563 = vunpack.c.h.b16 %v7484
    %v7564 = vunpack.c.l.b16 %v7485
    %v7565 = vunpack.c.h.b16 %v7485
    %v7566 = vunpack.c.l.b16 %v7486
    %v7567 = vunpack.c.h.b16 %v7486
    %v7568 = vunpack.c.l.b16 %v7487
    %v7569 = vunpack.c.h.b16 %v7487
    %v7570 = vunpack.c.l.b16 %v7488
    %v7571 = vunpack.c.h.b16 %v7488
    %v7572 = vunpack.c.l.b16 %v7489
    %v7573 = vunpack.c.h.b16 %v7489
    %v7574 = vunpack.c.l.b16 %v7490
    %v7575 = vunpack.c.h.b16 %v7490
    %v7576 = vunpack.c.l.b16 %v7491
    %v7577 = vunpack.c.h.b16 %v7491
    %v7578 = vunpack.c.l.b16 %v7492
    %v7579 = vunpack.c.h.b16 %v7492
    %v7580 = vunpack.c.l.b16 %v7493
    %v7581 = vunpack.c.h.b16 %v7493
    %v7582 = vunpack.c.l.b16 %v7494
    %v7583 = vunpack.c.h.b16 %v7494
    %v7584 = vunpack.c.l.b16 %v7495
    %v7585 = vunpack.c.h.b16 %v7495
    %v7586 = vunpack.c.l.b16 %v7496
    %v7587 = vunpack.c.h.b16 %v7496
    %v7588 = vunpack.c.l.b16 %v7497
    %v7589 = vunpack.c.h.b16 %v7497
    %v7590 = vunpack.c.l.b16 %v7498
    %v7591 = vunpack.c.h.b16 %v7498
    %v7592 = vunpack.c.l.b16 %v7499
    %v7593 = vunpack.c.h.b16 %v7499
    %v7594 = vunpack.c.l.b16 %v7500
    %v7595 = vunpack.c.h.b16 %v7500
    %v7596 = vunpack.c.l.b16 %v7501
    %v7597 = vunpack.c.h.b16 %v7501
    %v7598 = vpack.c.b16 %v7536, %v7534
    %v7599 = vpack.c.b16 %v7537, %v7535
    %v7600 = vpack.c.b16 %v7540, %v7538
    %v7601 = vpack.c.b16 %v7541, %v7539
    %v7602 = vpack.c.b16 %v7544, %v7542
    %v7603 = vpack.c.b16 %v7545, %v7543
    %v7604 = vpack.c.b16 %v7548, %v7546
    %v7605 = vpack.c.b16 %v7549, %v7547
    %v7606 = vpack.c.b16 %v7552, %v7550
    %v7607 = vpack.c.b16 %v7553, %v7551
    %v7608 = vpack.c.b16 %v7556, %v7554
    %v7609 = vpack.c.b16 %v7557, %v7555
    %v7610 = vpack.c.b16 %v7560, %v7558
    %v7611 = vpack.c.b16 %v7561, %v7559
    %v7612 = vpack.c.b16 %v7564, %v7562
    %v7613 = vpack.c.b16 %v7565, %v7563
    %v7614 = vpack.c.b16 %v7568, %v7566
    %v7615 = vpack.c.b16 %v7569, %v7567
    %v7616 = vpack.c.b16 %v7572, %v7570
    %v7617 = vpack.c.b16 %v7573, %v7571
    %v7618 = vpack.c.b16 %v7576, %v7574
    %v7619 = vpack.c.b16 %v7577, %v7575
    %v7620 = vpack.c.b16 %v7580, %v7578
    %v7621 = vpack.c.b16 %v7581, %v7579
    %v7622 = vpack.c.b16 %v7584, %v7582
    %v7623 = vpack.c.b16 %v7585, %v7583
    %v7624 = vpack.c.b16 %v7588, %v7586
    %v7625 = vpack.c.b16 %v7589, %v7587
    %v7626 = vpack.c.b16 %v7592, %v7590
    %v7627 = vpack.c.b16 %v7593, %v7591
    %v7628 = vpack.c.b16 %v7596, %v7594
    %v7629 = vpack.c.b16 %v7597, %v7595
    %7662 = vmatprep.subr.bf16.mxu0 %v7599
    %7663 = vmatpush1.bf16.msra.mxu0 %v7598
    %7664 = vmatprep.subr.bf16.mxu0 %v7601
    %7665 = vmatpush1.bf16.msra.mxu0 %v7600
    %7666 = vmatprep.subr.bf16.mxu0 %v7603
    %7667 = vmatpush1.bf16.msra.mxu0 %v7602
    %7668 = vmatprep.subr.bf16.mxu0 %v7605
    %7669 = vmatpush1.bf16.msra.mxu0 %v7604
    %7670 = vmatprep.subr.bf16.mxu0 %v7607
    %7671 = vmatpush1.bf16.msra.mxu0 %v7606
    %7672 = vmatprep.subr.bf16.mxu0 %v7609
    %7673 = vmatpush1.bf16.msra.mxu0 %v7608
    %7674 = vmatprep.subr.bf16.mxu0 %v7611
    %7675 = vmatpush1.bf16.msra.mxu0 %v7610
    %7676 = vmatprep.subr.bf16.mxu0 %v7613
    %7677 = vmatpush1.bf16.msra.mxu0 %v7612
    %7678 = vmatprep.subr.bf16.mxu0 %v7615
    %7679 = vmatpush1.bf16.msra.mxu0 %v7614
    %7680 = vmatprep.subr.bf16.mxu0 %v7617
    %7681 = vmatpush1.bf16.msra.mxu0 %v7616
    %7682 = vmatprep.subr.bf16.mxu0 %v7619
    %7683 = vmatpush1.bf16.msra.mxu0 %v7618
    %7684 = vmatprep.subr.bf16.mxu0 %v7621
    %7685 = vmatpush1.bf16.msra.mxu0 %v7620
    %7686 = vmatprep.subr.bf16.mxu0 %v7623
    %7687 = vmatpush1.bf16.msra.mxu0 %v7622
    %7688 = vmatprep.subr.bf16.mxu0 %v7625
    %7689 = vmatpush1.bf16.msra.mxu0 %v7624
    %7690 = vmatprep.subr.bf16.mxu0 %v7627
    %7691 = vmatpush1.bf16.msra.mxu0 %v7626
    %7692 = vmatprep.subr.bf16.mxu0 %v7629
    %7693 = vmatpush1.bf16.msra.mxu0 %v7628
    %7694 = vmatprep.mubr.bf16.mxu0 %v7163
    %7695 = vmatmul.mubr.bf16.gmra.mrb[0].mxu0 %v7162
    %v7696 = vpop.f32.mrb[0].mxu0
    %v7697 = vadd.f32 0.0, %v7696
    %v7698 = vpop.f32.mrb[0].mxu0
    %v7699 = vadd.f32 0.0, %v7698
    %v7700 = vpop.f32.mrb[0].mxu0
    %v7701 = vadd.f32 0.0, %v7700
    %v7702 = vpop.f32.mrb[0].mxu0
    %v7703 = vadd.f32 0.0, %v7702
    %7704 = vmatprep.mubr.bf16.mxu0 %v7165
    %7705 = vmatmul.mubr.bf16.gmra.mrb[0].mxu0 %v7164
    %v7706 = vpop.f32.mrb[0].mxu0
    %v7707 = vadd.f32 0.0, %v7706
    %v7708 = vpop.f32.mrb[0].mxu0
    %v7709 = vadd.f32 0.0, %v7708
    %v7710 = vpop.f32.mrb[0].mxu0
    %v7711 = vadd.f32 0.0, %v7710
    %v7712 = vpop.f32.mrb[0].mxu0
    %v7713 = vadd.f32 0.0, %v7712
    %7714 = vmatprep.mubr.bf16.mxu0 %v7167
    %7715 = vmatmul.mubr.bf16.gmra.mrb[0].mxu0 %v7166
    %v7716 = vpop.f32.mrb[0].mxu0
    %v7717 = vadd.f32 0.0, %v7716
    %v7718 = vpop.f32.mrb[0].mxu0
    %v7719 = vadd.f32 0.0, %v7718
    %v7720 = vpop.f32.mrb[0].mxu0
    %v7721 = vadd.f32 0.0, %v7720
    %v7722 = vpop.f32.mrb[0].mxu0
    %v7723 = vadd.f32 0.0, %v7722
    %7724 = vmatprep.mubr.bf16.mxu0 %v7169
    %7725 = vmatmul.mubr.bf16.gmra.mrb[0].mxu0 %v7168
    %v7726 = vpop.f32.mrb[0].mxu0
    %v7727 = vadd.f32 0.0, %v7726
    %v7728 = vpop.f32.mrb[0].mxu0
    %v7729 = vadd.f32 0.0, %v7728
    %v7730 = vpop.f32.mrb[0].mxu0
    %v7731 = vadd.f32 0.0, %v7730
    %v7732 = vpop.f32.mrb[0].mxu0
    %v7733 = vadd.f32 0.0, %v7732
    %7734 = vmatprep.mubr.bf16.mxu0 %v7171
    %7735 = vmatmul.mubr.bf16.gmra.mrb[0].mxu0 %v7170
    %v7736 = vpop.f32.mrb[0].mxu0
    %v7737 = vadd.f32 0.0, %v7736
    %v7738 = vpop.f32.mrb[0].mxu0
    %v7739 = vadd.f32 0.0, %v7738
    %v7740 = vpop.f32.mrb[0].mxu0
    %v7741 = vadd.f32 0.0, %v7740
    %v7742 = vpop.f32.mrb[0].mxu0
    %v7743 = vadd.f32 0.0, %v7742
    %7744 = vmatprep.mubr.bf16.mxu0 %v7173
    %7745 = vmatmul.mubr.bf16.gmra.mrb[0].mxu0 %v7172
    %v7746 = vpop.f32.mrb[0].mxu0
    %v7747 = vadd.f32 0.0, %v7746
    %v7748 = vpop.f32.mrb[0].mxu0
    %v7749 = vadd.f32 0.0, %v7748
    %v7750 = vpop.f32.mrb[0].mxu0
    %v7751 = vadd.f32 0.0, %v7750
    %v7752 = vpop.f32.mrb[0].mxu0
    %v7753 = vadd.f32 0.0, %v7752
    %7754 = vmatprep.mubr.bf16.mxu0 %v7175
    %7755 = vmatmul.mubr.bf16.gmra.mrb[0].mxu0 %v7174
    %v7756 = vpop.f32.mrb[0].mxu0
    %v7757 = vadd.f32 0.0, %v7756
    %v7758 = vpop.f32.mrb[0].mxu0
    %v7759 = vadd.f32 0.0, %v7758
    %v7760 = vpop.f32.mrb[0].mxu0
    %v7761 = vadd.f32 0.0, %v7760
    %v7762 = vpop.f32.mrb[0].mxu0
    %v7763 = vadd.f32 0.0, %v7762
    %7764 = vmatprep.mubr.bf16.mxu0 %v7177
    %7765 = vmatmul.mubr.bf16.gmra.mrb[0].mxu0 %v7176
    %v7766 = vpop.f32.mrb[0].mxu0
    %v7767 = vadd.f32 0.0, %v7766
    %v7768 = vpop.f32.mrb[0].mxu0
    %v7769 = vadd.f32 0.0, %v7768
    %v7770 = vpop.f32.mrb[0].mxu0
    %v7771 = vadd.f32 0.0, %v7770
    %v7772 = vpop.f32.mrb[0].mxu0
    %v7773 = vadd.f32 0.0, %v7772
    %7774 = vdwg.mxu0
    %v7807 = vunpack.c.l.b16 %v7437
    %v7808 = vunpack.c.h.b16 %v7437
    %v7809 = vunpack.c.l.b16 %v7438
    %v7810 = vunpack.c.h.b16 %v7438
    %v7811 = vunpack.c.l.b16 %v7439
    %v7812 = vunpack.c.h.b16 %v7439
    %v7813 = vunpack.c.l.b16 %v7440
    %v7814 = vunpack.c.h.b16 %v7440
    %v7815 = vunpack.c.l.b16 %v7441
    %v7816 = vunpack.c.h.b16 %v7441
    %v7817 = vunpack.c.l.b16 %v7442
    %v7818 = vunpack.c.h.b16 %v7442
    %v7819 = vunpack.c.l.b16 %v7443
    %v7820 = vunpack.c.h.b16 %v7443
    %v7821 = vunpack.c.l.b16 %v7444
    %v7822 = vunpack.c.h.b16 %v7444
    %v7823 = vunpack.c.l.b16 %v7445
    %v7824 = vunpack.c.h.b16 %v7445
    %v7825 = vunpack.c.l.b16 %v7446
    %v7826 = vunpack.c.h.b16 %v7446
    %v7827 = vunpack.c.l.b16 %v7447
    %v7828 = vunpack.c.h.b16 %v7447
    %v7829 = vunpack.c.l.b16 %v7448
    %v7830 = vunpack.c.h.b16 %v7448
    %v7831 = vunpack.c.l.b16 %v7449
    %v7832 = vunpack.c.h.b16 %v7449
    %v7833 = vunpack.c.l.b16 %v7450
    %v7834 = vunpack.c.h.b16 %v7450
    %v7835 = vunpack.c.l.b16 %v7451
    %v7836 = vunpack.c.h.b16 %v7451
    %v7837 = vunpack.c.l.b16 %v7452
    %v7838 = vunpack.c.h.b16 %v7452
    %v7839 = vunpack.c.l.b16 %v7453
    %v7840 = vunpack.c.h.b16 %v7453
    %v7841 = vunpack.c.l.b16 %v7454
    %v7842 = vunpack.c.h.b16 %v7454
    %v7843 = vunpack.c.l.b16 %v7455
    %v7844 = vunpack.c.h.b16 %v7455
    %v7845 = vunpack.c.l.b16 %v7456
    %v7846 = vunpack.c.h.b16 %v7456
    %v7847 = vunpack.c.l.b16 %v7457
    %v7848 = vunpack.c.h.b16 %v7457
    %v7849 = vunpack.c.l.b16 %v7458
    %v7850 = vunpack.c.h.b16 %v7458
    %v7851 = vunpack.c.l.b16 %v7459
    %v7852 = vunpack.c.h.b16 %v7459
    %v7853 = vunpack.c.l.b16 %v7460
    %v7854 = vunpack.c.h.b16 %v7460
    %v7855 = vunpack.c.l.b16 %v7461
    %v7856 = vunpack.c.h.b16 %v7461
    %v7857 = vunpack.c.l.b16 %v7462
    %v7858 = vunpack.c.h.b16 %v7462
    %v7859 = vunpack.c.l.b16 %v7463
    %v7860 = vunpack.c.h.b16 %v7463
    %v7861 = vunpack.c.l.b16 %v7464
    %v7862 = vunpack.c.h.b16 %v7464
    %v7863 = vunpack.c.l.b16 %v7465
    %v7864 = vunpack.c.h.b16 %v7465
    %v7865 = vunpack.c.l.b16 %v7466
    %v7866 = vunpack.c.h.b16 %v7466
    %v7867 = vunpack.c.l.b16 %v7467
    %v7868 = vunpack.c.h.b16 %v7467
    %v7869 = vunpack.c.l.b16 %v7468
    %v7870 = vunpack.c.h.b16 %v7468
    %v7871 = vpack.c.b16 %v7809, %v7807
    %v7872 = vpack.c.b16 %v7810, %v7808
    %v7873 = vpack.c.b16 %v7813, %v7811
    %v7874 = vpack.c.b16 %v7814, %v7812
    %v7875 = vpack.c.b16 %v7817, %v7815
    %v7876 = vpack.c.b16 %v7818, %v7816
    %v7877 = vpack.c.b16 %v7821, %v7819
    %v7878 = vpack.c.b16 %v7822, %v7820
    %v7879 = vpack.c.b16 %v7825, %v7823
    %v7880 = vpack.c.b16 %v7826, %v7824
    %v7881 = vpack.c.b16 %v7829, %v7827
    %v7882 = vpack.c.b16 %v7830, %v7828
    %v7883 = vpack.c.b16 %v7833, %v7831
    %v7884 = vpack.c.b16 %v7834, %v7832
    %v7885 = vpack.c.b16 %v7837, %v7835
    %v7886 = vpack.c.b16 %v7838, %v7836
    %v7887 = vpack.c.b16 %v7841, %v7839
    %v7888 = vpack.c.b16 %v7842, %v7840
    %v7889 = vpack.c.b16 %v7845, %v7843
    %v7890 = vpack.c.b16 %v7846, %v7844
    %v7891 = vpack.c.b16 %v7849, %v7847
    %v7892 = vpack.c.b16 %v7850, %v7848
    %v7893 = vpack.c.b16 %v7853, %v7851
    %v7894 = vpack.c.b16 %v7854, %v7852
    %v7895 = vpack.c.b16 %v7857, %v7855
    %v7896 = vpack.c.b16 %v7858, %v7856
    %v7897 = vpack.c.b16 %v7861, %v7859
    %v7898 = vpack.c.b16 %v7862, %v7860
    %v7899 = vpack.c.b16 %v7865, %v7863
    %v7900 = vpack.c.b16 %v7866, %v7864
    %v7901 = vpack.c.b16 %v7869, %v7867
    %v7902 = vpack.c.b16 %v7870, %v7868
    %7935 = vmatprep.subr.bf16.mxu0 %v7872
    %7936 = vmatpush1.bf16.msra.mxu0 %v7871
    %7937 = vmatprep.subr.bf16.mxu0 %v7874
    %7938 = vmatpush1.bf16.msra.mxu0 %v7873
    %7939 = vmatprep.subr.bf16.mxu0 %v7876
    %7940 = vmatpush1.bf16.msra.mxu0 %v7875
    %7941 = vmatprep.subr.bf16.mxu0 %v7878
    %7942 = vmatpush1.bf16.msra.mxu0 %v7877
    %7943 = vmatprep.subr.bf16.mxu0 %v7880
    %7944 = vmatpush1.bf16.msra.mxu0 %v7879
    %7945 = vmatprep.subr.bf16.mxu0 %v7882
    %7946 = vmatpush1.bf16.msra.mxu0 %v7881
    %7947 = vmatprep.subr.bf16.mxu0 %v7884
    %7948 = vmatpush1.bf16.msra.mxu0 %v7883
    %7949 = vmatprep.subr.bf16.mxu0 %v7886
    %7950 = vmatpush1.bf16.msra.mxu0 %v7885
    %7951 = vmatprep.subr.bf16.mxu0 %v7888
    %7952 = vmatpush1.bf16.msra.mxu0 %v7887
    %7953 = vmatprep.subr.bf16.mxu0 %v7890
    %7954 = vmatpush1.bf16.msra.mxu0 %v7889
    %7955 = vmatprep.subr.bf16.mxu0 %v7892
    %7956 = vmatpush1.bf16.msra.mxu0 %v7891
    %7957 = vmatprep.subr.bf16.mxu0 %v7894
    %7958 = vmatpush1.bf16.msra.mxu0 %v7893
    %7959 = vmatprep.subr.bf16.mxu0 %v7896
    %7960 = vmatpush1.bf16.msra.mxu0 %v7895
    %7961 = vmatprep.subr.bf16.mxu0 %v7898
    %7962 = vmatpush1.bf16.msra.mxu0 %v7897
    %7963 = vmatprep.subr.bf16.mxu0 %v7900
    %7964 = vmatpush1.bf16.msra.mxu0 %v7899
    %7965 = vmatprep.subr.bf16.mxu0 %v7902
    %7966 = vmatpush1.bf16.msra.mxu0 %v7901
    %7967 = vmatprep.mubr.bf16.mxu0 %v7292
    %7968 = vmatmul.mubr.bf16.gmra.mrb[0].mxu0 %v7291
    %v7969 = vpop.f32.mrb[0].mxu0
    %v7970 = vadd.f32 %v7697, %v7969
    %v7971 = vpop.f32.mrb[0].mxu0
    %v7972 = vadd.f32 %v7699, %v7971
    %v7973 = vpop.f32.mrb[0].mxu0
    %v7974 = vadd.f32 %v7701, %v7973
    %v7975 = vpop.f32.mrb[0].mxu0
    %v7976 = vadd.f32 %v7703, %v7975
    %7977 = vmatprep.mubr.bf16.mxu0 %v7294
    %7978 = vmatmul.mubr.bf16.gmra.mrb[0].mxu0 %v7293
    %v7979 = vpop.f32.mrb[0].mxu0
    %v7980 = vadd.f32 %v7707, %v7979
    %v7981 = vpop.f32.mrb[0].mxu0
    %v7982 = vadd.f32 %v7709, %v7981
    %v7983 = vpop.f32.mrb[0].mxu0
    %v7984 = vadd.f32 %v7711, %v7983
    %v7985 = vpop.f32.mrb[0].mxu0
    %v7986 = vadd.f32 %v7713, %v7985
    %7987 = vmatprep.mubr.bf16.mxu0 %v7296
    %7988 = vmatmul.mubr.bf16.gmra.mrb[0].mxu0 %v7295
    %v7989 = vpop.f32.mrb[0].mxu0
    %v7990 = vadd.f32 %v7717, %v7989
    %v7991 = vpop.f32.mrb[0].mxu0
    %v7992 = vadd.f32 %v7719, %v7991
    %v7993 = vpop.f32.mrb[0].mxu0
    %v7994 = vadd.f32 %v7721, %v7993
    %v7995 = vpop.f32.mrb[0].mxu0
    %v7996 = vadd.f32 %v7723, %v7995
    %7997 = vmatprep.mubr.bf16.mxu0 %v7298
    %7998 = vmatmul.mubr.bf16.gmra.mrb[0].mxu0 %v7297
    %v7999 = vpop.f32.mrb[0].mxu0
    %v8000 = vadd.f32 %v7727, %v7999
    %v8001 = vpop.f32.mrb[0].mxu0
    %v8002 = vadd.f32 %v7729, %v8001
    %v8003 = vpop.f32.mrb[0].mxu0
    %v8004 = vadd.f32 %v7731, %v8003
    %v8005 = vpop.f32.mrb[0].mxu0
    %v8006 = vadd.f32 %v7733, %v8005
    %8007 = vmatprep.mubr.bf16.mxu0 %v7300
    %8008 = vmatmul.mubr.bf16.gmra.mrb[0].mxu0 %v7299
    %v8009 = vpop.f32.mrb[0].mxu0
    %v8010 = vadd.f32 %v7737, %v8009
    %v8011 = vpop.f32.mrb[0].mxu0
    %v8012 = vadd.f32 %v7739, %v8011
    %v8013 = vpop.f32.mrb[0].mxu0
    %v8014 = vadd.f32 %v7741, %v8013
    %v8015 = vpop.f32.mrb[0].mxu0
    %v8016 = vadd.f32 %v7743, %v8015
    %8017 = vmatprep.mubr.bf16.mxu0 %v7302
    %8018 = vmatmul.mubr.bf16.gmra.mrb[0].mxu0 %v7301
    %v8019 = vpop.f32.mrb[0].mxu0
    %v8020 = vadd.f32 %v7747, %v8019
    %v8021 = vpop.f32.mrb[0].mxu0
    %v8022 = vadd.f32 %v7749, %v8021
    %v8023 = vpop.f32.mrb[0].mxu0
    %v8024 = vadd.f32 %v7751, %v8023
    %v8025 = vpop.f32.mrb[0].mxu0
    %v8026 = vadd.f32 %v7753, %v8025
    %8027 = vmatprep.mubr.bf16.mxu0 %v7304
    %8028 = vmatmul.mubr.bf16.gmra.mrb[0].mxu0 %v7303
    %v8029 = vpop.f32.mrb[0].mxu0
    %v8030 = vadd.f32 %v7757, %v8029
    %v8031 = vpop.f32.mrb[0].mxu0
    %v8032 = vadd.f32 %v7759, %v8031
    %v8033 = vpop.f32.mrb[0].mxu0
    %v8034 = vadd.f32 %v7761, %v8033
    %v8035 = vpop.f32.mrb[0].mxu0
    %v8036 = vadd.f32 %v7763, %v8035
    %8037 = vmatprep.mubr.bf16.mxu0 %v7306
    %8038 = vmatmul.mubr.bf16.gmra.mrb[0].mxu0 %v7305
    %v8039 = vpop.f32.mrb[0].mxu0
    %v8040 = vadd.f32 %v7767, %v8039
    %v8041 = vpop.f32.mrb[0].mxu0
    %v8042 = vadd.f32 %v7769, %v8041
    %v8043 = vpop.f32.mrb[0].mxu0
    %v8044 = vadd.f32 %v7771, %v8043
    %v8045 = vpop.f32.mrb[0].mxu0
    %v8046 = vadd.f32 %v7773, %v8045
    %8047 = vdwg.mxu0
    %s8048 = scalar_lea.vmem [#allocation5], 3584
    %v8049 = vld [vmem:[%s8048] sm:$0xff]
    %v8050 = vld [vmem:[%s8048 + $0x8] sm:$0xff]
    %v8051 = vld [vmem:[%s8048 + $0x10] sm:$0xff]
    %v8052 = vld [vmem:[%s8048 + $0x18] sm:$0xff]
    %v8053 = vld [vmem:[%s8048 + $0x20] sm:$0xff]
    %v8054 = vld [vmem:[%s8048 + $0x28] sm:$0xff]
    %v8055 = vld [vmem:[%s8048 + $0x30] sm:$0xff]
    %v8056 = vld [vmem:[%s8048 + $0x38] sm:$0xff]
    %v8057 = vld [vmem:[%s8048 + $0x40] sm:$0xff]
    %v8058 = vld [vmem:[%s8048 + $0x48] sm:$0xff]
    %v8059 = vld [vmem:[%s8048 + $0x50] sm:$0xff]
    %v8060 = vld [vmem:[%s8048 + $0x58] sm:$0xff]
    %v8061 = vld [vmem:[%s8048 + $0x60] sm:$0xff]
    %v8062 = vld [vmem:[%s8048 + $0x68] sm:$0xff]
    %v8063 = vld [vmem:[%s8048 + $0x70] sm:$0xff]
    %v8064 = vld [vmem:[%s8048 + $0x78] sm:$0xff]
    %v8065 = vld [vmem:[%s8048 + $0x80] sm:$0xff]
    %v8066 = vld [vmem:[%s8048 + $0x88] sm:$0xff]
    %v8067 = vld [vmem:[%s8048 + $0x90] sm:$0xff]
    %v8068 = vld [vmem:[%s8048 + $0x98] sm:$0xff]
    %v8069 = vld [vmem:[%s8048 + $0xa0] sm:$0xff]
    %v8070 = vld [vmem:[%s8048 + $0xa8] sm:$0xff]
    %v8071 = vld [vmem:[%s8048 + $0xb0] sm:$0xff]
    %v8072 = vld [vmem:[%s8048 + $0xb8] sm:$0xff]
    %v8073 = vld [vmem:[%s8048 + $0xc0] sm:$0xff]
    %v8074 = vld [vmem:[%s8048 + $0xc8] sm:$0xff]
    %v8075 = vld [vmem:[%s8048 + $0xd0] sm:$0xff]
    %v8076 = vld [vmem:[%s8048 + $0xd8] sm:$0xff]
    %v8077 = vld [vmem:[%s8048 + $0xe0] sm:$0xff]
    %v8078 = vld [vmem:[%s8048 + $0xe8] sm:$0xff]
    %v8079 = vld [vmem:[%s8048 + $0xf0] sm:$0xff]
    %v8080 = vld [vmem:[%s8048 + $0xf8] sm:$0xff]
    %v8113 = vunpack.c.l.b16 %v8049
    %v8114 = vunpack.c.h.b16 %v8049
    %v8115 = vunpack.c.l.b16 %v8050
    %v8116 = vunpack.c.h.b16 %v8050
    %v8117 = vunpack.c.l.b16 %v8051
    %v8118 = vunpack.c.h.b16 %v8051
    %v8119 = vunpack.c.l.b16 %v8052
    %v8120 = vunpack.c.h.b16 %v8052
    %v8121 = vunpack.c.l.b16 %v8053
    %v8122 = vunpack.c.h.b16 %v8053
    %v8123 = vunpack.c.l.b16 %v8054
    %v8124 = vunpack.c.h.b16 %v8054
    %v8125 = vunpack.c.l.b16 %v8055
    %v8126 = vunpack.c.h.b16 %v8055
    %v8127 = vunpack.c.l.b16 %v8056
    %v8128 = vunpack.c.h.b16 %v8056
    %v8129 = vunpack.c.l.b16 %v8057
    %v8130 = vunpack.c.h.b16 %v8057
    %v8131 = vunpack.c.l.b16 %v8058
    %v8132 = vunpack.c.h.b16 %v8058
    %v8133 = vunpack.c.l.b16 %v8059
    %v8134 = vunpack.c.h.b16 %v8059
    %v8135 = vunpack.c.l.b16 %v8060
    %v8136 = vunpack.c.h.b16 %v8060
    %v8137 = vunpack.c.l.b16 %v8061
    %v8138 = vunpack.c.h.b16 %v8061
    %v8139 = vunpack.c.l.b16 %v8062
    %v8140 = vunpack.c.h.b16 %v8062
    %v8141 = vunpack.c.l.b16 %v8063
    %v8142 = vunpack.c.h.b16 %v8063
    %v8143 = vunpack.c.l.b16 %v8064
    %v8144 = vunpack.c.h.b16 %v8064
    %v8145 = vunpack.c.l.b16 %v8065
    %v8146 = vunpack.c.h.b16 %v8065
    %v8147 = vunpack.c.l.b16 %v8066
    %v8148 = vunpack.c.h.b16 %v8066
    %v8149 = vunpack.c.l.b16 %v8067
    %v8150 = vunpack.c.h.b16 %v8067
    %v8151 = vunpack.c.l.b16 %v8068
    %v8152 = vunpack.c.h.b16 %v8068
    %v8153 = vunpack.c.l.b16 %v8069
    %v8154 = vunpack.c.h.b16 %v8069
    %v8155 = vunpack.c.l.b16 %v8070
    %v8156 = vunpack.c.h.b16 %v8070
    %v8157 = vunpack.c.l.b16 %v8071
    %v8158 = vunpack.c.h.b16 %v8071
    %v8159 = vunpack.c.l.b16 %v8072
    %v8160 = vunpack.c.h.b16 %v8072
    %v8161 = vunpack.c.l.b16 %v8073
    %v8162 = vunpack.c.h.b16 %v8073
    %v8163 = vunpack.c.l.b16 %v8074
    %v8164 = vunpack.c.h.b16 %v8074
    %v8165 = vunpack.c.l.b16 %v8075
    %v8166 = vunpack.c.h.b16 %v8075
    %v8167 = vunpack.c.l.b16 %v8076
    %v8168 = vunpack.c.h.b16 %v8076
    %v8169 = vunpack.c.l.b16 %v8077
    %v8170 = vunpack.c.h.b16 %v8077
    %v8171 = vunpack.c.l.b16 %v8078
    %v8172 = vunpack.c.h.b16 %v8078
    %v8173 = vunpack.c.l.b16 %v8079
    %v8174 = vunpack.c.h.b16 %v8079
    %v8175 = vunpack.c.l.b16 %v8080
    %v8176 = vunpack.c.h.b16 %v8080
    %v8177 = vpack.c.b16 %v8115, %v8113
    %v8178 = vpack.c.b16 %v8116, %v8114
    %v8179 = vpack.c.b16 %v8119, %v8117
    %v8180 = vpack.c.b16 %v8120, %v8118
    %v8181 = vpack.c.b16 %v8123, %v8121
    %v8182 = vpack.c.b16 %v8124, %v8122
    %v8183 = vpack.c.b16 %v8127, %v8125
    %v8184 = vpack.c.b16 %v8128, %v8126
    %v8185 = vpack.c.b16 %v8131, %v8129
    %v8186 = vpack.c.b16 %v8132, %v8130
    %v8187 = vpack.c.b16 %v8135, %v8133
    %v8188 = vpack.c.b16 %v8136, %v8134
    %v8189 = vpack.c.b16 %v8139, %v8137
    %v8190 = vpack.c.b16 %v8140, %v8138
    %v8191 = vpack.c.b16 %v8143, %v8141
    %v8192 = vpack.c.b16 %v8144, %v8142
    %v8193 = vpack.c.b16 %v8147, %v8145
    %v8194 = vpack.c.b16 %v8148, %v8146
    %v8195 = vpack.c.b16 %v8151, %v8149
    %v8196 = vpack.c.b16 %v8152, %v8150
    %v8197 = vpack.c.b16 %v8155, %v8153
    %v8198 = vpack.c.b16 %v8156, %v8154
    %v8199 = vpack.c.b16 %v8159, %v8157
    %v8200 = vpack.c.b16 %v8160, %v8158
    %v8201 = vpack.c.b16 %v8163, %v8161
    %v8202 = vpack.c.b16 %v8164, %v8162
    %v8203 = vpack.c.b16 %v8167, %v8165
    %v8204 = vpack.c.b16 %v8168, %v8166
    %v8205 = vpack.c.b16 %v8171, %v8169
    %v8206 = vpack.c.b16 %v8172, %v8170
    %v8207 = vpack.c.b16 %v8175, %v8173
    %v8208 = vpack.c.b16 %v8176, %v8174
    %8241 = vmatprep.subr.bf16.mxu0 %v8178
    %8242 = vmatpush1.bf16.msra.mxu0 %v8177
    %8243 = vmatprep.subr.bf16.mxu0 %v8180
    %8244 = vmatpush1.bf16.msra.mxu0 %v8179
    %8245 = vmatprep.subr.bf16.mxu0 %v8182
    %8246 = vmatpush1.bf16.msra.mxu0 %v8181
    %8247 = vmatprep.subr.bf16.mxu0 %v8184
    %8248 = vmatpush1.bf16.msra.mxu0 %v8183
    %8249 = vmatprep.subr.bf16.mxu0 %v8186
    %8250 = vmatpush1.bf16.msra.mxu0 %v8185
    %8251 = vmatprep.subr.bf16.mxu0 %v8188
    %8252 = vmatpush1.bf16.msra.mxu0 %v8187
    %8253 = vmatprep.subr.bf16.mxu0 %v8190
    %8254 = vmatpush1.bf16.msra.mxu0 %v8189
    %8255 = vmatprep.subr.bf16.mxu0 %v8192
    %8256 = vmatpush1.bf16.msra.mxu0 %v8191
    %8257 = vmatprep.subr.bf16.mxu0 %v8194
    %8258 = vmatpush1.bf16.msra.mxu0 %v8193
    %8259 = vmatprep.subr.bf16.mxu0 %v8196
    %8260 = vmatpush1.bf16.msra.mxu0 %v8195
    %8261 = vmatprep.subr.bf16.mxu0 %v8198
    %8262 = vmatpush1.bf16.msra.mxu0 %v8197
    %8263 = vmatprep.subr.bf16.mxu0 %v8200
    %8264 = vmatpush1.bf16.msra.mxu0 %v8199
    %8265 = vmatprep.subr.bf16.mxu0 %v8202
    %8266 = vmatpush1.bf16.msra.mxu0 %v8201
    %8267 = vmatprep.subr.bf16.mxu0 %v8204
    %8268 = vmatpush1.bf16.msra.mxu0 %v8203
    %8269 = vmatprep.subr.bf16.mxu0 %v8206
    %8270 = vmatpush1.bf16.msra.mxu0 %v8205
    %8271 = vmatprep.subr.bf16.mxu0 %v8208
    %8272 = vmatpush1.bf16.msra.mxu0 %v8207
    %8273 = vmatprep.mubr.bf16.mxu0 %v7421
    %8274 = vmatmul.mubr.bf16.gmra.mrb[0].mxu0 %v7420
    %v8275 = vpop.f32.mrb[0].mxu0
    %v8276 = vadd.f32 0.0, %v8275
    %v8277 = vpop.f32.mrb[0].mxu0
    %v8278 = vadd.f32 0.0, %v8277
    %v8279 = vpop.f32.mrb[0].mxu0
    %v8280 = vadd.f32 0.0, %v8279
    %v8281 = vpop.f32.mrb[0].mxu0
    %v8282 = vadd.f32 0.0, %v8281
    %8283 = vmatprep.mubr.bf16.mxu0 %v7423
    %8284 = vmatmul.mubr.bf16.gmra.mrb[0].mxu0 %v7422
    %v8285 = vpop.f32.mrb[0].mxu0
    %v8286 = vadd.f32 0.0, %v8285
    %v8287 = vpop.f32.mrb[0].mxu0
    %v8288 = vadd.f32 0.0, %v8287
    %v8289 = vpop.f32.mrb[0].mxu0
    %v8290 = vadd.f32 0.0, %v8289
    %v8291 = vpop.f32.mrb[0].mxu0
    %v8292 = vadd.f32 0.0, %v8291
    %8293 = vmatprep.mubr.bf16.mxu0 %v7425
    %8294 = vmatmul.mubr.bf16.gmra.mrb[0].mxu0 %v7424
    %v8295 = vpop.f32.mrb[0].mxu0
    %v8296 = vadd.f32 0.0, %v8295
    %v8297 = vpop.f32.mrb[0].mxu0
    %v8298 = vadd.f32 0.0, %v8297
    %v8299 = vpop.f32.mrb[0].mxu0
    %v8300 = vadd.f32 0.0, %v8299
    %v8301 = vpop.f32.mrb[0].mxu0
    %v8302 = vadd.f32 0.0, %v8301
    %8303 = vmatprep.mubr.bf16.mxu0 %v7427
    %8304 = vmatmul.mubr.bf16.gmra.mrb[0].mxu0 %v7426
    %v8305 = vpop.f32.mrb[0].mxu0
    %v8306 = vadd.f32 0.0, %v8305
    %v8307 = vpop.f32.mrb[0].mxu0
    %v8308 = vadd.f32 0.0, %v8307
    %v8309 = vpop.f32.mrb[0].mxu0
    %v8310 = vadd.f32 0.0, %v8309
    %v8311 = vpop.f32.mrb[0].mxu0
    %v8312 = vadd.f32 0.0, %v8311
    %8313 = vmatprep.mubr.bf16.mxu0 %v7429
    %8314 = vmatmul.mubr.bf16.gmra.mrb[0].mxu0 %v7428
    %v8315 = vpop.f32.mrb[0].mxu0
    %v8316 = vadd.f32 0.0, %v8315
    %v8317 = vpop.f32.mrb[0].mxu0
    %v8318 = vadd.f32 0.0, %v8317
    %v8319 = vpop.f32.mrb[0].mxu0
    %v8320 = vadd.f32 0.0, %v8319
    %v8321 = vpop.f32.mrb[0].mxu0
    %v8322 = vadd.f32 0.0, %v8321
    %8323 = vmatprep.mubr.bf16.mxu0 %v7431
    %8324 = vmatmul.mubr.bf16.gmra.mrb[0].mxu0 %v7430
    %v8325 = vpop.f32.mrb[0].mxu0
    %v8326 = vadd.f32 0.0, %v8325
    %v8327 = vpop.f32.mrb[0].mxu0
    %v8328 = vadd.f32 0.0, %v8327
    %v8329 = vpop.f32.mrb[0].mxu0
    %v8330 = vadd.f32 0.0, %v8329
    %v8331 = vpop.f32.mrb[0].mxu0
    %v8332 = vadd.f32 0.0, %v8331
    %8333 = vmatprep.mubr.bf16.mxu0 %v7433
    %8334 = vmatmul.mubr.bf16.gmra.mrb[0].mxu0 %v7432
    %v8335 = vpop.f32.mrb[0].mxu0
    %v8336 = vadd.f32 0.0, %v8335
    %v8337 = vpop.f32.mrb[0].mxu0
    %v8338 = vadd.f32 0.0, %v8337
    %v8339 = vpop.f32.mrb[0].mxu0
    %v8340 = vadd.f32 0.0, %v8339
    %v8341 = vpop.f32.mrb[0].mxu0
    %v8342 = vadd.f32 0.0, %v8341
    %8343 = vmatprep.mubr.bf16.mxu0 %v7435
    %8344 = vmatmul.mubr.bf16.gmra.mrb[0].mxu0 %v7434
    %v8345 = vpop.f32.mrb[0].mxu0
    %v8346 = vadd.f32 0.0, %v8345
    %v8347 = vpop.f32.mrb[0].mxu0
    %v8348 = vadd.f32 0.0, %v8347
    %v8349 = vpop.f32.mrb[0].mxu0
    %v8350 = vadd.f32 0.0, %v8349
    %v8351 = vpop.f32.mrb[0].mxu0
    %v8352 = vadd.f32 0.0, %v8351
    %8353 = vdwg.mxu0
    %v8354 = vadd.f32 %v7970, %v8276
    %v8355 = vadd.f32 %v7972, %v8278
    %v8356 = vadd.f32 %v7974, %v8280
    %v8357 = vadd.f32 %v7976, %v8282
    %v8358 = vadd.f32 %v7980, %v8286
    %v8359 = vadd.f32 %v7982, %v8288
    %v8360 = vadd.f32 %v7984, %v8290
    %v8361 = vadd.f32 %v7986, %v8292
    %v8362 = vadd.f32 %v7990, %v8296
    %v8363 = vadd.f32 %v7992, %v8298
    %v8364 = vadd.f32 %v7994, %v8300
    %v8365 = vadd.f32 %v7996, %v8302
    %v8366 = vadd.f32 %v8000, %v8306
    %v8367 = vadd.f32 %v8002, %v8308
    %v8368 = vadd.f32 %v8004, %v8310
    %v8369 = vadd.f32 %v8006, %v8312
    %v8370 = vadd.f32 %v8010, %v8316
    %v8371 = vadd.f32 %v8012, %v8318
    %v8372 = vadd.f32 %v8014, %v8320
    %v8373 = vadd.f32 %v8016, %v8322
    %v8374 = vadd.f32 %v8020, %v8326
    %v8375 = vadd.f32 %v8022, %v8328
    %v8376 = vadd.f32 %v8024, %v8330
    %v8377 = vadd.f32 %v8026, %v8332
    %v8378 = vadd.f32 %v8030, %v8336
    %v8379 = vadd.f32 %v8032, %v8338
    %v8380 = vadd.f32 %v8034, %v8340
    %v8381 = vadd.f32 %v8036, %v8342
    %v8382 = vadd.f32 %v8040, %v8346
    %v8383 = vadd.f32 %v8042, %v8348
    %v8384 = vadd.f32 %v8044, %v8350
    %v8385 = vadd.f32 %v8046, %v8352
    %s8386 = scalar_lea.vmem [#allocation7], 8
    %v8387 = vld [vmem:[%s8386] sm:$0x3]
    %v8389 = vlaneseq
    %v8390 = vshrl.u32 %v8389, 7
    %v8391 = vsub.s32 0, %v8390
    %v8392 = vrot.slane %v8387, %v8391
    %v8393 = vlaneseq
    %v8394 = vshrl.u32 %v8393, 7
    %v8395 = vsub.s32 1, %v8394
    %v8396 = vrot.slane %v8387, %v8395
    %v8399 = vadd.f32 %v8354, %v8392
    %v8400 = vadd.f32 %v8355, %v8396
    %v8401 = vadd.f32 %v8356, %v8392
    %v8402 = vadd.f32 %v8357, %v8396
    %v8403 = vadd.f32 %v8358, %v8392
    %v8404 = vadd.f32 %v8359, %v8396
    %v8405 = vadd.f32 %v8360, %v8392
    %v8406 = vadd.f32 %v8361, %v8396
    %v8407 = vadd.f32 %v8362, %v8392
    %v8408 = vadd.f32 %v8363, %v8396
    %v8409 = vadd.f32 %v8364, %v8392
    %v8410 = vadd.f32 %v8365, %v8396
    %v8411 = vadd.f32 %v8366, %v8392
    %v8412 = vadd.f32 %v8367, %v8396
    %v8413 = vadd.f32 %v8368, %v8392
    %v8414 = vadd.f32 %v8369, %v8396
    %v8415 = vadd.f32 %v8370, %v8392
    %v8416 = vadd.f32 %v8371, %v8396
    %v8417 = vadd.f32 %v8372, %v8392
    %v8418 = vadd.f32 %v8373, %v8396
    %v8419 = vadd.f32 %v8374, %v8392
    %v8420 = vadd.f32 %v8375, %v8396
    %v8421 = vadd.f32 %v8376, %v8392
    %v8422 = vadd.f32 %v8377, %v8396
    %v8423 = vadd.f32 %v8378, %v8392
    %v8424 = vadd.f32 %v8379, %v8396
    %v8425 = vadd.f32 %v8380, %v8392
    %v8426 = vadd.f32 %v8381, %v8396
    %v8427 = vadd.f32 %v8382, %v8392
    %v8428 = vadd.f32 %v8383, %v8396
    %v8429 = vadd.f32 %v8384, %v8392
    %v8430 = vadd.f32 %v8385, %v8396
    %v8431 = vadd.f32 %v8399, %v8401
    %v8432 = vadd.f32 %v8431, %v8403
    %v8433 = vadd.f32 %v8432, %v8405
    %v8434 = vadd.f32 %v8433, %v8407
    %v8435 = vadd.f32 %v8434, %v8409
    %v8436 = vadd.f32 %v8435, %v8411
    %v8437 = vadd.f32 %v8436, %v8413
    %v8438 = vadd.f32 %v8437, %v8415
    %v8439 = vadd.f32 %v8438, %v8417
    %v8440 = vadd.f32 %v8439, %v8419
    %v8441 = vadd.f32 %v8440, %v8421
    %v8442 = vadd.f32 %v8441, %v8423
    %v8443 = vadd.f32 %v8442, %v8425
    %v8444 = vadd.f32 %v8443, %v8427
    %v8445 = vadd.f32 %v8444, %v8429
    %v8446 = vrot.slane %v8445, 4
    %v8447 = vadd.f32 %v8445, %v8446
    %v8448 = vrot.slane %v8447, 2
    %v8449 = vadd.f32 %v8447, %v8448
    %v8450 = vrot.slane %v8449, 1
    %v8451 = vadd.f32 %v8449, %v8450
    %v8452 = vadd.f32 %v8400, %v8402
    %v8453 = vadd.f32 %v8452, %v8404
    %v8454 = vadd.f32 %v8453, %v8406
    %v8455 = vadd.f32 %v8454, %v8408
    %v8456 = vadd.f32 %v8455, %v8410
    %v8457 = vadd.f32 %v8456, %v8412
    %v8458 = vadd.f32 %v8457, %v8414
    %v8459 = vadd.f32 %v8458, %v8416
    %v8460 = vadd.f32 %v8459, %v8418
    %v8461 = vadd.f32 %v8460, %v8420
    %v8462 = vadd.f32 %v8461, %v8422
    %v8463 = vadd.f32 %v8462, %v8424
    %v8464 = vadd.f32 %v8463, %v8426
    %v8465 = vadd.f32 %v8464, %v8428
    %v8466 = vadd.f32 %v8465, %v8430
    %v8467 = vrot.slane %v8466, 4
    %v8468 = vadd.f32 %v8466, %v8467
    %v8469 = vrot.slane %v8468, 2
    %v8470 = vadd.f32 %v8468, %v8469
    %v8471 = vrot.slane %v8470, 1
    %v8472 = vadd.f32 %v8470, %v8471
    %v8473 = vmul.f32 %v8451, %v1646
    %v8474 = vmul.f32 %v8472, %v1646
    %v8475 = vsub.f32 %v8399, %v8473
    %v8476 = vsub.f32 %v8400, %v8474
    %v8477 = vsub.f32 %v8401, %v8473
    %v8478 = vsub.f32 %v8402, %v8474
    %v8479 = vsub.f32 %v8403, %v8473
    %v8480 = vsub.f32 %v8404, %v8474
    %v8481 = vsub.f32 %v8405, %v8473
    %v8482 = vsub.f32 %v8406, %v8474
    %v8483 = vsub.f32 %v8407, %v8473
    %v8484 = vsub.f32 %v8408, %v8474
    %v8485 = vsub.f32 %v8409, %v8473
    %v8486 = vsub.f32 %v8410, %v8474
    %v8487 = vsub.f32 %v8411, %v8473
    %v8488 = vsub.f32 %v8412, %v8474
    %v8489 = vsub.f32 %v8413, %v8473
    %v8490 = vsub.f32 %v8414, %v8474
    %v8491 = vsub.f32 %v8415, %v8473
    %v8492 = vsub.f32 %v8416, %v8474
    %v8493 = vsub.f32 %v8417, %v8473
    %v8494 = vsub.f32 %v8418, %v8474
    %v8495 = vsub.f32 %v8419, %v8473
    %v8496 = vsub.f32 %v8420, %v8474
    %v8497 = vsub.f32 %v8421, %v8473
    %v8498 = vsub.f32 %v8422, %v8474
    %v8499 = vsub.f32 %v8423, %v8473
    %v8500 = vsub.f32 %v8424, %v8474
    %v8501 = vsub.f32 %v8425, %v8473
    %v8502 = vsub.f32 %v8426, %v8474
    %v8503 = vsub.f32 %v8427, %v8473
    %v8504 = vsub.f32 %v8428, %v8474
    %v8505 = vsub.f32 %v8429, %v8473
    %v8506 = vsub.f32 %v8430, %v8474
    %v8507 = vmul.f32 %v8475, %v8475
    %v8508 = vmul.f32 %v8476, %v8476
    %v8509 = vmul.f32 %v8477, %v8477
    %v8510 = vmul.f32 %v8478, %v8478
    %v8511 = vmul.f32 %v8479, %v8479
    %v8512 = vmul.f32 %v8480, %v8480
    %v8513 = vmul.f32 %v8481, %v8481
    %v8514 = vmul.f32 %v8482, %v8482
    %v8515 = vmul.f32 %v8483, %v8483
    %v8516 = vmul.f32 %v8484, %v8484
    %v8517 = vmul.f32 %v8485, %v8485
    %v8518 = vmul.f32 %v8486, %v8486
    %v8519 = vmul.f32 %v8487, %v8487
    %v8520 = vmul.f32 %v8488, %v8488
    %v8521 = vmul.f32 %v8489, %v8489
    %v8522 = vmul.f32 %v8490, %v8490
    %v8523 = vmul.f32 %v8491, %v8491
    %v8524 = vmul.f32 %v8492, %v8492
    %v8525 = vmul.f32 %v8493, %v8493
    %v8526 = vmul.f32 %v8494, %v8494
    %v8527 = vmul.f32 %v8495, %v8495
    %v8528 = vmul.f32 %v8496, %v8496
    %v8529 = vmul.f32 %v8497, %v8497
    %v8530 = vmul.f32 %v8498, %v8498
    %v8531 = vmul.f32 %v8499, %v8499
    %v8532 = vmul.f32 %v8500, %v8500
    %v8533 = vmul.f32 %v8501, %v8501
    %v8534 = vmul.f32 %v8502, %v8502
    %v8535 = vmul.f32 %v8503, %v8503
    %v8536 = vmul.f32 %v8504, %v8504
    %v8537 = vmul.f32 %v8505, %v8505
    %v8538 = vmul.f32 %v8506, %v8506
    %v8539 = vadd.f32 %v8507, %v8509
    %v8540 = vadd.f32 %v8539, %v8511
    %v8541 = vadd.f32 %v8540, %v8513
    %v8542 = vadd.f32 %v8541, %v8515
    %v8543 = vadd.f32 %v8542, %v8517
    %v8544 = vadd.f32 %v8543, %v8519
    %v8545 = vadd.f32 %v8544, %v8521
    %v8546 = vadd.f32 %v8545, %v8523
    %v8547 = vadd.f32 %v8546, %v8525
    %v8548 = vadd.f32 %v8547, %v8527
    %v8549 = vadd.f32 %v8548, %v8529
    %v8550 = vadd.f32 %v8549, %v8531
    %v8551 = vadd.f32 %v8550, %v8533
    %v8552 = vadd.f32 %v8551, %v8535
    %v8553 = vadd.f32 %v8552, %v8537
    %v8554 = vrot.slane %v8553, 4
    %v8555 = vadd.f32 %v8553, %v8554
    %v8556 = vrot.slane %v8555, 2
    %v8557 = vadd.f32 %v8555, %v8556
    %v8558 = vrot.slane %v8557, 1
    %v8559 = vadd.f32 %v8557, %v8558
    %v8560 = vadd.f32 %v8508, %v8510
    %v8561 = vadd.f32 %v8560, %v8512
    %v8562 = vadd.f32 %v8561, %v8514
    %v8563 = vadd.f32 %v8562, %v8516
    %v8564 = vadd.f32 %v8563, %v8518
    %v8565 = vadd.f32 %v8564, %v8520
    %v8566 = vadd.f32 %v8565, %v8522
    %v8567 = vadd.f32 %v8566, %v8524
    %v8568 = vadd.f32 %v8567, %v8526
    %v8569 = vadd.f32 %v8568, %v8528
    %v8570 = vadd.f32 %v8569, %v8530
    %v8571 = vadd.f32 %v8570, %v8532
    %v8572 = vadd.f32 %v8571, %v8534
    %v8573 = vadd.f32 %v8572, %v8536
    %v8574 = vadd.f32 %v8573, %v8538
    %v8575 = vrot.slane %v8574, 4
    %v8576 = vadd.f32 %v8574, %v8575
    %v8577 = vrot.slane %v8576, 2
    %v8578 = vadd.f32 %v8576, %v8577
    %v8579 = vrot.slane %v8578, 1
    %v8580 = vadd.f32 %v8578, %v8579
    %v8581 = vmul.f32 %v8559, %v1646
    %v8582 = vmul.f32 %v8580, %v1646
    %v8583 = vadd.f32 %v8581, 1e-05
    %v8584 = vadd.f32 %v8582, 1e-05
    %v8585 = vrsqrt.pop %v8583
    %v8586 = vrsqrt.pop %v8584
    %v8587 = vmul.f32 %v8475, %v8585
    %v8588 = vmul.f32 %v8476, %v8586
    %v8589 = vmul.f32 %v8477, %v8585
    %v8590 = vmul.f32 %v8478, %v8586
    %v8591 = vmul.f32 %v8479, %v8585
    %v8592 = vmul.f32 %v8480, %v8586
    %v8593 = vmul.f32 %v8481, %v8585
    %v8594 = vmul.f32 %v8482, %v8586
    %v8595 = vmul.f32 %v8483, %v8585
    %v8596 = vmul.f32 %v8484, %v8586
    %v8597 = vmul.f32 %v8485, %v8585
    %v8598 = vmul.f32 %v8486, %v8586
    %v8599 = vmul.f32 %v8487, %v8585
    %v8600 = vmul.f32 %v8488, %v8586
    %v8601 = vmul.f32 %v8489, %v8585
    %v8602 = vmul.f32 %v8490, %v8586
    %v8603 = vmul.f32 %v8491, %v8585
    %v8604 = vmul.f32 %v8492, %v8586
    %v8605 = vmul.f32 %v8493, %v8585
    %v8606 = vmul.f32 %v8494, %v8586
    %v8607 = vmul.f32 %v8495, %v8585
    %v8608 = vmul.f32 %v8496, %v8586
    %v8609 = vmul.f32 %v8497, %v8585
    %v8610 = vmul.f32 %v8498, %v8586
    %v8611 = vmul.f32 %v8499, %v8585
    %v8612 = vmul.f32 %v8500, %v8586
    %v8613 = vmul.f32 %v8501, %v8585
    %v8614 = vmul.f32 %v8502, %v8586
    %v8615 = vmul.f32 %v8503, %v8585
    %v8616 = vmul.f32 %v8504, %v8586
    %v8617 = vmul.f32 %v8505, %v8585
    %v8618 = vmul.f32 %v8506, %v8586
    %s8619 = scalar_lea.vmem [#allocation8], 8
    %v8620 = vld [vmem:[%s8619] sm:$0x3]
    %v8622 = vlaneseq
    %v8623 = vshrl.u32 %v8622, 7
    %v8624 = vsub.s32 0, %v8623
    %v8625 = vrot.slane %v8620, %v8624
    %v8626 = vlaneseq
    %v8627 = vshrl.u32 %v8626, 7
    %v8628 = vsub.s32 1, %v8627
    %v8629 = vrot.slane %v8620, %v8628
    %v8632 = vmul.f32 %v8587, %v8625
    %v8633 = vmul.f32 %v8588, %v8629
    %v8634 = vmul.f32 %v8589, %v8625
    %v8635 = vmul.f32 %v8590, %v8629
    %v8636 = vmul.f32 %v8591, %v8625
    %v8637 = vmul.f32 %v8592, %v8629
    %v8638 = vmul.f32 %v8593, %v8625
    %v8639 = vmul.f32 %v8594, %v8629
    %v8640 = vmul.f32 %v8595, %v8625
    %v8641 = vmul.f32 %v8596, %v8629
    %v8642 = vmul.f32 %v8597, %v8625
    %v8643 = vmul.f32 %v8598, %v8629
    %v8644 = vmul.f32 %v8599, %v8625
    %v8645 = vmul.f32 %v8600, %v8629
    %v8646 = vmul.f32 %v8601, %v8625
    %v8647 = vmul.f32 %v8602, %v8629
    %v8648 = vmul.f32 %v8603, %v8625
    %v8649 = vmul.f32 %v8604, %v8629
    %v8650 = vmul.f32 %v8605, %v8625
    %v8651 = vmul.f32 %v8606, %v8629
    %v8652 = vmul.f32 %v8607, %v8625
    %v8653 = vmul.f32 %v8608, %v8629
    %v8654 = vmul.f32 %v8609, %v8625
    %v8655 = vmul.f32 %v8610, %v8629
    %v8656 = vmul.f32 %v8611, %v8625
    %v8657 = vmul.f32 %v8612, %v8629
    %v8658 = vmul.f32 %v8613, %v8625
    %v8659 = vmul.f32 %v8614, %v8629
    %v8660 = vmul.f32 %v8615, %v8625
    %v8661 = vmul.f32 %v8616, %v8629
    %v8662 = vmul.f32 %v8617, %v8625
    %v8663 = vmul.f32 %v8618, %v8629
    %s8664 = scalar_lea.vmem [#allocation10], 8
    %v8665 = vld [vmem:[%s8664] sm:$0x3]
    %v8667 = vlaneseq
    %v8668 = vshrl.u32 %v8667, 7
    %v8669 = vsub.s32 0, %v8668
    %v8670 = vrot.slane %v8665, %v8669
    %v8671 = vlaneseq
    %v8672 = vshrl.u32 %v8671, 7
    %v8673 = vsub.s32 1, %v8672
    %v8674 = vrot.slane %v8665, %v8673
    %v8677 = vadd.f32 %v8632, %v8670
    %v8678 = vadd.f32 %v8633, %v8674
    %v8679 = vadd.f32 %v8634, %v8670
    %v8680 = vadd.f32 %v8635, %v8674
    %v8681 = vadd.f32 %v8636, %v8670
    %v8682 = vadd.f32 %v8637, %v8674
    %v8683 = vadd.f32 %v8638, %v8670
    %v8684 = vadd.f32 %v8639, %v8674
    %v8685 = vadd.f32 %v8640, %v8670
    %v8686 = vadd.f32 %v8641, %v8674
    %v8687 = vadd.f32 %v8642, %v8670
    %v8688 = vadd.f32 %v8643, %v8674
    %v8689 = vadd.f32 %v8644, %v8670
    %v8690 = vadd.f32 %v8645, %v8674
    %v8691 = vadd.f32 %v8646, %v8670
    %v8692 = vadd.f32 %v8647, %v8674
    %v8693 = vadd.f32 %v8648, %v8670
    %v8694 = vadd.f32 %v8649, %v8674
    %v8695 = vadd.f32 %v8650, %v8670
    %v8696 = vadd.f32 %v8651, %v8674
    %v8697 = vadd.f32 %v8652, %v8670
    %v8698 = vadd.f32 %v8653, %v8674
    %v8699 = vadd.f32 %v8654, %v8670
    %v8700 = vadd.f32 %v8655, %v8674
    %v8701 = vadd.f32 %v8656, %v8670
    %v8702 = vadd.f32 %v8657, %v8674
    %v8703 = vadd.f32 %v8658, %v8670
    %v8704 = vadd.f32 %v8659, %v8674
    %v8705 = vadd.f32 %v8660, %v8670
    %v8706 = vadd.f32 %v8661, %v8674
    %v8707 = vadd.f32 %v8662, %v8670
    %v8708 = vadd.f32 %v8663, %v8674
    %vm8709 = vcmp.ge.f32.partialorder %v8677, 0.0
    %vm8710 = vcmp.ge.f32.partialorder %v8678, 0.0
    %vm8711 = vcmp.ge.f32.partialorder %v8679, 0.0
    %vm8712 = vcmp.ge.f32.partialorder %v8680, 0.0
    %vm8713 = vcmp.ge.f32.partialorder %v8681, 0.0
    %vm8714 = vcmp.ge.f32.partialorder %v8682, 0.0
    %vm8715 = vcmp.ge.f32.partialorder %v8683, 0.0
    %vm8716 = vcmp.ge.f32.partialorder %v8684, 0.0
    %vm8717 = vcmp.ge.f32.partialorder %v8685, 0.0
    %vm8718 = vcmp.ge.f32.partialorder %v8686, 0.0
    %vm8719 = vcmp.ge.f32.partialorder %v8687, 0.0
    %vm8720 = vcmp.ge.f32.partialorder %v8688, 0.0
    %vm8721 = vcmp.ge.f32.partialorder %v8689, 0.0
    %vm8722 = vcmp.ge.f32.partialorder %v8690, 0.0
    %vm8723 = vcmp.ge.f32.partialorder %v8691, 0.0
    %vm8724 = vcmp.ge.f32.partialorder %v8692, 0.0
    %vm8725 = vcmp.ge.f32.partialorder %v8693, 0.0
    %vm8726 = vcmp.ge.f32.partialorder %v8694, 0.0
    %vm8727 = vcmp.ge.f32.partialorder %v8695, 0.0
    %vm8728 = vcmp.ge.f32.partialorder %v8696, 0.0
    %vm8729 = vcmp.ge.f32.partialorder %v8697, 0.0
    %vm8730 = vcmp.ge.f32.partialorder %v8698, 0.0
    %vm8731 = vcmp.ge.f32.partialorder %v8699, 0.0
    %vm8732 = vcmp.ge.f32.partialorder %v8700, 0.0
    %vm8733 = vcmp.ge.f32.partialorder %v8701, 0.0
    %vm8734 = vcmp.ge.f32.partialorder %v8702, 0.0
    %vm8735 = vcmp.ge.f32.partialorder %v8703, 0.0
    %vm8736 = vcmp.ge.f32.partialorder %v8704, 0.0
    %vm8737 = vcmp.ge.f32.partialorder %v8705, 0.0
    %vm8738 = vcmp.ge.f32.partialorder %v8706, 0.0
    %vm8739 = vcmp.ge.f32.partialorder %v8707, 0.0
    %vm8740 = vcmp.ge.f32.partialorder %v8708, 0.0
    %v8741 = vmul.f32 %v8677, 0.2
    %v8742 = vmul.f32 %v8678, 0.2
    %v8743 = vmul.f32 %v8679, 0.2
    %v8744 = vmul.f32 %v8680, 0.2
    %v8745 = vmul.f32 %v8681, 0.2
    %v8746 = vmul.f32 %v8682, 0.2
    %v8747 = vmul.f32 %v8683, 0.2
    %v8748 = vmul.f32 %v8684, 0.2
    %v8749 = vmul.f32 %v8685, 0.2
    %v8750 = vmul.f32 %v8686, 0.2
    %v8751 = vmul.f32 %v8687, 0.2
    %v8752 = vmul.f32 %v8688, 0.2
    %v8753 = vmul.f32 %v8689, 0.2
    %v8754 = vmul.f32 %v8690, 0.2
    %v8755 = vmul.f32 %v8691, 0.2
    %v8756 = vmul.f32 %v8692, 0.2
    %v8757 = vmul.f32 %v8693, 0.2
    %v8758 = vmul.f32 %v8694, 0.2
    %v8759 = vmul.f32 %v8695, 0.2
    %v8760 = vmul.f32 %v8696, 0.2
    %v8761 = vmul.f32 %v8697, 0.2
    %v8762 = vmul.f32 %v8698, 0.2
    %v8763 = vmul.f32 %v8699, 0.2
    %v8764 = vmul.f32 %v8700, 0.2
    %v8765 = vmul.f32 %v8701, 0.2
    %v8766 = vmul.f32 %v8702, 0.2
    %v8767 = vmul.f32 %v8703, 0.2
    %v8768 = vmul.f32 %v8704, 0.2
    %v8769 = vmul.f32 %v8705, 0.2
    %v8770 = vmul.f32 %v8706, 0.2
    %v8771 = vmul.f32 %v8707, 0.2
    %v8772 = vmul.f32 %v8708, 0.2
    %v8773 = vsel %vm8709, %v8677, %v8741
    %v8774 = vsel %vm8710, %v8678, %v8742
    %v8775 = vsel %vm8711, %v8679, %v8743
    %v8776 = vsel %vm8712, %v8680, %v8744
    %v8777 = vsel %vm8713, %v8681, %v8745
    %v8778 = vsel %vm8714, %v8682, %v8746
    %v8779 = vsel %vm8715, %v8683, %v8747
    %v8780 = vsel %vm8716, %v8684, %v8748
    %v8781 = vsel %vm8717, %v8685, %v8749
    %v8782 = vsel %vm8718, %v8686, %v8750
    %v8783 = vsel %vm8719, %v8687, %v8751
    %v8784 = vsel %vm8720, %v8688, %v8752
    %v8785 = vsel %vm8721, %v8689, %v8753
    %v8786 = vsel %vm8722, %v8690, %v8754
    %v8787 = vsel %vm8723, %v8691, %v8755
    %v8788 = vsel %vm8724, %v8692, %v8756
    %v8789 = vsel %vm8725, %v8693, %v8757
    %v8790 = vsel %vm8726, %v8694, %v8758
    %v8791 = vsel %vm8727, %v8695, %v8759
    %v8792 = vsel %vm8728, %v8696, %v8760
    %v8793 = vsel %vm8729, %v8697, %v8761
    %v8794 = vsel %vm8730, %v8698, %v8762
    %v8795 = vsel %vm8731, %v8699, %v8763
    %v8796 = vsel %vm8732, %v8700, %v8764
    %v8797 = vsel %vm8733, %v8701, %v8765
    %v8798 = vsel %vm8734, %v8702, %v8766
    %v8799 = vsel %vm8735, %v8703, %v8767
    %v8800 = vsel %vm8736, %v8704, %v8768
    %v8801 = vsel %vm8737, %v8705, %v8769
    %v8802 = vsel %vm8738, %v8706, %v8770
    %v8803 = vsel %vm8739, %v8707, %v8771
    %v8804 = vsel %vm8740, %v8708, %v8772
    %8805 = vst [vmem:[#allocation2] sm:$0xff] %v8773
    %8806 = vst [vmem:[#allocation2 + $0x8] sm:$0xff] %v8774
    %8807 = vst [vmem:[#allocation2 + $0x10] sm:$0xff] %v8775
    %8808 = vst [vmem:[#allocation2 + $0x18] sm:$0xff] %v8776
    %8809 = vst [vmem:[#allocation2 + $0x20] sm:$0xff] %v8777
    %8810 = vst [vmem:[#allocation2 + $0x28] sm:$0xff] %v8778
    %8811 = vst [vmem:[#allocation2 + $0x30] sm:$0xff] %v8779
    %8812 = vst [vmem:[#allocation2 + $0x38] sm:$0xff] %v8780
    %8813 = vst [vmem:[#allocation2 + $0x40] sm:$0xff] %v8781
    %8814 = vst [vmem:[#allocation2 + $0x48] sm:$0xff] %v8782
    %8815 = vst [vmem:[#allocation2 + $0x50] sm:$0xff] %v8783
    %8816 = vst [vmem:[#allocation2 + $0x58] sm:$0xff] %v8784
    %8817 = vst [vmem:[#allocation2 + $0x60] sm:$0xff] %v8785
    %8818 = vst [vmem:[#allocation2 + $0x68] sm:$0xff] %v8786
    %8819 = vst [vmem:[#allocation2 + $0x70] sm:$0xff] %v8787
    %8820 = vst [vmem:[#allocation2 + $0x78] sm:$0xff] %v8788
    %8821 = vst [vmem:[#allocation2 + $0x80] sm:$0xff] %v8789
    %8822 = vst [vmem:[#allocation2 + $0x88] sm:$0xff] %v8790
    %8823 = vst [vmem:[#allocation2 + $0x90] sm:$0xff] %v8791
    %8824 = vst [vmem:[#allocation2 + $0x98] sm:$0xff] %v8792
    %8825 = vst [vmem:[#allocation2 + $0xa0] sm:$0xff] %v8793
    %8826 = vst [vmem:[#allocation2 + $0xa8] sm:$0xff] %v8794
    %8827 = vst [vmem:[#allocation2 + $0xb0] sm:$0xff] %v8795
    %8828 = vst [vmem:[#allocation2 + $0xb8] sm:$0xff] %v8796
    %8829 = vst [vmem:[#allocation2 + $0xc0] sm:$0xff] %v8797
    %8830 = vst [vmem:[#allocation2 + $0xc8] sm:$0xff] %v8798
    %8831 = vst [vmem:[#allocation2 + $0xd0] sm:$0xff] %v8799
    %8832 = vst [vmem:[#allocation2 + $0xd8] sm:$0xff] %v8800
    %8833 = vst [vmem:[#allocation2 + $0xe0] sm:$0xff] %v8801
    %8834 = vst [vmem:[#allocation2 + $0xe8] sm:$0xff] %v8802
    %8835 = vst [vmem:[#allocation2 + $0xf0] sm:$0xff] %v8803
    %8836 = vst [vmem:[#allocation2 + $0xf8] sm:$0xff] %v8804
    %v8837 = vld [vmem:[#allocation2] sm:$0xff]
    %v8838 = vld [vmem:[#allocation2 + $0x8] sm:$0xff]
    %v8839 = vld [vmem:[#allocation2 + $0x10] sm:$0xff]
    %v8840 = vld [vmem:[#allocation2 + $0x18] sm:$0xff]
    %v8841 = vld [vmem:[#allocation2 + $0x20] sm:$0xff]
    %v8842 = vld [vmem:[#allocation2 + $0x28] sm:$0xff]
    %v8843 = vld [vmem:[#allocation2 + $0x30] sm:$0xff]
    %v8844 = vld [vmem:[#allocation2 + $0x38] sm:$0xff]
    %v8845 = vld [vmem:[#allocation2 + $0x40] sm:$0xff]
    %v8846 = vld [vmem:[#allocation2 + $0x48] sm:$0xff]
    %v8847 = vld [vmem:[#allocation2 + $0x50] sm:$0xff]
    %v8848 = vld [vmem:[#allocation2 + $0x58] sm:$0xff]
    %v8849 = vld [vmem:[#allocation2 + $0x60] sm:$0xff]
    %v8850 = vld [vmem:[#allocation2 + $0x68] sm:$0xff]
    %v8851 = vld [vmem:[#allocation2 + $0x70] sm:$0xff]
    %v8852 = vld [vmem:[#allocation2 + $0x78] sm:$0xff]
    %v8853 = vld [vmem:[#allocation2 + $0x80] sm:$0xff]
    %v8854 = vld [vmem:[#allocation2 + $0x88] sm:$0xff]
    %v8855 = vld [vmem:[#allocation2 + $0x90] sm:$0xff]
    %v8856 = vld [vmem:[#allocation2 + $0x98] sm:$0xff]
    %v8857 = vld [vmem:[#allocation2 + $0xa0] sm:$0xff]
    %v8858 = vld [vmem:[#allocation2 + $0xa8] sm:$0xff]
    %v8859 = vld [vmem:[#allocation2 + $0xb0] sm:$0xff]
    %v8860 = vld [vmem:[#allocation2 + $0xb8] sm:$0xff]
    %v8861 = vld [vmem:[#allocation2 + $0xc0] sm:$0xff]
    %v8862 = vld [vmem:[#allocation2 + $0xc8] sm:$0xff]
    %v8863 = vld [vmem:[#allocation2 + $0xd0] sm:$0xff]
    %v8864 = vld [vmem:[#allocation2 + $0xd8] sm:$0xff]
    %v8865 = vld [vmem:[#allocation2 + $0xe0] sm:$0xff]
    %v8866 = vld [vmem:[#allocation2 + $0xe8] sm:$0xff]
    %v8867 = vld [vmem:[#allocation2 + $0xf0] sm:$0xff]
    %v8868 = vld [vmem:[#allocation2 + $0xf8] sm:$0xff]
    %v8869 = vpack.c.bf16 %v8839, %v8837
    %v8870 = vpack.c.bf16 %v8840, %v8838
    %v8871 = vpack.c.bf16 %v8843, %v8841
    %v8872 = vpack.c.bf16 %v8844, %v8842
    %v8873 = vpack.c.bf16 %v8847, %v8845
    %v8874 = vpack.c.bf16 %v8848, %v8846
    %v8875 = vpack.c.bf16 %v8851, %v8849
    %v8876 = vpack.c.bf16 %v8852, %v8850
    %v8877 = vpack.c.bf16 %v8855, %v8853
    %v8878 = vpack.c.bf16 %v8856, %v8854
    %v8879 = vpack.c.bf16 %v8859, %v8857
    %v8880 = vpack.c.bf16 %v8860, %v8858
    %v8881 = vpack.c.bf16 %v8863, %v8861
    %v8882 = vpack.c.bf16 %v8864, %v8862
    %v8883 = vpack.c.bf16 %v8867, %v8865
    %v8884 = vpack.c.bf16 %v8868, %v8866
    %8885 = vmatprep.subr.bf16.mxu0 %v8870
    %8886 = vmatpush1.bf16.msra.mxu0 %v8869
    %8887 = vmatprep.subr.bf16.mxu0 %v8872
    %8888 = vmatpush1.bf16.msra.mxu0 %v8871
    %8889 = vmatprep.subr.bf16.mxu0 %v8874
    %8890 = vmatpush1.bf16.msra.mxu0 %v8873
    %8891 = vmatprep.subr.bf16.mxu0 %v8876
    %8892 = vmatpush1.bf16.msra.mxu0 %v8875
    %8893 = vmatprep.subr.bf16.mxu0 %v8878
    %8894 = vmatpush1.bf16.msra.mxu0 %v8877
    %8895 = vmatprep.subr.bf16.mxu0 %v8880
    %8896 = vmatpush1.bf16.msra.mxu0 %v8879
    %8897 = vmatprep.subr.bf16.mxu0 %v8882
    %8898 = vmatpush1.bf16.msra.mxu0 %v8881
    %8899 = vmatprep.subr.bf16.mxu0 %v8884
    %8900 = vmatpush1.bf16.msra.mxu0 %v8883
    %8901 = vmatprep.subr.bf16.mxu0 0
    %8902 = vmatpush1.bf16.msra.mxu0 0
    %8903 = vmatprep.subr.bf16.mxu0 0
    %8904 = vmatpush1.bf16.msra.mxu0 0
    %8905 = vmatprep.subr.bf16.mxu0 0
    %8906 = vmatpush1.bf16.msra.mxu0 0
    %8907 = vmatprep.subr.bf16.mxu0 0
    %8908 = vmatpush1.bf16.msra.mxu0 0
    %8909 = vmatprep.subr.bf16.mxu0 0
    %8910 = vmatpush1.bf16.msra.mxu0 0
    %8911 = vmatprep.subr.bf16.mxu0 0
    %8912 = vmatpush1.bf16.msra.mxu0 0
    %8913 = vmatprep.subr.bf16.mxu0 0
    %8914 = vmatpush1.bf16.msra.mxu0 0
    %8915 = vmatprep.subr.bf16.mxu0 0
    %8916 = vmatpush1.bf16.msra.mxu0 0
    %8917 = vmatprep.mubr.bf16.mxu0 0
    %8918 = vmatmul.mubr.bf16.gmra.mrb[0].mxu0 %v289
    %v8919 = vpop.f32.mrb[0].mxu0
    %v8920 = vadd.f32 0.0, %v8919
    %v8921 = vpop.f32.mrb[0].mxu0
    %v8922 = vadd.f32 0.0, %v8921
    %v8923 = vpop.f32.mrb[0].mxu0
    %v8924 = vadd.f32 0.0, %v8923
    %v8925 = vpop.f32.mrb[0].mxu0
    %v8926 = vadd.f32 0.0, %v8925
    %8927 = vmatprep.mubr.bf16.mxu0 0
    %8928 = vmatmul.mubr.bf16.gmra.mrb[0].mxu0 %v290
    %v8929 = vpop.f32.mrb[0].mxu0
    %v8930 = vadd.f32 0.0, %v8929
    %v8931 = vpop.f32.mrb[0].mxu0
    %v8932 = vadd.f32 0.0, %v8931
    %v8933 = vpop.f32.mrb[0].mxu0
    %v8934 = vadd.f32 0.0, %v8933
    %v8935 = vpop.f32.mrb[0].mxu0
    %v8936 = vadd.f32 0.0, %v8935
    %8937 = vmatprep.mubr.bf16.mxu0 0
    %8938 = vmatmul.mubr.bf16.gmra.mrb[0].mxu0 %v291
    %v8939 = vpop.f32.mrb[0].mxu0
    %v8940 = vadd.f32 0.0, %v8939
    %v8941 = vpop.f32.mrb[0].mxu0
    %v8942 = vadd.f32 0.0, %v8941
    %v8943 = vpop.f32.mrb[0].mxu0
    %v8944 = vadd.f32 0.0, %v8943
    %v8945 = vpop.f32.mrb[0].mxu0
    %v8946 = vadd.f32 0.0, %v8945
    %8947 = vmatprep.mubr.bf16.mxu0 0
    %8948 = vmatmul.mubr.bf16.gmra.mrb[0].mxu0 %v292
    %v8949 = vpop.f32.mrb[0].mxu0
    %v8950 = vadd.f32 0.0, %v8949
    %v8951 = vpop.f32.mrb[0].mxu0
    %v8952 = vadd.f32 0.0, %v8951
    %v8953 = vpop.f32.mrb[0].mxu0
    %v8954 = vadd.f32 0.0, %v8953
    %v8955 = vpop.f32.mrb[0].mxu0
    %v8956 = vadd.f32 0.0, %v8955
    %8957 = vmatprep.mubr.bf16.mxu0 0
    %8958 = vmatmul.mubr.bf16.gmra.mrb[0].mxu0 %v293
    %v8959 = vpop.f32.mrb[0].mxu0
    %v8960 = vadd.f32 0.0, %v8959
    %v8961 = vpop.f32.mrb[0].mxu0
    %v8962 = vadd.f32 0.0, %v8961
    %v8963 = vpop.f32.mrb[0].mxu0
    %v8964 = vadd.f32 0.0, %v8963
    %v8965 = vpop.f32.mrb[0].mxu0
    %v8966 = vadd.f32 0.0, %v8965
    %8967 = vmatprep.mubr.bf16.mxu0 0
    %8968 = vmatmul.mubr.bf16.gmra.mrb[0].mxu0 %v294
    %v8969 = vpop.f32.mrb[0].mxu0
    %v8970 = vadd.f32 0.0, %v8969
    %v8971 = vpop.f32.mrb[0].mxu0
    %v8972 = vadd.f32 0.0, %v8971
    %v8973 = vpop.f32.mrb[0].mxu0
    %v8974 = vadd.f32 0.0, %v8973
    %v8975 = vpop.f32.mrb[0].mxu0
    %v8976 = vadd.f32 0.0, %v8975
    %8977 = vmatprep.mubr.bf16.mxu0 0
    %8978 = vmatmul.mubr.bf16.gmra.mrb[0].mxu0 %v295
    %v8979 = vpop.f32.mrb[0].mxu0
    %v8980 = vadd.f32 0.0, %v8979
    %v8981 = vpop.f32.mrb[0].mxu0
    %v8982 = vadd.f32 0.0, %v8981
    %v8983 = vpop.f32.mrb[0].mxu0
    %v8984 = vadd.f32 0.0, %v8983
    %v8985 = vpop.f32.mrb[0].mxu0
    %v8986 = vadd.f32 0.0, %v8985
    %8987 = vmatprep.mubr.bf16.mxu0 0
    %8988 = vmatmul.mubr.bf16.gmra.mrb[0].mxu0 %v296
    %v8989 = vpop.f32.mrb[0].mxu0
    %v8990 = vadd.f32 0.0, %v8989
    %v8991 = vpop.f32.mrb[0].mxu0
    %v8992 = vadd.f32 0.0, %v8991
    %v8993 = vpop.f32.mrb[0].mxu0
    %v8994 = vadd.f32 0.0, %v8993
    %v8995 = vpop.f32.mrb[0].mxu0
    %v8996 = vadd.f32 0.0, %v8995
    %8997 = vdwg.mxu0
    %v8998 = vpack.c.bf16 %v8924, %v8920
    %v8999 = vpack.c.bf16 %v8926, %v8922
    %v9000 = vpack.c.bf16 %v8934, %v8930
    %v9001 = vpack.c.bf16 %v8936, %v8932
    %v9002 = vpack.c.bf16 %v8944, %v8940
    %v9003 = vpack.c.bf16 %v8946, %v8942
    %v9004 = vpack.c.bf16 %v8954, %v8950
    %v9005 = vpack.c.bf16 %v8956, %v8952
    %v9006 = vpack.c.bf16 %v8964, %v8960
    %v9007 = vpack.c.bf16 %v8966, %v8962
    %v9008 = vpack.c.bf16 %v8974, %v8970
    %v9009 = vpack.c.bf16 %v8976, %v8972
    %v9010 = vpack.c.bf16 %v8984, %v8980
    %v9011 = vpack.c.bf16 %v8986, %v8982
    %v9012 = vpack.c.bf16 %v8994, %v8990
    %v9013 = vpack.c.bf16 %v8996, %v8992
    %9014 = vmatprep.subr.bf16.mxu0 %v8870
    %9015 = vmatpush1.bf16.msra.mxu0 %v8869
    %9016 = vmatprep.subr.bf16.mxu0 %v8872
    %9017 = vmatpush1.bf16.msra.mxu0 %v8871
    %9018 = vmatprep.subr.bf16.mxu0 %v8874
    %9019 = vmatpush1.bf16.msra.mxu0 %v8873
    %9020 = vmatprep.subr.bf16.mxu0 %v8876
    %9021 = vmatpush1.bf16.msra.mxu0 %v8875
    %9022 = vmatprep.subr.bf16.mxu0 %v8878
    %9023 = vmatpush1.bf16.msra.mxu0 %v8877
    %9024 = vmatprep.subr.bf16.mxu0 %v8880
    %9025 = vmatpush1.bf16.msra.mxu0 %v8879
    %9026 = vmatprep.subr.bf16.mxu0 %v8882
    %9027 = vmatpush1.bf16.msra.mxu0 %v8881
    %9028 = vmatprep.subr.bf16.mxu0 %v8884
    %9029 = vmatpush1.bf16.msra.mxu0 %v8883
    %9030 = vmatprep.subr.bf16.mxu0 0
    %9031 = vmatpush1.bf16.msra.mxu0 0
    %9032 = vmatprep.subr.bf16.mxu0 0
    %9033 = vmatpush1.bf16.msra.mxu0 0
    %9034 = vmatprep.subr.bf16.mxu0 0
    %9035 = vmatpush1.bf16.msra.mxu0 0
    %9036 = vmatprep.subr.bf16.mxu0 0
    %9037 = vmatpush1.bf16.msra.mxu0 0
    %9038 = vmatprep.subr.bf16.mxu0 0
    %9039 = vmatpush1.bf16.msra.mxu0 0
    %9040 = vmatprep.subr.bf16.mxu0 0
    %9041 = vmatpush1.bf16.msra.mxu0 0
    %9042 = vmatprep.subr.bf16.mxu0 0
    %9043 = vmatpush1.bf16.msra.mxu0 0
    %9044 = vmatprep.subr.bf16.mxu0 0
    %9045 = vmatpush1.bf16.msra.mxu0 0
    %9046 = vmatprep.mubr.bf16.mxu0 0
    %9047 = vmatmul.mubr.bf16.gmra.mrb[0].mxu0 %v466
    %v9048 = vpop.f32.mrb[0].mxu0
    %v9049 = vadd.f32 0.0, %v9048
    %v9050 = vpop.f32.mrb[0].mxu0
    %v9051 = vadd.f32 0.0, %v9050
    %v9052 = vpop.f32.mrb[0].mxu0
    %v9053 = vadd.f32 0.0, %v9052
    %v9054 = vpop.f32.mrb[0].mxu0
    %v9055 = vadd.f32 0.0, %v9054
    %9056 = vmatprep.mubr.bf16.mxu0 0
    %9057 = vmatmul.mubr.bf16.gmra.mrb[0].mxu0 %v467
    %v9058 = vpop.f32.mrb[0].mxu0
    %v9059 = vadd.f32 0.0, %v9058
    %v9060 = vpop.f32.mrb[0].mxu0
    %v9061 = vadd.f32 0.0, %v9060
    %v9062 = vpop.f32.mrb[0].mxu0
    %v9063 = vadd.f32 0.0, %v9062
    %v9064 = vpop.f32.mrb[0].mxu0
    %v9065 = vadd.f32 0.0, %v9064
    %9066 = vmatprep.mubr.bf16.mxu0 0
    %9067 = vmatmul.mubr.bf16.gmra.mrb[0].mxu0 %v468
    %v9068 = vpop.f32.mrb[0].mxu0
    %v9069 = vadd.f32 0.0, %v9068
    %v9070 = vpop.f32.mrb[0].mxu0
    %v9071 = vadd.f32 0.0, %v9070
    %v9072 = vpop.f32.mrb[0].mxu0
    %v9073 = vadd.f32 0.0, %v9072
    %v9074 = vpop.f32.mrb[0].mxu0
    %v9075 = vadd.f32 0.0, %v9074
    %9076 = vmatprep.mubr.bf16.mxu0 0
    %9077 = vmatmul.mubr.bf16.gmra.mrb[0].mxu0 %v469
    %v9078 = vpop.f32.mrb[0].mxu0
    %v9079 = vadd.f32 0.0, %v9078
    %v9080 = vpop.f32.mrb[0].mxu0
    %v9081 = vadd.f32 0.0, %v9080
    %v9082 = vpop.f32.mrb[0].mxu0
    %v9083 = vadd.f32 0.0, %v9082
    %v9084 = vpop.f32.mrb[0].mxu0
    %v9085 = vadd.f32 0.0, %v9084
    %9086 = vmatprep.mubr.bf16.mxu0 0
    %9087 = vmatmul.mubr.bf16.gmra.mrb[0].mxu0 %v470
    %v9088 = vpop.f32.mrb[0].mxu0
    %v9089 = vadd.f32 0.0, %v9088
    %v9090 = vpop.f32.mrb[0].mxu0
    %v9091 = vadd.f32 0.0, %v9090
    %v9092 = vpop.f32.mrb[0].mxu0
    %v9093 = vadd.f32 0.0, %v9092
    %v9094 = vpop.f32.mrb[0].mxu0
    %v9095 = vadd.f32 0.0, %v9094
    %9096 = vmatprep.mubr.bf16.mxu0 0
    %9097 = vmatmul.mubr.bf16.gmra.mrb[0].mxu0 %v471
    %v9098 = vpop.f32.mrb[0].mxu0
    %v9099 = vadd.f32 0.0, %v9098
    %v9100 = vpop.f32.mrb[0].mxu0
    %v9101 = vadd.f32 0.0, %v9100
    %v9102 = vpop.f32.mrb[0].mxu0
    %v9103 = vadd.f32 0.0, %v9102
    %v9104 = vpop.f32.mrb[0].mxu0
    %v9105 = vadd.f32 0.0, %v9104
    %9106 = vmatprep.mubr.bf16.mxu0 0
    %9107 = vmatmul.mubr.bf16.gmra.mrb[0].mxu0 %v472
    %v9108 = vpop.f32.mrb[0].mxu0
    %v9109 = vadd.f32 0.0, %v9108
    %v9110 = vpop.f32.mrb[0].mxu0
    %v9111 = vadd.f32 0.0, %v9110
    %v9112 = vpop.f32.mrb[0].mxu0
    %v9113 = vadd.f32 0.0, %v9112
    %v9114 = vpop.f32.mrb[0].mxu0
    %v9115 = vadd.f32 0.0, %v9114
    %9116 = vmatprep.mubr.bf16.mxu0 0
    %9117 = vmatmul.mubr.bf16.gmra.mrb[0].mxu0 %v473
    %v9118 = vpop.f32.mrb[0].mxu0
    %v9119 = vadd.f32 0.0, %v9118
    %v9120 = vpop.f32.mrb[0].mxu0
    %v9121 = vadd.f32 0.0, %v9120
    %v9122 = vpop.f32.mrb[0].mxu0
    %v9123 = vadd.f32 0.0, %v9122
    %v9124 = vpop.f32.mrb[0].mxu0
    %v9125 = vadd.f32 0.0, %v9124
    %9126 = vdwg.mxu0
    %v9127 = vpack.c.bf16 %v9053, %v9049
    %v9128 = vpack.c.bf16 %v9055, %v9051
    %v9129 = vpack.c.bf16 %v9063, %v9059
    %v9130 = vpack.c.bf16 %v9065, %v9061
    %v9131 = vpack.c.bf16 %v9073, %v9069
    %v9132 = vpack.c.bf16 %v9075, %v9071
    %v9133 = vpack.c.bf16 %v9083, %v9079
    %v9134 = vpack.c.bf16 %v9085, %v9081
    %v9135 = vpack.c.bf16 %v9093, %v9089
    %v9136 = vpack.c.bf16 %v9095, %v9091
    %v9137 = vpack.c.bf16 %v9103, %v9099
    %v9138 = vpack.c.bf16 %v9105, %v9101
    %v9139 = vpack.c.bf16 %v9113, %v9109
    %v9140 = vpack.c.bf16 %v9115, %v9111
    %v9141 = vpack.c.bf16 %v9123, %v9119
    %v9142 = vpack.c.bf16 %v9125, %v9121
    %s9143 = scalar_lea.vmem [#allocation5], 3840
    %v9144 = vld [vmem:[%s9143] sm:$0xff]
    %v9145 = vld [vmem:[%s9143 + $0x8] sm:$0xff]
    %v9146 = vld [vmem:[%s9143 + $0x10] sm:$0xff]
    %v9147 = vld [vmem:[%s9143 + $0x18] sm:$0xff]
    %v9148 = vld [vmem:[%s9143 + $0x20] sm:$0xff]
    %v9149 = vld [vmem:[%s9143 + $0x28] sm:$0xff]
    %v9150 = vld [vmem:[%s9143 + $0x30] sm:$0xff]
    %v9151 = vld [vmem:[%s9143 + $0x38] sm:$0xff]
    %v9152 = vld [vmem:[%s9143 + $0x40] sm:$0xff]
    %v9153 = vld [vmem:[%s9143 + $0x48] sm:$0xff]
    %v9154 = vld [vmem:[%s9143 + $0x50] sm:$0xff]
    %v9155 = vld [vmem:[%s9143 + $0x58] sm:$0xff]
    %v9156 = vld [vmem:[%s9143 + $0x60] sm:$0xff]
    %v9157 = vld [vmem:[%s9143 + $0x68] sm:$0xff]
    %v9158 = vld [vmem:[%s9143 + $0x70] sm:$0xff]
    %v9159 = vld [vmem:[%s9143 + $0x78] sm:$0xff]
    %v9160 = vld [vmem:[%s9143 + $0x80] sm:$0xff]
    %v9161 = vld [vmem:[%s9143 + $0x88] sm:$0xff]
    %v9162 = vld [vmem:[%s9143 + $0x90] sm:$0xff]
    %v9163 = vld [vmem:[%s9143 + $0x98] sm:$0xff]
    %v9164 = vld [vmem:[%s9143 + $0xa0] sm:$0xff]
    %v9165 = vld [vmem:[%s9143 + $0xa8] sm:$0xff]
    %v9166 = vld [vmem:[%s9143 + $0xb0] sm:$0xff]
    %v9167 = vld [vmem:[%s9143 + $0xb8] sm:$0xff]
    %v9168 = vld [vmem:[%s9143 + $0xc0] sm:$0xff]
    %v9169 = vld [vmem:[%s9143 + $0xc8] sm:$0xff]
    %v9170 = vld [vmem:[%s9143 + $0xd0] sm:$0xff]
    %v9171 = vld [vmem:[%s9143 + $0xd8] sm:$0xff]
    %v9172 = vld [vmem:[%s9143 + $0xe0] sm:$0xff]
    %v9173 = vld [vmem:[%s9143 + $0xe8] sm:$0xff]
    %v9174 = vld [vmem:[%s9143 + $0xf0] sm:$0xff]
    %v9175 = vld [vmem:[%s9143 + $0xf8] sm:$0xff]
    %s9176 = scalar_lea.vmem [#allocation5], 4096
    %v9177 = vld [vmem:[%s9176] sm:$0xff]
    %v9178 = vld [vmem:[%s9176 + $0x8] sm:$0xff]
    %v9179 = vld [vmem:[%s9176 + $0x10] sm:$0xff]
    %v9180 = vld [vmem:[%s9176 + $0x18] sm:$0xff]
    %v9181 = vld [vmem:[%s9176 + $0x20] sm:$0xff]
    %v9182 = vld [vmem:[%s9176 + $0x28] sm:$0xff]
    %v9183 = vld [vmem:[%s9176 + $0x30] sm:$0xff]
    %v9184 = vld [vmem:[%s9176 + $0x38] sm:$0xff]
    %v9185 = vld [vmem:[%s9176 + $0x40] sm:$0xff]
    %v9186 = vld [vmem:[%s9176 + $0x48] sm:$0xff]
    %v9187 = vld [vmem:[%s9176 + $0x50] sm:$0xff]
    %v9188 = vld [vmem:[%s9176 + $0x58] sm:$0xff]
    %v9189 = vld [vmem:[%s9176 + $0x60] sm:$0xff]
    %v9190 = vld [vmem:[%s9176 + $0x68] sm:$0xff]
    %v9191 = vld [vmem:[%s9176 + $0x70] sm:$0xff]
    %v9192 = vld [vmem:[%s9176 + $0x78] sm:$0xff]
    %v9193 = vld [vmem:[%s9176 + $0x80] sm:$0xff]
    %v9194 = vld [vmem:[%s9176 + $0x88] sm:$0xff]
    %v9195 = vld [vmem:[%s9176 + $0x90] sm:$0xff]
    %v9196 = vld [vmem:[%s9176 + $0x98] sm:$0xff]
    %v9197 = vld [vmem:[%s9176 + $0xa0] sm:$0xff]
    %v9198 = vld [vmem:[%s9176 + $0xa8] sm:$0xff]
    %v9199 = vld [vmem:[%s9176 + $0xb0] sm:$0xff]
    %v9200 = vld [vmem:[%s9176 + $0xb8] sm:$0xff]
    %v9201 = vld [vmem:[%s9176 + $0xc0] sm:$0xff]
    %v9202 = vld [vmem:[%s9176 + $0xc8] sm:$0xff]
    %v9203 = vld [vmem:[%s9176 + $0xd0] sm:$0xff]
    %v9204 = vld [vmem:[%s9176 + $0xd8] sm:$0xff]
    %v9205 = vld [vmem:[%s9176 + $0xe0] sm:$0xff]
    %v9206 = vld [vmem:[%s9176 + $0xe8] sm:$0xff]
    %v9207 = vld [vmem:[%s9176 + $0xf0] sm:$0xff]
    %v9208 = vld [vmem:[%s9176 + $0xf8] sm:$0xff]
    %v9241 = vunpack.c.l.b16 %v9177
    %v9242 = vunpack.c.h.b16 %v9177
    %v9243 = vunpack.c.l.b16 %v9178
    %v9244 = vunpack.c.h.b16 %v9178
    %v9245 = vunpack.c.l.b16 %v9179
    %v9246 = vunpack.c.h.b16 %v9179
    %v9247 = vunpack.c.l.b16 %v9180
    %v9248 = vunpack.c.h.b16 %v9180
    %v9249 = vunpack.c.l.b16 %v9181
    %v9250 = vunpack.c.h.b16 %v9181
    %v9251 = vunpack.c.l.b16 %v9182
    %v9252 = vunpack.c.h.b16 %v9182
    %v9253 = vunpack.c.l.b16 %v9183
    %v9254 = vunpack.c.h.b16 %v9183
    %v9255 = vunpack.c.l.b16 %v9184
    %v9256 = vunpack.c.h.b16 %v9184
    %v9257 = vunpack.c.l.b16 %v9185
    %v9258 = vunpack.c.h.b16 %v9185
    %v9259 = vunpack.c.l.b16 %v9186
    %v9260 = vunpack.c.h.b16 %v9186
    %v9261 = vunpack.c.l.b16 %v9187
    %v9262 = vunpack.c.h.b16 %v9187
    %v9263 = vunpack.c.l.b16 %v9188
    %v9264 = vunpack.c.h.b16 %v9188
    %v9265 = vunpack.c.l.b16 %v9189
    %v9266 = vunpack.c.h.b16 %v9189
    %v9267 = vunpack.c.l.b16 %v9190
    %v9268 = vunpack.c.h.b16 %v9190
    %v9269 = vunpack.c.l.b16 %v9191
    %v9270 = vunpack.c.h.b16 %v9191
    %v9271 = vunpack.c.l.b16 %v9192
    %v9272 = vunpack.c.h.b16 %v9192
    %v9273 = vunpack.c.l.b16 %v9193
    %v9274 = vunpack.c.h.b16 %v9193
    %v9275 = vunpack.c.l.b16 %v9194
    %v9276 = vunpack.c.h.b16 %v9194
    %v9277 = vunpack.c.l.b16 %v9195
    %v9278 = vunpack.c.h.b16 %v9195
    %v9279 = vunpack.c.l.b16 %v9196
    %v9280 = vunpack.c.h.b16 %v9196
    %v9281 = vunpack.c.l.b16 %v9197
    %v9282 = vunpack.c.h.b16 %v9197
    %v9283 = vunpack.c.l.b16 %v9198
    %v9284 = vunpack.c.h.b16 %v9198
    %v9285 = vunpack.c.l.b16 %v9199
    %v9286 = vunpack.c.h.b16 %v9199
    %v9287 = vunpack.c.l.b16 %v9200
    %v9288 = vunpack.c.h.b16 %v9200
    %v9289 = vunpack.c.l.b16 %v9201
    %v9290 = vunpack.c.h.b16 %v9201
    %v9291 = vunpack.c.l.b16 %v9202
    %v9292 = vunpack.c.h.b16 %v9202
    %v9293 = vunpack.c.l.b16 %v9203
    %v9294 = vunpack.c.h.b16 %v9203
    %v9295 = vunpack.c.l.b16 %v9204
    %v9296 = vunpack.c.h.b16 %v9204
    %v9297 = vunpack.c.l.b16 %v9205
    %v9298 = vunpack.c.h.b16 %v9205
    %v9299 = vunpack.c.l.b16 %v9206
    %v9300 = vunpack.c.h.b16 %v9206
    %v9301 = vunpack.c.l.b16 %v9207
    %v9302 = vunpack.c.h.b16 %v9207
    %v9303 = vunpack.c.l.b16 %v9208
    %v9304 = vunpack.c.h.b16 %v9208
    %v9305 = vpack.c.b16 %v9243, %v9241
    %v9306 = vpack.c.b16 %v9244, %v9242
    %v9307 = vpack.c.b16 %v9247, %v9245
    %v9308 = vpack.c.b16 %v9248, %v9246
    %v9309 = vpack.c.b16 %v9251, %v9249
    %v9310 = vpack.c.b16 %v9252, %v9250
    %v9311 = vpack.c.b16 %v9255, %v9253
    %v9312 = vpack.c.b16 %v9256, %v9254
    %v9313 = vpack.c.b16 %v9259, %v9257
    %v9314 = vpack.c.b16 %v9260, %v9258
    %v9315 = vpack.c.b16 %v9263, %v9261
    %v9316 = vpack.c.b16 %v9264, %v9262
    %v9317 = vpack.c.b16 %v9267, %v9265
    %v9318 = vpack.c.b16 %v9268, %v9266
    %v9319 = vpack.c.b16 %v9271, %v9269
    %v9320 = vpack.c.b16 %v9272, %v9270
    %v9321 = vpack.c.b16 %v9275, %v9273
    %v9322 = vpack.c.b16 %v9276, %v9274
    %v9323 = vpack.c.b16 %v9279, %v9277
    %v9324 = vpack.c.b16 %v9280, %v9278
    %v9325 = vpack.c.b16 %v9283, %v9281
    %v9326 = vpack.c.b16 %v9284, %v9282
    %v9327 = vpack.c.b16 %v9287, %v9285
    %v9328 = vpack.c.b16 %v9288, %v9286
    %v9329 = vpack.c.b16 %v9291, %v9289
    %v9330 = vpack.c.b16 %v9292, %v9290
    %v9331 = vpack.c.b16 %v9295, %v9293
    %v9332 = vpack.c.b16 %v9296, %v9294
    %v9333 = vpack.c.b16 %v9299, %v9297
    %v9334 = vpack.c.b16 %v9300, %v9298
    %v9335 = vpack.c.b16 %v9303, %v9301
    %v9336 = vpack.c.b16 %v9304, %v9302
    %9369 = vmatprep.subr.bf16.mxu0 %v9306
    %9370 = vmatpush1.bf16.msra.mxu0 %v9305
    %9371 = vmatprep.subr.bf16.mxu0 %v9308
    %9372 = vmatpush1.bf16.msra.mxu0 %v9307
    %9373 = vmatprep.subr.bf16.mxu0 %v9310
    %9374 = vmatpush1.bf16.msra.mxu0 %v9309
    %9375 = vmatprep.subr.bf16.mxu0 %v9312
    %9376 = vmatpush1.bf16.msra.mxu0 %v9311
    %9377 = vmatprep.subr.bf16.mxu0 %v9314
    %9378 = vmatpush1.bf16.msra.mxu0 %v9313
    %9379 = vmatprep.subr.bf16.mxu0 %v9316
    %9380 = vmatpush1.bf16.msra.mxu0 %v9315
    %9381 = vmatprep.subr.bf16.mxu0 %v9318
    %9382 = vmatpush1.bf16.msra.mxu0 %v9317
    %9383 = vmatprep.subr.bf16.mxu0 %v9320
    %9384 = vmatpush1.bf16.msra.mxu0 %v9319
    %9385 = vmatprep.subr.bf16.mxu0 %v9322
    %9386 = vmatpush1.bf16.msra.mxu0 %v9321
    %9387 = vmatprep.subr.bf16.mxu0 %v9324
    %9388 = vmatpush1.bf16.msra.mxu0 %v9323
    %9389 = vmatprep.subr.bf16.mxu0 %v9326
    %9390 = vmatpush1.bf16.msra.mxu0 %v9325
    %9391 = vmatprep.subr.bf16.mxu0 %v9328
    %9392 = vmatpush1.bf16.msra.mxu0 %v9327
    %9393 = vmatprep.subr.bf16.mxu0 %v9330
    %9394 = vmatpush1.bf16.msra.mxu0 %v9329
    %9395 = vmatprep.subr.bf16.mxu0 %v9332
    %9396 = vmatpush1.bf16.msra.mxu0 %v9331
    %9397 = vmatprep.subr.bf16.mxu0 %v9334
    %9398 = vmatpush1.bf16.msra.mxu0 %v9333
    %9399 = vmatprep.subr.bf16.mxu0 %v9336
    %9400 = vmatpush1.bf16.msra.mxu0 %v9335
    %9401 = vmatprep.mubr.bf16.mxu0 %v8870
    %9402 = vmatmul.mubr.bf16.gmra.mrb[0].mxu0 %v8869
    %v9403 = vpop.f32.mrb[0].mxu0
    %v9404 = vadd.f32 0.0, %v9403
    %v9405 = vpop.f32.mrb[0].mxu0
    %v9406 = vadd.f32 0.0, %v9405
    %v9407 = vpop.f32.mrb[0].mxu0
    %v9408 = vadd.f32 0.0, %v9407
    %v9409 = vpop.f32.mrb[0].mxu0
    %v9410 = vadd.f32 0.0, %v9409
    %9411 = vmatprep.mubr.bf16.mxu0 %v8872
    %9412 = vmatmul.mubr.bf16.gmra.mrb[0].mxu0 %v8871
    %v9413 = vpop.f32.mrb[0].mxu0
    %v9414 = vadd.f32 0.0, %v9413
    %v9415 = vpop.f32.mrb[0].mxu0
    %v9416 = vadd.f32 0.0, %v9415
    %v9417 = vpop.f32.mrb[0].mxu0
    %v9418 = vadd.f32 0.0, %v9417
    %v9419 = vpop.f32.mrb[0].mxu0
    %v9420 = vadd.f32 0.0, %v9419
    %9421 = vmatprep.mubr.bf16.mxu0 %v8874
    %9422 = vmatmul.mubr.bf16.gmra.mrb[0].mxu0 %v8873
    %v9423 = vpop.f32.mrb[0].mxu0
    %v9424 = vadd.f32 0.0, %v9423
    %v9425 = vpop.f32.mrb[0].mxu0
    %v9426 = vadd.f32 0.0, %v9425
    %v9427 = vpop.f32.mrb[0].mxu0
    %v9428 = vadd.f32 0.0, %v9427
    %v9429 = vpop.f32.mrb[0].mxu0
    %v9430 = vadd.f32 0.0, %v9429
    %9431 = vmatprep.mubr.bf16.mxu0 %v8876
    %9432 = vmatmul.mubr.bf16.gmra.mrb[0].mxu0 %v8875
    %v9433 = vpop.f32.mrb[0].mxu0
    %v9434 = vadd.f32 0.0, %v9433
    %v9435 = vpop.f32.mrb[0].mxu0
    %v9436 = vadd.f32 0.0, %v9435
    %v9437 = vpop.f32.mrb[0].mxu0
    %v9438 = vadd.f32 0.0, %v9437
    %v9439 = vpop.f32.mrb[0].mxu0
    %v9440 = vadd.f32 0.0, %v9439
    %9441 = vmatprep.mubr.bf16.mxu0 %v8878
    %9442 = vmatmul.mubr.bf16.gmra.mrb[0].mxu0 %v8877
    %v9443 = vpop.f32.mrb[0].mxu0
    %v9444 = vadd.f32 0.0, %v9443
    %v9445 = vpop.f32.mrb[0].mxu0
    %v9446 = vadd.f32 0.0, %v9445
    %v9447 = vpop.f32.mrb[0].mxu0
    %v9448 = vadd.f32 0.0, %v9447
    %v9449 = vpop.f32.mrb[0].mxu0
    %v9450 = vadd.f32 0.0, %v9449
    %9451 = vmatprep.mubr.bf16.mxu0 %v8880
    %9452 = vmatmul.mubr.bf16.gmra.mrb[0].mxu0 %v8879
    %v9453 = vpop.f32.mrb[0].mxu0
    %v9454 = vadd.f32 0.0, %v9453
    %v9455 = vpop.f32.mrb[0].mxu0
    %v9456 = vadd.f32 0.0, %v9455
    %v9457 = vpop.f32.mrb[0].mxu0
    %v9458 = vadd.f32 0.0, %v9457
    %v9459 = vpop.f32.mrb[0].mxu0
    %v9460 = vadd.f32 0.0, %v9459
    %9461 = vmatprep.mubr.bf16.mxu0 %v8882
    %9462 = vmatmul.mubr.bf16.gmra.mrb[0].mxu0 %v8881
    %v9463 = vpop.f32.mrb[0].mxu0
    %v9464 = vadd.f32 0.0, %v9463
    %v9465 = vpop.f32.mrb[0].mxu0
    %v9466 = vadd.f32 0.0, %v9465
    %v9467 = vpop.f32.mrb[0].mxu0
    %v9468 = vadd.f32 0.0, %v9467
    %v9469 = vpop.f32.mrb[0].mxu0
    %v9470 = vadd.f32 0.0, %v9469
    %9471 = vmatprep.mubr.bf16.mxu0 %v8884
    %9472 = vmatmul.mubr.bf16.gmra.mrb[0].mxu0 %v8883
    %v9473 = vpop.f32.mrb[0].mxu0
    %v9474 = vadd.f32 0.0, %v9473
    %v9475 = vpop.f32.mrb[0].mxu0
    %v9476 = vadd.f32 0.0, %v9475
    %v9477 = vpop.f32.mrb[0].mxu0
    %v9478 = vadd.f32 0.0, %v9477
    %v9479 = vpop.f32.mrb[0].mxu0
    %v9480 = vadd.f32 0.0, %v9479
    %9481 = vdwg.mxu0
    %v9514 = vunpack.c.l.b16 %v9144
    %v9515 = vunpack.c.h.b16 %v9144
    %v9516 = vunpack.c.l.b16 %v9145
    %v9517 = vunpack.c.h.b16 %v9145
    %v9518 = vunpack.c.l.b16 %v9146
    %v9519 = vunpack.c.h.b16 %v9146
    %v9520 = vunpack.c.l.b16 %v9147
    %v9521 = vunpack.c.h.b16 %v9147
    %v9522 = vunpack.c.l.b16 %v9148
    %v9523 = vunpack.c.h.b16 %v9148
    %v9524 = vunpack.c.l.b16 %v9149
    %v9525 = vunpack.c.h.b16 %v9149
    %v9526 = vunpack.c.l.b16 %v9150
    %v9527 = vunpack.c.h.b16 %v9150
    %v9528 = vunpack.c.l.b16 %v9151
    %v9529 = vunpack.c.h.b16 %v9151
    %v9530 = vunpack.c.l.b16 %v9152
    %v9531 = vunpack.c.h.b16 %v9152
    %v9532 = vunpack.c.l.b16 %v9153
    %v9533 = vunpack.c.h.b16 %v9153
    %v9534 = vunpack.c.l.b16 %v9154
    %v9535 = vunpack.c.h.b16 %v9154
    %v9536 = vunpack.c.l.b16 %v9155
    %v9537 = vunpack.c.h.b16 %v9155
    %v9538 = vunpack.c.l.b16 %v9156
    %v9539 = vunpack.c.h.b16 %v9156
    %v9540 = vunpack.c.l.b16 %v9157
    %v9541 = vunpack.c.h.b16 %v9157
    %v9542 = vunpack.c.l.b16 %v9158
    %v9543 = vunpack.c.h.b16 %v9158
    %v9544 = vunpack.c.l.b16 %v9159
    %v9545 = vunpack.c.h.b16 %v9159
    %v9546 = vunpack.c.l.b16 %v9160
    %v9547 = vunpack.c.h.b16 %v9160
    %v9548 = vunpack.c.l.b16 %v9161
    %v9549 = vunpack.c.h.b16 %v9161
    %v9550 = vunpack.c.l.b16 %v9162
    %v9551 = vunpack.c.h.b16 %v9162
    %v9552 = vunpack.c.l.b16 %v9163
    %v9553 = vunpack.c.h.b16 %v9163
    %v9554 = vunpack.c.l.b16 %v9164
    %v9555 = vunpack.c.h.b16 %v9164
    %v9556 = vunpack.c.l.b16 %v9165
    %v9557 = vunpack.c.h.b16 %v9165
    %v9558 = vunpack.c.l.b16 %v9166
    %v9559 = vunpack.c.h.b16 %v9166
    %v9560 = vunpack.c.l.b16 %v9167
    %v9561 = vunpack.c.h.b16 %v9167
    %v9562 = vunpack.c.l.b16 %v9168
    %v9563 = vunpack.c.h.b16 %v9168
    %v9564 = vunpack.c.l.b16 %v9169
    %v9565 = vunpack.c.h.b16 %v9169
    %v9566 = vunpack.c.l.b16 %v9170
    %v9567 = vunpack.c.h.b16 %v9170
    %v9568 = vunpack.c.l.b16 %v9171
    %v9569 = vunpack.c.h.b16 %v9171
    %v9570 = vunpack.c.l.b16 %v9172
    %v9571 = vunpack.c.h.b16 %v9172
    %v9572 = vunpack.c.l.b16 %v9173
    %v9573 = vunpack.c.h.b16 %v9173
    %v9574 = vunpack.c.l.b16 %v9174
    %v9575 = vunpack.c.h.b16 %v9174
    %v9576 = vunpack.c.l.b16 %v9175
    %v9577 = vunpack.c.h.b16 %v9175
    %v9578 = vpack.c.b16 %v9516, %v9514
    %v9579 = vpack.c.b16 %v9517, %v9515
    %v9580 = vpack.c.b16 %v9520, %v9518
    %v9581 = vpack.c.b16 %v9521, %v9519
    %v9582 = vpack.c.b16 %v9524, %v9522
    %v9583 = vpack.c.b16 %v9525, %v9523
    %v9584 = vpack.c.b16 %v9528, %v9526
    %v9585 = vpack.c.b16 %v9529, %v9527
    %v9586 = vpack.c.b16 %v9532, %v9530
    %v9587 = vpack.c.b16 %v9533, %v9531
    %v9588 = vpack.c.b16 %v9536, %v9534
    %v9589 = vpack.c.b16 %v9537, %v9535
    %v9590 = vpack.c.b16 %v9540, %v9538
    %v9591 = vpack.c.b16 %v9541, %v9539
    %v9592 = vpack.c.b16 %v9544, %v9542
    %v9593 = vpack.c.b16 %v9545, %v9543
    %v9594 = vpack.c.b16 %v9548, %v9546
    %v9595 = vpack.c.b16 %v9549, %v9547
    %v9596 = vpack.c.b16 %v9552, %v9550
    %v9597 = vpack.c.b16 %v9553, %v9551
    %v9598 = vpack.c.b16 %v9556, %v9554
    %v9599 = vpack.c.b16 %v9557, %v9555
    %v9600 = vpack.c.b16 %v9560, %v9558
    %v9601 = vpack.c.b16 %v9561, %v9559
    %v9602 = vpack.c.b16 %v9564, %v9562
    %v9603 = vpack.c.b16 %v9565, %v9563
    %v9604 = vpack.c.b16 %v9568, %v9566
    %v9605 = vpack.c.b16 %v9569, %v9567
    %v9606 = vpack.c.b16 %v9572, %v9570
    %v9607 = vpack.c.b16 %v9573, %v9571
    %v9608 = vpack.c.b16 %v9576, %v9574
    %v9609 = vpack.c.b16 %v9577, %v9575
    %9642 = vmatprep.subr.bf16.mxu0 %v9579
    %9643 = vmatpush1.bf16.msra.mxu0 %v9578
    %9644 = vmatprep.subr.bf16.mxu0 %v9581
    %9645 = vmatpush1.bf16.msra.mxu0 %v9580
    %9646 = vmatprep.subr.bf16.mxu0 %v9583
    %9647 = vmatpush1.bf16.msra.mxu0 %v9582
    %9648 = vmatprep.subr.bf16.mxu0 %v9585
    %9649 = vmatpush1.bf16.msra.mxu0 %v9584
    %9650 = vmatprep.subr.bf16.mxu0 %v9587
    %9651 = vmatpush1.bf16.msra.mxu0 %v9586
    %9652 = vmatprep.subr.bf16.mxu0 %v9589
    %9653 = vmatpush1.bf16.msra.mxu0 %v9588
    %9654 = vmatprep.subr.bf16.mxu0 %v9591
    %9655 = vmatpush1.bf16.msra.mxu0 %v9590
    %9656 = vmatprep.subr.bf16.mxu0 %v9593
    %9657 = vmatpush1.bf16.msra.mxu0 %v9592
    %9658 = vmatprep.subr.bf16.mxu0 %v9595
    %9659 = vmatpush1.bf16.msra.mxu0 %v9594
    %9660 = vmatprep.subr.bf16.mxu0 %v9597
    %9661 = vmatpush1.bf16.msra.mxu0 %v9596
    %9662 = vmatprep.subr.bf16.mxu0 %v9599
    %9663 = vmatpush1.bf16.msra.mxu0 %v9598
    %9664 = vmatprep.subr.bf16.mxu0 %v9601
    %9665 = vmatpush1.bf16.msra.mxu0 %v9600
    %9666 = vmatprep.subr.bf16.mxu0 %v9603
    %9667 = vmatpush1.bf16.msra.mxu0 %v9602
    %9668 = vmatprep.subr.bf16.mxu0 %v9605
    %9669 = vmatpush1.bf16.msra.mxu0 %v9604
    %9670 = vmatprep.subr.bf16.mxu0 %v9607
    %9671 = vmatpush1.bf16.msra.mxu0 %v9606
    %9672 = vmatprep.subr.bf16.mxu0 %v9609
    %9673 = vmatpush1.bf16.msra.mxu0 %v9608
    %9674 = vmatprep.mubr.bf16.mxu0 %v8999
    %9675 = vmatmul.mubr.bf16.gmra.mrb[0].mxu0 %v8998
    %v9676 = vpop.f32.mrb[0].mxu0
    %v9677 = vadd.f32 %v9404, %v9676
    %v9678 = vpop.f32.mrb[0].mxu0
    %v9679 = vadd.f32 %v9406, %v9678
    %v9680 = vpop.f32.mrb[0].mxu0
    %v9681 = vadd.f32 %v9408, %v9680
    %v9682 = vpop.f32.mrb[0].mxu0
    %v9683 = vadd.f32 %v9410, %v9682
    %9684 = vmatprep.mubr.bf16.mxu0 %v9001
    %9685 = vmatmul.mubr.bf16.gmra.mrb[0].mxu0 %v9000
    %v9686 = vpop.f32.mrb[0].mxu0
    %v9687 = vadd.f32 %v9414, %v9686
    %v9688 = vpop.f32.mrb[0].mxu0
    %v9689 = vadd.f32 %v9416, %v9688
    %v9690 = vpop.f32.mrb[0].mxu0
    %v9691 = vadd.f32 %v9418, %v9690
    %v9692 = vpop.f32.mrb[0].mxu0
    %v9693 = vadd.f32 %v9420, %v9692
    %9694 = vmatprep.mubr.bf16.mxu0 %v9003
    %9695 = vmatmul.mubr.bf16.gmra.mrb[0].mxu0 %v9002
    %v9696 = vpop.f32.mrb[0].mxu0
    %v9697 = vadd.f32 %v9424, %v9696
    %v9698 = vpop.f32.mrb[0].mxu0
    %v9699 = vadd.f32 %v9426, %v9698
    %v9700 = vpop.f32.mrb[0].mxu0
    %v9701 = vadd.f32 %v9428, %v9700
    %v9702 = vpop.f32.mrb[0].mxu0
    %v9703 = vadd.f32 %v9430, %v9702
    %9704 = vmatprep.mubr.bf16.mxu0 %v9005
    %9705 = vmatmul.mubr.bf16.gmra.mrb[0].mxu0 %v9004
    %v9706 = vpop.f32.mrb[0].mxu0
    %v9707 = vadd.f32 %v9434, %v9706
    %v9708 = vpop.f32.mrb[0].mxu0
    %v9709 = vadd.f32 %v9436, %v9708
    %v9710 = vpop.f32.mrb[0].mxu0
    %v9711 = vadd.f32 %v9438, %v9710
    %v9712 = vpop.f32.mrb[0].mxu0
    %v9713 = vadd.f32 %v9440, %v9712
    %9714 = vmatprep.mubr.bf16.mxu0 %v9007
    %9715 = vmatmul.mubr.bf16.gmra.mrb[0].mxu0 %v9006
    %v9716 = vpop.f32.mrb[0].mxu0
    %v9717 = vadd.f32 %v9444, %v9716
    %v9718 = vpop.f32.mrb[0].mxu0
    %v9719 = vadd.f32 %v9446, %v9718
    %v9720 = vpop.f32.mrb[0].mxu0
    %v9721 = vadd.f32 %v9448, %v9720
    %v9722 = vpop.f32.mrb[0].mxu0
    %v9723 = vadd.f32 %v9450, %v9722
    %9724 = vmatprep.mubr.bf16.mxu0 %v9009
    %9725 = vmatmul.mubr.bf16.gmra.mrb[0].mxu0 %v9008
    %v9726 = vpop.f32.mrb[0].mxu0
    %v9727 = vadd.f32 %v9454, %v9726
    %v9728 = vpop.f32.mrb[0].mxu0
    %v9729 = vadd.f32 %v9456, %v9728
    %v9730 = vpop.f32.mrb[0].mxu0
    %v9731 = vadd.f32 %v9458, %v9730
    %v9732 = vpop.f32.mrb[0].mxu0
    %v9733 = vadd.f32 %v9460, %v9732
    %9734 = vmatprep.mubr.bf16.mxu0 %v9011
    %9735 = vmatmul.mubr.bf16.gmra.mrb[0].mxu0 %v9010
    %v9736 = vpop.f32.mrb[0].mxu0
    %v9737 = vadd.f32 %v9464, %v9736
    %v9738 = vpop.f32.mrb[0].mxu0
    %v9739 = vadd.f32 %v9466, %v9738
    %v9740 = vpop.f32.mrb[0].mxu0
    %v9741 = vadd.f32 %v9468, %v9740
    %v9742 = vpop.f32.mrb[0].mxu0
    %v9743 = vadd.f32 %v9470, %v9742
    %9744 = vmatprep.mubr.bf16.mxu0 %v9013
    %9745 = vmatmul.mubr.bf16.gmra.mrb[0].mxu0 %v9012
    %v9746 = vpop.f32.mrb[0].mxu0
    %v9747 = vadd.f32 %v9474, %v9746
    %v9748 = vpop.f32.mrb[0].mxu0
    %v9749 = vadd.f32 %v9476, %v9748
    %v9750 = vpop.f32.mrb[0].mxu0
    %v9751 = vadd.f32 %v9478, %v9750
    %v9752 = vpop.f32.mrb[0].mxu0
    %v9753 = vadd.f32 %v9480, %v9752
    %9754 = vdwg.mxu0
    %s9755 = scalar_lea.vmem [#allocation5], 4352
    %v9756 = vld [vmem:[%s9755] sm:$0xff]
    %v9757 = vld [vmem:[%s9755 + $0x8] sm:$0xff]
    %v9758 = vld [vmem:[%s9755 + $0x10] sm:$0xff]
    %v9759 = vld [vmem:[%s9755 + $0x18] sm:$0xff]
    %v9760 = vld [vmem:[%s9755 + $0x20] sm:$0xff]
    %v9761 = vld [vmem:[%s9755 + $0x28] sm:$0xff]
    %v9762 = vld [vmem:[%s9755 + $0x30] sm:$0xff]
    %v9763 = vld [vmem:[%s9755 + $0x38] sm:$0xff]
    %v9764 = vld [vmem:[%s9755 + $0x40] sm:$0xff]
    %v9765 = vld [vmem:[%s9755 + $0x48] sm:$0xff]
    %v9766 = vld [vmem:[%s9755 + $0x50] sm:$0xff]
    %v9767 = vld [vmem:[%s9755 + $0x58] sm:$0xff]
    %v9768 = vld [vmem:[%s9755 + $0x60] sm:$0xff]
    %v9769 = vld [vmem:[%s9755 + $0x68] sm:$0xff]
    %v9770 = vld [vmem:[%s9755 + $0x70] sm:$0xff]
    %v9771 = vld [vmem:[%s9755 + $0x78] sm:$0xff]
    %v9772 = vld [vmem:[%s9755 + $0x80] sm:$0xff]
    %v9773 = vld [vmem:[%s9755 + $0x88] sm:$0xff]
    %v9774 = vld [vmem:[%s9755 + $0x90] sm:$0xff]
    %v9775 = vld [vmem:[%s9755 + $0x98] sm:$0xff]
    %v9776 = vld [vmem:[%s9755 + $0xa0] sm:$0xff]
    %v9777 = vld [vmem:[%s9755 + $0xa8] sm:$0xff]
    %v9778 = vld [vmem:[%s9755 + $0xb0] sm:$0xff]
    %v9779 = vld [vmem:[%s9755 + $0xb8] sm:$0xff]
    %v9780 = vld [vmem:[%s9755 + $0xc0] sm:$0xff]
    %v9781 = vld [vmem:[%s9755 + $0xc8] sm:$0xff]
    %v9782 = vld [vmem:[%s9755 + $0xd0] sm:$0xff]
    %v9783 = vld [vmem:[%s9755 + $0xd8] sm:$0xff]
    %v9784 = vld [vmem:[%s9755 + $0xe0] sm:$0xff]
    %v9785 = vld [vmem:[%s9755 + $0xe8] sm:$0xff]
    %v9786 = vld [vmem:[%s9755 + $0xf0] sm:$0xff]
    %v9787 = vld [vmem:[%s9755 + $0xf8] sm:$0xff]
    %v9820 = vunpack.c.l.b16 %v9756
    %v9821 = vunpack.c.h.b16 %v9756
    %v9822 = vunpack.c.l.b16 %v9757
    %v9823 = vunpack.c.h.b16 %v9757
    %v9824 = vunpack.c.l.b16 %v9758
    %v9825 = vunpack.c.h.b16 %v9758
    %v9826 = vunpack.c.l.b16 %v9759
    %v9827 = vunpack.c.h.b16 %v9759
    %v9828 = vunpack.c.l.b16 %v9760
    %v9829 = vunpack.c.h.b16 %v9760
    %v9830 = vunpack.c.l.b16 %v9761
    %v9831 = vunpack.c.h.b16 %v9761
    %v9832 = vunpack.c.l.b16 %v9762
    %v9833 = vunpack.c.h.b16 %v9762
    %v9834 = vunpack.c.l.b16 %v9763
    %v9835 = vunpack.c.h.b16 %v9763
    %v9836 = vunpack.c.l.b16 %v9764
    %v9837 = vunpack.c.h.b16 %v9764
    %v9838 = vunpack.c.l.b16 %v9765
    %v9839 = vunpack.c.h.b16 %v9765
    %v9840 = vunpack.c.l.b16 %v9766
    %v9841 = vunpack.c.h.b16 %v9766
    %v9842 = vunpack.c.l.b16 %v9767
    %v9843 = vunpack.c.h.b16 %v9767
    %v9844 = vunpack.c.l.b16 %v9768
    %v9845 = vunpack.c.h.b16 %v9768
    %v9846 = vunpack.c.l.b16 %v9769
    %v9847 = vunpack.c.h.b16 %v9769
    %v9848 = vunpack.c.l.b16 %v9770
    %v9849 = vunpack.c.h.b16 %v9770
    %v9850 = vunpack.c.l.b16 %v9771
    %v9851 = vunpack.c.h.b16 %v9771
    %v9852 = vunpack.c.l.b16 %v9772
    %v9853 = vunpack.c.h.b16 %v9772
    %v9854 = vunpack.c.l.b16 %v9773
    %v9855 = vunpack.c.h.b16 %v9773
    %v9856 = vunpack.c.l.b16 %v9774
    %v9857 = vunpack.c.h.b16 %v9774
    %v9858 = vunpack.c.l.b16 %v9775
    %v9859 = vunpack.c.h.b16 %v9775
    %v9860 = vunpack.c.l.b16 %v9776
    %v9861 = vunpack.c.h.b16 %v9776
    %v9862 = vunpack.c.l.b16 %v9777
    %v9863 = vunpack.c.h.b16 %v9777
    %v9864 = vunpack.c.l.b16 %v9778
    %v9865 = vunpack.c.h.b16 %v9778
    %v9866 = vunpack.c.l.b16 %v9779
    %v9867 = vunpack.c.h.b16 %v9779
    %v9868 = vunpack.c.l.b16 %v9780
    %v9869 = vunpack.c.h.b16 %v9780
    %v9870 = vunpack.c.l.b16 %v9781
    %v9871 = vunpack.c.h.b16 %v9781
    %v9872 = vunpack.c.l.b16 %v9782
    %v9873 = vunpack.c.h.b16 %v9782
    %v9874 = vunpack.c.l.b16 %v9783
    %v9875 = vunpack.c.h.b16 %v9783
    %v9876 = vunpack.c.l.b16 %v9784
    %v9877 = vunpack.c.h.b16 %v9784
    %v9878 = vunpack.c.l.b16 %v9785
    %v9879 = vunpack.c.h.b16 %v9785
    %v9880 = vunpack.c.l.b16 %v9786
    %v9881 = vunpack.c.h.b16 %v9786
    %v9882 = vunpack.c.l.b16 %v9787
    %v9883 = vunpack.c.h.b16 %v9787
    %v9884 = vpack.c.b16 %v9822, %v9820
    %v9885 = vpack.c.b16 %v9823, %v9821
    %v9886 = vpack.c.b16 %v9826, %v9824
    %v9887 = vpack.c.b16 %v9827, %v9825
    %v9888 = vpack.c.b16 %v9830, %v9828
    %v9889 = vpack.c.b16 %v9831, %v9829
    %v9890 = vpack.c.b16 %v9834, %v9832
    %v9891 = vpack.c.b16 %v9835, %v9833
    %v9892 = vpack.c.b16 %v9838, %v9836
    %v9893 = vpack.c.b16 %v9839, %v9837
    %v9894 = vpack.c.b16 %v9842, %v9840
    %v9895 = vpack.c.b16 %v9843, %v9841
    %v9896 = vpack.c.b16 %v9846, %v9844
    %v9897 = vpack.c.b16 %v9847, %v9845
    %v9898 = vpack.c.b16 %v9850, %v9848
    %v9899 = vpack.c.b16 %v9851, %v9849
    %v9900 = vpack.c.b16 %v9854, %v9852
    %v9901 = vpack.c.b16 %v9855, %v9853
    %v9902 = vpack.c.b16 %v9858, %v9856
    %v9903 = vpack.c.b16 %v9859, %v9857
    %v9904 = vpack.c.b16 %v9862, %v9860
    %v9905 = vpack.c.b16 %v9863, %v9861
    %v9906 = vpack.c.b16 %v9866, %v9864
    %v9907 = vpack.c.b16 %v9867, %v9865
    %v9908 = vpack.c.b16 %v9870, %v9868
    %v9909 = vpack.c.b16 %v9871, %v9869
    %v9910 = vpack.c.b16 %v9874, %v9872
    %v9911 = vpack.c.b16 %v9875, %v9873
    %v9912 = vpack.c.b16 %v9878, %v9876
    %v9913 = vpack.c.b16 %v9879, %v9877
    %v9914 = vpack.c.b16 %v9882, %v9880
    %v9915 = vpack.c.b16 %v9883, %v9881
    %9948 = vmatprep.subr.bf16.mxu0 %v9885
    %9949 = vmatpush1.bf16.msra.mxu0 %v9884
    %9950 = vmatprep.subr.bf16.mxu0 %v9887
    %9951 = vmatpush1.bf16.msra.mxu0 %v9886
    %9952 = vmatprep.subr.bf16.mxu0 %v9889
    %9953 = vmatpush1.bf16.msra.mxu0 %v9888
    %9954 = vmatprep.subr.bf16.mxu0 %v9891
    %9955 = vmatpush1.bf16.msra.mxu0 %v9890
    %9956 = vmatprep.subr.bf16.mxu0 %v9893
    %9957 = vmatpush1.bf16.msra.mxu0 %v9892
    %9958 = vmatprep.subr.bf16.mxu0 %v9895
    %9959 = vmatpush1.bf16.msra.mxu0 %v9894
    %9960 = vmatprep.subr.bf16.mxu0 %v9897
    %9961 = vmatpush1.bf16.msra.mxu0 %v9896
    %9962 = vmatprep.subr.bf16.mxu0 %v9899
    %9963 = vmatpush1.bf16.msra.mxu0 %v9898
    %9964 = vmatprep.subr.bf16.mxu0 %v9901
    %9965 = vmatpush1.bf16.msra.mxu0 %v9900
    %9966 = vmatprep.subr.bf16.mxu0 %v9903
    %9967 = vmatpush1.bf16.msra.mxu0 %v9902
    %9968 = vmatprep.subr.bf16.mxu0 %v9905
    %9969 = vmatpush1.bf16.msra.mxu0 %v9904
    %9970 = vmatprep.subr.bf16.mxu0 %v9907
    %9971 = vmatpush1.bf16.msra.mxu0 %v9906
    %9972 = vmatprep.subr.bf16.mxu0 %v9909
    %9973 = vmatpush1.bf16.msra.mxu0 %v9908
    %9974 = vmatprep.subr.bf16.mxu0 %v9911
    %9975 = vmatpush1.bf16.msra.mxu0 %v9910
    %9976 = vmatprep.subr.bf16.mxu0 %v9913
    %9977 = vmatpush1.bf16.msra.mxu0 %v9912
    %9978 = vmatprep.subr.bf16.mxu0 %v9915
    %9979 = vmatpush1.bf16.msra.mxu0 %v9914
    %9980 = vmatprep.mubr.bf16.mxu0 %v9128
    %9981 = vmatmul.mubr.bf16.gmra.mrb[0].mxu0 %v9127
    %v9982 = vpop.f32.mrb[0].mxu0
    %v9983 = vadd.f32 0.0, %v9982
    %v9984 = vpop.f32.mrb[0].mxu0
    %v9985 = vadd.f32 0.0, %v9984
    %v9986 = vpop.f32.mrb[0].mxu0
    %v9987 = vadd.f32 0.0, %v9986
    %v9988 = vpop.f32.mrb[0].mxu0
    %v9989 = vadd.f32 0.0, %v9988
    %9990 = vmatprep.mubr.bf16.mxu0 %v9130
    %9991 = vmatmul.mubr.bf16.gmra.mrb[0].mxu0 %v9129
    %v9992 = vpop.f32.mrb[0].mxu0
    %v9993 = vadd.f32 0.0, %v9992
    %v9994 = vpop.f32.mrb[0].mxu0
    %v9995 = vadd.f32 0.0, %v9994
    %v9996 = vpop.f32.mrb[0].mxu0
    %v9997 = vadd.f32 0.0, %v9996
    %v9998 = vpop.f32.mrb[0].mxu0
    %v9999 = vadd.f32 0.0, %v9998
    %10000 = vmatprep.mubr.bf16.mxu0 %v9132
    %10001 = vmatmul.mubr.bf16.gmra.mrb[0].mxu0 %v9131
    %v10002 = vpop.f32.mrb[0].mxu0
    %v10003 = vadd.f32 0.0, %v10002
    %v10004 = vpop.f32.mrb[0].mxu0
    %v10005 = vadd.f32 0.0, %v10004
    %v10006 = vpop.f32.mrb[0].mxu0
    %v10007 = vadd.f32 0.0, %v10006
    %v10008 = vpop.f32.mrb[0].mxu0
    %v10009 = vadd.f32 0.0, %v10008
    %10010 = vmatprep.mubr.bf16.mxu0 %v9134
    %10011 = vmatmul.mubr.bf16.gmra.mrb[0].mxu0 %v9133
    %v10012 = vpop.f32.mrb[0].mxu0
    %v10013 = vadd.f32 0.0, %v10012
    %v10014 = vpop.f32.mrb[0].mxu0
    %v10015 = vadd.f32 0.0, %v10014
    %v10016 = vpop.f32.mrb[0].mxu0
    %v10017 = vadd.f32 0.0, %v10016
    %v10018 = vpop.f32.mrb[0].mxu0
    %v10019 = vadd.f32 0.0, %v10018
    %10020 = vmatprep.mubr.bf16.mxu0 %v9136
    %10021 = vmatmul.mubr.bf16.gmra.mrb[0].mxu0 %v9135
    %v10022 = vpop.f32.mrb[0].mxu0
    %v10023 = vadd.f32 0.0, %v10022
    %v10024 = vpop.f32.mrb[0].mxu0
    %v10025 = vadd.f32 0.0, %v10024
    %v10026 = vpop.f32.mrb[0].mxu0
    %v10027 = vadd.f32 0.0, %v10026
    %v10028 = vpop.f32.mrb[0].mxu0
    %v10029 = vadd.f32 0.0, %v10028
    %10030 = vmatprep.mubr.bf16.mxu0 %v9138
    %10031 = vmatmul.mubr.bf16.gmra.mrb[0].mxu0 %v9137
    %v10032 = vpop.f32.mrb[0].mxu0
    %v10033 = vadd.f32 0.0, %v10032
    %v10034 = vpop.f32.mrb[0].mxu0
    %v10035 = vadd.f32 0.0, %v10034
    %v10036 = vpop.f32.mrb[0].mxu0
    %v10037 = vadd.f32 0.0, %v10036
    %v10038 = vpop.f32.mrb[0].mxu0
    %v10039 = vadd.f32 0.0, %v10038
    %10040 = vmatprep.mubr.bf16.mxu0 %v9140
    %10041 = vmatmul.mubr.bf16.gmra.mrb[0].mxu0 %v9139
    %v10042 = vpop.f32.mrb[0].mxu0
    %v10043 = vadd.f32 0.0, %v10042
    %v10044 = vpop.f32.mrb[0].mxu0
    %v10045 = vadd.f32 0.0, %v10044
    %v10046 = vpop.f32.mrb[0].mxu0
    %v10047 = vadd.f32 0.0, %v10046
    %v10048 = vpop.f32.mrb[0].mxu0
    %v10049 = vadd.f32 0.0, %v10048
    %10050 = vmatprep.mubr.bf16.mxu0 %v9142
    %10051 = vmatmul.mubr.bf16.gmra.mrb[0].mxu0 %v9141
    %v10052 = vpop.f32.mrb[0].mxu0
    %v10053 = vadd.f32 0.0, %v10052
    %v10054 = vpop.f32.mrb[0].mxu0
    %v10055 = vadd.f32 0.0, %v10054
    %v10056 = vpop.f32.mrb[0].mxu0
    %v10057 = vadd.f32 0.0, %v10056
    %v10058 = vpop.f32.mrb[0].mxu0
    %v10059 = vadd.f32 0.0, %v10058
    %10060 = vdwg.mxu0
    %v10061 = vadd.f32 %v9677, %v9983
    %v10062 = vadd.f32 %v9679, %v9985
    %v10063 = vadd.f32 %v9681, %v9987
    %v10064 = vadd.f32 %v9683, %v9989
    %v10065 = vadd.f32 %v9687, %v9993
    %v10066 = vadd.f32 %v9689, %v9995
    %v10067 = vadd.f32 %v9691, %v9997
    %v10068 = vadd.f32 %v9693, %v9999
    %v10069 = vadd.f32 %v9697, %v10003
    %v10070 = vadd.f32 %v9699, %v10005
    %v10071 = vadd.f32 %v9701, %v10007
    %v10072 = vadd.f32 %v9703, %v10009
    %v10073 = vadd.f32 %v9707, %v10013
    %v10074 = vadd.f32 %v9709, %v10015
    %v10075 = vadd.f32 %v9711, %v10017
    %v10076 = vadd.f32 %v9713, %v10019
    %v10077 = vadd.f32 %v9717, %v10023
    %v10078 = vadd.f32 %v9719, %v10025
    %v10079 = vadd.f32 %v9721, %v10027
    %v10080 = vadd.f32 %v9723, %v10029
    %v10081 = vadd.f32 %v9727, %v10033
    %v10082 = vadd.f32 %v9729, %v10035
    %v10083 = vadd.f32 %v9731, %v10037
    %v10084 = vadd.f32 %v9733, %v10039
    %v10085 = vadd.f32 %v9737, %v10043
    %v10086 = vadd.f32 %v9739, %v10045
    %v10087 = vadd.f32 %v9741, %v10047
    %v10088 = vadd.f32 %v9743, %v10049
    %v10089 = vadd.f32 %v9747, %v10053
    %v10090 = vadd.f32 %v9749, %v10055
    %v10091 = vadd.f32 %v9751, %v10057
    %v10092 = vadd.f32 %v9753, %v10059
    %s10093 = scalar_lea.vmem [#allocation7], 10
    %v10094 = vld [vmem:[%s10093] sm:$0x3]
    %v10096 = vlaneseq
    %v10097 = vshrl.u32 %v10096, 7
    %v10098 = vsub.s32 0, %v10097
    %v10099 = vrot.slane %v10094, %v10098
    %v10100 = vlaneseq
    %v10101 = vshrl.u32 %v10100, 7
    %v10102 = vsub.s32 1, %v10101
    %v10103 = vrot.slane %v10094, %v10102
    %v10106 = vadd.f32 %v10061, %v10099
    %v10107 = vadd.f32 %v10062, %v10103
    %v10108 = vadd.f32 %v10063, %v10099
    %v10109 = vadd.f32 %v10064, %v10103
    %v10110 = vadd.f32 %v10065, %v10099
    %v10111 = vadd.f32 %v10066, %v10103
    %v10112 = vadd.f32 %v10067, %v10099
    %v10113 = vadd.f32 %v10068, %v10103
    %v10114 = vadd.f32 %v10069, %v10099
    %v10115 = vadd.f32 %v10070, %v10103
    %v10116 = vadd.f32 %v10071, %v10099
    %v10117 = vadd.f32 %v10072, %v10103
    %v10118 = vadd.f32 %v10073, %v10099
    %v10119 = vadd.f32 %v10074, %v10103
    %v10120 = vadd.f32 %v10075, %v10099
    %v10121 = vadd.f32 %v10076, %v10103
    %v10122 = vadd.f32 %v10077, %v10099
    %v10123 = vadd.f32 %v10078, %v10103
    %v10124 = vadd.f32 %v10079, %v10099
    %v10125 = vadd.f32 %v10080, %v10103
    %v10126 = vadd.f32 %v10081, %v10099
    %v10127 = vadd.f32 %v10082, %v10103
    %v10128 = vadd.f32 %v10083, %v10099
    %v10129 = vadd.f32 %v10084, %v10103
    %v10130 = vadd.f32 %v10085, %v10099
    %v10131 = vadd.f32 %v10086, %v10103
    %v10132 = vadd.f32 %v10087, %v10099
    %v10133 = vadd.f32 %v10088, %v10103
    %v10134 = vadd.f32 %v10089, %v10099
    %v10135 = vadd.f32 %v10090, %v10103
    %v10136 = vadd.f32 %v10091, %v10099
    %v10137 = vadd.f32 %v10092, %v10103
    %v10138 = vadd.f32 %v10106, %v10108
    %v10139 = vadd.f32 %v10138, %v10110
    %v10140 = vadd.f32 %v10139, %v10112
    %v10141 = vadd.f32 %v10140, %v10114
    %v10142 = vadd.f32 %v10141, %v10116
    %v10143 = vadd.f32 %v10142, %v10118
    %v10144 = vadd.f32 %v10143, %v10120
    %v10145 = vadd.f32 %v10144, %v10122
    %v10146 = vadd.f32 %v10145, %v10124
    %v10147 = vadd.f32 %v10146, %v10126
    %v10148 = vadd.f32 %v10147, %v10128
    %v10149 = vadd.f32 %v10148, %v10130
    %v10150 = vadd.f32 %v10149, %v10132
    %v10151 = vadd.f32 %v10150, %v10134
    %v10152 = vadd.f32 %v10151, %v10136
    %v10153 = vrot.slane %v10152, 4
    %v10154 = vadd.f32 %v10152, %v10153
    %v10155 = vrot.slane %v10154, 2
    %v10156 = vadd.f32 %v10154, %v10155
    %v10157 = vrot.slane %v10156, 1
    %v10158 = vadd.f32 %v10156, %v10157
    %v10159 = vadd.f32 %v10107, %v10109
    %v10160 = vadd.f32 %v10159, %v10111
    %v10161 = vadd.f32 %v10160, %v10113
    %v10162 = vadd.f32 %v10161, %v10115
    %v10163 = vadd.f32 %v10162, %v10117
    %v10164 = vadd.f32 %v10163, %v10119
    %v10165 = vadd.f32 %v10164, %v10121
    %v10166 = vadd.f32 %v10165, %v10123
    %v10167 = vadd.f32 %v10166, %v10125
    %v10168 = vadd.f32 %v10167, %v10127
    %v10169 = vadd.f32 %v10168, %v10129
    %v10170 = vadd.f32 %v10169, %v10131
    %v10171 = vadd.f32 %v10170, %v10133
    %v10172 = vadd.f32 %v10171, %v10135
    %v10173 = vadd.f32 %v10172, %v10137
    %v10174 = vrot.slane %v10173, 4
    %v10175 = vadd.f32 %v10173, %v10174
    %v10176 = vrot.slane %v10175, 2
    %v10177 = vadd.f32 %v10175, %v10176
    %v10178 = vrot.slane %v10177, 1
    %v10179 = vadd.f32 %v10177, %v10178
    %v10180 = vmul.f32 %v10158, %v1646
    %v10181 = vmul.f32 %v10179, %v1646
    %v10182 = vsub.f32 %v10106, %v10180
    %v10183 = vsub.f32 %v10107, %v10181
    %v10184 = vsub.f32 %v10108, %v10180
    %v10185 = vsub.f32 %v10109, %v10181
    %v10186 = vsub.f32 %v10110, %v10180
    %v10187 = vsub.f32 %v10111, %v10181
    %v10188 = vsub.f32 %v10112, %v10180
    %v10189 = vsub.f32 %v10113, %v10181
    %v10190 = vsub.f32 %v10114, %v10180
    %v10191 = vsub.f32 %v10115, %v10181
    %v10192 = vsub.f32 %v10116, %v10180
    %v10193 = vsub.f32 %v10117, %v10181
    %v10194 = vsub.f32 %v10118, %v10180
    %v10195 = vsub.f32 %v10119, %v10181
    %v10196 = vsub.f32 %v10120, %v10180
    %v10197 = vsub.f32 %v10121, %v10181
    %v10198 = vsub.f32 %v10122, %v10180
    %v10199 = vsub.f32 %v10123, %v10181
    %v10200 = vsub.f32 %v10124, %v10180
    %v10201 = vsub.f32 %v10125, %v10181
    %v10202 = vsub.f32 %v10126, %v10180
    %v10203 = vsub.f32 %v10127, %v10181
    %v10204 = vsub.f32 %v10128, %v10180
    %v10205 = vsub.f32 %v10129, %v10181
    %v10206 = vsub.f32 %v10130, %v10180
    %v10207 = vsub.f32 %v10131, %v10181
    %v10208 = vsub.f32 %v10132, %v10180
    %v10209 = vsub.f32 %v10133, %v10181
    %v10210 = vsub.f32 %v10134, %v10180
    %v10211 = vsub.f32 %v10135, %v10181
    %v10212 = vsub.f32 %v10136, %v10180
    %v10213 = vsub.f32 %v10137, %v10181
    %v10214 = vmul.f32 %v10182, %v10182
    %v10215 = vmul.f32 %v10183, %v10183
    %v10216 = vmul.f32 %v10184, %v10184
    %v10217 = vmul.f32 %v10185, %v10185
    %v10218 = vmul.f32 %v10186, %v10186
    %v10219 = vmul.f32 %v10187, %v10187
    %v10220 = vmul.f32 %v10188, %v10188
    %v10221 = vmul.f32 %v10189, %v10189
    %v10222 = vmul.f32 %v10190, %v10190
    %v10223 = vmul.f32 %v10191, %v10191
    %v10224 = vmul.f32 %v10192, %v10192
    %v10225 = vmul.f32 %v10193, %v10193
    %v10226 = vmul.f32 %v10194, %v10194
    %v10227 = vmul.f32 %v10195, %v10195
    %v10228 = vmul.f32 %v10196, %v10196
    %v10229 = vmul.f32 %v10197, %v10197
    %v10230 = vmul.f32 %v10198, %v10198
    %v10231 = vmul.f32 %v10199, %v10199
    %v10232 = vmul.f32 %v10200, %v10200
    %v10233 = vmul.f32 %v10201, %v10201
    %v10234 = vmul.f32 %v10202, %v10202
    %v10235 = vmul.f32 %v10203, %v10203
    %v10236 = vmul.f32 %v10204, %v10204
    %v10237 = vmul.f32 %v10205, %v10205
    %v10238 = vmul.f32 %v10206, %v10206
    %v10239 = vmul.f32 %v10207, %v10207
    %v10240 = vmul.f32 %v10208, %v10208
    %v10241 = vmul.f32 %v10209, %v10209
    %v10242 = vmul.f32 %v10210, %v10210
    %v10243 = vmul.f32 %v10211, %v10211
    %v10244 = vmul.f32 %v10212, %v10212
    %v10245 = vmul.f32 %v10213, %v10213
    %v10246 = vadd.f32 %v10214, %v10216
    %v10247 = vadd.f32 %v10246, %v10218
    %v10248 = vadd.f32 %v10247, %v10220
    %v10249 = vadd.f32 %v10248, %v10222
    %v10250 = vadd.f32 %v10249, %v10224
    %v10251 = vadd.f32 %v10250, %v10226
    %v10252 = vadd.f32 %v10251, %v10228
    %v10253 = vadd.f32 %v10252, %v10230
    %v10254 = vadd.f32 %v10253, %v10232
    %v10255 = vadd.f32 %v10254, %v10234
    %v10256 = vadd.f32 %v10255, %v10236
    %v10257 = vadd.f32 %v10256, %v10238
    %v10258 = vadd.f32 %v10257, %v10240
    %v10259 = vadd.f32 %v10258, %v10242
    %v10260 = vadd.f32 %v10259, %v10244
    %v10261 = vrot.slane %v10260, 4
    %v10262 = vadd.f32 %v10260, %v10261
    %v10263 = vrot.slane %v10262, 2
    %v10264 = vadd.f32 %v10262, %v10263
    %v10265 = vrot.slane %v10264, 1
    %v10266 = vadd.f32 %v10264, %v10265
    %v10267 = vadd.f32 %v10215, %v10217
    %v10268 = vadd.f32 %v10267, %v10219
    %v10269 = vadd.f32 %v10268, %v10221
    %v10270 = vadd.f32 %v10269, %v10223
    %v10271 = vadd.f32 %v10270, %v10225
    %v10272 = vadd.f32 %v10271, %v10227
    %v10273 = vadd.f32 %v10272, %v10229
    %v10274 = vadd.f32 %v10273, %v10231
    %v10275 = vadd.f32 %v10274, %v10233
    %v10276 = vadd.f32 %v10275, %v10235
    %v10277 = vadd.f32 %v10276, %v10237
    %v10278 = vadd.f32 %v10277, %v10239
    %v10279 = vadd.f32 %v10278, %v10241
    %v10280 = vadd.f32 %v10279, %v10243
    %v10281 = vadd.f32 %v10280, %v10245
    %v10282 = vrot.slane %v10281, 4
    %v10283 = vadd.f32 %v10281, %v10282
    %v10284 = vrot.slane %v10283, 2
    %v10285 = vadd.f32 %v10283, %v10284
    %v10286 = vrot.slane %v10285, 1
    %v10287 = vadd.f32 %v10285, %v10286
    %v10288 = vmul.f32 %v10266, %v1646
    %v10289 = vmul.f32 %v10287, %v1646
    %v10290 = vadd.f32 %v10288, 1e-05
    %v10291 = vadd.f32 %v10289, 1e-05
    %v10292 = vrsqrt.pop %v10290
    %v10293 = vrsqrt.pop %v10291
    %v10294 = vmul.f32 %v10182, %v10292
    %v10295 = vmul.f32 %v10183, %v10293
    %v10296 = vmul.f32 %v10184, %v10292
    %v10297 = vmul.f32 %v10185, %v10293
    %v10298 = vmul.f32 %v10186, %v10292
    %v10299 = vmul.f32 %v10187, %v10293
    %v10300 = vmul.f32 %v10188, %v10292
    %v10301 = vmul.f32 %v10189, %v10293
    %v10302 = vmul.f32 %v10190, %v10292
    %v10303 = vmul.f32 %v10191, %v10293
    %v10304 = vmul.f32 %v10192, %v10292
    %v10305 = vmul.f32 %v10193, %v10293
    %v10306 = vmul.f32 %v10194, %v10292
    %v10307 = vmul.f32 %v10195, %v10293
    %v10308 = vmul.f32 %v10196, %v10292
    %v10309 = vmul.f32 %v10197, %v10293
    %v10310 = vmul.f32 %v10198, %v10292
    %v10311 = vmul.f32 %v10199, %v10293
    %v10312 = vmul.f32 %v10200, %v10292
    %v10313 = vmul.f32 %v10201, %v10293
    %v10314 = vmul.f32 %v10202, %v10292
    %v10315 = vmul.f32 %v10203, %v10293
    %v10316 = vmul.f32 %v10204, %v10292
    %v10317 = vmul.f32 %v10205, %v10293
    %v10318 = vmul.f32 %v10206, %v10292
    %v10319 = vmul.f32 %v10207, %v10293
    %v10320 = vmul.f32 %v10208, %v10292
    %v10321 = vmul.f32 %v10209, %v10293
    %v10322 = vmul.f32 %v10210, %v10292
    %v10323 = vmul.f32 %v10211, %v10293
    %v10324 = vmul.f32 %v10212, %v10292
    %v10325 = vmul.f32 %v10213, %v10293
    %s10326 = scalar_lea.vmem [#allocation8], 10
    %v10327 = vld [vmem:[%s10326] sm:$0x3]
    %v10329 = vlaneseq
    %v10330 = vshrl.u32 %v10329, 7
    %v10331 = vsub.s32 0, %v10330
    %v10332 = vrot.slane %v10327, %v10331
    %v10333 = vlaneseq
    %v10334 = vshrl.u32 %v10333, 7
    %v10335 = vsub.s32 1, %v10334
    %v10336 = vrot.slane %v10327, %v10335
    %v10339 = vmul.f32 %v10294, %v10332
    %v10340 = vmul.f32 %v10295, %v10336
    %v10341 = vmul.f32 %v10296, %v10332
    %v10342 = vmul.f32 %v10297, %v10336
    %v10343 = vmul.f32 %v10298, %v10332
    %v10344 = vmul.f32 %v10299, %v10336
    %v10345 = vmul.f32 %v10300, %v10332
    %v10346 = vmul.f32 %v10301, %v10336
    %v10347 = vmul.f32 %v10302, %v10332
    %v10348 = vmul.f32 %v10303, %v10336
    %v10349 = vmul.f32 %v10304, %v10332
    %v10350 = vmul.f32 %v10305, %v10336
    %v10351 = vmul.f32 %v10306, %v10332
    %v10352 = vmul.f32 %v10307, %v10336
    %v10353 = vmul.f32 %v10308, %v10332
    %v10354 = vmul.f32 %v10309, %v10336
    %v10355 = vmul.f32 %v10310, %v10332
    %v10356 = vmul.f32 %v10311, %v10336
    %v10357 = vmul.f32 %v10312, %v10332
    %v10358 = vmul.f32 %v10313, %v10336
    %v10359 = vmul.f32 %v10314, %v10332
    %v10360 = vmul.f32 %v10315, %v10336
    %v10361 = vmul.f32 %v10316, %v10332
    %v10362 = vmul.f32 %v10317, %v10336
    %v10363 = vmul.f32 %v10318, %v10332
    %v10364 = vmul.f32 %v10319, %v10336
    %v10365 = vmul.f32 %v10320, %v10332
    %v10366 = vmul.f32 %v10321, %v10336
    %v10367 = vmul.f32 %v10322, %v10332
    %v10368 = vmul.f32 %v10323, %v10336
    %v10369 = vmul.f32 %v10324, %v10332
    %v10370 = vmul.f32 %v10325, %v10336
    %s10371 = scalar_lea.vmem [#allocation10], 10
    %v10372 = vld [vmem:[%s10371] sm:$0x3]
    %v10374 = vlaneseq
    %v10375 = vshrl.u32 %v10374, 7
    %v10376 = vsub.s32 0, %v10375
    %v10377 = vrot.slane %v10372, %v10376
    %v10378 = vlaneseq
    %v10379 = vshrl.u32 %v10378, 7
    %v10380 = vsub.s32 1, %v10379
    %v10381 = vrot.slane %v10372, %v10380
    %v10384 = vadd.f32 %v10339, %v10377
    %v10385 = vadd.f32 %v10340, %v10381
    %v10386 = vadd.f32 %v10341, %v10377
    %v10387 = vadd.f32 %v10342, %v10381
    %v10388 = vadd.f32 %v10343, %v10377
    %v10389 = vadd.f32 %v10344, %v10381
    %v10390 = vadd.f32 %v10345, %v10377
    %v10391 = vadd.f32 %v10346, %v10381
    %v10392 = vadd.f32 %v10347, %v10377
    %v10393 = vadd.f32 %v10348, %v10381
    %v10394 = vadd.f32 %v10349, %v10377
    %v10395 = vadd.f32 %v10350, %v10381
    %v10396 = vadd.f32 %v10351, %v10377
    %v10397 = vadd.f32 %v10352, %v10381
    %v10398 = vadd.f32 %v10353, %v10377
    %v10399 = vadd.f32 %v10354, %v10381
    %v10400 = vadd.f32 %v10355, %v10377
    %v10401 = vadd.f32 %v10356, %v10381
    %v10402 = vadd.f32 %v10357, %v10377
    %v10403 = vadd.f32 %v10358, %v10381
    %v10404 = vadd.f32 %v10359, %v10377
    %v10405 = vadd.f32 %v10360, %v10381
    %v10406 = vadd.f32 %v10361, %v10377
    %v10407 = vadd.f32 %v10362, %v10381
    %v10408 = vadd.f32 %v10363, %v10377
    %v10409 = vadd.f32 %v10364, %v10381
    %v10410 = vadd.f32 %v10365, %v10377
    %v10411 = vadd.f32 %v10366, %v10381
    %v10412 = vadd.f32 %v10367, %v10377
    %v10413 = vadd.f32 %v10368, %v10381
    %v10414 = vadd.f32 %v10369, %v10377
    %v10415 = vadd.f32 %v10370, %v10381
    %vm10416 = vcmp.ge.f32.partialorder %v10384, 0.0
    %vm10417 = vcmp.ge.f32.partialorder %v10385, 0.0
    %vm10418 = vcmp.ge.f32.partialorder %v10386, 0.0
    %vm10419 = vcmp.ge.f32.partialorder %v10387, 0.0
    %vm10420 = vcmp.ge.f32.partialorder %v10388, 0.0
    %vm10421 = vcmp.ge.f32.partialorder %v10389, 0.0
    %vm10422 = vcmp.ge.f32.partialorder %v10390, 0.0
    %vm10423 = vcmp.ge.f32.partialorder %v10391, 0.0
    %vm10424 = vcmp.ge.f32.partialorder %v10392, 0.0
    %vm10425 = vcmp.ge.f32.partialorder %v10393, 0.0
    %vm10426 = vcmp.ge.f32.partialorder %v10394, 0.0
    %vm10427 = vcmp.ge.f32.partialorder %v10395, 0.0
    %vm10428 = vcmp.ge.f32.partialorder %v10396, 0.0
    %vm10429 = vcmp.ge.f32.partialorder %v10397, 0.0
    %vm10430 = vcmp.ge.f32.partialorder %v10398, 0.0
    %vm10431 = vcmp.ge.f32.partialorder %v10399, 0.0
    %vm10432 = vcmp.ge.f32.partialorder %v10400, 0.0
    %vm10433 = vcmp.ge.f32.partialorder %v10401, 0.0
    %vm10434 = vcmp.ge.f32.partialorder %v10402, 0.0
    %vm10435 = vcmp.ge.f32.partialorder %v10403, 0.0
    %vm10436 = vcmp.ge.f32.partialorder %v10404, 0.0
    %vm10437 = vcmp.ge.f32.partialorder %v10405, 0.0
    %vm10438 = vcmp.ge.f32.partialorder %v10406, 0.0
    %vm10439 = vcmp.ge.f32.partialorder %v10407, 0.0
    %vm10440 = vcmp.ge.f32.partialorder %v10408, 0.0
    %vm10441 = vcmp.ge.f32.partialorder %v10409, 0.0
    %vm10442 = vcmp.ge.f32.partialorder %v10410, 0.0
    %vm10443 = vcmp.ge.f32.partialorder %v10411, 0.0
    %vm10444 = vcmp.ge.f32.partialorder %v10412, 0.0
    %vm10445 = vcmp.ge.f32.partialorder %v10413, 0.0
    %vm10446 = vcmp.ge.f32.partialorder %v10414, 0.0
    %vm10447 = vcmp.ge.f32.partialorder %v10415, 0.0
    %v10448 = vmul.f32 %v10384, 0.2
    %v10449 = vmul.f32 %v10385, 0.2
    %v10450 = vmul.f32 %v10386, 0.2
    %v10451 = vmul.f32 %v10387, 0.2
    %v10452 = vmul.f32 %v10388, 0.2
    %v10453 = vmul.f32 %v10389, 0.2
    %v10454 = vmul.f32 %v10390, 0.2
    %v10455 = vmul.f32 %v10391, 0.2
    %v10456 = vmul.f32 %v10392, 0.2
    %v10457 = vmul.f32 %v10393, 0.2
    %v10458 = vmul.f32 %v10394, 0.2
    %v10459 = vmul.f32 %v10395, 0.2
    %v10460 = vmul.f32 %v10396, 0.2
    %v10461 = vmul.f32 %v10397, 0.2
    %v10462 = vmul.f32 %v10398, 0.2
    %v10463 = vmul.f32 %v10399, 0.2
    %v10464 = vmul.f32 %v10400, 0.2
    %v10465 = vmul.f32 %v10401, 0.2
    %v10466 = vmul.f32 %v10402, 0.2
    %v10467 = vmul.f32 %v10403, 0.2
    %v10468 = vmul.f32 %v10404, 0.2
    %v10469 = vmul.f32 %v10405, 0.2
    %v10470 = vmul.f32 %v10406, 0.2
    %v10471 = vmul.f32 %v10407, 0.2
    %v10472 = vmul.f32 %v10408, 0.2
    %v10473 = vmul.f32 %v10409, 0.2
    %v10474 = vmul.f32 %v10410, 0.2
    %v10475 = vmul.f32 %v10411, 0.2
    %v10476 = vmul.f32 %v10412, 0.2
    %v10477 = vmul.f32 %v10413, 0.2
    %v10478 = vmul.f32 %v10414, 0.2
    %v10479 = vmul.f32 %v10415, 0.2
    %v10480 = vsel %vm10416, %v10384, %v10448
    %v10481 = vsel %vm10417, %v10385, %v10449
    %v10482 = vsel %vm10418, %v10386, %v10450
    %v10483 = vsel %vm10419, %v10387, %v10451
    %v10484 = vsel %vm10420, %v10388, %v10452
    %v10485 = vsel %vm10421, %v10389, %v10453
    %v10486 = vsel %vm10422, %v10390, %v10454
    %v10487 = vsel %vm10423, %v10391, %v10455
    %v10488 = vsel %vm10424, %v10392, %v10456
    %v10489 = vsel %vm10425, %v10393, %v10457
    %v10490 = vsel %vm10426, %v10394, %v10458
    %v10491 = vsel %vm10427, %v10395, %v10459
    %v10492 = vsel %vm10428, %v10396, %v10460
    %v10493 = vsel %vm10429, %v10397, %v10461
    %v10494 = vsel %vm10430, %v10398, %v10462
    %v10495 = vsel %vm10431, %v10399, %v10463
    %v10496 = vsel %vm10432, %v10400, %v10464
    %v10497 = vsel %vm10433, %v10401, %v10465
    %v10498 = vsel %vm10434, %v10402, %v10466
    %v10499 = vsel %vm10435, %v10403, %v10467
    %v10500 = vsel %vm10436, %v10404, %v10468
    %v10501 = vsel %vm10437, %v10405, %v10469
    %v10502 = vsel %vm10438, %v10406, %v10470
    %v10503 = vsel %vm10439, %v10407, %v10471
    %v10504 = vsel %vm10440, %v10408, %v10472
    %v10505 = vsel %vm10441, %v10409, %v10473
    %v10506 = vsel %vm10442, %v10410, %v10474
    %v10507 = vsel %vm10443, %v10411, %v10475
    %v10508 = vsel %vm10444, %v10412, %v10476
    %v10509 = vsel %vm10445, %v10413, %v10477
    %v10510 = vsel %vm10446, %v10414, %v10478
    %v10511 = vsel %vm10447, %v10415, %v10479
    %10512 = vst [vmem:[#allocation2] sm:$0xff] %v10480
    %10513 = vst [vmem:[#allocation2 + $0x8] sm:$0xff] %v10481
    %10514 = vst [vmem:[#allocation2 + $0x10] sm:$0xff] %v10482
    %10515 = vst [vmem:[#allocation2 + $0x18] sm:$0xff] %v10483
    %10516 = vst [vmem:[#allocation2 + $0x20] sm:$0xff] %v10484
    %10517 = vst [vmem:[#allocation2 + $0x28] sm:$0xff] %v10485
    %10518 = vst [vmem:[#allocation2 + $0x30] sm:$0xff] %v10486
    %10519 = vst [vmem:[#allocation2 + $0x38] sm:$0xff] %v10487
    %10520 = vst [vmem:[#allocation2 + $0x40] sm:$0xff] %v10488
    %10521 = vst [vmem:[#allocation2 + $0x48] sm:$0xff] %v10489
    %10522 = vst [vmem:[#allocation2 + $0x50] sm:$0xff] %v10490
    %10523 = vst [vmem:[#allocation2 + $0x58] sm:$0xff] %v10491
    %10524 = vst [vmem:[#allocation2 + $0x60] sm:$0xff] %v10492
    %10525 = vst [vmem:[#allocation2 + $0x68] sm:$0xff] %v10493
    %10526 = vst [vmem:[#allocation2 + $0x70] sm:$0xff] %v10494
    %10527 = vst [vmem:[#allocation2 + $0x78] sm:$0xff] %v10495
    %10528 = vst [vmem:[#allocation2 + $0x80] sm:$0xff] %v10496
    %10529 = vst [vmem:[#allocation2 + $0x88] sm:$0xff] %v10497
    %10530 = vst [vmem:[#allocation2 + $0x90] sm:$0xff] %v10498
    %10531 = vst [vmem:[#allocation2 + $0x98] sm:$0xff] %v10499
    %10532 = vst [vmem:[#allocation2 + $0xa0] sm:$0xff] %v10500
    %10533 = vst [vmem:[#allocation2 + $0xa8] sm:$0xff] %v10501
    %10534 = vst [vmem:[#allocation2 + $0xb0] sm:$0xff] %v10502
    %10535 = vst [vmem:[#allocation2 + $0xb8] sm:$0xff] %v10503
    %10536 = vst [vmem:[#allocation2 + $0xc0] sm:$0xff] %v10504
    %10537 = vst [vmem:[#allocation2 + $0xc8] sm:$0xff] %v10505
    %10538 = vst [vmem:[#allocation2 + $0xd0] sm:$0xff] %v10506
    %10539 = vst [vmem:[#allocation2 + $0xd8] sm:$0xff] %v10507
    %10540 = vst [vmem:[#allocation2 + $0xe0] sm:$0xff] %v10508
    %10541 = vst [vmem:[#allocation2 + $0xe8] sm:$0xff] %v10509
    %10542 = vst [vmem:[#allocation2 + $0xf0] sm:$0xff] %v10510
    %10543 = vst [vmem:[#allocation2 + $0xf8] sm:$0xff] %v10511
    %v10544 = vld [vmem:[#allocation2] sm:$0xff]
    %v10545 = vld [vmem:[#allocation2 + $0x8] sm:$0xff]
    %v10546 = vld [vmem:[#allocation2 + $0x10] sm:$0xff]
    %v10547 = vld [vmem:[#allocation2 + $0x18] sm:$0xff]
    %v10548 = vld [vmem:[#allocation2 + $0x20] sm:$0xff]
    %v10549 = vld [vmem:[#allocation2 + $0x28] sm:$0xff]
    %v10550 = vld [vmem:[#allocation2 + $0x30] sm:$0xff]
    %v10551 = vld [vmem:[#allocation2 + $0x38] sm:$0xff]
    %v10552 = vld [vmem:[#allocation2 + $0x40] sm:$0xff]
    %v10553 = vld [vmem:[#allocation2 + $0x48] sm:$0xff]
    %v10554 = vld [vmem:[#allocation2 + $0x50] sm:$0xff]
    %v10555 = vld [vmem:[#allocation2 + $0x58] sm:$0xff]
    %v10556 = vld [vmem:[#allocation2 + $0x60] sm:$0xff]
    %v10557 = vld [vmem:[#allocation2 + $0x68] sm:$0xff]
    %v10558 = vld [vmem:[#allocation2 + $0x70] sm:$0xff]
    %v10559 = vld [vmem:[#allocation2 + $0x78] sm:$0xff]
    %v10560 = vld [vmem:[#allocation2 + $0x80] sm:$0xff]
    %v10561 = vld [vmem:[#allocation2 + $0x88] sm:$0xff]
    %v10562 = vld [vmem:[#allocation2 + $0x90] sm:$0xff]
    %v10563 = vld [vmem:[#allocation2 + $0x98] sm:$0xff]
    %v10564 = vld [vmem:[#allocation2 + $0xa0] sm:$0xff]
    %v10565 = vld [vmem:[#allocation2 + $0xa8] sm:$0xff]
    %v10566 = vld [vmem:[#allocation2 + $0xb0] sm:$0xff]
    %v10567 = vld [vmem:[#allocation2 + $0xb8] sm:$0xff]
    %v10568 = vld [vmem:[#allocation2 + $0xc0] sm:$0xff]
    %v10569 = vld [vmem:[#allocation2 + $0xc8] sm:$0xff]
    %v10570 = vld [vmem:[#allocation2 + $0xd0] sm:$0xff]
    %v10571 = vld [vmem:[#allocation2 + $0xd8] sm:$0xff]
    %v10572 = vld [vmem:[#allocation2 + $0xe0] sm:$0xff]
    %v10573 = vld [vmem:[#allocation2 + $0xe8] sm:$0xff]
    %v10574 = vld [vmem:[#allocation2 + $0xf0] sm:$0xff]
    %v10575 = vld [vmem:[#allocation2 + $0xf8] sm:$0xff]
    %v10576 = vpack.c.bf16 %v10546, %v10544
    %v10577 = vpack.c.bf16 %v10547, %v10545
    %v10578 = vpack.c.bf16 %v10550, %v10548
    %v10579 = vpack.c.bf16 %v10551, %v10549
    %v10580 = vpack.c.bf16 %v10554, %v10552
    %v10581 = vpack.c.bf16 %v10555, %v10553
    %v10582 = vpack.c.bf16 %v10558, %v10556
    %v10583 = vpack.c.bf16 %v10559, %v10557
    %v10584 = vpack.c.bf16 %v10562, %v10560
    %v10585 = vpack.c.bf16 %v10563, %v10561
    %v10586 = vpack.c.bf16 %v10566, %v10564
    %v10587 = vpack.c.bf16 %v10567, %v10565
    %v10588 = vpack.c.bf16 %v10570, %v10568
    %v10589 = vpack.c.bf16 %v10571, %v10569
    %v10590 = vpack.c.bf16 %v10574, %v10572
    %v10591 = vpack.c.bf16 %v10575, %v10573
    %v10592 = vld [vmem:[%s7] sm:$0xf]
    %v10593 = vld [vmem:[%s7 + $0x4] sm:$0xf]
    %v10594 = vld [vmem:[%s7 + $0x8] sm:$0xf]
    %v10595 = vld [vmem:[%s7 + $0xc] sm:$0xf]
    %v10596 = vld [vmem:[%s7 + $0x10] sm:$0xf]
    %v10597 = vld [vmem:[%s7 + $0x14] sm:$0xf]
    %v10598 = vld [vmem:[%s7 + $0x18] sm:$0xf]
    %v10599 = vld [vmem:[%s7 + $0x1c] sm:$0xf]
    %v10600 = vld [vmem:[%s7 + $0x20] sm:$0xf]
    %v10601 = vld [vmem:[%s7 + $0x24] sm:$0xf]
    %v10602 = vld [vmem:[%s7 + $0x28] sm:$0xf]
    %v10603 = vld [vmem:[%s7 + $0x2c] sm:$0xf]
    %v10604 = vld [vmem:[%s7 + $0x30] sm:$0xf]
    %v10605 = vld [vmem:[%s7 + $0x34] sm:$0xf]
    %v10606 = vld [vmem:[%s7 + $0x38] sm:$0xf]
    %v10607 = vld [vmem:[%s7 + $0x3c] sm:$0xf]
    %v10608 = vld [vmem:[%s7 + $0x40] sm:$0xf]
    %v10609 = vld [vmem:[%s7 + $0x44] sm:$0xf]
    %v10610 = vld [vmem:[%s7 + $0x48] sm:$0xf]
    %v10611 = vld [vmem:[%s7 + $0x4c] sm:$0xf]
    %v10612 = vld [vmem:[%s7 + $0x50] sm:$0xf]
    %v10613 = vld [vmem:[%s7 + $0x54] sm:$0xf]
    %v10614 = vld [vmem:[%s7 + $0x58] sm:$0xf]
    %v10615 = vld [vmem:[%s7 + $0x5c] sm:$0xf]
    %v10616 = vld [vmem:[%s7 + $0x60] sm:$0xf]
    %v10617 = vld [vmem:[%s7 + $0x64] sm:$0xf]
    %v10618 = vld [vmem:[%s7 + $0x68] sm:$0xf]
    %v10619 = vld [vmem:[%s7 + $0x6c] sm:$0xf]
    %v10620 = vld [vmem:[%s7 + $0x70] sm:$0xf]
    %v10621 = vld [vmem:[%s7 + $0x74] sm:$0xf]
    %v10622 = vld [vmem:[%s7 + $0x78] sm:$0xf]
    %v10623 = vld [vmem:[%s7 + $0x7c] sm:$0xf]
    %v10624 = vld [vmem:[#allocation11] sm:$0x1]
    %v10626 = vlaneseq
    %v10627 = vshrl.u32 %v10626, 7
    %v10628 = vsub.s32 0, %v10627
    %v10629 = vrot.slane %v10624, %v10628
    %v10663 = vunpack.c.l.b16 %v10592
    %v10664 = vunpack.c.l.b16 %v10593
    %v10665 = vunpack.c.l.b16 %v10594
    %v10666 = vunpack.c.l.b16 %v10595
    %v10667 = vunpack.c.l.b16 %v10596
    %v10668 = vunpack.c.l.b16 %v10597
    %v10669 = vunpack.c.l.b16 %v10598
    %v10670 = vunpack.c.l.b16 %v10599
    %v10671 = vunpack.c.l.b16 %v10600
    %v10672 = vunpack.c.l.b16 %v10601
    %v10673 = vunpack.c.l.b16 %v10602
    %v10674 = vunpack.c.l.b16 %v10603
    %v10675 = vunpack.c.l.b16 %v10604
    %v10676 = vunpack.c.l.b16 %v10605
    %v10677 = vunpack.c.l.b16 %v10606
    %v10678 = vunpack.c.l.b16 %v10607
    %v10679 = vunpack.c.l.b16 %v10608
    %v10680 = vunpack.c.l.b16 %v10609
    %v10681 = vunpack.c.l.b16 %v10610
    %v10682 = vunpack.c.l.b16 %v10611
    %v10683 = vunpack.c.l.b16 %v10612
    %v10684 = vunpack.c.l.b16 %v10613
    %v10685 = vunpack.c.l.b16 %v10614
    %v10686 = vunpack.c.l.b16 %v10615
    %v10687 = vunpack.c.l.b16 %v10616
    %v10688 = vunpack.c.l.b16 %v10617
    %v10689 = vunpack.c.l.b16 %v10618
    %v10690 = vunpack.c.l.b16 %v10619
    %v10691 = vunpack.c.l.b16 %v10620
    %v10692 = vunpack.c.l.b16 %v10621
    %v10693 = vunpack.c.l.b16 %v10622
    %v10694 = vunpack.c.l.b16 %v10623
    %v10695 = vpack.c.b16 %v10664, %v10663
    %v10696 = vpack.c.b16 %v10666, %v10665
    %v10697 = vpack.c.b16 %v10668, %v10667
    %v10698 = vpack.c.b16 %v10670, %v10669
    %v10699 = vpack.c.b16 %v10672, %v10671
    %v10700 = vpack.c.b16 %v10674, %v10673
    %v10701 = vpack.c.b16 %v10676, %v10675
    %v10702 = vpack.c.b16 %v10678, %v10677
    %v10703 = vpack.c.b16 %v10680, %v10679
    %v10704 = vpack.c.b16 %v10682, %v10681
    %v10705 = vpack.c.b16 %v10684, %v10683
    %v10706 = vpack.c.b16 %v10686, %v10685
    %v10707 = vpack.c.b16 %v10688, %v10687
    %v10708 = vpack.c.b16 %v10690, %v10689
    %v10709 = vpack.c.b16 %v10692, %v10691
    %v10710 = vpack.c.b16 %v10694, %v10693
    %10727 = vmatprep.subr.bf16.mxu0 0
    %10728 = vmatpush1.bf16.msra.mxu0 %v10695
    %10729 = vmatprep.subr.bf16.mxu0 0
    %10730 = vmatpush1.bf16.msra.mxu0 %v10696
    %10731 = vmatprep.subr.bf16.mxu0 0
    %10732 = vmatpush1.bf16.msra.mxu0 %v10697
    %10733 = vmatprep.subr.bf16.mxu0 0
    %10734 = vmatpush1.bf16.msra.mxu0 %v10698
    %10735 = vmatprep.subr.bf16.mxu0 0
    %10736 = vmatpush1.bf16.msra.mxu0 %v10699
    %10737 = vmatprep.subr.bf16.mxu0 0
    %10738 = vmatpush1.bf16.msra.mxu0 %v10700
    %10739 = vmatprep.subr.bf16.mxu0 0
    %10740 = vmatpush1.bf16.msra.mxu0 %v10701
    %10741 = vmatprep.subr.bf16.mxu0 0
    %10742 = vmatpush1.bf16.msra.mxu0 %v10702
    %10743 = vmatprep.subr.bf16.mxu0 0
    %10744 = vmatpush1.bf16.msra.mxu0 %v10703
    %10745 = vmatprep.subr.bf16.mxu0 0
    %10746 = vmatpush1.bf16.msra.mxu0 %v10704
    %10747 = vmatprep.subr.bf16.mxu0 0
    %10748 = vmatpush1.bf16.msra.mxu0 %v10705
    %10749 = vmatprep.subr.bf16.mxu0 0
    %10750 = vmatpush1.bf16.msra.mxu0 %v10706
    %10751 = vmatprep.subr.bf16.mxu0 0
    %10752 = vmatpush1.bf16.msra.mxu0 %v10707
    %10753 = vmatprep.subr.bf16.mxu0 0
    %10754 = vmatpush1.bf16.msra.mxu0 %v10708
    %10755 = vmatprep.subr.bf16.mxu0 0
    %10756 = vmatpush1.bf16.msra.mxu0 %v10709
    %10757 = vmatprep.subr.bf16.mxu0 0
    %10758 = vmatpush1.bf16.msra.mxu0 %v10710
    %10759 = vmatprep.mubr.bf16.mxu0 %v10577
    %10760 = vmatmul.mubr.bf16.gmra.mrb[0].mxu0 %v10576
    %v10761 = vpop.f32.mrb[0].mxu0
    %v10762 = vadd.f32 %v10629, %v10761
    %v10763 = vpop.f32.mrb[0].mxu0
    %v10764 = vpop.f32.mrb[0].mxu0
    %v10765 = vadd.f32 %v10629, %v10764
    %v10766 = vpop.f32.mrb[0].mxu0
    %10767 = vmatprep.mubr.bf16.mxu0 %v10579
    %10768 = vmatmul.mubr.bf16.gmra.mrb[0].mxu0 %v10578
    %v10769 = vpop.f32.mrb[0].mxu0
    %v10770 = vadd.f32 %v10629, %v10769
    %v10771 = vpop.f32.mrb[0].mxu0
    %v10772 = vpop.f32.mrb[0].mxu0
    %v10773 = vadd.f32 %v10629, %v10772
    %v10774 = vpop.f32.mrb[0].mxu0
    %10775 = vmatprep.mubr.bf16.mxu0 %v10581
    %10776 = vmatmul.mubr.bf16.gmra.mrb[0].mxu0 %v10580
    %v10777 = vpop.f32.mrb[0].mxu0
    %v10778 = vadd.f32 %v10629, %v10777
    %v10779 = vpop.f32.mrb[0].mxu0
    %v10780 = vpop.f32.mrb[0].mxu0
    %v10781 = vadd.f32 %v10629, %v10780
    %v10782 = vpop.f32.mrb[0].mxu0
    %10783 = vmatprep.mubr.bf16.mxu0 %v10583
    %10784 = vmatmul.mubr.bf16.gmra.mrb[0].mxu0 %v10582
    %v10785 = vpop.f32.mrb[0].mxu0
    %v10786 = vadd.f32 %v10629, %v10785
    %v10787 = vpop.f32.mrb[0].mxu0
    %v10788 = vpop.f32.mrb[0].mxu0
    %v10789 = vadd.f32 %v10629, %v10788
    %v10790 = vpop.f32.mrb[0].mxu0
    %10791 = vmatprep.mubr.bf16.mxu0 %v10585
    %10792 = vmatmul.mubr.bf16.gmra.mrb[0].mxu0 %v10584
    %v10793 = vpop.f32.mrb[0].mxu0
    %v10794 = vadd.f32 %v10629, %v10793
    %v10795 = vpop.f32.mrb[0].mxu0
    %v10796 = vpop.f32.mrb[0].mxu0
    %v10797 = vadd.f32 %v10629, %v10796
    %v10798 = vpop.f32.mrb[0].mxu0
    %10799 = vmatprep.mubr.bf16.mxu0 %v10587
    %10800 = vmatmul.mubr.bf16.gmra.mrb[0].mxu0 %v10586
    %v10801 = vpop.f32.mrb[0].mxu0
    %v10802 = vadd.f32 %v10629, %v10801
    %v10803 = vpop.f32.mrb[0].mxu0
    %v10804 = vpop.f32.mrb[0].mxu0
    %v10805 = vadd.f32 %v10629, %v10804
    %v10806 = vpop.f32.mrb[0].mxu0
    %10807 = vmatprep.mubr.bf16.mxu0 %v10589
    %10808 = vmatmul.mubr.bf16.gmra.mrb[0].mxu0 %v10588
    %v10809 = vpop.f32.mrb[0].mxu0
    %v10810 = vadd.f32 %v10629, %v10809
    %v10811 = vpop.f32.mrb[0].mxu0
    %v10812 = vpop.f32.mrb[0].mxu0
    %v10813 = vadd.f32 %v10629, %v10812
    %v10814 = vpop.f32.mrb[0].mxu0
    %10815 = vmatprep.mubr.bf16.mxu0 %v10591
    %10816 = vmatmul.mubr.bf16.gmra.mrb[0].mxu0 %v10590
    %v10817 = vpop.f32.mrb[0].mxu0
    %v10818 = vadd.f32 %v10629, %v10817
    %v10819 = vpop.f32.mrb[0].mxu0
    %v10820 = vpop.f32.mrb[0].mxu0
    %v10821 = vadd.f32 %v10629, %v10820
    %v10822 = vpop.f32.mrb[0].mxu0
    %10823 = vdwg.mxu0
    %vm10824 = vcmask 64512
    %10825 = vst.msk [vmem:[%s9] sm:$0xff] %vm10824, %v10762
    %10826 = vst.msk [vmem:[%s9 + $0x8] sm:$0xff] %vm10824, %v10765
    %10827 = vst.msk [vmem:[%s9 + $0x10] sm:$0xff] %vm10824, %v10770
    %10828 = vst.msk [vmem:[%s9 + $0x18] sm:$0xff] %vm10824, %v10773
    %10829 = vst.msk [vmem:[%s9 + $0x20] sm:$0xff] %vm10824, %v10778
    %10830 = vst.msk [vmem:[%s9 + $0x28] sm:$0xff] %vm10824, %v10781
    %10831 = vst.msk [vmem:[%s9 + $0x30] sm:$0xff] %vm10824, %v10786
    %10832 = vst.msk [vmem:[%s9 + $0x38] sm:$0xff] %vm10824, %v10789
    %10833 = vst.msk [vmem:[%s9 + $0x40] sm:$0xff] %vm10824, %v10794
    %10834 = vst.msk [vmem:[%s9 + $0x48] sm:$0xff] %vm10824, %v10797
    %10835 = vst.msk [vmem:[%s9 + $0x50] sm:$0xff] %vm10824, %v10802
    %10836 = vst.msk [vmem:[%s9 + $0x58] sm:$0xff] %vm10824, %v10805
    %10837 = vst.msk [vmem:[%s9 + $0x60] sm:$0xff] %vm10824, %v10810
    %10838 = vst.msk [vmem:[%s9 + $0x68] sm:$0xff] %vm10824, %v10813
    %10839 = vst.msk [vmem:[%s9 + $0x70] sm:$0xff] %vm10824, %v10818
    %10840 = vst.msk [vmem:[%s9 + $0x78] sm:$0xff] %vm10824, %v10821
    // Predicated region
    $region62: #{cluster_classify.1} parent=1 // pred_check
      _
    $region63: #{cluster_classify.1} parent=1 // pred_check_branch
      %10842 = sbr.rel (0) target = $region65
    $region64: #{cluster_classify.1} parent=1 // pred_region
      _
    $region65: #{cluster_classify.1} parent=1 // pred_fallthru
      _
    // Predicated region
    $region66: #{cluster_classify.1} parent=1 // pred_check
      _
    $region67: #{cluster_classify.1} parent=1 // pred_check_branch
      %10844 = sbr.rel (0) target = $region69
    $region68: #{cluster_classify.1} parent=1 // pred_region
      _
    $region69: #{cluster_classify.1} parent=1 // pred_fallthru
      _
    %10845 = vsyncpa [#allocation4], 1
    %10846 = vsyncpa [#allocation6], 1
    %10847 = vsyncpa [#allocation9], 1
    %10848 = vsyncpa [#allocation12], 1

</llo_original>
